<compile_context>
chip_gen: v7x
topology: tpu7x:2x2x1
jax: 0.10.0
libtpu: 0.0.40
codegen_flags: <defaults>
</compile_context>

<pallas_src>
import math

import jax
import jax.numpy as jnp
from jax.experimental import pallas as pl
from jax.experimental.pallas import tpu as pltpu


def _bf16_exp_ok():
    """bf16 transcendentals are profitable/supported on v6e / v7x EUPs; keep f32 elsewhere."""
    try:
        kind = jax.devices()[0].device_kind.lower()
    except Exception:
        return False
    return ("v6" in kind) or ("v7" in kind)


def mha_within_feat_forward(x_nchw, params, *, inpd, outd, n_heads=8, eps=1e-5):
    N, C, H, W = x_nchw.shape
    assert N == 1, "module's x.view(1, H, W, outd) requires batch size 1"
    assert C == inpd and outd % n_heads == 0
    S = H * W
    hd = outd // n_heads
    scale = 1.0 / math.sqrt(hd)
    exp_dtype = jnp.bfloat16 if _bf16_exp_ok() else jnp.float32

    # NCHW -> (C, S): pure metadata reshape (channels on sublanes, positions on lanes).
    x_t = x_nchw.reshape(inpd, S)

    # ---- parameter-only prep (free under jit; pre-transposed bf16 MXU operands) ----
    w1_t = params["w1"].T.astype(jnp.bfloat16)                          # (outd, inpd)
    wi, bi = params["wi"], params["bi"]
    wqkv_t = jnp.concatenate(
        [(wi[:, 0 * outd:1 * outd] * scale).T,                          # q scale folded
         wi[:, 1 * outd:2 * outd].T,
         wi[:, 2 * outd:3 * outd].T], axis=0).astype(jnp.bfloat16)      # (3*outd, outd)
    wo_t = params["wo"].T.astype(jnp.bfloat16)                          # (outd, outd)
    w2_t = params["w2"].T.astype(jnp.bfloat16)                          # (inpd, outd)

    # All small per-channel vectors in ONE packed array (one DMA instead of 7):
    # columns: 0=g1, 1=be1, 2=bq (scale folded), 3=g2, 4=be2.
    # b1, b2, bk, bv, bo are intentionally dropped (exactly cancelled: see header).
    vrows = max(outd, inpd)
    vecs = jnp.zeros((vrows, 8), jnp.float32)
    vecs = vecs.at[:outd, 0].set(params["g1"][0])
    vecs = vecs.at[:outd, 1].set(params["be1"][0])
    vecs = vecs.at[:outd, 2].set(bi[0, 0 * outd:1 * outd] * scale)
    vecs = vecs.at[:inpd, 3].set(params["g2"][0])
    vecs = vecs.at[:inpd, 4].set(params["be2"][0])

    def kernel(x_ref, w1_ref, wqkv_ref, wo_ref, w2_ref, vecs_ref, o_ref):
        f32 = jnp.float32
        bf16 = jnp.bfloat16
        g1 = vecs_ref[0:outd, 0:1]
        be1 = vecs_ref[0:outd, 1:2]
        bq = vecs_ref[0:outd, 2:3]
        g2 = vecs_ref[0:inpd, 3:4]
        be2 = vecs_ref[0:inpd, 4:5]

        # --- Conv2d1 (1x1) as a channel matmul; bias cancelled by training-mode BN1 ---
        h = jnp.dot(w1_ref[...], x_ref[...].astype(bf16),
                    preferred_element_type=f32)                          # (outd, S)

        # --- BatchNorm2d(outd): batch stats over positions (lane axis), centered
        #     two-pass variance, folded scale/shift; then ReLU ---
        mu1 = jnp.mean(h, axis=1, keepdims=True)
        hc = h - mu1
        var1 = jnp.mean(hc * hc, axis=1, keepdims=True)
        h = jnp.maximum(hc * (jax.lax.rsqrt(var1 + eps) * g1) + be1, 0.0)

        # --- Packed q|k|v projection: one (3*outd, outd) x (outd, S) matmul ---
        qkv = jnp.dot(wqkv_ref[...], h.astype(bf16),
                      preferred_element_type=f32)                        # (3*outd, S)
        q = (qkv[0:outd] + bq).reshape(n_heads, hd, S).astype(bf16)
        k = qkv[outd:2 * outd].reshape(n_heads, hd, S).astype(bf16)      # bk dropped (exact)
        v = qkv[2 * outd:3 * outd].reshape(n_heads, hd, S).astype(bf16)  # bv dropped (exact)

        # --- Head-batched attention, all tensors in (head, head_dim, S) layout ---
        s = jnp.einsum("hdq,hdk->hqk", q, k,
                       preferred_element_type=f32)                       # (nh, S, S)
        s = s - jnp.max(s, axis=-1, keepdims=True)
        p = jnp.exp(s.astype(exp_dtype)).astype(bf16)                    # bf16 EUP on v6e/v7x

        # PV matmul; denominator via a ones-row matmul so it lands position-in-lanes,
        # allowing normalization AFTER PV on the small (nh, hd, S) tensor.
        o_h = jnp.einsum("hdk,hqk->hdq", v, p,
                         preferred_element_type=f32)                     # (nh, hd, S)
        den = jnp.einsum("hok,hqk->hoq",
                         jnp.ones((n_heads, 1, S), bf16), p,
                         preferred_element_type=f32)                     # (nh, 1, S)
        o_h = o_h * pl.reciprocal(den, approx=True)

        # Center across positions BEFORE the bf16 cast: BN2 removes the batch mean
        # anyway (exact), and rounding the centered signal keeps bf16 error relative
        # to the position-varying part BN2 actually keeps.
        o_flat = o_h.reshape(outd, S)
        o_flat = o_flat - jnp.mean(o_flat, axis=1, keepdims=True)

        # --- Out-projection: single (outd, outd) matmul (bo cancelled by BN2) ---
        attn = jnp.dot(wo_ref[...], o_flat.astype(bf16),
                       preferred_element_type=f32)                       # (outd, S)

        # --- Conv2d2 (1x1; bias cancelled by BN2) + BatchNorm2d(inpd) + ReLU ---
        y = jnp.dot(w2_ref[...], attn.astype(bf16),
                    preferred_element_type=f32)                          # (inpd, S)
        mu2 = jnp.mean(y, axis=1, keepdims=True)
        yc = y - mu2
        var2 = jnp.mean(yc * yc, axis=1, keepdims=True)
        o_ref[...] = jnp.maximum(yc * (jax.lax.rsqrt(var2 + eps) * g2) + be2, 0.0)

    # Advisory cost hint for XLA's scheduler around this tiny custom call.
    flops = 2 * S * outd * (inpd + 3 * outd + outd + inpd) + 2 * S * S * (2 * outd + n_heads)
    transcendentals = n_heads * S * S + n_heads * S + outd + inpd
    bytes_accessed = (x_t.size * 4 + w1_t.size * 2 + wqkv_t.size * 2 + wo_t.size * 2
                      + w2_t.size * 2 + vecs.size * 4 + inpd * S * 4)

    out_t = pl.pallas_call(
        kernel,
        out_shape=jax.ShapeDtypeStruct((inpd, S), jnp.float32),
        in_specs=[pl.BlockSpec(memory_space=pltpu.MemorySpace.VMEM)] * 6,
        out_specs=pl.BlockSpec(memory_space=pltpu.MemorySpace.VMEM),
        compiler_params=pltpu.CompilerParams(
            # peak live intermediates ~8 MiB ((heads, S, S) scores/probs); 24 MiB
            # leaves ~3x headroom while freeing the rest of scoped VMEM for neighbors.
            vmem_limit_bytes=24 * 1024 * 1024),
        cost_estimate=pl.CostEstimate(flops=flops, transcendentals=transcendentals,
                                      bytes_accessed=bytes_accessed),
    )(x_t, w1_t, wqkv_t, wo_t, w2_t, vecs)

    # (C, S) is exactly flattened NCHW for N == 1: metadata reshape only.
    return out_t.reshape(1, inpd, H, W)


def mha_within_feat_reference(x_nchw, params, *, inpd, outd, n_heads=8, eps=1e-5):
    """Plain-JAX f32 literal translation of the PyTorch module (for validation)."""
    N, C, H, W = x_nchw.shape
    S = H * W
    hd = outd // n_heads
    scale = 1.0 / math.sqrt(hd)
    x = jnp.transpose(x_nchw, (0, 2, 3, 1)).reshape(S, inpd)
    h = x @ params["w1"] + params["b1"]
    mu = jnp.mean(h, 0, keepdims=True)
    var = jnp.mean((h - mu) ** 2, 0, keepdims=True)
    h = (h - mu) / jnp.sqrt(var + eps) * params["g1"] + params["be1"]
    h = jnp.maximum(h, 0.0)
    qkv = h @ params["wi"] + params["bi"]
    q, k, v = qkv[:, :outd], qkv[:, outd:2 * outd], qkv[:, 2 * outd:]
    outs = []
    for hh in range(n_heads):
        sl = slice(hh * hd, (hh + 1) * hd)
        s = (q[:, sl] * scale) @ k[:, sl].T
        p = jax.nn.softmax(s, axis=-1)
        outs.append(p @ v[:, sl])
    attn = jnp.concatenate(outs, 1) @ params["wo"] + params["bo"]
    y = attn @ params["w2"] + params["b2"]
    mu2 = jnp.mean(y, 0, keepdims=True)
    var2 = jnp.mean((y - mu2) ** 2, 0, keepdims=True)
    y = (y - mu2) / jnp.sqrt(var2 + eps) * params["g2"] + params["be2"]
    y = jnp.maximum(y, 0.0)
    return jnp.transpose(y.reshape(1, H, W, inpd), (0, 3, 1, 2))


def init_params(key, inpd, outd):
    """Deterministic synthetic parameters matching the PyTorch module's shapes.

    Weights are stored pre-transposed into the matmul-friendly (in, out) layout:
      Conv2d1.weight (outd, inpd, 1, 1) -> w1 (inpd, outd)
      mha.in_proj_weight (3*outd, outd) -> wi (outd, 3*outd)
      mha.out_proj.weight (outd, outd)  -> wo (outd, outd) [transposed]
      Conv2d2.weight (inpd, outd, 1, 1) -> w2 (outd, inpd)
    """
    ks = jax.random.split(key, 12)

    def n(k, shape, sc=0.05):
        return (jax.random.normal(k, shape) * sc).astype(jnp.float32)

    return dict(
        w1=n(ks[0], (inpd, outd)),
        b1=n(ks[1], (1, outd)),
        g1=(1.0 + n(ks[2], (1, outd), 0.1)).astype(jnp.float32),
        be1=n(ks[3], (1, outd), 0.1),
        wi=n(ks[4], (outd, 3 * outd)),
        bi=n(ks[5], (1, 3 * outd)),
        wo=n(ks[6], (outd, outd)),
        bo=n(ks[7], (1, outd)),
        w2=n(ks[8], (outd, inpd)),
        b2=n(ks[9], (1, inpd)),
        g2=(1.0 + n(ks[10], (1, inpd), 0.1)).astype(jnp.float32),
        be2=n(ks[11], (1, inpd), 0.1),
    )


if __name__ == "__main__":
    inpd, outd, H, W = 32, 64, 16, 16          # outd divisible by 8 heads; S = 256
    key = jax.random.PRNGKey(0)
    kx, kp = jax.random.split(key)
    x = jax.random.normal(kx, (1, inpd, H, W), dtype=jnp.float32)
    params = init_params(kp, inpd, outd)

    out = mha_within_feat_forward(x, params, inpd=inpd, outd=outd)
    out = jax.block_until_ready(out)
    assert out.shape == (1, inpd, H, W), out.shape
    assert bool(jnp.all(out >= 0.0))           # final ReLU
    assert bool(jnp.all(jnp.isfinite(out)))

    # Validate against the plain-JAX f32 reference.  Tolerance accounts for bf16
    # MXU operands / bf16 exp on newer chips, the EUP approximate reciprocal in the
    # softmax, and fp reassociation; structural errors would be O(1).
    ref = jax.block_until_ready(
        mha_within_feat_reference(x, params, inpd=inpd, outd=outd))
    max_err = float(jnp.max(jnp.abs(out - ref)))
    assert max_err < 7.5e-2, f"max abs error vs reference: {max_err}"

    print("KERNEL_OK")
</pallas_src>

<mosaic_0001>
module attributes {stable_mosaic.version = 11 : i64} {
  func.func @kernel(%arg0: memref<32x256xf32, #tpu.memory_space<vmem>>, %arg1: memref<64x32xbf16, #tpu.memory_space<vmem>>, %arg2: memref<192x64xbf16, #tpu.memory_space<vmem>>, %arg3: memref<64x64xbf16, #tpu.memory_space<vmem>>, %arg4: memref<32x64xbf16, #tpu.memory_space<vmem>>, %arg5: memref<64x8xf32, #tpu.memory_space<vmem>>, %arg6: memref<32x256xf32, #tpu.memory_space<vmem>>) attributes {dimension_semantics = [], scalar_prefetch = 0 : i64, scratch_operands = 0 : i64, tpu.core_type = #tpu.core_type<tc>} {
    %c0 = arith.constant 0 : index
    %c0_0 = arith.constant 0 : index
    %0 = vector.load %arg5[%c0, %c0_0] : memref<64x8xf32, #tpu.memory_space<vmem>>, vector<64x1xf32>
    %c0_1 = arith.constant 0 : index
    %c1 = arith.constant 1 : index
    %1 = vector.load %arg5[%c0_1, %c1] : memref<64x8xf32, #tpu.memory_space<vmem>>, vector<64x1xf32>
    %c0_2 = arith.constant 0 : index
    %c2 = arith.constant 2 : index
    %2 = vector.load %arg5[%c0_2, %c2] : memref<64x8xf32, #tpu.memory_space<vmem>>, vector<64x1xf32>
    %c0_3 = arith.constant 0 : index
    %c3 = arith.constant 3 : index
    %3 = vector.load %arg5[%c0_3, %c3] : memref<64x8xf32, #tpu.memory_space<vmem>>, vector<32x1xf32>
    %c0_4 = arith.constant 0 : index
    %c4 = arith.constant 4 : index
    %4 = vector.load %arg5[%c0_4, %c4] : memref<64x8xf32, #tpu.memory_space<vmem>>, vector<32x1xf32>
    %c0_5 = arith.constant 0 : index
    %c0_6 = arith.constant 0 : index
    %5 = vector.load %arg1[%c0_5, %c0_6] : memref<64x32xbf16, #tpu.memory_space<vmem>>, vector<64x32xbf16>
    %c0_7 = arith.constant 0 : index
    %c0_8 = arith.constant 0 : index
    %6 = vector.load %arg0[%c0_7, %c0_8] : memref<32x256xf32, #tpu.memory_space<vmem>>, vector<32x256xf32>
    %7 = arith.truncf %6 : vector<32x256xf32> to vector<32x256xbf16>
    %cst = arith.constant dense<0.000000e+00> : vector<64x256xf32>
    %8 = tpu.matmul %5, %7, %cst {dimension_numbers = #tpu.dot_dimension_numbers<[1], [0], [0], [1], [0, 0, 1, 1], [], []>} : vector<64x32xbf16>, vector<32x256xbf16>, vector<64x256xf32> -> vector<64x256xf32>
    %cst_9 = arith.constant dense<0.000000e+00> : vector<64xf32>
    %9 = vector.multi_reduction <add>, %8, %cst_9 [1] : vector<64x256xf32> to vector<64xf32>
    %10 = vector.shape_cast %9 : vector<64xf32> to vector<64x1xf32>
    %cst_10 = arith.constant 2.560000e+02 : f32
    %11 = vector.broadcast %cst_10 : f32 to vector<64x1xf32>
    %12 = arith.divf %10, %11 : vector<64x1xf32>
    %13 = vector.broadcast %12 : vector<64x1xf32> to vector<64x256xf32>
    %14 = arith.subf %8, %13 : vector<64x256xf32>
    %15 = arith.mulf %14, %14 : vector<64x256xf32>
    %cst_11 = arith.constant dense<0.000000e+00> : vector<64xf32>
    %16 = vector.multi_reduction <add>, %15, %cst_11 [1] : vector<64x256xf32> to vector<64xf32>
    %17 = vector.shape_cast %16 : vector<64xf32> to vector<64x1xf32>
    %cst_12 = arith.constant 2.560000e+02 : f32
    %18 = vector.broadcast %cst_12 : f32 to vector<64x1xf32>
    %19 = arith.divf %17, %18 : vector<64x1xf32>
    %cst_13 = arith.constant 9.99999974E-6 : f32
    %20 = vector.broadcast %cst_13 : f32 to vector<64x1xf32>
    %21 = arith.addf %19, %20 : vector<64x1xf32>
    %22 = math.rsqrt %21 : vector<64x1xf32>
    %23 = arith.mulf %22, %0 : vector<64x1xf32>
    %24 = vector.broadcast %23 : vector<64x1xf32> to vector<64x256xf32>
    %25 = arith.mulf %14, %24 : vector<64x256xf32>
    %26 = vector.broadcast %1 : vector<64x1xf32> to vector<64x256xf32>
    %27 = arith.addf %25, %26 : vector<64x256xf32>
    %cst_14 = arith.constant 0.000000e+00 : f32
    %28 = vector.broadcast %cst_14 : f32 to vector<64x256xf32>
    %29 = arith.maximumf %27, %28 : vector<64x256xf32>
    %c0_15 = arith.constant 0 : index
    %c0_16 = arith.constant 0 : index
    %30 = vector.load %arg2[%c0_15, %c0_16] : memref<192x64xbf16, #tpu.memory_space<vmem>>, vector<192x64xbf16>
    %31 = arith.truncf %29 : vector<64x256xf32> to vector<64x256xbf16>
    %cst_17 = arith.constant dense<0.000000e+00> : vector<192x256xf32>
    %32 = tpu.matmul %30, %31, %cst_17 {dimension_numbers = #tpu.dot_dimension_numbers<[1], [0], [0], [1], [0, 0, 1, 1], [], []>} : vector<192x64xbf16>, vector<64x256xbf16>, vector<192x256xf32> -> vector<192x256xf32>
    %33 = vector.extract_strided_slice %32 {offsets = [0, 0], sizes = [64, 256], strides = [1, 1]} : vector<192x256xf32> to vector<64x256xf32>
    %34 = vector.broadcast %2 : vector<64x1xf32> to vector<64x256xf32>
    %35 = arith.addf %33, %34 : vector<64x256xf32>
    %36 = vector.shape_cast %35 : vector<64x256xf32> to vector<8x8x256xf32>
    %37 = arith.truncf %36 : vector<8x8x256xf32> to vector<8x8x256xbf16>
    %38 = vector.extract_strided_slice %32 {offsets = [64, 0], sizes = [64, 256], strides = [1, 1]} : vector<192x256xf32> to vector<64x256xf32>
    %39 = vector.shape_cast %38 : vector<64x256xf32> to vector<8x8x256xf32>
    %40 = arith.truncf %39 : vector<8x8x256xf32> to vector<8x8x256xbf16>
    %41 = vector.extract_strided_slice %32 {offsets = [128, 0], sizes = [64, 256], strides = [1, 1]} : vector<192x256xf32> to vector<64x256xf32>
    %42 = vector.shape_cast %41 : vector<64x256xf32> to vector<8x8x256xf32>
    %43 = arith.truncf %42 : vector<8x8x256xf32> to vector<8x8x256xbf16>
    "tpu.trace_start"() <{level = 10 : i32, message = "hdq,hdk->hqk"}> : () -> ()
    %cst_18 = arith.constant dense<0.000000e+00> : vector<8x256x256xf32>
    %44 = tpu.matmul %37, %40, %cst_18 {dimension_numbers = #tpu.dot_dimension_numbers<[1], [1], [2], [2], [0, 0, 0, 2, 1, 2], [0], [0]>} : vector<8x8x256xbf16>, vector<8x8x256xbf16>, vector<8x256x256xf32> -> vector<8x256x256xf32>
    "tpu.trace_stop"() : () -> ()
    %cst_19 = arith.constant dense<0xFF800000> : vector<8x256xf32>
    %45 = vector.multi_reduction <maximumf>, %44, %cst_19 [2] : vector<8x256x256xf32> to vector<8x256xf32>
    %46 = vector.shape_cast %45 : vector<8x256xf32> to vector<8x256x1xf32>
    %47 = vector.broadcast %46 : vector<8x256x1xf32> to vector<8x256x256xf32>
    %48 = arith.subf %44, %47 : vector<8x256x256xf32>
    %49 = math.exp %48 : vector<8x256x256xf32>
    %50 = arith.truncf %49 : vector<8x256x256xf32> to vector<8x256x256xbf16>
    "tpu.trace_start"() <{level = 10 : i32, message = "hdk,hqk->hdq"}> : () -> ()
    %cst_20 = arith.constant dense<0.000000e+00> : vector<8x8x256xf32>
    %51 = tpu.matmul %43, %50, %cst_20 {dimension_numbers = #tpu.dot_dimension_numbers<[2], [2], [1], [1], [0, 0, 0, 1, 1, 1], [0], [0]>} : vector<8x8x256xbf16>, vector<8x256x256xbf16>, vector<8x8x256xf32> -> vector<8x8x256xf32>
    %cst_21 = arith.constant 1.000000e+00 : bf16
    "tpu.trace_stop"() : () -> ()
    %52 = vector.broadcast %cst_21 : bf16 to vector<8x1x256xbf16>
    "tpu.trace_start"() <{level = 10 : i32, message = "hok,hqk->hoq"}> : () -> ()
    %cst_22 = arith.constant dense<0.000000e+00> : vector<8x1x256xf32>
    %53 = tpu.matmul %52, %50, %cst_22 {dimension_numbers = #tpu.dot_dimension_numbers<[2], [2], [1], [1], [0, 0, 0, 1, 1, 1], [0], [0]>} : vector<8x1x256xbf16>, vector<8x256x256xbf16>, vector<8x1x256xf32> -> vector<8x1x256xf32>
    "tpu.trace_stop"() : () -> ()
    %54 = tpu.reciprocal %53 {approx = true} : vector<8x1x256xf32> -> vector<8x1x256xf32>
    %55 = vector.broadcast %54 : vector<8x1x256xf32> to vector<8x8x256xf32>
    %56 = arith.mulf %51, %55 : vector<8x8x256xf32>
    %57 = vector.shape_cast %56 : vector<8x8x256xf32> to vector<64x256xf32>
    %cst_23 = arith.constant dense<0.000000e+00> : vector<64xf32>
    %58 = vector.multi_reduction <add>, %57, %cst_23 [1] : vector<64x256xf32> to vector<64xf32>
    %59 = vector.shape_cast %58 : vector<64xf32> to vector<64x1xf32>
    %cst_24 = arith.constant 2.560000e+02 : f32
    %60 = vector.broadcast %cst_24 : f32 to vector<64x1xf32>
    %61 = arith.divf %59, %60 : vector<64x1xf32>
    %62 = vector.broadcast %61 : vector<64x1xf32> to vector<64x256xf32>
    %63 = arith.subf %57, %62 : vector<64x256xf32>
    %c0_25 = arith.constant 0 : index
    %c0_26 = arith.constant 0 : index
    %64 = vector.load %arg3[%c0_25, %c0_26] : memref<64x64xbf16, #tpu.memory_space<vmem>>, vector<64x64xbf16>
    %65 = arith.truncf %63 : vector<64x256xf32> to vector<64x256xbf16>
    %cst_27 = arith.constant dense<0.000000e+00> : vector<64x256xf32>
    %66 = tpu.matmul %64, %65, %cst_27 {dimension_numbers = #tpu.dot_dimension_numbers<[1], [0], [0], [1], [0, 0, 1, 1], [], []>} : vector<64x64xbf16>, vector<64x256xbf16>, vector<64x256xf32> -> vector<64x256xf32>
    %c0_28 = arith.constant 0 : index
    %c0_29 = arith.constant 0 : index
    %67 = vector.load %arg4[%c0_28, %c0_29] : memref<32x64xbf16, #tpu.memory_space<vmem>>, vector<32x64xbf16>
    %68 = arith.truncf %66 : vector<64x256xf32> to vector<64x256xbf16>
    %cst_30 = arith.constant dense<0.000000e+00> : vector<32x256xf32>
    %69 = tpu.matmul %67, %68, %cst_30 {dimension_numbers = #tpu.dot_dimension_numbers<[1], [0], [0], [1], [0, 0, 1, 1], [], []>} : vector<32x64xbf16>, vector<64x256xbf16>, vector<32x256xf32> -> vector<32x256xf32>
    %cst_31 = arith.constant dense<0.000000e+00> : vector<32xf32>
    %70 = vector.multi_reduction <add>, %69, %cst_31 [1] : vector<32x256xf32> to vector<32xf32>
    %71 = vector.shape_cast %70 : vector<32xf32> to vector<32x1xf32>
    %cst_32 = arith.constant 2.560000e+02 : f32
    %72 = vector.broadcast %cst_32 : f32 to vector<32x1xf32>
    %73 = arith.divf %71, %72 : vector<32x1xf32>
    %74 = vector.broadcast %73 : vector<32x1xf32> to vector<32x256xf32>
    %75 = arith.subf %69, %74 : vector<32x256xf32>
    %76 = arith.mulf %75, %75 : vector<32x256xf32>
    %cst_33 = arith.constant dense<0.000000e+00> : vector<32xf32>
    %77 = vector.multi_reduction <add>, %76, %cst_33 [1] : vector<32x256xf32> to vector<32xf32>
    %78 = vector.shape_cast %77 : vector<32xf32> to vector<32x1xf32>
    %cst_34 = arith.constant 2.560000e+02 : f32
    %79 = vector.broadcast %cst_34 : f32 to vector<32x1xf32>
    %80 = arith.divf %78, %79 : vector<32x1xf32>
    %cst_35 = arith.constant 9.99999974E-6 : f32
    %81 = vector.broadcast %cst_35 : f32 to vector<32x1xf32>
    %82 = arith.addf %80, %81 : vector<32x1xf32>
    %83 = math.rsqrt %82 : vector<32x1xf32>
    %84 = arith.mulf %83, %3 : vector<32x1xf32>
    %85 = vector.broadcast %84 : vector<32x1xf32> to vector<32x256xf32>
    %86 = arith.mulf %75, %85 : vector<32x256xf32>
    %87 = vector.broadcast %4 : vector<32x1xf32> to vector<32x256xf32>
    %88 = arith.addf %86, %87 : vector<32x256xf32>
    %cst_36 = arith.constant 0.000000e+00 : f32
    %89 = vector.broadcast %cst_36 : f32 to vector<32x256xf32>
    %90 = arith.maximumf %88, %89 : vector<32x256xf32>
    %c0_37 = arith.constant 0 : index
    %c0_38 = arith.constant 0 : index
    %91 = vector.load %arg6[%c0_37, %c0_38] : memref<32x256xf32, #tpu.memory_space<vmem>>, vector<32x256xf32>
    tpu.vector_store %arg6[%c0_37, %c0_38], %90 {strides = array<i32>} : memref<32x256xf32, #tpu.memory_space<vmem>>, vector<32x256xf32>,
    return
  }
}

</mosaic_0001>

<llo_original>
// kernel: tpu_custom_call.1
$region0: #{tpu_custom_call.1}
  #allocation0 [shape = 'u32[]', space=smem, size = 0x4, offset = 0x4, fixed_abs, tag = 'smem constant byte address 0x4 - core index']
  #allocation1 [shape = 'u32[144,128]{1,0:T(1,128)}', space=vmem, size = 0x12000, scoped, tag = 'internal scratch']
  %s0 = inlined_call_operand.vmem [shape: f32[32,256], index: 0, kind: input, shape index: {}]
  %s1 = inlined_call_operand.vmem [shape: bf16[64,32], index: 1, kind: input, shape index: {}]
  %s2 = inlined_call_operand.vmem [shape: bf16[192,64], index: 2, kind: input, shape index: {}]
  %s3 = inlined_call_operand.vmem [shape: bf16[64,64], index: 3, kind: input, shape index: {}]
  %s4 = inlined_call_operand.vmem [shape: bf16[32,64], index: 4, kind: input, shape index: {}]
  %s5 = inlined_call_operand.vmem [shape: f32[64,8], index: 5, kind: input, shape index: {}]
  %s6 = inlined_call_operand.hbm [shape: f32[32,256], index: 6, kind: output, shape index: {}]
  %s7 = sld [smem:[#allocation0]]
  $region34: #{tpu_custom_call.1} parent=0
    _
  %s9 = ssub.s32 1, %s7
  %s10 = scalar_select 0, %s9, %s7
  $region1: #{tpu_custom_call.1} parent=0
    #allocation2 [shape = 'u8[32768]{0}', space=vmem, size = 0x8000, scoped, tag = 'output window, operand 0, single buffered']
    #allocation3 [shape = 's32[1]{0}', space=sflag, size = 0x4, scoped, tag = 'scoped memory for tpu_custom_call.1']
    %11 = vsyncpa [#allocation3], 0
    // Predicated region
    $region2: #{tpu_custom_call.1} parent=1 // pred_check
      _
    $region3: #{tpu_custom_call.1} parent=1 // pred_check_branch
      %13 = sbr.rel (0) target = $region5
    $region4: #{tpu_custom_call.1} parent=1 // pred_region
      _
    $region5: #{tpu_custom_call.1} parent=1 // pred_fallthru
      _
    // Predicated region
    $region6: #{tpu_custom_call.1} parent=1 // pred_check
      _
    $region7: #{tpu_custom_call.1} parent=1 // pred_check_branch
      %15 = sbr.rel (0) target = $region9
    $region8: #{tpu_custom_call.1} parent=1 // pred_region
      _
    $region9: #{tpu_custom_call.1} parent=1 // pred_fallthru
      _
    // Predicated region
    $region10: #{tpu_custom_call.1} parent=1 // pred_check
      _
    $region11: #{tpu_custom_call.1} parent=1 // pred_check_branch
      %17 = sbr.rel (0) target = $region13
    $region12: #{tpu_custom_call.1} parent=1 // pred_region
      _
    $region13: #{tpu_custom_call.1} parent=1 // pred_fallthru
      _
    // Predicated region
    $region14: #{tpu_custom_call.1} parent=1 // pred_check
      _
    $region15: #{tpu_custom_call.1} parent=1 // pred_check_branch
      %19 = sbr.rel (0) target = $region17
    $region16: #{tpu_custom_call.1} parent=1 // pred_region
      _
    $region17: #{tpu_custom_call.1} parent=1 // pred_fallthru
      _
    // Predicated region
    $region18: #{tpu_custom_call.1} parent=1 // pred_check
      _
    $region19: #{tpu_custom_call.1} parent=1 // pred_check_branch
      %21 = sbr.rel (0) target = $region21
    $region20: #{tpu_custom_call.1} parent=1 // pred_region
      _
    $region21: #{tpu_custom_call.1} parent=1 // pred_fallthru
      _
    // Predicated region
    $region22: #{tpu_custom_call.1} parent=1 // pred_check
      _
    $region23: #{tpu_custom_call.1} parent=1 // pred_check_branch
      %23 = sbr.rel (0) target = $region25
    $region24: #{tpu_custom_call.1} parent=1 // pred_region
      _
    $region25: #{tpu_custom_call.1} parent=1 // pred_fallthru
      _
    %v26 = vld [vmem:[%s5] sm:$0xff]
    %v27 = vld [vmem:[%s5 + $0x8] sm:$0xff]
    %v28 = vld [vmem:[%s5 + $0x10] sm:$0xff]
    %v29 = vld [vmem:[%s5 + $0x18] sm:$0xff]
    %v30 = vld [vmem:[%s5 + $0x20] sm:$0xff]
    %v31 = vld [vmem:[%s5 + $0x28] sm:$0xff]
    %v32 = vld [vmem:[%s5 + $0x30] sm:$0xff]
    %v33 = vld [vmem:[%s5 + $0x38] sm:$0xff]
    %v34 = vld [vmem:[%s1] sm:$0xf]
    %v35 = vld [vmem:[%s1 + $0x4] sm:$0xf]
    %v36 = vld [vmem:[%s1 + $0x8] sm:$0xf]
    %v37 = vld [vmem:[%s1 + $0xc] sm:$0xf]
    %v38 = vld [vmem:[%s1 + $0x10] sm:$0xf]
    %v39 = vld [vmem:[%s1 + $0x14] sm:$0xf]
    %v40 = vld [vmem:[%s1 + $0x18] sm:$0xf]
    %v41 = vld [vmem:[%s1 + $0x1c] sm:$0xf]
    %v42 = vld [vmem:[%s0] sm:$0xff]
    %v43 = vld [vmem:[%s0 + $0x8] sm:$0xff]
    %v44 = vld [vmem:[%s0 + $0x10] sm:$0xff]
    %v45 = vld [vmem:[%s0 + $0x18] sm:$0xff]
    %v46 = vld [vmem:[%s0 + $0x20] sm:$0xff]
    %v47 = vld [vmem:[%s0 + $0x28] sm:$0xff]
    %v48 = vld [vmem:[%s0 + $0x30] sm:$0xff]
    %v49 = vld [vmem:[%s0 + $0x38] sm:$0xff]
    %v50 = vpack.c.bf16 %v44, %v42
    %v51 = vpack.c.bf16 %v45, %v43
    %v52 = vpack.c.bf16 %v48, %v46
    %v53 = vpack.c.bf16 %v49, %v47
    %v62 = vunpack.c.l.b16 %v34
    %v63 = vunpack.c.l.b16 %v35
    %v64 = vunpack.c.l.b16 %v36
    %v65 = vunpack.c.l.b16 %v37
    %v66 = vunpack.c.l.b16 %v38
    %v67 = vunpack.c.l.b16 %v39
    %v68 = vunpack.c.l.b16 %v40
    %v69 = vunpack.c.l.b16 %v41
    %v70 = vpack.c.b16 %v63, %v62
    %v71 = vpack.c.b16 %v65, %v64
    %v72 = vpack.c.b16 %v67, %v66
    %v73 = vpack.c.b16 %v69, %v68
    %vm74 = vcmask 261120
    %v76 = vsel %vm74, %v70, 0
    %v79 = vsel %vm74, %v71, 0
    %v82 = vsel %vm74, %v72, 0
    %v85 = vsel %vm74, %v73, 0
    %87 = vmatprep.subr.bf16.mxu0 %v51
    %88 = vmatpush1.bf16.msra.mxu0 %v50
    %89 = vmatprep.subr.bf16.mxu0 %v53
    %90 = vmatpush1.bf16.msra.mxu0 %v52
    %91 = vmatprep.subr.bf16.mxu0 0
    %92 = vmatpush1.bf16.msra.mxu0 0
    %93 = vmatprep.subr.bf16.mxu0 0
    %94 = vmatpush1.bf16.msra.mxu0 0
    %95 = vmatprep.subr.bf16.mxu0 0
    %96 = vmatpush1.bf16.msra.mxu0 0
    %97 = vmatprep.subr.bf16.mxu0 0
    %98 = vmatpush1.bf16.msra.mxu0 0
    %99 = vmatprep.subr.bf16.mxu0 0
    %100 = vmatpush1.bf16.msra.mxu0 0
    %101 = vmatprep.subr.bf16.mxu0 0
    %102 = vmatpush1.bf16.msra.mxu0 0
    %103 = vmatprep.subr.bf16.mxu0 0
    %104 = vmatpush1.bf16.msra.mxu0 0
    %105 = vmatprep.subr.bf16.mxu0 0
    %106 = vmatpush1.bf16.msra.mxu0 0
    %107 = vmatprep.subr.bf16.mxu0 0
    %108 = vmatpush1.bf16.msra.mxu0 0
    %109 = vmatprep.subr.bf16.mxu0 0
    %110 = vmatpush1.bf16.msra.mxu0 0
    %111 = vmatprep.subr.bf16.mxu0 0
    %112 = vmatpush1.bf16.msra.mxu0 0
    %113 = vmatprep.subr.bf16.mxu0 0
    %114 = vmatpush1.bf16.msra.mxu0 0
    %115 = vmatprep.subr.bf16.mxu0 0
    %116 = vmatpush1.bf16.msra.mxu0 0
    %117 = vmatprep.subr.bf16.mxu0 0
    %118 = vmatpush1.bf16.msra.mxu0 0
    %119 = vmatprep.mubr.bf16.mxu0 0
    %120 = vmatmul.mubr.bf16.gmra.mrb[0].mxu0 %v76
    %v121 = vpop.f32.mrb[0].mxu0
    %v122 = vadd.f32 0.0, %v121
    %v123 = vpop.f32.mrb[0].mxu0
    %v124 = vadd.f32 0.0, %v123
    %v125 = vpop.f32.mrb[0].mxu0
    %v126 = vadd.f32 0.0, %v125
    %v127 = vpop.f32.mrb[0].mxu0
    %v128 = vadd.f32 0.0, %v127
    %129 = vmatprep.mubr.bf16.mxu0 0
    %130 = vmatmul.mubr.bf16.gmra.mrb[0].mxu0 %v79
    %v131 = vpop.f32.mrb[0].mxu0
    %v132 = vadd.f32 0.0, %v131
    %v133 = vpop.f32.mrb[0].mxu0
    %v134 = vadd.f32 0.0, %v133
    %v135 = vpop.f32.mrb[0].mxu0
    %v136 = vadd.f32 0.0, %v135
    %v137 = vpop.f32.mrb[0].mxu0
    %v138 = vadd.f32 0.0, %v137
    %139 = vmatprep.mubr.bf16.mxu0 0
    %140 = vmatmul.mubr.bf16.gmra.mrb[0].mxu0 %v82
    %v141 = vpop.f32.mrb[0].mxu0
    %v142 = vadd.f32 0.0, %v141
    %v143 = vpop.f32.mrb[0].mxu0
    %v144 = vadd.f32 0.0, %v143
    %v145 = vpop.f32.mrb[0].mxu0
    %v146 = vadd.f32 0.0, %v145
    %v147 = vpop.f32.mrb[0].mxu0
    %v148 = vadd.f32 0.0, %v147
    %149 = vmatprep.mubr.bf16.mxu0 0
    %150 = vmatmul.mubr.bf16.gmra.mrb[0].mxu0 %v85
    %v151 = vpop.f32.mrb[0].mxu0
    %v152 = vadd.f32 0.0, %v151
    %v153 = vpop.f32.mrb[0].mxu0
    %v154 = vadd.f32 0.0, %v153
    %v155 = vpop.f32.mrb[0].mxu0
    %v156 = vadd.f32 0.0, %v155
    %v157 = vpop.f32.mrb[0].mxu0
    %v158 = vadd.f32 0.0, %v157
    %159 = vdwg.mxu0
    %v160 = vadd.f32 %v122, %v124
    %161 = vadd.xlane.f32.xlu0 %v160
    %v162 = vpop.xlane.xlu0 %161
    %v163 = vadd.f32 %v126, %v128
    %164 = vadd.xlane.f32.xlu0 %v163
    %v165 = vpop.xlane.xlu0 %164
    %v166 = vadd.f32 %v132, %v134
    %167 = vadd.xlane.f32.xlu0 %v166
    %v168 = vpop.xlane.xlu0 %167
    %v169 = vadd.f32 %v136, %v138
    %170 = vadd.xlane.f32.xlu0 %v169
    %v171 = vpop.xlane.xlu0 %170
    %v172 = vadd.f32 %v142, %v144
    %173 = vadd.xlane.f32.xlu0 %v172
    %v174 = vpop.xlane.xlu0 %173
    %v175 = vadd.f32 %v146, %v148
    %176 = vadd.xlane.f32.xlu0 %v175
    %v177 = vpop.xlane.xlu0 %176
    %v178 = vadd.f32 %v152, %v154
    %179 = vadd.xlane.f32.xlu0 %v178
    %v180 = vpop.xlane.xlu0 %179
    %v181 = vadd.f32 %v156, %v158
    %182 = vadd.xlane.f32.xlu0 %v181
    %v183 = vpop.xlane.xlu0 %182
    %v184 = vrcp.pop 256.0
    %v185 = vmul.f32 %v162, %v184
    %v186 = vmul.f32 %v165, %v184
    %v187 = vmul.f32 %v168, %v184
    %v188 = vmul.f32 %v171, %v184
    %v189 = vmul.f32 %v174, %v184
    %v190 = vmul.f32 %v177, %v184
    %v191 = vmul.f32 %v180, %v184
    %v192 = vmul.f32 %v183, %v184
    %v193 = vsub.f32 %v122, %v185
    %v194 = vsub.f32 %v124, %v185
    %v195 = vsub.f32 %v126, %v186
    %v196 = vsub.f32 %v128, %v186
    %v197 = vsub.f32 %v132, %v187
    %v198 = vsub.f32 %v134, %v187
    %v199 = vsub.f32 %v136, %v188
    %v200 = vsub.f32 %v138, %v188
    %v201 = vsub.f32 %v142, %v189
    %v202 = vsub.f32 %v144, %v189
    %v203 = vsub.f32 %v146, %v190
    %v204 = vsub.f32 %v148, %v190
    %v205 = vsub.f32 %v152, %v191
    %v206 = vsub.f32 %v154, %v191
    %v207 = vsub.f32 %v156, %v192
    %v208 = vsub.f32 %v158, %v192
    %v209 = vmul.f32 %v193, %v193
    %v210 = vmul.f32 %v194, %v194
    %v211 = vmul.f32 %v195, %v195
    %v212 = vmul.f32 %v196, %v196
    %v213 = vmul.f32 %v197, %v197
    %v214 = vmul.f32 %v198, %v198
    %v215 = vmul.f32 %v199, %v199
    %v216 = vmul.f32 %v200, %v200
    %v217 = vmul.f32 %v201, %v201
    %v218 = vmul.f32 %v202, %v202
    %v219 = vmul.f32 %v203, %v203
    %v220 = vmul.f32 %v204, %v204
    %v221 = vmul.f32 %v205, %v205
    %v222 = vmul.f32 %v206, %v206
    %v223 = vmul.f32 %v207, %v207
    %v224 = vmul.f32 %v208, %v208
    %v225 = vadd.f32 %v209, %v210
    %226 = vadd.xlane.f32.xlu0 %v225
    %v227 = vpop.xlane.xlu0 %226
    %v228 = vadd.f32 %v211, %v212
    %229 = vadd.xlane.f32.xlu0 %v228
    %v230 = vpop.xlane.xlu0 %229
    %v231 = vadd.f32 %v213, %v214
    %232 = vadd.xlane.f32.xlu0 %v231
    %v233 = vpop.xlane.xlu0 %232
    %v234 = vadd.f32 %v215, %v216
    %235 = vadd.xlane.f32.xlu0 %v234
    %v236 = vpop.xlane.xlu0 %235
    %v237 = vadd.f32 %v217, %v218
    %238 = vadd.xlane.f32.xlu0 %v237
    %v239 = vpop.xlane.xlu0 %238
    %v240 = vadd.f32 %v219, %v220
    %241 = vadd.xlane.f32.xlu0 %v240
    %v242 = vpop.xlane.xlu0 %241
    %v243 = vadd.f32 %v221, %v222
    %244 = vadd.xlane.f32.xlu0 %v243
    %v245 = vpop.xlane.xlu0 %244
    %v246 = vadd.f32 %v223, %v224
    %247 = vadd.xlane.f32.xlu0 %v246
    %v248 = vpop.xlane.xlu0 %247
    %v249 = vmul.f32 %v227, %v184
    %v250 = vmul.f32 %v230, %v184
    %v251 = vmul.f32 %v233, %v184
    %v252 = vmul.f32 %v236, %v184
    %v253 = vmul.f32 %v239, %v184
    %v254 = vmul.f32 %v242, %v184
    %v255 = vmul.f32 %v245, %v184
    %v256 = vmul.f32 %v248, %v184
    %v257 = vadd.f32 %v249, 1e-05
    %v258 = vadd.f32 %v250, 1e-05
    %v259 = vadd.f32 %v251, 1e-05
    %v260 = vadd.f32 %v252, 1e-05
    %v261 = vadd.f32 %v253, 1e-05
    %v262 = vadd.f32 %v254, 1e-05
    %v263 = vadd.f32 %v255, 1e-05
    %v264 = vadd.f32 %v256, 1e-05
    %v265 = vrsqrt.pop %v257
    %v266 = vrsqrt.pop %v258
    %v267 = vrsqrt.pop %v259
    %v268 = vrsqrt.pop %v260
    %v269 = vrsqrt.pop %v261
    %v270 = vrsqrt.pop %v262
    %v271 = vrsqrt.pop %v263
    %v272 = vrsqrt.pop %v264
    %v273 = vmul.f32 %v265, %v26
    %v274 = vmul.f32 %v266, %v27
    %v275 = vmul.f32 %v267, %v28
    %v276 = vmul.f32 %v268, %v29
    %v277 = vmul.f32 %v269, %v30
    %v278 = vmul.f32 %v270, %v31
    %v279 = vmul.f32 %v271, %v32
    %v280 = vmul.f32 %v272, %v33
    %282 = vset.pattern.permute.xlu0 0
    %283 = vperm.xlu0 %282, %v273
    %v284 = vpop.permute.xlu0 %283
    %287 = vset.pattern.permute.xlu0 0
    %288 = vperm.xlu0 %287, %v274
    %v289 = vpop.permute.xlu0 %288
    %292 = vset.pattern.permute.xlu0 0
    %293 = vperm.xlu0 %292, %v275
    %v294 = vpop.permute.xlu0 %293
    %297 = vset.pattern.permute.xlu0 0
    %298 = vperm.xlu0 %297, %v276
    %v299 = vpop.permute.xlu0 %298
    %302 = vset.pattern.permute.xlu0 0
    %303 = vperm.xlu0 %302, %v277
    %v304 = vpop.permute.xlu0 %303
    %307 = vset.pattern.permute.xlu0 0
    %308 = vperm.xlu0 %307, %v278
    %v309 = vpop.permute.xlu0 %308
    %312 = vset.pattern.permute.xlu0 0
    %313 = vperm.xlu0 %312, %v279
    %v314 = vpop.permute.xlu0 %313
    %317 = vset.pattern.permute.xlu0 0
    %318 = vperm.xlu0 %317, %v280
    %v319 = vpop.permute.xlu0 %318
    %v321 = vmul.f32 %v193, %v284
    %v322 = vmul.f32 %v194, %v284
    %v323 = vmul.f32 %v195, %v289
    %v324 = vmul.f32 %v196, %v289
    %v325 = vmul.f32 %v197, %v294
    %v326 = vmul.f32 %v198, %v294
    %v327 = vmul.f32 %v199, %v299
    %v328 = vmul.f32 %v200, %v299
    %v329 = vmul.f32 %v201, %v304
    %v330 = vmul.f32 %v202, %v304
    %v331 = vmul.f32 %v203, %v309
    %v332 = vmul.f32 %v204, %v309
    %v333 = vmul.f32 %v205, %v314
    %v334 = vmul.f32 %v206, %v314
    %v335 = vmul.f32 %v207, %v319
    %v336 = vmul.f32 %v208, %v319
    %338 = vset.pattern.permute.xlu0 1
    %339 = vperm.xlu0 %338, %v26
    %v340 = vpop.permute.xlu0 %339
    %343 = vset.pattern.permute.xlu0 1
    %344 = vperm.xlu0 %343, %v27
    %v345 = vpop.permute.xlu0 %344
    %348 = vset.pattern.permute.xlu0 1
    %349 = vperm.xlu0 %348, %v28
    %v350 = vpop.permute.xlu0 %349
    %353 = vset.pattern.permute.xlu0 1
    %354 = vperm.xlu0 %353, %v29
    %v355 = vpop.permute.xlu0 %354
    %358 = vset.pattern.permute.xlu0 1
    %359 = vperm.xlu0 %358, %v30
    %v360 = vpop.permute.xlu0 %359
    %363 = vset.pattern.permute.xlu0 1
    %364 = vperm.xlu0 %363, %v31
    %v365 = vpop.permute.xlu0 %364
    %368 = vset.pattern.permute.xlu0 1
    %369 = vperm.xlu0 %368, %v32
    %v370 = vpop.permute.xlu0 %369
    %373 = vset.pattern.permute.xlu0 1
    %374 = vperm.xlu0 %373, %v33
    %v375 = vpop.permute.xlu0 %374
    %v377 = vadd.f32 %v321, %v340
    %v378 = vadd.f32 %v322, %v340
    %v379 = vadd.f32 %v323, %v345
    %v380 = vadd.f32 %v324, %v345
    %v381 = vadd.f32 %v325, %v350
    %v382 = vadd.f32 %v326, %v350
    %v383 = vadd.f32 %v327, %v355
    %v384 = vadd.f32 %v328, %v355
    %v385 = vadd.f32 %v329, %v360
    %v386 = vadd.f32 %v330, %v360
    %v387 = vadd.f32 %v331, %v365
    %v388 = vadd.f32 %v332, %v365
    %v389 = vadd.f32 %v333, %v370
    %v390 = vadd.f32 %v334, %v370
    %v391 = vadd.f32 %v335, %v375
    %v392 = vadd.f32 %v336, %v375
    %v393 = vmax.f32 %v377, 0.0
    %v394 = vmax.f32 %v378, 0.0
    %v395 = vmax.f32 %v379, 0.0
    %v396 = vmax.f32 %v380, 0.0
    %v397 = vmax.f32 %v381, 0.0
    %v398 = vmax.f32 %v382, 0.0
    %v399 = vmax.f32 %v383, 0.0
    %v400 = vmax.f32 %v384, 0.0
    %v401 = vmax.f32 %v385, 0.0
    %v402 = vmax.f32 %v386, 0.0
    %v403 = vmax.f32 %v387, 0.0
    %v404 = vmax.f32 %v388, 0.0
    %v405 = vmax.f32 %v389, 0.0
    %v406 = vmax.f32 %v390, 0.0
    %v407 = vmax.f32 %v391, 0.0
    %v408 = vmax.f32 %v392, 0.0
    %v409 = vld [vmem:[%s2] sm:$0xf]
    %v410 = vld [vmem:[%s2 + $0x4] sm:$0xf]
    %v411 = vld [vmem:[%s2 + $0x8] sm:$0xf]
    %v412 = vld [vmem:[%s2 + $0xc] sm:$0xf]
    %v413 = vld [vmem:[%s2 + $0x10] sm:$0xf]
    %v414 = vld [vmem:[%s2 + $0x14] sm:$0xf]
    %v415 = vld [vmem:[%s2 + $0x18] sm:$0xf]
    %v416 = vld [vmem:[%s2 + $0x1c] sm:$0xf]
    %v417 = vld [vmem:[%s2 + $0x20] sm:$0xf]
    %v418 = vld [vmem:[%s2 + $0x24] sm:$0xf]
    %v419 = vld [vmem:[%s2 + $0x28] sm:$0xf]
    %v420 = vld [vmem:[%s2 + $0x2c] sm:$0xf]
    %v421 = vld [vmem:[%s2 + $0x30] sm:$0xf]
    %v422 = vld [vmem:[%s2 + $0x34] sm:$0xf]
    %v423 = vld [vmem:[%s2 + $0x38] sm:$0xf]
    %v424 = vld [vmem:[%s2 + $0x3c] sm:$0xf]
    %v425 = vld [vmem:[%s2 + $0x40] sm:$0xf]
    %v426 = vld [vmem:[%s2 + $0x44] sm:$0xf]
    %v427 = vld [vmem:[%s2 + $0x48] sm:$0xf]
    %v428 = vld [vmem:[%s2 + $0x4c] sm:$0xf]
    %v429 = vld [vmem:[%s2 + $0x50] sm:$0xf]
    %v430 = vld [vmem:[%s2 + $0x54] sm:$0xf]
    %v431 = vld [vmem:[%s2 + $0x58] sm:$0xf]
    %v432 = vld [vmem:[%s2 + $0x5c] sm:$0xf]
    %v433 = vpack.c.bf16 %v395, %v393
    %v434 = vpack.c.bf16 %v396, %v394
    %v435 = vpack.c.bf16 %v399, %v397
    %v436 = vpack.c.bf16 %v400, %v398
    %v437 = vpack.c.bf16 %v403, %v401
    %v438 = vpack.c.bf16 %v404, %v402
    %v439 = vpack.c.bf16 %v407, %v405
    %v440 = vpack.c.bf16 %v408, %v406
    %v465 = vunpack.c.l.b16 %v409
    %v466 = vunpack.c.l.b16 %v410
    %v467 = vunpack.c.l.b16 %v411
    %v468 = vunpack.c.l.b16 %v412
    %v469 = vunpack.c.l.b16 %v413
    %v470 = vunpack.c.l.b16 %v414
    %v471 = vunpack.c.l.b16 %v415
    %v472 = vunpack.c.l.b16 %v416
    %v473 = vunpack.c.l.b16 %v417
    %v474 = vunpack.c.l.b16 %v418
    %v475 = vunpack.c.l.b16 %v419
    %v476 = vunpack.c.l.b16 %v420
    %v477 = vunpack.c.l.b16 %v421
    %v478 = vunpack.c.l.b16 %v422
    %v479 = vunpack.c.l.b16 %v423
    %v480 = vunpack.c.l.b16 %v424
    %v481 = vunpack.c.l.b16 %v425
    %v482 = vunpack.c.l.b16 %v426
    %v483 = vunpack.c.l.b16 %v427
    %v484 = vunpack.c.l.b16 %v428
    %v485 = vunpack.c.l.b16 %v429
    %v486 = vunpack.c.l.b16 %v430
    %v487 = vunpack.c.l.b16 %v431
    %v488 = vunpack.c.l.b16 %v432
    %v489 = vpack.c.b16 %v466, %v465
    %v490 = vpack.c.b16 %v468, %v467
    %v491 = vpack.c.b16 %v470, %v469
    %v492 = vpack.c.b16 %v472, %v471
    %v493 = vpack.c.b16 %v474, %v473
    %v494 = vpack.c.b16 %v476, %v475
    %v495 = vpack.c.b16 %v478, %v477
    %v496 = vpack.c.b16 %v480, %v479
    %v497 = vpack.c.b16 %v482, %v481
    %v498 = vpack.c.b16 %v484, %v483
    %v499 = vpack.c.b16 %v486, %v485
    %v500 = vpack.c.b16 %v488, %v487
    %vm501 = vcmask 523264
    %v503 = vsel %vm501, %v489, 0
    %v506 = vsel %vm501, %v490, 0
    %v509 = vsel %vm501, %v491, 0
    %v512 = vsel %vm501, %v492, 0
    %v515 = vsel %vm501, %v493, 0
    %v518 = vsel %vm501, %v494, 0
    %v521 = vsel %vm501, %v495, 0
    %v524 = vsel %vm501, %v496, 0
    %v527 = vsel %vm501, %v497, 0
    %v530 = vsel %vm501, %v498, 0
    %v533 = vsel %vm501, %v499, 0
    %v536 = vsel %vm501, %v500, 0
    %538 = vmatprep.subr.bf16.mxu0 %v434
    %539 = vmatpush1.bf16.msra.mxu0 %v433
    %540 = vmatprep.subr.bf16.mxu0 %v436
    %541 = vmatpush1.bf16.msra.mxu0 %v435
    %542 = vmatprep.subr.bf16.mxu0 %v438
    %543 = vmatpush1.bf16.msra.mxu0 %v437
    %544 = vmatprep.subr.bf16.mxu0 %v440
    %545 = vmatpush1.bf16.msra.mxu0 %v439
    %546 = vmatprep.subr.bf16.mxu0 0
    %547 = vmatpush1.bf16.msra.mxu0 0
    %548 = vmatprep.subr.bf16.mxu0 0
    %549 = vmatpush1.bf16.msra.mxu0 0
    %550 = vmatprep.subr.bf16.mxu0 0
    %551 = vmatpush1.bf16.msra.mxu0 0
    %552 = vmatprep.subr.bf16.mxu0 0
    %553 = vmatpush1.bf16.msra.mxu0 0
    %554 = vmatprep.subr.bf16.mxu0 0
    %555 = vmatpush1.bf16.msra.mxu0 0
    %556 = vmatprep.subr.bf16.mxu0 0
    %557 = vmatpush1.bf16.msra.mxu0 0
    %558 = vmatprep.subr.bf16.mxu0 0
    %559 = vmatpush1.bf16.msra.mxu0 0
    %560 = vmatprep.subr.bf16.mxu0 0
    %561 = vmatpush1.bf16.msra.mxu0 0
    %562 = vmatprep.subr.bf16.mxu0 0
    %563 = vmatpush1.bf16.msra.mxu0 0
    %564 = vmatprep.subr.bf16.mxu0 0
    %565 = vmatpush1.bf16.msra.mxu0 0
    %566 = vmatprep.subr.bf16.mxu0 0
    %567 = vmatpush1.bf16.msra.mxu0 0
    %568 = vmatprep.subr.bf16.mxu0 0
    %569 = vmatpush1.bf16.msra.mxu0 0
    %570 = vmatprep.mubr.bf16.mxu0 0
    %571 = vmatmul.mubr.bf16.gmra.mrb[0].mxu0 %v503
    %v572 = vpop.f32.mrb[0].mxu0
    %v573 = vadd.f32 0.0, %v572
    %v574 = vpop.f32.mrb[0].mxu0
    %v575 = vadd.f32 0.0, %v574
    %v576 = vpop.f32.mrb[0].mxu0
    %v577 = vadd.f32 0.0, %v576
    %v578 = vpop.f32.mrb[0].mxu0
    %v579 = vadd.f32 0.0, %v578
    %580 = vmatprep.mubr.bf16.mxu0 0
    %581 = vmatmul.mubr.bf16.gmra.mrb[0].mxu0 %v506
    %v582 = vpop.f32.mrb[0].mxu0
    %v583 = vadd.f32 0.0, %v582
    %v584 = vpop.f32.mrb[0].mxu0
    %v585 = vadd.f32 0.0, %v584
    %v586 = vpop.f32.mrb[0].mxu0
    %v587 = vadd.f32 0.0, %v586
    %v588 = vpop.f32.mrb[0].mxu0
    %v589 = vadd.f32 0.0, %v588
    %590 = vmatprep.mubr.bf16.mxu0 0
    %591 = vmatmul.mubr.bf16.gmra.mrb[0].mxu0 %v509
    %v592 = vpop.f32.mrb[0].mxu0
    %v593 = vadd.f32 0.0, %v592
    %v594 = vpop.f32.mrb[0].mxu0
    %v595 = vadd.f32 0.0, %v594
    %v596 = vpop.f32.mrb[0].mxu0
    %v597 = vadd.f32 0.0, %v596
    %v598 = vpop.f32.mrb[0].mxu0
    %v599 = vadd.f32 0.0, %v598
    %600 = vmatprep.mubr.bf16.mxu0 0
    %601 = vmatmul.mubr.bf16.gmra.mrb[0].mxu0 %v512
    %v602 = vpop.f32.mrb[0].mxu0
    %v603 = vadd.f32 0.0, %v602
    %v604 = vpop.f32.mrb[0].mxu0
    %v605 = vadd.f32 0.0, %v604
    %v606 = vpop.f32.mrb[0].mxu0
    %v607 = vadd.f32 0.0, %v606
    %v608 = vpop.f32.mrb[0].mxu0
    %v609 = vadd.f32 0.0, %v608
    %610 = vmatprep.mubr.bf16.mxu0 0
    %611 = vmatmul.mubr.bf16.gmra.mrb[0].mxu0 %v515
    %v612 = vpop.f32.mrb[0].mxu0
    %v613 = vadd.f32 0.0, %v612
    %v614 = vpop.f32.mrb[0].mxu0
    %v615 = vadd.f32 0.0, %v614
    %v616 = vpop.f32.mrb[0].mxu0
    %v617 = vadd.f32 0.0, %v616
    %v618 = vpop.f32.mrb[0].mxu0
    %v619 = vadd.f32 0.0, %v618
    %620 = vmatprep.mubr.bf16.mxu0 0
    %621 = vmatmul.mubr.bf16.gmra.mrb[0].mxu0 %v518
    %v622 = vpop.f32.mrb[0].mxu0
    %v623 = vadd.f32 0.0, %v622
    %v624 = vpop.f32.mrb[0].mxu0
    %v625 = vadd.f32 0.0, %v624
    %v626 = vpop.f32.mrb[0].mxu0
    %v627 = vadd.f32 0.0, %v626
    %v628 = vpop.f32.mrb[0].mxu0
    %v629 = vadd.f32 0.0, %v628
    %630 = vmatprep.mubr.bf16.mxu0 0
    %631 = vmatmul.mubr.bf16.gmra.mrb[0].mxu0 %v521
    %v632 = vpop.f32.mrb[0].mxu0
    %v633 = vadd.f32 0.0, %v632
    %v634 = vpop.f32.mrb[0].mxu0
    %v635 = vadd.f32 0.0, %v634
    %v636 = vpop.f32.mrb[0].mxu0
    %v637 = vadd.f32 0.0, %v636
    %v638 = vpop.f32.mrb[0].mxu0
    %v639 = vadd.f32 0.0, %v638
    %640 = vmatprep.mubr.bf16.mxu0 0
    %641 = vmatmul.mubr.bf16.gmra.mrb[0].mxu0 %v524
    %v642 = vpop.f32.mrb[0].mxu0
    %v643 = vadd.f32 0.0, %v642
    %v644 = vpop.f32.mrb[0].mxu0
    %v645 = vadd.f32 0.0, %v644
    %v646 = vpop.f32.mrb[0].mxu0
    %v647 = vadd.f32 0.0, %v646
    %v648 = vpop.f32.mrb[0].mxu0
    %v649 = vadd.f32 0.0, %v648
    %650 = vmatprep.mubr.bf16.mxu0 0
    %651 = vmatmul.mubr.bf16.gmra.mrb[0].mxu0 %v527
    %v652 = vpop.f32.mrb[0].mxu0
    %v653 = vadd.f32 0.0, %v652
    %v654 = vpop.f32.mrb[0].mxu0
    %v655 = vadd.f32 0.0, %v654
    %v656 = vpop.f32.mrb[0].mxu0
    %v657 = vadd.f32 0.0, %v656
    %v658 = vpop.f32.mrb[0].mxu0
    %v659 = vadd.f32 0.0, %v658
    %660 = vmatprep.mubr.bf16.mxu0 0
    %661 = vmatmul.mubr.bf16.gmra.mrb[0].mxu0 %v530
    %v662 = vpop.f32.mrb[0].mxu0
    %v663 = vadd.f32 0.0, %v662
    %v664 = vpop.f32.mrb[0].mxu0
    %v665 = vadd.f32 0.0, %v664
    %v666 = vpop.f32.mrb[0].mxu0
    %v667 = vadd.f32 0.0, %v666
    %v668 = vpop.f32.mrb[0].mxu0
    %v669 = vadd.f32 0.0, %v668
    %670 = vmatprep.mubr.bf16.mxu0 0
    %671 = vmatmul.mubr.bf16.gmra.mrb[0].mxu0 %v533
    %v672 = vpop.f32.mrb[0].mxu0
    %v673 = vadd.f32 0.0, %v672
    %v674 = vpop.f32.mrb[0].mxu0
    %v675 = vadd.f32 0.0, %v674
    %v676 = vpop.f32.mrb[0].mxu0
    %v677 = vadd.f32 0.0, %v676
    %v678 = vpop.f32.mrb[0].mxu0
    %v679 = vadd.f32 0.0, %v678
    %680 = vmatprep.mubr.bf16.mxu0 0
    %681 = vmatmul.mubr.bf16.gmra.mrb[0].mxu0 %v536
    %v682 = vpop.f32.mrb[0].mxu0
    %v683 = vadd.f32 0.0, %v682
    %v684 = vpop.f32.mrb[0].mxu0
    %v685 = vadd.f32 0.0, %v684
    %v686 = vpop.f32.mrb[0].mxu0
    %v687 = vadd.f32 0.0, %v686
    %v688 = vpop.f32.mrb[0].mxu0
    %v689 = vadd.f32 0.0, %v688
    %690 = vdwg.mxu0
    %691 = vset.pattern.permute.xlu0 2
    %692 = vperm.xlu0 %691, %v26
    %v693 = vpop.permute.xlu0 %692
    %695 = vset.pattern.permute.xlu0 2
    %696 = vperm.xlu0 %695, %v27
    %v697 = vpop.permute.xlu0 %696
    %699 = vset.pattern.permute.xlu0 2
    %700 = vperm.xlu0 %699, %v28
    %v701 = vpop.permute.xlu0 %700
    %703 = vset.pattern.permute.xlu0 2
    %704 = vperm.xlu0 %703, %v29
    %v705 = vpop.permute.xlu0 %704
    %707 = vset.pattern.permute.xlu0 2
    %708 = vperm.xlu0 %707, %v30
    %v709 = vpop.permute.xlu0 %708
    %711 = vset.pattern.permute.xlu0 2
    %712 = vperm.xlu0 %711, %v31
    %v713 = vpop.permute.xlu0 %712
    %715 = vset.pattern.permute.xlu0 2
    %716 = vperm.xlu0 %715, %v32
    %v717 = vpop.permute.xlu0 %716
    %719 = vset.pattern.permute.xlu0 2
    %720 = vperm.xlu0 %719, %v33
    %v721 = vpop.permute.xlu0 %720
    %v723 = vadd.f32 %v573, %v693
    %v724 = vadd.f32 %v575, %v693
    %v725 = vadd.f32 %v577, %v697
    %v726 = vadd.f32 %v579, %v697
    %v727 = vadd.f32 %v583, %v701
    %v728 = vadd.f32 %v585, %v701
    %v729 = vadd.f32 %v587, %v705
    %v730 = vadd.f32 %v589, %v705
    %v731 = vadd.f32 %v593, %v709
    %v732 = vadd.f32 %v595, %v709
    %v733 = vadd.f32 %v597, %v713
    %v734 = vadd.f32 %v599, %v713
    %v735 = vadd.f32 %v603, %v717
    %v736 = vadd.f32 %v605, %v717
    %v737 = vadd.f32 %v607, %v721
    %v738 = vadd.f32 %v609, %v721
    %v739 = vpack.c.bf16 %v723, %v723
    %v740 = vpack.c.bf16 %v724, %v724
    %v741 = vpack.c.bf16 %v725, %v725
    %v742 = vpack.c.bf16 %v726, %v726
    %v743 = vpack.c.bf16 %v727, %v727
    %v744 = vpack.c.bf16 %v728, %v728
    %v745 = vpack.c.bf16 %v729, %v729
    %v746 = vpack.c.bf16 %v730, %v730
    %v747 = vpack.c.bf16 %v731, %v731
    %v748 = vpack.c.bf16 %v732, %v732
    %v749 = vpack.c.bf16 %v733, %v733
    %v750 = vpack.c.bf16 %v734, %v734
    %v751 = vpack.c.bf16 %v735, %v735
    %v752 = vpack.c.bf16 %v736, %v736
    %v753 = vpack.c.bf16 %v737, %v737
    %v754 = vpack.c.bf16 %v738, %v738
    %v755 = vpack.c.bf16 %v613, %v613
    %v756 = vpack.c.bf16 %v615, %v615
    %v757 = vpack.c.bf16 %v617, %v617
    %v758 = vpack.c.bf16 %v619, %v619
    %v759 = vpack.c.bf16 %v623, %v623
    %v760 = vpack.c.bf16 %v625, %v625
    %v761 = vpack.c.bf16 %v627, %v627
    %v762 = vpack.c.bf16 %v629, %v629
    %v763 = vpack.c.bf16 %v633, %v633
    %v764 = vpack.c.bf16 %v635, %v635
    %v765 = vpack.c.bf16 %v637, %v637
    %v766 = vpack.c.bf16 %v639, %v639
    %v767 = vpack.c.bf16 %v643, %v643
    %v768 = vpack.c.bf16 %v645, %v645
    %v769 = vpack.c.bf16 %v647, %v647
    %v770 = vpack.c.bf16 %v649, %v649
    %v771 = vpack.c.bf16 %v653, %v653
    %v772 = vpack.c.bf16 %v655, %v655
    %v773 = vpack.c.bf16 %v657, %v657
    %v774 = vpack.c.bf16 %v659, %v659
    %v775 = vpack.c.bf16 %v663, %v663
    %v776 = vpack.c.bf16 %v665, %v665
    %v777 = vpack.c.bf16 %v667, %v667
    %v778 = vpack.c.bf16 %v669, %v669
    %v779 = vpack.c.bf16 %v673, %v673
    %v780 = vpack.c.bf16 %v675, %v675
    %v781 = vpack.c.bf16 %v677, %v677
    %v782 = vpack.c.bf16 %v679, %v679
    %v783 = vpack.c.bf16 %v683, %v683
    %v784 = vpack.c.bf16 %v685, %v685
    %v785 = vpack.c.bf16 %v687, %v687
    %v786 = vpack.c.bf16 %v689, %v689
    %787 = vxpose.xlu0.c.b16.start [1/8] %v739, 128
    %788 = vxpose.xlu0.c.b16.cont [2/8] 0, 128
    %789 = vxpose.xlu0.c.b16.cont [3/8] 0, 128
    %790 = vxpose.xlu0.c.b16.cont [4/8] 0, 128
    %791 = vxpose.xlu0.c.b16.cont [5/8] 0, 128
    %792 = vxpose.xlu0.c.b16.cont [6/8] 0, 128
    %793 = vxpose.xlu0.c.b16.cont [7/8] 0, 128
    %794 = vxpose.xlu0.c.b16.end [8/8] 0, 128
    %v795 = vpop.trf.xlu0
    %v796 = vpop.trf.xlu0
    %v797 = vpop.trf.xlu0
    %v798 = vpop.trf.xlu0
    %v799 = vpop.trf.xlu0
    %v800 = vpop.trf.xlu0
    %v801 = vpop.trf.xlu0
    %v802 = vpop.trf.xlu0
    %803 = vxpose.xlu0.c.b16.start [1/8] %v740, 128
    %804 = vxpose.xlu0.c.b16.cont [2/8] 0, 128
    %805 = vxpose.xlu0.c.b16.cont [3/8] 0, 128
    %806 = vxpose.xlu0.c.b16.cont [4/8] 0, 128
    %807 = vxpose.xlu0.c.b16.cont [5/8] 0, 128
    %808 = vxpose.xlu0.c.b16.cont [6/8] 0, 128
    %809 = vxpose.xlu0.c.b16.cont [7/8] 0, 128
    %810 = vxpose.xlu0.c.b16.end [8/8] 0, 128
    %v811 = vpop.trf.xlu0
    %v812 = vpop.trf.xlu0
    %v813 = vpop.trf.xlu0
    %v814 = vpop.trf.xlu0
    %v815 = vpop.trf.xlu0
    %v816 = vpop.trf.xlu0
    %v817 = vpop.trf.xlu0
    %v818 = vpop.trf.xlu0
    %vm819 = vcmask 64512
    %v821 = vsel %vm819, %v795, 0
    %v824 = vsel %vm819, %v796, 0
    %v827 = vsel %vm819, %v797, 0
    %v830 = vsel %vm819, %v798, 0
    %v833 = vsel %vm819, %v799, 0
    %v836 = vsel %vm819, %v800, 0
    %v839 = vsel %vm819, %v801, 0
    %v842 = vsel %vm819, %v802, 0
    %v845 = vsel %vm819, %v811, 0
    %v848 = vsel %vm819, %v812, 0
    %v851 = vsel %vm819, %v813, 0
    %v854 = vsel %vm819, %v814, 0
    %v857 = vsel %vm819, %v815, 0
    %v860 = vsel %vm819, %v816, 0
    %v863 = vsel %vm819, %v817, 0
    %v866 = vsel %vm819, %v818, 0
    %vm868 = vcmask 1043456
    %v870 = vsel %vm868, %v755, 0
    %v873 = vsel %vm868, %v756, 0
    %875 = vmatprep.subr.bf16.mxu0 %v873
    %876 = vmatpush1.bf16.msra.mxu0 %v870
    %877 = vmatprep.subr.bf16.mxu0 0
    %878 = vmatpush1.bf16.msra.mxu0 0
    %879 = vmatprep.subr.bf16.mxu0 0
    %880 = vmatpush1.bf16.msra.mxu0 0
    %881 = vmatprep.subr.bf16.mxu0 0
    %882 = vmatpush1.bf16.msra.mxu0 0
    %883 = vmatprep.subr.bf16.mxu0 0
    %884 = vmatpush1.bf16.msra.mxu0 0
    %885 = vmatprep.subr.bf16.mxu0 0
    %886 = vmatpush1.bf16.msra.mxu0 0
    %887 = vmatprep.subr.bf16.mxu0 0
    %888 = vmatpush1.bf16.msra.mxu0 0
    %889 = vmatprep.subr.bf16.mxu0 0
    %890 = vmatpush1.bf16.msra.mxu0 0
    %891 = vmatprep.subr.bf16.mxu0 0
    %892 = vmatpush1.bf16.msra.mxu0 0
    %893 = vmatprep.subr.bf16.mxu0 0
    %894 = vmatpush1.bf16.msra.mxu0 0
    %895 = vmatprep.subr.bf16.mxu0 0
    %896 = vmatpush1.bf16.msra.mxu0 0
    %897 = vmatprep.subr.bf16.mxu0 0
    %898 = vmatpush1.bf16.msra.mxu0 0
    %899 = vmatprep.subr.bf16.mxu0 0
    %900 = vmatpush1.bf16.msra.mxu0 0
    %901 = vmatprep.subr.bf16.mxu0 0
    %902 = vmatpush1.bf16.msra.mxu0 0
    %903 = vmatprep.subr.bf16.mxu0 0
    %904 = vmatpush1.bf16.msra.mxu0 0
    %905 = vmatprep.subr.bf16.mxu0 0
    %906 = vmatpush1.bf16.msra.mxu0 0
    %907 = vmatprep.mubr.bf16.mxu0 0
    %908 = vmatmul.mubr.bf16.gmra.mrb[0].mxu0 %v821
    %v909 = vpop.f32.mrb[0].mxu0
    %v910 = vadd.f32 0.0, %v909
    %v911 = vpop.f32.mrb[0].mxu0
    %v912 = vadd.f32 0.0, %v911
    %v913 = vpop.f32.mrb[0].mxu0
    %v914 = vadd.f32 0.0, %v913
    %v915 = vpop.f32.mrb[0].mxu0
    %v916 = vadd.f32 0.0, %v915
    %917 = vmatprep.mubr.bf16.mxu0 0
    %918 = vmatmul.mubr.bf16.gmra.mrb[0].mxu0 %v824
    %v919 = vpop.f32.mrb[0].mxu0
    %v920 = vadd.f32 0.0, %v919
    %v921 = vpop.f32.mrb[0].mxu0
    %v922 = vadd.f32 0.0, %v921
    %v923 = vpop.f32.mrb[0].mxu0
    %v924 = vadd.f32 0.0, %v923
    %v925 = vpop.f32.mrb[0].mxu0
    %v926 = vadd.f32 0.0, %v925
    %927 = vmatprep.mubr.bf16.mxu0 0
    %928 = vmatmul.mubr.bf16.gmra.mrb[0].mxu0 %v827
    %v929 = vpop.f32.mrb[0].mxu0
    %v930 = vadd.f32 0.0, %v929
    %v931 = vpop.f32.mrb[0].mxu0
    %v932 = vadd.f32 0.0, %v931
    %v933 = vpop.f32.mrb[0].mxu0
    %v934 = vadd.f32 0.0, %v933
    %v935 = vpop.f32.mrb[0].mxu0
    %v936 = vadd.f32 0.0, %v935
    %937 = vmatprep.mubr.bf16.mxu0 0
    %938 = vmatmul.mubr.bf16.gmra.mrb[0].mxu0 %v830
    %v939 = vpop.f32.mrb[0].mxu0
    %v940 = vadd.f32 0.0, %v939
    %v941 = vpop.f32.mrb[0].mxu0
    %v942 = vadd.f32 0.0, %v941
    %v943 = vpop.f32.mrb[0].mxu0
    %v944 = vadd.f32 0.0, %v943
    %v945 = vpop.f32.mrb[0].mxu0
    %v946 = vadd.f32 0.0, %v945
    %947 = vmatprep.mubr.bf16.mxu0 0
    %948 = vmatmul.mubr.bf16.gmra.mrb[0].mxu0 %v833
    %v949 = vpop.f32.mrb[0].mxu0
    %v950 = vadd.f32 0.0, %v949
    %v951 = vpop.f32.mrb[0].mxu0
    %v952 = vadd.f32 0.0, %v951
    %v953 = vpop.f32.mrb[0].mxu0
    %v954 = vadd.f32 0.0, %v953
    %v955 = vpop.f32.mrb[0].mxu0
    %v956 = vadd.f32 0.0, %v955
    %957 = vmatprep.mubr.bf16.mxu0 0
    %958 = vmatmul.mubr.bf16.gmra.mrb[0].mxu0 %v836
    %v959 = vpop.f32.mrb[0].mxu0
    %v960 = vadd.f32 0.0, %v959
    %v961 = vpop.f32.mrb[0].mxu0
    %v962 = vadd.f32 0.0, %v961
    %v963 = vpop.f32.mrb[0].mxu0
    %v964 = vadd.f32 0.0, %v963
    %v965 = vpop.f32.mrb[0].mxu0
    %v966 = vadd.f32 0.0, %v965
    %967 = vmatprep.mubr.bf16.mxu0 0
    %968 = vmatmul.mubr.bf16.gmra.mrb[0].mxu0 %v839
    %v969 = vpop.f32.mrb[0].mxu0
    %v970 = vadd.f32 0.0, %v969
    %v971 = vpop.f32.mrb[0].mxu0
    %v972 = vadd.f32 0.0, %v971
    %v973 = vpop.f32.mrb[0].mxu0
    %v974 = vadd.f32 0.0, %v973
    %v975 = vpop.f32.mrb[0].mxu0
    %v976 = vadd.f32 0.0, %v975
    %977 = vmatprep.mubr.bf16.mxu0 0
    %978 = vmatmul.mubr.bf16.gmra.mrb[0].mxu0 %v842
    %v979 = vpop.f32.mrb[0].mxu0
    %v980 = vadd.f32 0.0, %v979
    %v981 = vpop.f32.mrb[0].mxu0
    %v982 = vadd.f32 0.0, %v981
    %v983 = vpop.f32.mrb[0].mxu0
    %v984 = vadd.f32 0.0, %v983
    %v985 = vpop.f32.mrb[0].mxu0
    %v986 = vadd.f32 0.0, %v985
    %987 = vmatprep.mubr.bf16.mxu0 0
    %988 = vmatmul.mubr.bf16.gmra.mrb[0].mxu0 %v845
    %v989 = vpop.f32.mrb[0].mxu0
    %v990 = vadd.f32 0.0, %v989
    %v991 = vpop.f32.mrb[0].mxu0
    %v992 = vadd.f32 0.0, %v991
    %v993 = vpop.f32.mrb[0].mxu0
    %v994 = vadd.f32 0.0, %v993
    %v995 = vpop.f32.mrb[0].mxu0
    %v996 = vadd.f32 0.0, %v995
    %997 = vmatprep.mubr.bf16.mxu0 0
    %998 = vmatmul.mubr.bf16.gmra.mrb[0].mxu0 %v848
    %v999 = vpop.f32.mrb[0].mxu0
    %v1000 = vadd.f32 0.0, %v999
    %v1001 = vpop.f32.mrb[0].mxu0
    %v1002 = vadd.f32 0.0, %v1001
    %v1003 = vpop.f32.mrb[0].mxu0
    %v1004 = vadd.f32 0.0, %v1003
    %v1005 = vpop.f32.mrb[0].mxu0
    %v1006 = vadd.f32 0.0, %v1005
    %1007 = vmatprep.mubr.bf16.mxu0 0
    %1008 = vmatmul.mubr.bf16.gmra.mrb[0].mxu0 %v851
    %v1009 = vpop.f32.mrb[0].mxu0
    %v1010 = vadd.f32 0.0, %v1009
    %v1011 = vpop.f32.mrb[0].mxu0
    %v1012 = vadd.f32 0.0, %v1011
    %v1013 = vpop.f32.mrb[0].mxu0
    %v1014 = vadd.f32 0.0, %v1013
    %v1015 = vpop.f32.mrb[0].mxu0
    %v1016 = vadd.f32 0.0, %v1015
    %1017 = vmatprep.mubr.bf16.mxu0 0
    %1018 = vmatmul.mubr.bf16.gmra.mrb[0].mxu0 %v854
    %v1019 = vpop.f32.mrb[0].mxu0
    %v1020 = vadd.f32 0.0, %v1019
    %v1021 = vpop.f32.mrb[0].mxu0
    %v1022 = vadd.f32 0.0, %v1021
    %v1023 = vpop.f32.mrb[0].mxu0
    %v1024 = vadd.f32 0.0, %v1023
    %v1025 = vpop.f32.mrb[0].mxu0
    %v1026 = vadd.f32 0.0, %v1025
    %1027 = vmatprep.mubr.bf16.mxu0 0
    %1028 = vmatmul.mubr.bf16.gmra.mrb[0].mxu0 %v857
    %v1029 = vpop.f32.mrb[0].mxu0
    %v1030 = vadd.f32 0.0, %v1029
    %v1031 = vpop.f32.mrb[0].mxu0
    %v1032 = vadd.f32 0.0, %v1031
    %v1033 = vpop.f32.mrb[0].mxu0
    %v1034 = vadd.f32 0.0, %v1033
    %v1035 = vpop.f32.mrb[0].mxu0
    %v1036 = vadd.f32 0.0, %v1035
    %1037 = vmatprep.mubr.bf16.mxu0 0
    %1038 = vmatmul.mubr.bf16.gmra.mrb[0].mxu0 %v860
    %v1039 = vpop.f32.mrb[0].mxu0
    %v1040 = vadd.f32 0.0, %v1039
    %v1041 = vpop.f32.mrb[0].mxu0
    %v1042 = vadd.f32 0.0, %v1041
    %v1043 = vpop.f32.mrb[0].mxu0
    %v1044 = vadd.f32 0.0, %v1043
    %v1045 = vpop.f32.mrb[0].mxu0
    %v1046 = vadd.f32 0.0, %v1045
    %1047 = vmatprep.mubr.bf16.mxu0 0
    %1048 = vmatmul.mubr.bf16.gmra.mrb[0].mxu0 %v863
    %v1049 = vpop.f32.mrb[0].mxu0
    %v1050 = vadd.f32 0.0, %v1049
    %v1051 = vpop.f32.mrb[0].mxu0
    %v1052 = vadd.f32 0.0, %v1051
    %v1053 = vpop.f32.mrb[0].mxu0
    %v1054 = vadd.f32 0.0, %v1053
    %v1055 = vpop.f32.mrb[0].mxu0
    %v1056 = vadd.f32 0.0, %v1055
    %1057 = vmatprep.mubr.bf16.mxu0 0
    %1058 = vmatmul.mubr.bf16.gmra.mrb[0].mxu0 %v866
    %v1059 = vpop.f32.mrb[0].mxu0
    %v1060 = vadd.f32 0.0, %v1059
    %v1061 = vpop.f32.mrb[0].mxu0
    %v1062 = vadd.f32 0.0, %v1061
    %v1063 = vpop.f32.mrb[0].mxu0
    %v1064 = vadd.f32 0.0, %v1063
    %v1065 = vpop.f32.mrb[0].mxu0
    %v1066 = vadd.f32 0.0, %v1065
    %1067 = vdwg.mxu0
    %1068 = vxpose.xlu0.c.b16.start [1/8] %v741, 128
    %1069 = vxpose.xlu0.c.b16.cont [2/8] 0, 128
    %1070 = vxpose.xlu0.c.b16.cont [3/8] 0, 128
    %1071 = vxpose.xlu0.c.b16.cont [4/8] 0, 128
    %1072 = vxpose.xlu0.c.b16.cont [5/8] 0, 128
    %1073 = vxpose.xlu0.c.b16.cont [6/8] 0, 128
    %1074 = vxpose.xlu0.c.b16.cont [7/8] 0, 128
    %1075 = vxpose.xlu0.c.b16.end [8/8] 0, 128
    %v1076 = vpop.trf.xlu0
    %v1077 = vpop.trf.xlu0
    %v1078 = vpop.trf.xlu0
    %v1079 = vpop.trf.xlu0
    %v1080 = vpop.trf.xlu0
    %v1081 = vpop.trf.xlu0
    %v1082 = vpop.trf.xlu0
    %v1083 = vpop.trf.xlu0
    %1084 = vxpose.xlu0.c.b16.start [1/8] %v742, 128
    %1085 = vxpose.xlu0.c.b16.cont [2/8] 0, 128
    %1086 = vxpose.xlu0.c.b16.cont [3/8] 0, 128
    %1087 = vxpose.xlu0.c.b16.cont [4/8] 0, 128
    %1088 = vxpose.xlu0.c.b16.cont [5/8] 0, 128
    %1089 = vxpose.xlu0.c.b16.cont [6/8] 0, 128
    %1090 = vxpose.xlu0.c.b16.cont [7/8] 0, 128
    %1091 = vxpose.xlu0.c.b16.end [8/8] 0, 128
    %v1092 = vpop.trf.xlu0
    %v1093 = vpop.trf.xlu0
    %v1094 = vpop.trf.xlu0
    %v1095 = vpop.trf.xlu0
    %v1096 = vpop.trf.xlu0
    %v1097 = vpop.trf.xlu0
    %v1098 = vpop.trf.xlu0
    %v1099 = vpop.trf.xlu0
    %v1101 = vsel %vm819, %v1076, 0
    %v1104 = vsel %vm819, %v1077, 0
    %v1107 = vsel %vm819, %v1078, 0
    %v1110 = vsel %vm819, %v1079, 0
    %v1113 = vsel %vm819, %v1080, 0
    %v1116 = vsel %vm819, %v1081, 0
    %v1119 = vsel %vm819, %v1082, 0
    %v1122 = vsel %vm819, %v1083, 0
    %v1125 = vsel %vm819, %v1092, 0
    %v1128 = vsel %vm819, %v1093, 0
    %v1131 = vsel %vm819, %v1094, 0
    %v1134 = vsel %vm819, %v1095, 0
    %v1137 = vsel %vm819, %v1096, 0
    %v1140 = vsel %vm819, %v1097, 0
    %v1143 = vsel %vm819, %v1098, 0
    %v1146 = vsel %vm819, %v1099, 0
    %v1149 = vsel %vm868, %v757, 0
    %v1152 = vsel %vm868, %v758, 0
    %1154 = vmatprep.subr.bf16.mxu0 %v1152
    %1155 = vmatpush1.bf16.msra.mxu0 %v1149
    %1156 = vmatprep.subr.bf16.mxu0 0
    %1157 = vmatpush1.bf16.msra.mxu0 0
    %1158 = vmatprep.subr.bf16.mxu0 0
    %1159 = vmatpush1.bf16.msra.mxu0 0
    %1160 = vmatprep.subr.bf16.mxu0 0
    %1161 = vmatpush1.bf16.msra.mxu0 0
    %1162 = vmatprep.subr.bf16.mxu0 0
    %1163 = vmatpush1.bf16.msra.mxu0 0
    %1164 = vmatprep.subr.bf16.mxu0 0
    %1165 = vmatpush1.bf16.msra.mxu0 0
    %1166 = vmatprep.subr.bf16.mxu0 0
    %1167 = vmatpush1.bf16.msra.mxu0 0
    %1168 = vmatprep.subr.bf16.mxu0 0
    %1169 = vmatpush1.bf16.msra.mxu0 0
    %1170 = vmatprep.subr.bf16.mxu0 0
    %1171 = vmatpush1.bf16.msra.mxu0 0
    %1172 = vmatprep.subr.bf16.mxu0 0
    %1173 = vmatpush1.bf16.msra.mxu0 0
    %1174 = vmatprep.subr.bf16.mxu0 0
    %1175 = vmatpush1.bf16.msra.mxu0 0
    %1176 = vmatprep.subr.bf16.mxu0 0
    %1177 = vmatpush1.bf16.msra.mxu0 0
    %1178 = vmatprep.subr.bf16.mxu0 0
    %1179 = vmatpush1.bf16.msra.mxu0 0
    %1180 = vmatprep.subr.bf16.mxu0 0
    %1181 = vmatpush1.bf16.msra.mxu0 0
    %1182 = vmatprep.subr.bf16.mxu0 0
    %1183 = vmatpush1.bf16.msra.mxu0 0
    %1184 = vmatprep.subr.bf16.mxu0 0
    %1185 = vmatpush1.bf16.msra.mxu0 0
    %1186 = vmatprep.mubr.bf16.mxu0 0
    %1187 = vmatmul.mubr.bf16.gmra.mrb[0].mxu0 %v1101
    %v1188 = vpop.f32.mrb[0].mxu0
    %v1189 = vadd.f32 0.0, %v1188
    %v1190 = vpop.f32.mrb[0].mxu0
    %v1191 = vadd.f32 0.0, %v1190
    %v1192 = vpop.f32.mrb[0].mxu0
    %v1193 = vadd.f32 0.0, %v1192
    %v1194 = vpop.f32.mrb[0].mxu0
    %v1195 = vadd.f32 0.0, %v1194
    %1196 = vmatprep.mubr.bf16.mxu0 0
    %1197 = vmatmul.mubr.bf16.gmra.mrb[0].mxu0 %v1104
    %v1198 = vpop.f32.mrb[0].mxu0
    %v1199 = vadd.f32 0.0, %v1198
    %v1200 = vpop.f32.mrb[0].mxu0
    %v1201 = vadd.f32 0.0, %v1200
    %v1202 = vpop.f32.mrb[0].mxu0
    %v1203 = vadd.f32 0.0, %v1202
    %v1204 = vpop.f32.mrb[0].mxu0
    %v1205 = vadd.f32 0.0, %v1204
    %1206 = vmatprep.mubr.bf16.mxu0 0
    %1207 = vmatmul.mubr.bf16.gmra.mrb[0].mxu0 %v1107
    %v1208 = vpop.f32.mrb[0].mxu0
    %v1209 = vadd.f32 0.0, %v1208
    %v1210 = vpop.f32.mrb[0].mxu0
    %v1211 = vadd.f32 0.0, %v1210
    %v1212 = vpop.f32.mrb[0].mxu0
    %v1213 = vadd.f32 0.0, %v1212
    %v1214 = vpop.f32.mrb[0].mxu0
    %v1215 = vadd.f32 0.0, %v1214
    %1216 = vmatprep.mubr.bf16.mxu0 0
    %1217 = vmatmul.mubr.bf16.gmra.mrb[0].mxu0 %v1110
    %v1218 = vpop.f32.mrb[0].mxu0
    %v1219 = vadd.f32 0.0, %v1218
    %v1220 = vpop.f32.mrb[0].mxu0
    %v1221 = vadd.f32 0.0, %v1220
    %v1222 = vpop.f32.mrb[0].mxu0
    %v1223 = vadd.f32 0.0, %v1222
    %v1224 = vpop.f32.mrb[0].mxu0
    %v1225 = vadd.f32 0.0, %v1224
    %1226 = vmatprep.mubr.bf16.mxu0 0
    %1227 = vmatmul.mubr.bf16.gmra.mrb[0].mxu0 %v1113
    %v1228 = vpop.f32.mrb[0].mxu0
    %v1229 = vadd.f32 0.0, %v1228
    %v1230 = vpop.f32.mrb[0].mxu0
    %v1231 = vadd.f32 0.0, %v1230
    %v1232 = vpop.f32.mrb[0].mxu0
    %v1233 = vadd.f32 0.0, %v1232
    %v1234 = vpop.f32.mrb[0].mxu0
    %v1235 = vadd.f32 0.0, %v1234
    %1236 = vmatprep.mubr.bf16.mxu0 0
    %1237 = vmatmul.mubr.bf16.gmra.mrb[0].mxu0 %v1116
    %v1238 = vpop.f32.mrb[0].mxu0
    %v1239 = vadd.f32 0.0, %v1238
    %v1240 = vpop.f32.mrb[0].mxu0
    %v1241 = vadd.f32 0.0, %v1240
    %v1242 = vpop.f32.mrb[0].mxu0
    %v1243 = vadd.f32 0.0, %v1242
    %v1244 = vpop.f32.mrb[0].mxu0
    %v1245 = vadd.f32 0.0, %v1244
    %1246 = vmatprep.mubr.bf16.mxu0 0
    %1247 = vmatmul.mubr.bf16.gmra.mrb[0].mxu0 %v1119
    %v1248 = vpop.f32.mrb[0].mxu0
    %v1249 = vadd.f32 0.0, %v1248
    %v1250 = vpop.f32.mrb[0].mxu0
    %v1251 = vadd.f32 0.0, %v1250
    %v1252 = vpop.f32.mrb[0].mxu0
    %v1253 = vadd.f32 0.0, %v1252
    %v1254 = vpop.f32.mrb[0].mxu0
    %v1255 = vadd.f32 0.0, %v1254
    %1256 = vmatprep.mubr.bf16.mxu0 0
    %1257 = vmatmul.mubr.bf16.gmra.mrb[0].mxu0 %v1122
    %v1258 = vpop.f32.mrb[0].mxu0
    %v1259 = vadd.f32 0.0, %v1258
    %v1260 = vpop.f32.mrb[0].mxu0
    %v1261 = vadd.f32 0.0, %v1260
    %v1262 = vpop.f32.mrb[0].mxu0
    %v1263 = vadd.f32 0.0, %v1262
    %v1264 = vpop.f32.mrb[0].mxu0
    %v1265 = vadd.f32 0.0, %v1264
    %1266 = vmatprep.mubr.bf16.mxu0 0
    %1267 = vmatmul.mubr.bf16.gmra.mrb[0].mxu0 %v1125
    %v1268 = vpop.f32.mrb[0].mxu0
    %v1269 = vadd.f32 0.0, %v1268
    %v1270 = vpop.f32.mrb[0].mxu0
    %v1271 = vadd.f32 0.0, %v1270
    %v1272 = vpop.f32.mrb[0].mxu0
    %v1273 = vadd.f32 0.0, %v1272
    %v1274 = vpop.f32.mrb[0].mxu0
    %v1275 = vadd.f32 0.0, %v1274
    %1276 = vmatprep.mubr.bf16.mxu0 0
    %1277 = vmatmul.mubr.bf16.gmra.mrb[0].mxu0 %v1128
    %v1278 = vpop.f32.mrb[0].mxu0
    %v1279 = vadd.f32 0.0, %v1278
    %v1280 = vpop.f32.mrb[0].mxu0
    %v1281 = vadd.f32 0.0, %v1280
    %v1282 = vpop.f32.mrb[0].mxu0
    %v1283 = vadd.f32 0.0, %v1282
    %v1284 = vpop.f32.mrb[0].mxu0
    %v1285 = vadd.f32 0.0, %v1284
    %1286 = vmatprep.mubr.bf16.mxu0 0
    %1287 = vmatmul.mubr.bf16.gmra.mrb[0].mxu0 %v1131
    %v1288 = vpop.f32.mrb[0].mxu0
    %v1289 = vadd.f32 0.0, %v1288
    %v1290 = vpop.f32.mrb[0].mxu0
    %v1291 = vadd.f32 0.0, %v1290
    %v1292 = vpop.f32.mrb[0].mxu0
    %v1293 = vadd.f32 0.0, %v1292
    %v1294 = vpop.f32.mrb[0].mxu0
    %v1295 = vadd.f32 0.0, %v1294
    %1296 = vmatprep.mubr.bf16.mxu0 0
    %1297 = vmatmul.mubr.bf16.gmra.mrb[0].mxu0 %v1134
    %v1298 = vpop.f32.mrb[0].mxu0
    %v1299 = vadd.f32 0.0, %v1298
    %v1300 = vpop.f32.mrb[0].mxu0
    %v1301 = vadd.f32 0.0, %v1300
    %v1302 = vpop.f32.mrb[0].mxu0
    %v1303 = vadd.f32 0.0, %v1302
    %v1304 = vpop.f32.mrb[0].mxu0
    %v1305 = vadd.f32 0.0, %v1304
    %1306 = vmatprep.mubr.bf16.mxu0 0
    %1307 = vmatmul.mubr.bf16.gmra.mrb[0].mxu0 %v1137
    %v1308 = vpop.f32.mrb[0].mxu0
    %v1309 = vadd.f32 0.0, %v1308
    %v1310 = vpop.f32.mrb[0].mxu0
    %v1311 = vadd.f32 0.0, %v1310
    %v1312 = vpop.f32.mrb[0].mxu0
    %v1313 = vadd.f32 0.0, %v1312
    %v1314 = vpop.f32.mrb[0].mxu0
    %v1315 = vadd.f32 0.0, %v1314
    %1316 = vmatprep.mubr.bf16.mxu0 0
    %1317 = vmatmul.mubr.bf16.gmra.mrb[0].mxu0 %v1140
    %v1318 = vpop.f32.mrb[0].mxu0
    %v1319 = vadd.f32 0.0, %v1318
    %v1320 = vpop.f32.mrb[0].mxu0
    %v1321 = vadd.f32 0.0, %v1320
    %v1322 = vpop.f32.mrb[0].mxu0
    %v1323 = vadd.f32 0.0, %v1322
    %v1324 = vpop.f32.mrb[0].mxu0
    %v1325 = vadd.f32 0.0, %v1324
    %1326 = vmatprep.mubr.bf16.mxu0 0
    %1327 = vmatmul.mubr.bf16.gmra.mrb[0].mxu0 %v1143
    %v1328 = vpop.f32.mrb[0].mxu0
    %v1329 = vadd.f32 0.0, %v1328
    %v1330 = vpop.f32.mrb[0].mxu0
    %v1331 = vadd.f32 0.0, %v1330
    %v1332 = vpop.f32.mrb[0].mxu0
    %v1333 = vadd.f32 0.0, %v1332
    %v1334 = vpop.f32.mrb[0].mxu0
    %v1335 = vadd.f32 0.0, %v1334
    %1336 = vmatprep.mubr.bf16.mxu0 0
    %1337 = vmatmul.mubr.bf16.gmra.mrb[0].mxu0 %v1146
    %v1338 = vpop.f32.mrb[0].mxu0
    %v1339 = vadd.f32 0.0, %v1338
    %v1340 = vpop.f32.mrb[0].mxu0
    %v1341 = vadd.f32 0.0, %v1340
    %v1342 = vpop.f32.mrb[0].mxu0
    %v1343 = vadd.f32 0.0, %v1342
    %v1344 = vpop.f32.mrb[0].mxu0
    %v1345 = vadd.f32 0.0, %v1344
    %1346 = vdwg.mxu0
    %1347 = vxpose.xlu0.c.b16.start [1/8] %v743, 128
    %1348 = vxpose.xlu0.c.b16.cont [2/8] 0, 128
    %1349 = vxpose.xlu0.c.b16.cont [3/8] 0, 128
    %1350 = vxpose.xlu0.c.b16.cont [4/8] 0, 128
    %1351 = vxpose.xlu0.c.b16.cont [5/8] 0, 128
    %1352 = vxpose.xlu0.c.b16.cont [6/8] 0, 128
    %1353 = vxpose.xlu0.c.b16.cont [7/8] 0, 128
    %1354 = vxpose.xlu0.c.b16.end [8/8] 0, 128
    %v1355 = vpop.trf.xlu0
    %v1356 = vpop.trf.xlu0
    %v1357 = vpop.trf.xlu0
    %v1358 = vpop.trf.xlu0
    %v1359 = vpop.trf.xlu0
    %v1360 = vpop.trf.xlu0
    %v1361 = vpop.trf.xlu0
    %v1362 = vpop.trf.xlu0
    %1363 = vxpose.xlu0.c.b16.start [1/8] %v744, 128
    %1364 = vxpose.xlu0.c.b16.cont [2/8] 0, 128
    %1365 = vxpose.xlu0.c.b16.cont [3/8] 0, 128
    %1366 = vxpose.xlu0.c.b16.cont [4/8] 0, 128
    %1367 = vxpose.xlu0.c.b16.cont [5/8] 0, 128
    %1368 = vxpose.xlu0.c.b16.cont [6/8] 0, 128
    %1369 = vxpose.xlu0.c.b16.cont [7/8] 0, 128
    %1370 = vxpose.xlu0.c.b16.end [8/8] 0, 128
    %v1371 = vpop.trf.xlu0
    %v1372 = vpop.trf.xlu0
    %v1373 = vpop.trf.xlu0
    %v1374 = vpop.trf.xlu0
    %v1375 = vpop.trf.xlu0
    %v1376 = vpop.trf.xlu0
    %v1377 = vpop.trf.xlu0
    %v1378 = vpop.trf.xlu0
    %v1380 = vsel %vm819, %v1355, 0
    %v1383 = vsel %vm819, %v1356, 0
    %v1386 = vsel %vm819, %v1357, 0
    %v1389 = vsel %vm819, %v1358, 0
    %v1392 = vsel %vm819, %v1359, 0
    %v1395 = vsel %vm819, %v1360, 0
    %v1398 = vsel %vm819, %v1361, 0
    %v1401 = vsel %vm819, %v1362, 0
    %v1404 = vsel %vm819, %v1371, 0
    %v1407 = vsel %vm819, %v1372, 0
    %v1410 = vsel %vm819, %v1373, 0
    %v1413 = vsel %vm819, %v1374, 0
    %v1416 = vsel %vm819, %v1375, 0
    %v1419 = vsel %vm819, %v1376, 0
    %v1422 = vsel %vm819, %v1377, 0
    %v1425 = vsel %vm819, %v1378, 0
    %v1428 = vsel %vm868, %v759, 0
    %v1431 = vsel %vm868, %v760, 0
    %1433 = vmatprep.subr.bf16.mxu0 %v1431
    %1434 = vmatpush1.bf16.msra.mxu0 %v1428
    %1435 = vmatprep.subr.bf16.mxu0 0
    %1436 = vmatpush1.bf16.msra.mxu0 0
    %1437 = vmatprep.subr.bf16.mxu0 0
    %1438 = vmatpush1.bf16.msra.mxu0 0
    %1439 = vmatprep.subr.bf16.mxu0 0
    %1440 = vmatpush1.bf16.msra.mxu0 0
    %1441 = vmatprep.subr.bf16.mxu0 0
    %1442 = vmatpush1.bf16.msra.mxu0 0
    %1443 = vmatprep.subr.bf16.mxu0 0
    %1444 = vmatpush1.bf16.msra.mxu0 0
    %1445 = vmatprep.subr.bf16.mxu0 0
    %1446 = vmatpush1.bf16.msra.mxu0 0
    %1447 = vmatprep.subr.bf16.mxu0 0
    %1448 = vmatpush1.bf16.msra.mxu0 0
    %1449 = vmatprep.subr.bf16.mxu0 0
    %1450 = vmatpush1.bf16.msra.mxu0 0
    %1451 = vmatprep.subr.bf16.mxu0 0
    %1452 = vmatpush1.bf16.msra.mxu0 0
    %1453 = vmatprep.subr.bf16.mxu0 0
    %1454 = vmatpush1.bf16.msra.mxu0 0
    %1455 = vmatprep.subr.bf16.mxu0 0
    %1456 = vmatpush1.bf16.msra.mxu0 0
    %1457 = vmatprep.subr.bf16.mxu0 0
    %1458 = vmatpush1.bf16.msra.mxu0 0
    %1459 = vmatprep.subr.bf16.mxu0 0
    %1460 = vmatpush1.bf16.msra.mxu0 0
    %1461 = vmatprep.subr.bf16.mxu0 0
    %1462 = vmatpush1.bf16.msra.mxu0 0
    %1463 = vmatprep.subr.bf16.mxu0 0
    %1464 = vmatpush1.bf16.msra.mxu0 0
    %1465 = vmatprep.mubr.bf16.mxu0 0
    %1466 = vmatmul.mubr.bf16.gmra.mrb[0].mxu0 %v1380
    %v1467 = vpop.f32.mrb[0].mxu0
    %v1468 = vadd.f32 0.0, %v1467
    %v1469 = vpop.f32.mrb[0].mxu0
    %v1470 = vadd.f32 0.0, %v1469
    %v1471 = vpop.f32.mrb[0].mxu0
    %v1472 = vadd.f32 0.0, %v1471
    %v1473 = vpop.f32.mrb[0].mxu0
    %v1474 = vadd.f32 0.0, %v1473
    %1475 = vmatprep.mubr.bf16.mxu0 0
    %1476 = vmatmul.mubr.bf16.gmra.mrb[0].mxu0 %v1383
    %v1477 = vpop.f32.mrb[0].mxu0
    %v1478 = vadd.f32 0.0, %v1477
    %v1479 = vpop.f32.mrb[0].mxu0
    %v1480 = vadd.f32 0.0, %v1479
    %v1481 = vpop.f32.mrb[0].mxu0
    %v1482 = vadd.f32 0.0, %v1481
    %v1483 = vpop.f32.mrb[0].mxu0
    %v1484 = vadd.f32 0.0, %v1483
    %1485 = vmatprep.mubr.bf16.mxu0 0
    %1486 = vmatmul.mubr.bf16.gmra.mrb[0].mxu0 %v1386
    %v1487 = vpop.f32.mrb[0].mxu0
    %v1488 = vadd.f32 0.0, %v1487
    %v1489 = vpop.f32.mrb[0].mxu0
    %v1490 = vadd.f32 0.0, %v1489
    %v1491 = vpop.f32.mrb[0].mxu0
    %v1492 = vadd.f32 0.0, %v1491
    %v1493 = vpop.f32.mrb[0].mxu0
    %v1494 = vadd.f32 0.0, %v1493
    %1495 = vmatprep.mubr.bf16.mxu0 0
    %1496 = vmatmul.mubr.bf16.gmra.mrb[0].mxu0 %v1389
    %v1497 = vpop.f32.mrb[0].mxu0
    %v1498 = vadd.f32 0.0, %v1497
    %v1499 = vpop.f32.mrb[0].mxu0
    %v1500 = vadd.f32 0.0, %v1499
    %v1501 = vpop.f32.mrb[0].mxu0
    %v1502 = vadd.f32 0.0, %v1501
    %v1503 = vpop.f32.mrb[0].mxu0
    %v1504 = vadd.f32 0.0, %v1503
    %1505 = vmatprep.mubr.bf16.mxu0 0
    %1506 = vmatmul.mubr.bf16.gmra.mrb[0].mxu0 %v1392
    %v1507 = vpop.f32.mrb[0].mxu0
    %v1508 = vadd.f32 0.0, %v1507
    %v1509 = vpop.f32.mrb[0].mxu0
    %v1510 = vadd.f32 0.0, %v1509
    %v1511 = vpop.f32.mrb[0].mxu0
    %v1512 = vadd.f32 0.0, %v1511
    %v1513 = vpop.f32.mrb[0].mxu0
    %v1514 = vadd.f32 0.0, %v1513
    %1515 = vmatprep.mubr.bf16.mxu0 0
    %1516 = vmatmul.mubr.bf16.gmra.mrb[0].mxu0 %v1395
    %v1517 = vpop.f32.mrb[0].mxu0
    %v1518 = vadd.f32 0.0, %v1517
    %v1519 = vpop.f32.mrb[0].mxu0
    %v1520 = vadd.f32 0.0, %v1519
    %v1521 = vpop.f32.mrb[0].mxu0
    %v1522 = vadd.f32 0.0, %v1521
    %v1523 = vpop.f32.mrb[0].mxu0
    %v1524 = vadd.f32 0.0, %v1523
    %1525 = vmatprep.mubr.bf16.mxu0 0
    %1526 = vmatmul.mubr.bf16.gmra.mrb[0].mxu0 %v1398
    %v1527 = vpop.f32.mrb[0].mxu0
    %v1528 = vadd.f32 0.0, %v1527
    %v1529 = vpop.f32.mrb[0].mxu0
    %v1530 = vadd.f32 0.0, %v1529
    %v1531 = vpop.f32.mrb[0].mxu0
    %v1532 = vadd.f32 0.0, %v1531
    %v1533 = vpop.f32.mrb[0].mxu0
    %v1534 = vadd.f32 0.0, %v1533
    %1535 = vmatprep.mubr.bf16.mxu0 0
    %1536 = vmatmul.mubr.bf16.gmra.mrb[0].mxu0 %v1401
    %v1537 = vpop.f32.mrb[0].mxu0
    %v1538 = vadd.f32 0.0, %v1537
    %v1539 = vpop.f32.mrb[0].mxu0
    %v1540 = vadd.f32 0.0, %v1539
    %v1541 = vpop.f32.mrb[0].mxu0
    %v1542 = vadd.f32 0.0, %v1541
    %v1543 = vpop.f32.mrb[0].mxu0
    %v1544 = vadd.f32 0.0, %v1543
    %1545 = vmatprep.mubr.bf16.mxu0 0
    %1546 = vmatmul.mubr.bf16.gmra.mrb[0].mxu0 %v1404
    %v1547 = vpop.f32.mrb[0].mxu0
    %v1548 = vadd.f32 0.0, %v1547
    %v1549 = vpop.f32.mrb[0].mxu0
    %v1550 = vadd.f32 0.0, %v1549
    %v1551 = vpop.f32.mrb[0].mxu0
    %v1552 = vadd.f32 0.0, %v1551
    %v1553 = vpop.f32.mrb[0].mxu0
    %v1554 = vadd.f32 0.0, %v1553
    %1555 = vmatprep.mubr.bf16.mxu0 0
    %1556 = vmatmul.mubr.bf16.gmra.mrb[0].mxu0 %v1407
    %v1557 = vpop.f32.mrb[0].mxu0
    %v1558 = vadd.f32 0.0, %v1557
    %v1559 = vpop.f32.mrb[0].mxu0
    %v1560 = vadd.f32 0.0, %v1559
    %v1561 = vpop.f32.mrb[0].mxu0
    %v1562 = vadd.f32 0.0, %v1561
    %v1563 = vpop.f32.mrb[0].mxu0
    %v1564 = vadd.f32 0.0, %v1563
    %1565 = vmatprep.mubr.bf16.mxu0 0
    %1566 = vmatmul.mubr.bf16.gmra.mrb[0].mxu0 %v1410
    %v1567 = vpop.f32.mrb[0].mxu0
    %v1568 = vadd.f32 0.0, %v1567
    %v1569 = vpop.f32.mrb[0].mxu0
    %v1570 = vadd.f32 0.0, %v1569
    %v1571 = vpop.f32.mrb[0].mxu0
    %v1572 = vadd.f32 0.0, %v1571
    %v1573 = vpop.f32.mrb[0].mxu0
    %v1574 = vadd.f32 0.0, %v1573
    %1575 = vmatprep.mubr.bf16.mxu0 0
    %1576 = vmatmul.mubr.bf16.gmra.mrb[0].mxu0 %v1413
    %v1577 = vpop.f32.mrb[0].mxu0
    %v1578 = vadd.f32 0.0, %v1577
    %v1579 = vpop.f32.mrb[0].mxu0
    %v1580 = vadd.f32 0.0, %v1579
    %v1581 = vpop.f32.mrb[0].mxu0
    %v1582 = vadd.f32 0.0, %v1581
    %v1583 = vpop.f32.mrb[0].mxu0
    %v1584 = vadd.f32 0.0, %v1583
    %1585 = vmatprep.mubr.bf16.mxu0 0
    %1586 = vmatmul.mubr.bf16.gmra.mrb[0].mxu0 %v1416
    %v1587 = vpop.f32.mrb[0].mxu0
    %v1588 = vadd.f32 0.0, %v1587
    %v1589 = vpop.f32.mrb[0].mxu0
    %v1590 = vadd.f32 0.0, %v1589
    %v1591 = vpop.f32.mrb[0].mxu0
    %v1592 = vadd.f32 0.0, %v1591
    %v1593 = vpop.f32.mrb[0].mxu0
    %v1594 = vadd.f32 0.0, %v1593
    %1595 = vmatprep.mubr.bf16.mxu0 0
    %1596 = vmatmul.mubr.bf16.gmra.mrb[0].mxu0 %v1419
    %v1597 = vpop.f32.mrb[0].mxu0
    %v1598 = vadd.f32 0.0, %v1597
    %v1599 = vpop.f32.mrb[0].mxu0
    %v1600 = vadd.f32 0.0, %v1599
    %v1601 = vpop.f32.mrb[0].mxu0
    %v1602 = vadd.f32 0.0, %v1601
    %v1603 = vpop.f32.mrb[0].mxu0
    %v1604 = vadd.f32 0.0, %v1603
    %1605 = vmatprep.mubr.bf16.mxu0 0
    %1606 = vmatmul.mubr.bf16.gmra.mrb[0].mxu0 %v1422
    %v1607 = vpop.f32.mrb[0].mxu0
    %v1608 = vadd.f32 0.0, %v1607
    %v1609 = vpop.f32.mrb[0].mxu0
    %v1610 = vadd.f32 0.0, %v1609
    %v1611 = vpop.f32.mrb[0].mxu0
    %v1612 = vadd.f32 0.0, %v1611
    %v1613 = vpop.f32.mrb[0].mxu0
    %v1614 = vadd.f32 0.0, %v1613
    %1615 = vmatprep.mubr.bf16.mxu0 0
    %1616 = vmatmul.mubr.bf16.gmra.mrb[0].mxu0 %v1425
    %v1617 = vpop.f32.mrb[0].mxu0
    %v1618 = vadd.f32 0.0, %v1617
    %v1619 = vpop.f32.mrb[0].mxu0
    %v1620 = vadd.f32 0.0, %v1619
    %v1621 = vpop.f32.mrb[0].mxu0
    %v1622 = vadd.f32 0.0, %v1621
    %v1623 = vpop.f32.mrb[0].mxu0
    %v1624 = vadd.f32 0.0, %v1623
    %1625 = vdwg.mxu0
    %1626 = vxpose.xlu0.c.b16.start [1/8] %v745, 128
    %1627 = vxpose.xlu0.c.b16.cont [2/8] 0, 128
    %1628 = vxpose.xlu0.c.b16.cont [3/8] 0, 128
    %1629 = vxpose.xlu0.c.b16.cont [4/8] 0, 128
    %1630 = vxpose.xlu0.c.b16.cont [5/8] 0, 128
    %1631 = vxpose.xlu0.c.b16.cont [6/8] 0, 128
    %1632 = vxpose.xlu0.c.b16.cont [7/8] 0, 128
    %1633 = vxpose.xlu0.c.b16.end [8/8] 0, 128
    %v1634 = vpop.trf.xlu0
    %v1635 = vpop.trf.xlu0
    %v1636 = vpop.trf.xlu0
    %v1637 = vpop.trf.xlu0
    %v1638 = vpop.trf.xlu0
    %v1639 = vpop.trf.xlu0
    %v1640 = vpop.trf.xlu0
    %v1641 = vpop.trf.xlu0
    %1642 = vxpose.xlu0.c.b16.start [1/8] %v746, 128
    %1643 = vxpose.xlu0.c.b16.cont [2/8] 0, 128
    %1644 = vxpose.xlu0.c.b16.cont [3/8] 0, 128
    %1645 = vxpose.xlu0.c.b16.cont [4/8] 0, 128
    %1646 = vxpose.xlu0.c.b16.cont [5/8] 0, 128
    %1647 = vxpose.xlu0.c.b16.cont [6/8] 0, 128
    %1648 = vxpose.xlu0.c.b16.cont [7/8] 0, 128
    %1649 = vxpose.xlu0.c.b16.end [8/8] 0, 128
    %v1650 = vpop.trf.xlu0
    %v1651 = vpop.trf.xlu0
    %v1652 = vpop.trf.xlu0
    %v1653 = vpop.trf.xlu0
    %v1654 = vpop.trf.xlu0
    %v1655 = vpop.trf.xlu0
    %v1656 = vpop.trf.xlu0
    %v1657 = vpop.trf.xlu0
    %v1659 = vsel %vm819, %v1634, 0
    %v1662 = vsel %vm819, %v1635, 0
    %v1665 = vsel %vm819, %v1636, 0
    %v1668 = vsel %vm819, %v1637, 0
    %v1671 = vsel %vm819, %v1638, 0
    %v1674 = vsel %vm819, %v1639, 0
    %v1677 = vsel %vm819, %v1640, 0
    %v1680 = vsel %vm819, %v1641, 0
    %v1683 = vsel %vm819, %v1650, 0
    %v1686 = vsel %vm819, %v1651, 0
    %v1689 = vsel %vm819, %v1652, 0
    %v1692 = vsel %vm819, %v1653, 0
    %v1695 = vsel %vm819, %v1654, 0
    %v1698 = vsel %vm819, %v1655, 0
    %v1701 = vsel %vm819, %v1656, 0
    %v1704 = vsel %vm819, %v1657, 0
    %v1707 = vsel %vm868, %v761, 0
    %v1710 = vsel %vm868, %v762, 0
    %1712 = vmatprep.subr.bf16.mxu0 %v1710
    %1713 = vmatpush1.bf16.msra.mxu0 %v1707
    %1714 = vmatprep.subr.bf16.mxu0 0
    %1715 = vmatpush1.bf16.msra.mxu0 0
    %1716 = vmatprep.subr.bf16.mxu0 0
    %1717 = vmatpush1.bf16.msra.mxu0 0
    %1718 = vmatprep.subr.bf16.mxu0 0
    %1719 = vmatpush1.bf16.msra.mxu0 0
    %1720 = vmatprep.subr.bf16.mxu0 0
    %1721 = vmatpush1.bf16.msra.mxu0 0
    %1722 = vmatprep.subr.bf16.mxu0 0
    %1723 = vmatpush1.bf16.msra.mxu0 0
    %1724 = vmatprep.subr.bf16.mxu0 0
    %1725 = vmatpush1.bf16.msra.mxu0 0
    %1726 = vmatprep.subr.bf16.mxu0 0
    %1727 = vmatpush1.bf16.msra.mxu0 0
    %1728 = vmatprep.subr.bf16.mxu0 0
    %1729 = vmatpush1.bf16.msra.mxu0 0
    %1730 = vmatprep.subr.bf16.mxu0 0
    %1731 = vmatpush1.bf16.msra.mxu0 0
    %1732 = vmatprep.subr.bf16.mxu0 0
    %1733 = vmatpush1.bf16.msra.mxu0 0
    %1734 = vmatprep.subr.bf16.mxu0 0
    %1735 = vmatpush1.bf16.msra.mxu0 0
    %1736 = vmatprep.subr.bf16.mxu0 0
    %1737 = vmatpush1.bf16.msra.mxu0 0
    %1738 = vmatprep.subr.bf16.mxu0 0
    %1739 = vmatpush1.bf16.msra.mxu0 0
    %1740 = vmatprep.subr.bf16.mxu0 0
    %1741 = vmatpush1.bf16.msra.mxu0 0
    %1742 = vmatprep.subr.bf16.mxu0 0
    %1743 = vmatpush1.bf16.msra.mxu0 0
    %1744 = vmatprep.mubr.bf16.mxu0 0
    %1745 = vmatmul.mubr.bf16.gmra.mrb[0].mxu0 %v1659
    %v1746 = vpop.f32.mrb[0].mxu0
    %v1747 = vadd.f32 0.0, %v1746
    %v1748 = vpop.f32.mrb[0].mxu0
    %v1749 = vadd.f32 0.0, %v1748
    %v1750 = vpop.f32.mrb[0].mxu0
    %v1751 = vadd.f32 0.0, %v1750
    %v1752 = vpop.f32.mrb[0].mxu0
    %v1753 = vadd.f32 0.0, %v1752
    %1754 = vmatprep.mubr.bf16.mxu0 0
    %1755 = vmatmul.mubr.bf16.gmra.mrb[0].mxu0 %v1662
    %v1756 = vpop.f32.mrb[0].mxu0
    %v1757 = vadd.f32 0.0, %v1756
    %v1758 = vpop.f32.mrb[0].mxu0
    %v1759 = vadd.f32 0.0, %v1758
    %v1760 = vpop.f32.mrb[0].mxu0
    %v1761 = vadd.f32 0.0, %v1760
    %v1762 = vpop.f32.mrb[0].mxu0
    %v1763 = vadd.f32 0.0, %v1762
    %1764 = vmatprep.mubr.bf16.mxu0 0
    %1765 = vmatmul.mubr.bf16.gmra.mrb[0].mxu0 %v1665
    %v1766 = vpop.f32.mrb[0].mxu0
    %v1767 = vadd.f32 0.0, %v1766
    %v1768 = vpop.f32.mrb[0].mxu0
    %v1769 = vadd.f32 0.0, %v1768
    %v1770 = vpop.f32.mrb[0].mxu0
    %v1771 = vadd.f32 0.0, %v1770
    %v1772 = vpop.f32.mrb[0].mxu0
    %v1773 = vadd.f32 0.0, %v1772
    %1774 = vmatprep.mubr.bf16.mxu0 0
    %1775 = vmatmul.mubr.bf16.gmra.mrb[0].mxu0 %v1668
    %v1776 = vpop.f32.mrb[0].mxu0
    %v1777 = vadd.f32 0.0, %v1776
    %v1778 = vpop.f32.mrb[0].mxu0
    %v1779 = vadd.f32 0.0, %v1778
    %v1780 = vpop.f32.mrb[0].mxu0
    %v1781 = vadd.f32 0.0, %v1780
    %v1782 = vpop.f32.mrb[0].mxu0
    %v1783 = vadd.f32 0.0, %v1782
    %1784 = vmatprep.mubr.bf16.mxu0 0
    %1785 = vmatmul.mubr.bf16.gmra.mrb[0].mxu0 %v1671
    %v1786 = vpop.f32.mrb[0].mxu0
    %v1787 = vadd.f32 0.0, %v1786
    %v1788 = vpop.f32.mrb[0].mxu0
    %v1789 = vadd.f32 0.0, %v1788
    %v1790 = vpop.f32.mrb[0].mxu0
    %v1791 = vadd.f32 0.0, %v1790
    %v1792 = vpop.f32.mrb[0].mxu0
    %v1793 = vadd.f32 0.0, %v1792
    %1794 = vmatprep.mubr.bf16.mxu0 0
    %1795 = vmatmul.mubr.bf16.gmra.mrb[0].mxu0 %v1674
    %v1796 = vpop.f32.mrb[0].mxu0
    %v1797 = vadd.f32 0.0, %v1796
    %v1798 = vpop.f32.mrb[0].mxu0
    %v1799 = vadd.f32 0.0, %v1798
    %v1800 = vpop.f32.mrb[0].mxu0
    %v1801 = vadd.f32 0.0, %v1800
    %v1802 = vpop.f32.mrb[0].mxu0
    %v1803 = vadd.f32 0.0, %v1802
    %1804 = vmatprep.mubr.bf16.mxu0 0
    %1805 = vmatmul.mubr.bf16.gmra.mrb[0].mxu0 %v1677
    %v1806 = vpop.f32.mrb[0].mxu0
    %v1807 = vadd.f32 0.0, %v1806
    %v1808 = vpop.f32.mrb[0].mxu0
    %v1809 = vadd.f32 0.0, %v1808
    %v1810 = vpop.f32.mrb[0].mxu0
    %v1811 = vadd.f32 0.0, %v1810
    %v1812 = vpop.f32.mrb[0].mxu0
    %v1813 = vadd.f32 0.0, %v1812
    %1814 = vmatprep.mubr.bf16.mxu0 0
    %1815 = vmatmul.mubr.bf16.gmra.mrb[0].mxu0 %v1680
    %v1816 = vpop.f32.mrb[0].mxu0
    %v1817 = vadd.f32 0.0, %v1816
    %v1818 = vpop.f32.mrb[0].mxu0
    %v1819 = vadd.f32 0.0, %v1818
    %v1820 = vpop.f32.mrb[0].mxu0
    %v1821 = vadd.f32 0.0, %v1820
    %v1822 = vpop.f32.mrb[0].mxu0
    %v1823 = vadd.f32 0.0, %v1822
    %1824 = vmatprep.mubr.bf16.mxu0 0
    %1825 = vmatmul.mubr.bf16.gmra.mrb[0].mxu0 %v1683
    %v1826 = vpop.f32.mrb[0].mxu0
    %v1827 = vadd.f32 0.0, %v1826
    %v1828 = vpop.f32.mrb[0].mxu0
    %v1829 = vadd.f32 0.0, %v1828
    %v1830 = vpop.f32.mrb[0].mxu0
    %v1831 = vadd.f32 0.0, %v1830
    %v1832 = vpop.f32.mrb[0].mxu0
    %v1833 = vadd.f32 0.0, %v1832
    %1834 = vmatprep.mubr.bf16.mxu0 0
    %1835 = vmatmul.mubr.bf16.gmra.mrb[0].mxu0 %v1686
    %v1836 = vpop.f32.mrb[0].mxu0
    %v1837 = vadd.f32 0.0, %v1836
    %v1838 = vpop.f32.mrb[0].mxu0
    %v1839 = vadd.f32 0.0, %v1838
    %v1840 = vpop.f32.mrb[0].mxu0
    %v1841 = vadd.f32 0.0, %v1840
    %v1842 = vpop.f32.mrb[0].mxu0
    %v1843 = vadd.f32 0.0, %v1842
    %1844 = vmatprep.mubr.bf16.mxu0 0
    %1845 = vmatmul.mubr.bf16.gmra.mrb[0].mxu0 %v1689
    %v1846 = vpop.f32.mrb[0].mxu0
    %v1847 = vadd.f32 0.0, %v1846
    %v1848 = vpop.f32.mrb[0].mxu0
    %v1849 = vadd.f32 0.0, %v1848
    %v1850 = vpop.f32.mrb[0].mxu0
    %v1851 = vadd.f32 0.0, %v1850
    %v1852 = vpop.f32.mrb[0].mxu0
    %v1853 = vadd.f32 0.0, %v1852
    %1854 = vmatprep.mubr.bf16.mxu0 0
    %1855 = vmatmul.mubr.bf16.gmra.mrb[0].mxu0 %v1692
    %v1856 = vpop.f32.mrb[0].mxu0
    %v1857 = vadd.f32 0.0, %v1856
    %v1858 = vpop.f32.mrb[0].mxu0
    %v1859 = vadd.f32 0.0, %v1858
    %v1860 = vpop.f32.mrb[0].mxu0
    %v1861 = vadd.f32 0.0, %v1860
    %v1862 = vpop.f32.mrb[0].mxu0
    %v1863 = vadd.f32 0.0, %v1862
    %1864 = vmatprep.mubr.bf16.mxu0 0
    %1865 = vmatmul.mubr.bf16.gmra.mrb[0].mxu0 %v1695
    %v1866 = vpop.f32.mrb[0].mxu0
    %v1867 = vadd.f32 0.0, %v1866
    %v1868 = vpop.f32.mrb[0].mxu0
    %v1869 = vadd.f32 0.0, %v1868
    %v1870 = vpop.f32.mrb[0].mxu0
    %v1871 = vadd.f32 0.0, %v1870
    %v1872 = vpop.f32.mrb[0].mxu0
    %v1873 = vadd.f32 0.0, %v1872
    %1874 = vmatprep.mubr.bf16.mxu0 0
    %1875 = vmatmul.mubr.bf16.gmra.mrb[0].mxu0 %v1698
    %v1876 = vpop.f32.mrb[0].mxu0
    %v1877 = vadd.f32 0.0, %v1876
    %v1878 = vpop.f32.mrb[0].mxu0
    %v1879 = vadd.f32 0.0, %v1878
    %v1880 = vpop.f32.mrb[0].mxu0
    %v1881 = vadd.f32 0.0, %v1880
    %v1882 = vpop.f32.mrb[0].mxu0
    %v1883 = vadd.f32 0.0, %v1882
    %1884 = vmatprep.mubr.bf16.mxu0 0
    %1885 = vmatmul.mubr.bf16.gmra.mrb[0].mxu0 %v1701
    %v1886 = vpop.f32.mrb[0].mxu0
    %v1887 = vadd.f32 0.0, %v1886
    %v1888 = vpop.f32.mrb[0].mxu0
    %v1889 = vadd.f32 0.0, %v1888
    %v1890 = vpop.f32.mrb[0].mxu0
    %v1891 = vadd.f32 0.0, %v1890
    %v1892 = vpop.f32.mrb[0].mxu0
    %v1893 = vadd.f32 0.0, %v1892
    %1894 = vmatprep.mubr.bf16.mxu0 0
    %1895 = vmatmul.mubr.bf16.gmra.mrb[0].mxu0 %v1704
    %v1896 = vpop.f32.mrb[0].mxu0
    %v1897 = vadd.f32 0.0, %v1896
    %v1898 = vpop.f32.mrb[0].mxu0
    %v1899 = vadd.f32 0.0, %v1898
    %v1900 = vpop.f32.mrb[0].mxu0
    %v1901 = vadd.f32 0.0, %v1900
    %v1902 = vpop.f32.mrb[0].mxu0
    %v1903 = vadd.f32 0.0, %v1902
    %1904 = vdwg.mxu0
    %1905 = vxpose.xlu0.c.b16.start [1/8] %v747, 128
    %1906 = vxpose.xlu0.c.b16.cont [2/8] 0, 128
    %1907 = vxpose.xlu0.c.b16.cont [3/8] 0, 128
    %1908 = vxpose.xlu0.c.b16.cont [4/8] 0, 128
    %1909 = vxpose.xlu0.c.b16.cont [5/8] 0, 128
    %1910 = vxpose.xlu0.c.b16.cont [6/8] 0, 128
    %1911 = vxpose.xlu0.c.b16.cont [7/8] 0, 128
    %1912 = vxpose.xlu0.c.b16.end [8/8] 0, 128
    %v1913 = vpop.trf.xlu0
    %v1914 = vpop.trf.xlu0
    %v1915 = vpop.trf.xlu0
    %v1916 = vpop.trf.xlu0
    %v1917 = vpop.trf.xlu0
    %v1918 = vpop.trf.xlu0
    %v1919 = vpop.trf.xlu0
    %v1920 = vpop.trf.xlu0
    %1921 = vxpose.xlu0.c.b16.start [1/8] %v748, 128
    %1922 = vxpose.xlu0.c.b16.cont [2/8] 0, 128
    %1923 = vxpose.xlu0.c.b16.cont [3/8] 0, 128
    %1924 = vxpose.xlu0.c.b16.cont [4/8] 0, 128
    %1925 = vxpose.xlu0.c.b16.cont [5/8] 0, 128
    %1926 = vxpose.xlu0.c.b16.cont [6/8] 0, 128
    %1927 = vxpose.xlu0.c.b16.cont [7/8] 0, 128
    %1928 = vxpose.xlu0.c.b16.end [8/8] 0, 128
    %v1929 = vpop.trf.xlu0
    %v1930 = vpop.trf.xlu0
    %v1931 = vpop.trf.xlu0
    %v1932 = vpop.trf.xlu0
    %v1933 = vpop.trf.xlu0
    %v1934 = vpop.trf.xlu0
    %v1935 = vpop.trf.xlu0
    %v1936 = vpop.trf.xlu0
    %v1938 = vsel %vm819, %v1913, 0
    %v1941 = vsel %vm819, %v1914, 0
    %v1944 = vsel %vm819, %v1915, 0
    %v1947 = vsel %vm819, %v1916, 0
    %v1950 = vsel %vm819, %v1917, 0
    %v1953 = vsel %vm819, %v1918, 0
    %v1956 = vsel %vm819, %v1919, 0
    %v1959 = vsel %vm819, %v1920, 0
    %v1962 = vsel %vm819, %v1929, 0
    %v1965 = vsel %vm819, %v1930, 0
    %v1968 = vsel %vm819, %v1931, 0
    %v1971 = vsel %vm819, %v1932, 0
    %v1974 = vsel %vm819, %v1933, 0
    %v1977 = vsel %vm819, %v1934, 0
    %v1980 = vsel %vm819, %v1935, 0
    %v1983 = vsel %vm819, %v1936, 0
    %v1986 = vsel %vm868, %v763, 0
    %v1989 = vsel %vm868, %v764, 0
    %1991 = vmatprep.subr.bf16.mxu0 %v1989
    %1992 = vmatpush1.bf16.msra.mxu0 %v1986
    %1993 = vmatprep.subr.bf16.mxu0 0
    %1994 = vmatpush1.bf16.msra.mxu0 0
    %1995 = vmatprep.subr.bf16.mxu0 0
    %1996 = vmatpush1.bf16.msra.mxu0 0
    %1997 = vmatprep.subr.bf16.mxu0 0
    %1998 = vmatpush1.bf16.msra.mxu0 0
    %1999 = vmatprep.subr.bf16.mxu0 0
    %2000 = vmatpush1.bf16.msra.mxu0 0
    %2001 = vmatprep.subr.bf16.mxu0 0
    %2002 = vmatpush1.bf16.msra.mxu0 0
    %2003 = vmatprep.subr.bf16.mxu0 0
    %2004 = vmatpush1.bf16.msra.mxu0 0
    %2005 = vmatprep.subr.bf16.mxu0 0
    %2006 = vmatpush1.bf16.msra.mxu0 0
    %2007 = vmatprep.subr.bf16.mxu0 0
    %2008 = vmatpush1.bf16.msra.mxu0 0
    %2009 = vmatprep.subr.bf16.mxu0 0
    %2010 = vmatpush1.bf16.msra.mxu0 0
    %2011 = vmatprep.subr.bf16.mxu0 0
    %2012 = vmatpush1.bf16.msra.mxu0 0
    %2013 = vmatprep.subr.bf16.mxu0 0
    %2014 = vmatpush1.bf16.msra.mxu0 0
    %2015 = vmatprep.subr.bf16.mxu0 0
    %2016 = vmatpush1.bf16.msra.mxu0 0
    %2017 = vmatprep.subr.bf16.mxu0 0
    %2018 = vmatpush1.bf16.msra.mxu0 0
    %2019 = vmatprep.subr.bf16.mxu0 0
    %2020 = vmatpush1.bf16.msra.mxu0 0
    %2021 = vmatprep.subr.bf16.mxu0 0
    %2022 = vmatpush1.bf16.msra.mxu0 0
    %2023 = vmatprep.mubr.bf16.mxu0 0
    %2024 = vmatmul.mubr.bf16.gmra.mrb[0].mxu0 %v1938
    %v2025 = vpop.f32.mrb[0].mxu0
    %v2026 = vadd.f32 0.0, %v2025
    %v2027 = vpop.f32.mrb[0].mxu0
    %v2028 = vadd.f32 0.0, %v2027
    %v2029 = vpop.f32.mrb[0].mxu0
    %v2030 = vadd.f32 0.0, %v2029
    %v2031 = vpop.f32.mrb[0].mxu0
    %v2032 = vadd.f32 0.0, %v2031
    %2033 = vmatprep.mubr.bf16.mxu0 0
    %2034 = vmatmul.mubr.bf16.gmra.mrb[0].mxu0 %v1941
    %v2035 = vpop.f32.mrb[0].mxu0
    %v2036 = vadd.f32 0.0, %v2035
    %v2037 = vpop.f32.mrb[0].mxu0
    %v2038 = vadd.f32 0.0, %v2037
    %v2039 = vpop.f32.mrb[0].mxu0
    %v2040 = vadd.f32 0.0, %v2039
    %v2041 = vpop.f32.mrb[0].mxu0
    %v2042 = vadd.f32 0.0, %v2041
    %2043 = vmatprep.mubr.bf16.mxu0 0
    %2044 = vmatmul.mubr.bf16.gmra.mrb[0].mxu0 %v1944
    %v2045 = vpop.f32.mrb[0].mxu0
    %v2046 = vadd.f32 0.0, %v2045
    %v2047 = vpop.f32.mrb[0].mxu0
    %v2048 = vadd.f32 0.0, %v2047
    %v2049 = vpop.f32.mrb[0].mxu0
    %v2050 = vadd.f32 0.0, %v2049
    %v2051 = vpop.f32.mrb[0].mxu0
    %v2052 = vadd.f32 0.0, %v2051
    %2053 = vmatprep.mubr.bf16.mxu0 0
    %2054 = vmatmul.mubr.bf16.gmra.mrb[0].mxu0 %v1947
    %v2055 = vpop.f32.mrb[0].mxu0
    %v2056 = vadd.f32 0.0, %v2055
    %v2057 = vpop.f32.mrb[0].mxu0
    %v2058 = vadd.f32 0.0, %v2057
    %v2059 = vpop.f32.mrb[0].mxu0
    %v2060 = vadd.f32 0.0, %v2059
    %v2061 = vpop.f32.mrb[0].mxu0
    %v2062 = vadd.f32 0.0, %v2061
    %2063 = vmatprep.mubr.bf16.mxu0 0
    %2064 = vmatmul.mubr.bf16.gmra.mrb[0].mxu0 %v1950
    %v2065 = vpop.f32.mrb[0].mxu0
    %v2066 = vadd.f32 0.0, %v2065
    %v2067 = vpop.f32.mrb[0].mxu0
    %v2068 = vadd.f32 0.0, %v2067
    %v2069 = vpop.f32.mrb[0].mxu0
    %v2070 = vadd.f32 0.0, %v2069
    %v2071 = vpop.f32.mrb[0].mxu0
    %v2072 = vadd.f32 0.0, %v2071
    %2073 = vmatprep.mubr.bf16.mxu0 0
    %2074 = vmatmul.mubr.bf16.gmra.mrb[0].mxu0 %v1953
    %v2075 = vpop.f32.mrb[0].mxu0
    %v2076 = vadd.f32 0.0, %v2075
    %v2077 = vpop.f32.mrb[0].mxu0
    %v2078 = vadd.f32 0.0, %v2077
    %v2079 = vpop.f32.mrb[0].mxu0
    %v2080 = vadd.f32 0.0, %v2079
    %v2081 = vpop.f32.mrb[0].mxu0
    %v2082 = vadd.f32 0.0, %v2081
    %2083 = vmatprep.mubr.bf16.mxu0 0
    %2084 = vmatmul.mubr.bf16.gmra.mrb[0].mxu0 %v1956
    %v2085 = vpop.f32.mrb[0].mxu0
    %v2086 = vadd.f32 0.0, %v2085
    %v2087 = vpop.f32.mrb[0].mxu0
    %v2088 = vadd.f32 0.0, %v2087
    %v2089 = vpop.f32.mrb[0].mxu0
    %v2090 = vadd.f32 0.0, %v2089
    %v2091 = vpop.f32.mrb[0].mxu0
    %v2092 = vadd.f32 0.0, %v2091
    %2093 = vmatprep.mubr.bf16.mxu0 0
    %2094 = vmatmul.mubr.bf16.gmra.mrb[0].mxu0 %v1959
    %v2095 = vpop.f32.mrb[0].mxu0
    %v2096 = vadd.f32 0.0, %v2095
    %v2097 = vpop.f32.mrb[0].mxu0
    %v2098 = vadd.f32 0.0, %v2097
    %v2099 = vpop.f32.mrb[0].mxu0
    %v2100 = vadd.f32 0.0, %v2099
    %v2101 = vpop.f32.mrb[0].mxu0
    %v2102 = vadd.f32 0.0, %v2101
    %2103 = vmatprep.mubr.bf16.mxu0 0
    %2104 = vmatmul.mubr.bf16.gmra.mrb[0].mxu0 %v1962
    %v2105 = vpop.f32.mrb[0].mxu0
    %v2106 = vadd.f32 0.0, %v2105
    %v2107 = vpop.f32.mrb[0].mxu0
    %v2108 = vadd.f32 0.0, %v2107
    %v2109 = vpop.f32.mrb[0].mxu0
    %v2110 = vadd.f32 0.0, %v2109
    %v2111 = vpop.f32.mrb[0].mxu0
    %v2112 = vadd.f32 0.0, %v2111
    %2113 = vmatprep.mubr.bf16.mxu0 0
    %2114 = vmatmul.mubr.bf16.gmra.mrb[0].mxu0 %v1965
    %v2115 = vpop.f32.mrb[0].mxu0
    %v2116 = vadd.f32 0.0, %v2115
    %v2117 = vpop.f32.mrb[0].mxu0
    %v2118 = vadd.f32 0.0, %v2117
    %v2119 = vpop.f32.mrb[0].mxu0
    %v2120 = vadd.f32 0.0, %v2119
    %v2121 = vpop.f32.mrb[0].mxu0
    %v2122 = vadd.f32 0.0, %v2121
    %2123 = vmatprep.mubr.bf16.mxu0 0
    %2124 = vmatmul.mubr.bf16.gmra.mrb[0].mxu0 %v1968
    %v2125 = vpop.f32.mrb[0].mxu0
    %v2126 = vadd.f32 0.0, %v2125
    %v2127 = vpop.f32.mrb[0].mxu0
    %v2128 = vadd.f32 0.0, %v2127
    %v2129 = vpop.f32.mrb[0].mxu0
    %v2130 = vadd.f32 0.0, %v2129
    %v2131 = vpop.f32.mrb[0].mxu0
    %v2132 = vadd.f32 0.0, %v2131
    %2133 = vmatprep.mubr.bf16.mxu0 0
    %2134 = vmatmul.mubr.bf16.gmra.mrb[0].mxu0 %v1971
    %v2135 = vpop.f32.mrb[0].mxu0
    %v2136 = vadd.f32 0.0, %v2135
    %v2137 = vpop.f32.mrb[0].mxu0
    %v2138 = vadd.f32 0.0, %v2137
    %v2139 = vpop.f32.mrb[0].mxu0
    %v2140 = vadd.f32 0.0, %v2139
    %v2141 = vpop.f32.mrb[0].mxu0
    %v2142 = vadd.f32 0.0, %v2141
    %2143 = vmatprep.mubr.bf16.mxu0 0
    %2144 = vmatmul.mubr.bf16.gmra.mrb[0].mxu0 %v1974
    %v2145 = vpop.f32.mrb[0].mxu0
    %v2146 = vadd.f32 0.0, %v2145
    %v2147 = vpop.f32.mrb[0].mxu0
    %v2148 = vadd.f32 0.0, %v2147
    %v2149 = vpop.f32.mrb[0].mxu0
    %v2150 = vadd.f32 0.0, %v2149
    %v2151 = vpop.f32.mrb[0].mxu0
    %v2152 = vadd.f32 0.0, %v2151
    %2153 = vmatprep.mubr.bf16.mxu0 0
    %2154 = vmatmul.mubr.bf16.gmra.mrb[0].mxu0 %v1977
    %v2155 = vpop.f32.mrb[0].mxu0
    %v2156 = vadd.f32 0.0, %v2155
    %v2157 = vpop.f32.mrb[0].mxu0
    %v2158 = vadd.f32 0.0, %v2157
    %v2159 = vpop.f32.mrb[0].mxu0
    %v2160 = vadd.f32 0.0, %v2159
    %v2161 = vpop.f32.mrb[0].mxu0
    %v2162 = vadd.f32 0.0, %v2161
    %2163 = vmatprep.mubr.bf16.mxu0 0
    %2164 = vmatmul.mubr.bf16.gmra.mrb[0].mxu0 %v1980
    %v2165 = vpop.f32.mrb[0].mxu0
    %v2166 = vadd.f32 0.0, %v2165
    %v2167 = vpop.f32.mrb[0].mxu0
    %v2168 = vadd.f32 0.0, %v2167
    %v2169 = vpop.f32.mrb[0].mxu0
    %v2170 = vadd.f32 0.0, %v2169
    %v2171 = vpop.f32.mrb[0].mxu0
    %v2172 = vadd.f32 0.0, %v2171
    %2173 = vmatprep.mubr.bf16.mxu0 0
    %2174 = vmatmul.mubr.bf16.gmra.mrb[0].mxu0 %v1983
    %v2175 = vpop.f32.mrb[0].mxu0
    %v2176 = vadd.f32 0.0, %v2175
    %v2177 = vpop.f32.mrb[0].mxu0
    %v2178 = vadd.f32 0.0, %v2177
    %v2179 = vpop.f32.mrb[0].mxu0
    %v2180 = vadd.f32 0.0, %v2179
    %v2181 = vpop.f32.mrb[0].mxu0
    %v2182 = vadd.f32 0.0, %v2181
    %2183 = vdwg.mxu0
    %2184 = vxpose.xlu0.c.b16.start [1/8] %v749, 128
    %2185 = vxpose.xlu0.c.b16.cont [2/8] 0, 128
    %2186 = vxpose.xlu0.c.b16.cont [3/8] 0, 128
    %2187 = vxpose.xlu0.c.b16.cont [4/8] 0, 128
    %2188 = vxpose.xlu0.c.b16.cont [5/8] 0, 128
    %2189 = vxpose.xlu0.c.b16.cont [6/8] 0, 128
    %2190 = vxpose.xlu0.c.b16.cont [7/8] 0, 128
    %2191 = vxpose.xlu0.c.b16.end [8/8] 0, 128
    %v2192 = vpop.trf.xlu0
    %v2193 = vpop.trf.xlu0
    %v2194 = vpop.trf.xlu0
    %v2195 = vpop.trf.xlu0
    %v2196 = vpop.trf.xlu0
    %v2197 = vpop.trf.xlu0
    %v2198 = vpop.trf.xlu0
    %v2199 = vpop.trf.xlu0
    %2200 = vxpose.xlu0.c.b16.start [1/8] %v750, 128
    %2201 = vxpose.xlu0.c.b16.cont [2/8] 0, 128
    %2202 = vxpose.xlu0.c.b16.cont [3/8] 0, 128
    %2203 = vxpose.xlu0.c.b16.cont [4/8] 0, 128
    %2204 = vxpose.xlu0.c.b16.cont [5/8] 0, 128
    %2205 = vxpose.xlu0.c.b16.cont [6/8] 0, 128
    %2206 = vxpose.xlu0.c.b16.cont [7/8] 0, 128
    %2207 = vxpose.xlu0.c.b16.end [8/8] 0, 128
    %v2208 = vpop.trf.xlu0
    %v2209 = vpop.trf.xlu0
    %v2210 = vpop.trf.xlu0
    %v2211 = vpop.trf.xlu0
    %v2212 = vpop.trf.xlu0
    %v2213 = vpop.trf.xlu0
    %v2214 = vpop.trf.xlu0
    %v2215 = vpop.trf.xlu0
    %v2217 = vsel %vm819, %v2192, 0
    %v2220 = vsel %vm819, %v2193, 0
    %v2223 = vsel %vm819, %v2194, 0
    %v2226 = vsel %vm819, %v2195, 0
    %v2229 = vsel %vm819, %v2196, 0
    %v2232 = vsel %vm819, %v2197, 0
    %v2235 = vsel %vm819, %v2198, 0
    %v2238 = vsel %vm819, %v2199, 0
    %v2241 = vsel %vm819, %v2208, 0
    %v2244 = vsel %vm819, %v2209, 0
    %v2247 = vsel %vm819, %v2210, 0
    %v2250 = vsel %vm819, %v2211, 0
    %v2253 = vsel %vm819, %v2212, 0
    %v2256 = vsel %vm819, %v2213, 0
    %v2259 = vsel %vm819, %v2214, 0
    %v2262 = vsel %vm819, %v2215, 0
    %v2265 = vsel %vm868, %v765, 0
    %v2268 = vsel %vm868, %v766, 0
    %2270 = vmatprep.subr.bf16.mxu0 %v2268
    %2271 = vmatpush1.bf16.msra.mxu0 %v2265
    %2272 = vmatprep.subr.bf16.mxu0 0
    %2273 = vmatpush1.bf16.msra.mxu0 0
    %2274 = vmatprep.subr.bf16.mxu0 0
    %2275 = vmatpush1.bf16.msra.mxu0 0
    %2276 = vmatprep.subr.bf16.mxu0 0
    %2277 = vmatpush1.bf16.msra.mxu0 0
    %2278 = vmatprep.subr.bf16.mxu0 0
    %2279 = vmatpush1.bf16.msra.mxu0 0
    %2280 = vmatprep.subr.bf16.mxu0 0
    %2281 = vmatpush1.bf16.msra.mxu0 0
    %2282 = vmatprep.subr.bf16.mxu0 0
    %2283 = vmatpush1.bf16.msra.mxu0 0
    %2284 = vmatprep.subr.bf16.mxu0 0
    %2285 = vmatpush1.bf16.msra.mxu0 0
    %2286 = vmatprep.subr.bf16.mxu0 0
    %2287 = vmatpush1.bf16.msra.mxu0 0
    %2288 = vmatprep.subr.bf16.mxu0 0
    %2289 = vmatpush1.bf16.msra.mxu0 0
    %2290 = vmatprep.subr.bf16.mxu0 0
    %2291 = vmatpush1.bf16.msra.mxu0 0
    %2292 = vmatprep.subr.bf16.mxu0 0
    %2293 = vmatpush1.bf16.msra.mxu0 0
    %2294 = vmatprep.subr.bf16.mxu0 0
    %2295 = vmatpush1.bf16.msra.mxu0 0
    %2296 = vmatprep.subr.bf16.mxu0 0
    %2297 = vmatpush1.bf16.msra.mxu0 0
    %2298 = vmatprep.subr.bf16.mxu0 0
    %2299 = vmatpush1.bf16.msra.mxu0 0
    %2300 = vmatprep.subr.bf16.mxu0 0
    %2301 = vmatpush1.bf16.msra.mxu0 0
    %2302 = vmatprep.mubr.bf16.mxu0 0
    %2303 = vmatmul.mubr.bf16.gmra.mrb[0].mxu0 %v2217
    %v2304 = vpop.f32.mrb[0].mxu0
    %v2305 = vadd.f32 0.0, %v2304
    %v2306 = vpop.f32.mrb[0].mxu0
    %v2307 = vadd.f32 0.0, %v2306
    %v2308 = vpop.f32.mrb[0].mxu0
    %v2309 = vadd.f32 0.0, %v2308
    %v2310 = vpop.f32.mrb[0].mxu0
    %v2311 = vadd.f32 0.0, %v2310
    %2312 = vmatprep.mubr.bf16.mxu0 0
    %2313 = vmatmul.mubr.bf16.gmra.mrb[0].mxu0 %v2220
    %v2314 = vpop.f32.mrb[0].mxu0
    %v2315 = vadd.f32 0.0, %v2314
    %v2316 = vpop.f32.mrb[0].mxu0
    %v2317 = vadd.f32 0.0, %v2316
    %v2318 = vpop.f32.mrb[0].mxu0
    %v2319 = vadd.f32 0.0, %v2318
    %v2320 = vpop.f32.mrb[0].mxu0
    %v2321 = vadd.f32 0.0, %v2320
    %2322 = vmatprep.mubr.bf16.mxu0 0
    %2323 = vmatmul.mubr.bf16.gmra.mrb[0].mxu0 %v2223
    %v2324 = vpop.f32.mrb[0].mxu0
    %v2325 = vadd.f32 0.0, %v2324
    %v2326 = vpop.f32.mrb[0].mxu0
    %v2327 = vadd.f32 0.0, %v2326
    %v2328 = vpop.f32.mrb[0].mxu0
    %v2329 = vadd.f32 0.0, %v2328
    %v2330 = vpop.f32.mrb[0].mxu0
    %v2331 = vadd.f32 0.0, %v2330
    %2332 = vmatprep.mubr.bf16.mxu0 0
    %2333 = vmatmul.mubr.bf16.gmra.mrb[0].mxu0 %v2226
    %v2334 = vpop.f32.mrb[0].mxu0
    %v2335 = vadd.f32 0.0, %v2334
    %v2336 = vpop.f32.mrb[0].mxu0
    %v2337 = vadd.f32 0.0, %v2336
    %v2338 = vpop.f32.mrb[0].mxu0
    %v2339 = vadd.f32 0.0, %v2338
    %v2340 = vpop.f32.mrb[0].mxu0
    %v2341 = vadd.f32 0.0, %v2340
    %2342 = vmatprep.mubr.bf16.mxu0 0
    %2343 = vmatmul.mubr.bf16.gmra.mrb[0].mxu0 %v2229
    %v2344 = vpop.f32.mrb[0].mxu0
    %v2345 = vadd.f32 0.0, %v2344
    %v2346 = vpop.f32.mrb[0].mxu0
    %v2347 = vadd.f32 0.0, %v2346
    %v2348 = vpop.f32.mrb[0].mxu0
    %v2349 = vadd.f32 0.0, %v2348
    %v2350 = vpop.f32.mrb[0].mxu0
    %v2351 = vadd.f32 0.0, %v2350
    %2352 = vmatprep.mubr.bf16.mxu0 0
    %2353 = vmatmul.mubr.bf16.gmra.mrb[0].mxu0 %v2232
    %v2354 = vpop.f32.mrb[0].mxu0
    %v2355 = vadd.f32 0.0, %v2354
    %v2356 = vpop.f32.mrb[0].mxu0
    %v2357 = vadd.f32 0.0, %v2356
    %v2358 = vpop.f32.mrb[0].mxu0
    %v2359 = vadd.f32 0.0, %v2358
    %v2360 = vpop.f32.mrb[0].mxu0
    %v2361 = vadd.f32 0.0, %v2360
    %2362 = vmatprep.mubr.bf16.mxu0 0
    %2363 = vmatmul.mubr.bf16.gmra.mrb[0].mxu0 %v2235
    %v2364 = vpop.f32.mrb[0].mxu0
    %v2365 = vadd.f32 0.0, %v2364
    %v2366 = vpop.f32.mrb[0].mxu0
    %v2367 = vadd.f32 0.0, %v2366
    %v2368 = vpop.f32.mrb[0].mxu0
    %v2369 = vadd.f32 0.0, %v2368
    %v2370 = vpop.f32.mrb[0].mxu0
    %v2371 = vadd.f32 0.0, %v2370
    %2372 = vmatprep.mubr.bf16.mxu0 0
    %2373 = vmatmul.mubr.bf16.gmra.mrb[0].mxu0 %v2238
    %v2374 = vpop.f32.mrb[0].mxu0
    %v2375 = vadd.f32 0.0, %v2374
    %v2376 = vpop.f32.mrb[0].mxu0
    %v2377 = vadd.f32 0.0, %v2376
    %v2378 = vpop.f32.mrb[0].mxu0
    %v2379 = vadd.f32 0.0, %v2378
    %v2380 = vpop.f32.mrb[0].mxu0
    %v2381 = vadd.f32 0.0, %v2380
    %2382 = vmatprep.mubr.bf16.mxu0 0
    %2383 = vmatmul.mubr.bf16.gmra.mrb[0].mxu0 %v2241
    %v2384 = vpop.f32.mrb[0].mxu0
    %v2385 = vadd.f32 0.0, %v2384
    %v2386 = vpop.f32.mrb[0].mxu0
    %v2387 = vadd.f32 0.0, %v2386
    %v2388 = vpop.f32.mrb[0].mxu0
    %v2389 = vadd.f32 0.0, %v2388
    %v2390 = vpop.f32.mrb[0].mxu0
    %v2391 = vadd.f32 0.0, %v2390
    %2392 = vmatprep.mubr.bf16.mxu0 0
    %2393 = vmatmul.mubr.bf16.gmra.mrb[0].mxu0 %v2244
    %v2394 = vpop.f32.mrb[0].mxu0
    %v2395 = vadd.f32 0.0, %v2394
    %v2396 = vpop.f32.mrb[0].mxu0
    %v2397 = vadd.f32 0.0, %v2396
    %v2398 = vpop.f32.mrb[0].mxu0
    %v2399 = vadd.f32 0.0, %v2398
    %v2400 = vpop.f32.mrb[0].mxu0
    %v2401 = vadd.f32 0.0, %v2400
    %2402 = vmatprep.mubr.bf16.mxu0 0
    %2403 = vmatmul.mubr.bf16.gmra.mrb[0].mxu0 %v2247
    %v2404 = vpop.f32.mrb[0].mxu0
    %v2405 = vadd.f32 0.0, %v2404
    %v2406 = vpop.f32.mrb[0].mxu0
    %v2407 = vadd.f32 0.0, %v2406
    %v2408 = vpop.f32.mrb[0].mxu0
    %v2409 = vadd.f32 0.0, %v2408
    %v2410 = vpop.f32.mrb[0].mxu0
    %v2411 = vadd.f32 0.0, %v2410
    %2412 = vmatprep.mubr.bf16.mxu0 0
    %2413 = vmatmul.mubr.bf16.gmra.mrb[0].mxu0 %v2250
    %v2414 = vpop.f32.mrb[0].mxu0
    %v2415 = vadd.f32 0.0, %v2414
    %v2416 = vpop.f32.mrb[0].mxu0
    %v2417 = vadd.f32 0.0, %v2416
    %v2418 = vpop.f32.mrb[0].mxu0
    %v2419 = vadd.f32 0.0, %v2418
    %v2420 = vpop.f32.mrb[0].mxu0
    %v2421 = vadd.f32 0.0, %v2420
    %2422 = vmatprep.mubr.bf16.mxu0 0
    %2423 = vmatmul.mubr.bf16.gmra.mrb[0].mxu0 %v2253
    %v2424 = vpop.f32.mrb[0].mxu0
    %v2425 = vadd.f32 0.0, %v2424
    %v2426 = vpop.f32.mrb[0].mxu0
    %v2427 = vadd.f32 0.0, %v2426
    %v2428 = vpop.f32.mrb[0].mxu0
    %v2429 = vadd.f32 0.0, %v2428
    %v2430 = vpop.f32.mrb[0].mxu0
    %v2431 = vadd.f32 0.0, %v2430
    %2432 = vmatprep.mubr.bf16.mxu0 0
    %2433 = vmatmul.mubr.bf16.gmra.mrb[0].mxu0 %v2256
    %v2434 = vpop.f32.mrb[0].mxu0
    %v2435 = vadd.f32 0.0, %v2434
    %v2436 = vpop.f32.mrb[0].mxu0
    %v2437 = vadd.f32 0.0, %v2436
    %v2438 = vpop.f32.mrb[0].mxu0
    %v2439 = vadd.f32 0.0, %v2438
    %v2440 = vpop.f32.mrb[0].mxu0
    %v2441 = vadd.f32 0.0, %v2440
    %2442 = vmatprep.mubr.bf16.mxu0 0
    %2443 = vmatmul.mubr.bf16.gmra.mrb[0].mxu0 %v2259
    %v2444 = vpop.f32.mrb[0].mxu0
    %v2445 = vadd.f32 0.0, %v2444
    %v2446 = vpop.f32.mrb[0].mxu0
    %v2447 = vadd.f32 0.0, %v2446
    %v2448 = vpop.f32.mrb[0].mxu0
    %v2449 = vadd.f32 0.0, %v2448
    %v2450 = vpop.f32.mrb[0].mxu0
    %v2451 = vadd.f32 0.0, %v2450
    %2452 = vmatprep.mubr.bf16.mxu0 0
    %2453 = vmatmul.mubr.bf16.gmra.mrb[0].mxu0 %v2262
    %v2454 = vpop.f32.mrb[0].mxu0
    %v2455 = vadd.f32 0.0, %v2454
    %v2456 = vpop.f32.mrb[0].mxu0
    %v2457 = vadd.f32 0.0, %v2456
    %v2458 = vpop.f32.mrb[0].mxu0
    %v2459 = vadd.f32 0.0, %v2458
    %v2460 = vpop.f32.mrb[0].mxu0
    %v2461 = vadd.f32 0.0, %v2460
    %2462 = vdwg.mxu0
    %2463 = vxpose.xlu0.c.b16.start [1/8] %v751, 128
    %2464 = vxpose.xlu0.c.b16.cont [2/8] 0, 128
    %2465 = vxpose.xlu0.c.b16.cont [3/8] 0, 128
    %2466 = vxpose.xlu0.c.b16.cont [4/8] 0, 128
    %2467 = vxpose.xlu0.c.b16.cont [5/8] 0, 128
    %2468 = vxpose.xlu0.c.b16.cont [6/8] 0, 128
    %2469 = vxpose.xlu0.c.b16.cont [7/8] 0, 128
    %2470 = vxpose.xlu0.c.b16.end [8/8] 0, 128
    %v2471 = vpop.trf.xlu0
    %v2472 = vpop.trf.xlu0
    %v2473 = vpop.trf.xlu0
    %v2474 = vpop.trf.xlu0
    %v2475 = vpop.trf.xlu0
    %v2476 = vpop.trf.xlu0
    %v2477 = vpop.trf.xlu0
    %v2478 = vpop.trf.xlu0
    %2479 = vxpose.xlu0.c.b16.start [1/8] %v752, 128
    %2480 = vxpose.xlu0.c.b16.cont [2/8] 0, 128
    %2481 = vxpose.xlu0.c.b16.cont [3/8] 0, 128
    %2482 = vxpose.xlu0.c.b16.cont [4/8] 0, 128
    %2483 = vxpose.xlu0.c.b16.cont [5/8] 0, 128
    %2484 = vxpose.xlu0.c.b16.cont [6/8] 0, 128
    %2485 = vxpose.xlu0.c.b16.cont [7/8] 0, 128
    %2486 = vxpose.xlu0.c.b16.end [8/8] 0, 128
    %v2487 = vpop.trf.xlu0
    %v2488 = vpop.trf.xlu0
    %v2489 = vpop.trf.xlu0
    %v2490 = vpop.trf.xlu0
    %v2491 = vpop.trf.xlu0
    %v2492 = vpop.trf.xlu0
    %v2493 = vpop.trf.xlu0
    %v2494 = vpop.trf.xlu0
    %v2496 = vsel %vm819, %v2471, 0
    %v2499 = vsel %vm819, %v2472, 0
    %v2502 = vsel %vm819, %v2473, 0
    %v2505 = vsel %vm819, %v2474, 0
    %v2508 = vsel %vm819, %v2475, 0
    %v2511 = vsel %vm819, %v2476, 0
    %v2514 = vsel %vm819, %v2477, 0
    %v2517 = vsel %vm819, %v2478, 0
    %v2520 = vsel %vm819, %v2487, 0
    %v2523 = vsel %vm819, %v2488, 0
    %v2526 = vsel %vm819, %v2489, 0
    %v2529 = vsel %vm819, %v2490, 0
    %v2532 = vsel %vm819, %v2491, 0
    %v2535 = vsel %vm819, %v2492, 0
    %v2538 = vsel %vm819, %v2493, 0
    %v2541 = vsel %vm819, %v2494, 0
    %v2544 = vsel %vm868, %v767, 0
    %v2547 = vsel %vm868, %v768, 0
    %2549 = vmatprep.subr.bf16.mxu0 %v2547
    %2550 = vmatpush1.bf16.msra.mxu0 %v2544
    %2551 = vmatprep.subr.bf16.mxu0 0
    %2552 = vmatpush1.bf16.msra.mxu0 0
    %2553 = vmatprep.subr.bf16.mxu0 0
    %2554 = vmatpush1.bf16.msra.mxu0 0
    %2555 = vmatprep.subr.bf16.mxu0 0
    %2556 = vmatpush1.bf16.msra.mxu0 0
    %2557 = vmatprep.subr.bf16.mxu0 0
    %2558 = vmatpush1.bf16.msra.mxu0 0
    %2559 = vmatprep.subr.bf16.mxu0 0
    %2560 = vmatpush1.bf16.msra.mxu0 0
    %2561 = vmatprep.subr.bf16.mxu0 0
    %2562 = vmatpush1.bf16.msra.mxu0 0
    %2563 = vmatprep.subr.bf16.mxu0 0
    %2564 = vmatpush1.bf16.msra.mxu0 0
    %2565 = vmatprep.subr.bf16.mxu0 0
    %2566 = vmatpush1.bf16.msra.mxu0 0
    %2567 = vmatprep.subr.bf16.mxu0 0
    %2568 = vmatpush1.bf16.msra.mxu0 0
    %2569 = vmatprep.subr.bf16.mxu0 0
    %2570 = vmatpush1.bf16.msra.mxu0 0
    %2571 = vmatprep.subr.bf16.mxu0 0
    %2572 = vmatpush1.bf16.msra.mxu0 0
    %2573 = vmatprep.subr.bf16.mxu0 0
    %2574 = vmatpush1.bf16.msra.mxu0 0
    %2575 = vmatprep.subr.bf16.mxu0 0
    %2576 = vmatpush1.bf16.msra.mxu0 0
    %2577 = vmatprep.subr.bf16.mxu0 0
    %2578 = vmatpush1.bf16.msra.mxu0 0
    %2579 = vmatprep.subr.bf16.mxu0 0
    %2580 = vmatpush1.bf16.msra.mxu0 0
    %2581 = vmatprep.mubr.bf16.mxu0 0
    %2582 = vmatmul.mubr.bf16.gmra.mrb[0].mxu0 %v2496
    %v2583 = vpop.f32.mrb[0].mxu0
    %v2584 = vadd.f32 0.0, %v2583
    %v2585 = vpop.f32.mrb[0].mxu0
    %v2586 = vadd.f32 0.0, %v2585
    %v2587 = vpop.f32.mrb[0].mxu0
    %v2588 = vadd.f32 0.0, %v2587
    %v2589 = vpop.f32.mrb[0].mxu0
    %v2590 = vadd.f32 0.0, %v2589
    %2591 = vmatprep.mubr.bf16.mxu0 0
    %2592 = vmatmul.mubr.bf16.gmra.mrb[0].mxu0 %v2499
    %v2593 = vpop.f32.mrb[0].mxu0
    %v2594 = vadd.f32 0.0, %v2593
    %v2595 = vpop.f32.mrb[0].mxu0
    %v2596 = vadd.f32 0.0, %v2595
    %v2597 = vpop.f32.mrb[0].mxu0
    %v2598 = vadd.f32 0.0, %v2597
    %v2599 = vpop.f32.mrb[0].mxu0
    %v2600 = vadd.f32 0.0, %v2599
    %2601 = vmatprep.mubr.bf16.mxu0 0
    %2602 = vmatmul.mubr.bf16.gmra.mrb[0].mxu0 %v2502
    %v2603 = vpop.f32.mrb[0].mxu0
    %v2604 = vadd.f32 0.0, %v2603
    %v2605 = vpop.f32.mrb[0].mxu0
    %v2606 = vadd.f32 0.0, %v2605
    %v2607 = vpop.f32.mrb[0].mxu0
    %v2608 = vadd.f32 0.0, %v2607
    %v2609 = vpop.f32.mrb[0].mxu0
    %v2610 = vadd.f32 0.0, %v2609
    %2611 = vmatprep.mubr.bf16.mxu0 0
    %2612 = vmatmul.mubr.bf16.gmra.mrb[0].mxu0 %v2505
    %v2613 = vpop.f32.mrb[0].mxu0
    %v2614 = vadd.f32 0.0, %v2613
    %v2615 = vpop.f32.mrb[0].mxu0
    %v2616 = vadd.f32 0.0, %v2615
    %v2617 = vpop.f32.mrb[0].mxu0
    %v2618 = vadd.f32 0.0, %v2617
    %v2619 = vpop.f32.mrb[0].mxu0
    %v2620 = vadd.f32 0.0, %v2619
    %2621 = vmatprep.mubr.bf16.mxu0 0
    %2622 = vmatmul.mubr.bf16.gmra.mrb[0].mxu0 %v2508
    %v2623 = vpop.f32.mrb[0].mxu0
    %v2624 = vadd.f32 0.0, %v2623
    %v2625 = vpop.f32.mrb[0].mxu0
    %v2626 = vadd.f32 0.0, %v2625
    %v2627 = vpop.f32.mrb[0].mxu0
    %v2628 = vadd.f32 0.0, %v2627
    %v2629 = vpop.f32.mrb[0].mxu0
    %v2630 = vadd.f32 0.0, %v2629
    %2631 = vmatprep.mubr.bf16.mxu0 0
    %2632 = vmatmul.mubr.bf16.gmra.mrb[0].mxu0 %v2511
    %v2633 = vpop.f32.mrb[0].mxu0
    %v2634 = vadd.f32 0.0, %v2633
    %v2635 = vpop.f32.mrb[0].mxu0
    %v2636 = vadd.f32 0.0, %v2635
    %v2637 = vpop.f32.mrb[0].mxu0
    %v2638 = vadd.f32 0.0, %v2637
    %v2639 = vpop.f32.mrb[0].mxu0
    %v2640 = vadd.f32 0.0, %v2639
    %2641 = vmatprep.mubr.bf16.mxu0 0
    %2642 = vmatmul.mubr.bf16.gmra.mrb[0].mxu0 %v2514
    %v2643 = vpop.f32.mrb[0].mxu0
    %v2644 = vadd.f32 0.0, %v2643
    %v2645 = vpop.f32.mrb[0].mxu0
    %v2646 = vadd.f32 0.0, %v2645
    %v2647 = vpop.f32.mrb[0].mxu0
    %v2648 = vadd.f32 0.0, %v2647
    %v2649 = vpop.f32.mrb[0].mxu0
    %v2650 = vadd.f32 0.0, %v2649
    %2651 = vmatprep.mubr.bf16.mxu0 0
    %2652 = vmatmul.mubr.bf16.gmra.mrb[0].mxu0 %v2517
    %v2653 = vpop.f32.mrb[0].mxu0
    %v2654 = vadd.f32 0.0, %v2653
    %v2655 = vpop.f32.mrb[0].mxu0
    %v2656 = vadd.f32 0.0, %v2655
    %v2657 = vpop.f32.mrb[0].mxu0
    %v2658 = vadd.f32 0.0, %v2657
    %v2659 = vpop.f32.mrb[0].mxu0
    %v2660 = vadd.f32 0.0, %v2659
    %2661 = vmatprep.mubr.bf16.mxu0 0
    %2662 = vmatmul.mubr.bf16.gmra.mrb[0].mxu0 %v2520
    %v2663 = vpop.f32.mrb[0].mxu0
    %v2664 = vadd.f32 0.0, %v2663
    %v2665 = vpop.f32.mrb[0].mxu0
    %v2666 = vadd.f32 0.0, %v2665
    %v2667 = vpop.f32.mrb[0].mxu0
    %v2668 = vadd.f32 0.0, %v2667
    %v2669 = vpop.f32.mrb[0].mxu0
    %v2670 = vadd.f32 0.0, %v2669
    %2671 = vmatprep.mubr.bf16.mxu0 0
    %2672 = vmatmul.mubr.bf16.gmra.mrb[0].mxu0 %v2523
    %v2673 = vpop.f32.mrb[0].mxu0
    %v2674 = vadd.f32 0.0, %v2673
    %v2675 = vpop.f32.mrb[0].mxu0
    %v2676 = vadd.f32 0.0, %v2675
    %v2677 = vpop.f32.mrb[0].mxu0
    %v2678 = vadd.f32 0.0, %v2677
    %v2679 = vpop.f32.mrb[0].mxu0
    %v2680 = vadd.f32 0.0, %v2679
    %2681 = vmatprep.mubr.bf16.mxu0 0
    %2682 = vmatmul.mubr.bf16.gmra.mrb[0].mxu0 %v2526
    %v2683 = vpop.f32.mrb[0].mxu0
    %v2684 = vadd.f32 0.0, %v2683
    %v2685 = vpop.f32.mrb[0].mxu0
    %v2686 = vadd.f32 0.0, %v2685
    %v2687 = vpop.f32.mrb[0].mxu0
    %v2688 = vadd.f32 0.0, %v2687
    %v2689 = vpop.f32.mrb[0].mxu0
    %v2690 = vadd.f32 0.0, %v2689
    %2691 = vmatprep.mubr.bf16.mxu0 0
    %2692 = vmatmul.mubr.bf16.gmra.mrb[0].mxu0 %v2529
    %v2693 = vpop.f32.mrb[0].mxu0
    %v2694 = vadd.f32 0.0, %v2693
    %v2695 = vpop.f32.mrb[0].mxu0
    %v2696 = vadd.f32 0.0, %v2695
    %v2697 = vpop.f32.mrb[0].mxu0
    %v2698 = vadd.f32 0.0, %v2697
    %v2699 = vpop.f32.mrb[0].mxu0
    %v2700 = vadd.f32 0.0, %v2699
    %2701 = vmatprep.mubr.bf16.mxu0 0
    %2702 = vmatmul.mubr.bf16.gmra.mrb[0].mxu0 %v2532
    %v2703 = vpop.f32.mrb[0].mxu0
    %v2704 = vadd.f32 0.0, %v2703
    %v2705 = vpop.f32.mrb[0].mxu0
    %v2706 = vadd.f32 0.0, %v2705
    %v2707 = vpop.f32.mrb[0].mxu0
    %v2708 = vadd.f32 0.0, %v2707
    %v2709 = vpop.f32.mrb[0].mxu0
    %v2710 = vadd.f32 0.0, %v2709
    %2711 = vmatprep.mubr.bf16.mxu0 0
    %2712 = vmatmul.mubr.bf16.gmra.mrb[0].mxu0 %v2535
    %v2713 = vpop.f32.mrb[0].mxu0
    %v2714 = vadd.f32 0.0, %v2713
    %v2715 = vpop.f32.mrb[0].mxu0
    %v2716 = vadd.f32 0.0, %v2715
    %v2717 = vpop.f32.mrb[0].mxu0
    %v2718 = vadd.f32 0.0, %v2717
    %v2719 = vpop.f32.mrb[0].mxu0
    %v2720 = vadd.f32 0.0, %v2719
    %2721 = vmatprep.mubr.bf16.mxu0 0
    %2722 = vmatmul.mubr.bf16.gmra.mrb[0].mxu0 %v2538
    %v2723 = vpop.f32.mrb[0].mxu0
    %v2724 = vadd.f32 0.0, %v2723
    %v2725 = vpop.f32.mrb[0].mxu0
    %v2726 = vadd.f32 0.0, %v2725
    %v2727 = vpop.f32.mrb[0].mxu0
    %v2728 = vadd.f32 0.0, %v2727
    %v2729 = vpop.f32.mrb[0].mxu0
    %v2730 = vadd.f32 0.0, %v2729
    %2731 = vmatprep.mubr.bf16.mxu0 0
    %2732 = vmatmul.mubr.bf16.gmra.mrb[0].mxu0 %v2541
    %v2733 = vpop.f32.mrb[0].mxu0
    %v2734 = vadd.f32 0.0, %v2733
    %v2735 = vpop.f32.mrb[0].mxu0
    %v2736 = vadd.f32 0.0, %v2735
    %v2737 = vpop.f32.mrb[0].mxu0
    %v2738 = vadd.f32 0.0, %v2737
    %v2739 = vpop.f32.mrb[0].mxu0
    %v2740 = vadd.f32 0.0, %v2739
    %2741 = vdwg.mxu0
    %2742 = vxpose.xlu0.c.b16.start [1/8] %v753, 128
    %2743 = vxpose.xlu0.c.b16.cont [2/8] 0, 128
    %2744 = vxpose.xlu0.c.b16.cont [3/8] 0, 128
    %2745 = vxpose.xlu0.c.b16.cont [4/8] 0, 128
    %2746 = vxpose.xlu0.c.b16.cont [5/8] 0, 128
    %2747 = vxpose.xlu0.c.b16.cont [6/8] 0, 128
    %2748 = vxpose.xlu0.c.b16.cont [7/8] 0, 128
    %2749 = vxpose.xlu0.c.b16.end [8/8] 0, 128
    %v2750 = vpop.trf.xlu0
    %v2751 = vpop.trf.xlu0
    %v2752 = vpop.trf.xlu0
    %v2753 = vpop.trf.xlu0
    %v2754 = vpop.trf.xlu0
    %v2755 = vpop.trf.xlu0
    %v2756 = vpop.trf.xlu0
    %v2757 = vpop.trf.xlu0
    %2758 = vxpose.xlu0.c.b16.start [1/8] %v754, 128
    %2759 = vxpose.xlu0.c.b16.cont [2/8] 0, 128
    %2760 = vxpose.xlu0.c.b16.cont [3/8] 0, 128
    %2761 = vxpose.xlu0.c.b16.cont [4/8] 0, 128
    %2762 = vxpose.xlu0.c.b16.cont [5/8] 0, 128
    %2763 = vxpose.xlu0.c.b16.cont [6/8] 0, 128
    %2764 = vxpose.xlu0.c.b16.cont [7/8] 0, 128
    %2765 = vxpose.xlu0.c.b16.end [8/8] 0, 128
    %v2766 = vpop.trf.xlu0
    %v2767 = vpop.trf.xlu0
    %v2768 = vpop.trf.xlu0
    %v2769 = vpop.trf.xlu0
    %v2770 = vpop.trf.xlu0
    %v2771 = vpop.trf.xlu0
    %v2772 = vpop.trf.xlu0
    %v2773 = vpop.trf.xlu0
    %v2775 = vsel %vm819, %v2750, 0
    %v2778 = vsel %vm819, %v2751, 0
    %v2781 = vsel %vm819, %v2752, 0
    %v2784 = vsel %vm819, %v2753, 0
    %v2787 = vsel %vm819, %v2754, 0
    %v2790 = vsel %vm819, %v2755, 0
    %v2793 = vsel %vm819, %v2756, 0
    %v2796 = vsel %vm819, %v2757, 0
    %v2799 = vsel %vm819, %v2766, 0
    %v2802 = vsel %vm819, %v2767, 0
    %v2805 = vsel %vm819, %v2768, 0
    %v2808 = vsel %vm819, %v2769, 0
    %v2811 = vsel %vm819, %v2770, 0
    %v2814 = vsel %vm819, %v2771, 0
    %v2817 = vsel %vm819, %v2772, 0
    %v2820 = vsel %vm819, %v2773, 0
    %v2823 = vsel %vm868, %v769, 0
    %v2826 = vsel %vm868, %v770, 0
    %2828 = vmatprep.subr.bf16.mxu0 %v2826
    %2829 = vmatpush1.bf16.msra.mxu0 %v2823
    %2830 = vmatprep.subr.bf16.mxu0 0
    %2831 = vmatpush1.bf16.msra.mxu0 0
    %2832 = vmatprep.subr.bf16.mxu0 0
    %2833 = vmatpush1.bf16.msra.mxu0 0
    %2834 = vmatprep.subr.bf16.mxu0 0
    %2835 = vmatpush1.bf16.msra.mxu0 0
    %2836 = vmatprep.subr.bf16.mxu0 0
    %2837 = vmatpush1.bf16.msra.mxu0 0
    %2838 = vmatprep.subr.bf16.mxu0 0
    %2839 = vmatpush1.bf16.msra.mxu0 0
    %2840 = vmatprep.subr.bf16.mxu0 0
    %2841 = vmatpush1.bf16.msra.mxu0 0
    %2842 = vmatprep.subr.bf16.mxu0 0
    %2843 = vmatpush1.bf16.msra.mxu0 0
    %2844 = vmatprep.subr.bf16.mxu0 0
    %2845 = vmatpush1.bf16.msra.mxu0 0
    %2846 = vmatprep.subr.bf16.mxu0 0
    %2847 = vmatpush1.bf16.msra.mxu0 0
    %2848 = vmatprep.subr.bf16.mxu0 0
    %2849 = vmatpush1.bf16.msra.mxu0 0
    %2850 = vmatprep.subr.bf16.mxu0 0
    %2851 = vmatpush1.bf16.msra.mxu0 0
    %2852 = vmatprep.subr.bf16.mxu0 0
    %2853 = vmatpush1.bf16.msra.mxu0 0
    %2854 = vmatprep.subr.bf16.mxu0 0
    %2855 = vmatpush1.bf16.msra.mxu0 0
    %2856 = vmatprep.subr.bf16.mxu0 0
    %2857 = vmatpush1.bf16.msra.mxu0 0
    %2858 = vmatprep.subr.bf16.mxu0 0
    %2859 = vmatpush1.bf16.msra.mxu0 0
    %2860 = vmatprep.mubr.bf16.mxu0 0
    %2861 = vmatmul.mubr.bf16.gmra.mrb[0].mxu0 %v2775
    %v2862 = vpop.f32.mrb[0].mxu0
    %v2863 = vadd.f32 0.0, %v2862
    %v2864 = vpop.f32.mrb[0].mxu0
    %v2865 = vadd.f32 0.0, %v2864
    %v2866 = vpop.f32.mrb[0].mxu0
    %v2867 = vadd.f32 0.0, %v2866
    %v2868 = vpop.f32.mrb[0].mxu0
    %v2869 = vadd.f32 0.0, %v2868
    %2870 = vmatprep.mubr.bf16.mxu0 0
    %2871 = vmatmul.mubr.bf16.gmra.mrb[0].mxu0 %v2778
    %v2872 = vpop.f32.mrb[0].mxu0
    %v2873 = vadd.f32 0.0, %v2872
    %v2874 = vpop.f32.mrb[0].mxu0
    %v2875 = vadd.f32 0.0, %v2874
    %v2876 = vpop.f32.mrb[0].mxu0
    %v2877 = vadd.f32 0.0, %v2876
    %v2878 = vpop.f32.mrb[0].mxu0
    %v2879 = vadd.f32 0.0, %v2878
    %2880 = vmatprep.mubr.bf16.mxu0 0
    %2881 = vmatmul.mubr.bf16.gmra.mrb[0].mxu0 %v2781
    %v2882 = vpop.f32.mrb[0].mxu0
    %v2883 = vadd.f32 0.0, %v2882
    %v2884 = vpop.f32.mrb[0].mxu0
    %v2885 = vadd.f32 0.0, %v2884
    %v2886 = vpop.f32.mrb[0].mxu0
    %v2887 = vadd.f32 0.0, %v2886
    %v2888 = vpop.f32.mrb[0].mxu0
    %v2889 = vadd.f32 0.0, %v2888
    %2890 = vmatprep.mubr.bf16.mxu0 0
    %2891 = vmatmul.mubr.bf16.gmra.mrb[0].mxu0 %v2784
    %v2892 = vpop.f32.mrb[0].mxu0
    %v2893 = vadd.f32 0.0, %v2892
    %v2894 = vpop.f32.mrb[0].mxu0
    %v2895 = vadd.f32 0.0, %v2894
    %v2896 = vpop.f32.mrb[0].mxu0
    %v2897 = vadd.f32 0.0, %v2896
    %v2898 = vpop.f32.mrb[0].mxu0
    %v2899 = vadd.f32 0.0, %v2898
    %2900 = vmatprep.mubr.bf16.mxu0 0
    %2901 = vmatmul.mubr.bf16.gmra.mrb[0].mxu0 %v2787
    %v2902 = vpop.f32.mrb[0].mxu0
    %v2903 = vadd.f32 0.0, %v2902
    %v2904 = vpop.f32.mrb[0].mxu0
    %v2905 = vadd.f32 0.0, %v2904
    %v2906 = vpop.f32.mrb[0].mxu0
    %v2907 = vadd.f32 0.0, %v2906
    %v2908 = vpop.f32.mrb[0].mxu0
    %v2909 = vadd.f32 0.0, %v2908
    %2910 = vmatprep.mubr.bf16.mxu0 0
    %2911 = vmatmul.mubr.bf16.gmra.mrb[0].mxu0 %v2790
    %v2912 = vpop.f32.mrb[0].mxu0
    %v2913 = vadd.f32 0.0, %v2912
    %v2914 = vpop.f32.mrb[0].mxu0
    %v2915 = vadd.f32 0.0, %v2914
    %v2916 = vpop.f32.mrb[0].mxu0
    %v2917 = vadd.f32 0.0, %v2916
    %v2918 = vpop.f32.mrb[0].mxu0
    %v2919 = vadd.f32 0.0, %v2918
    %2920 = vmatprep.mubr.bf16.mxu0 0
    %2921 = vmatmul.mubr.bf16.gmra.mrb[0].mxu0 %v2793
    %v2922 = vpop.f32.mrb[0].mxu0
    %v2923 = vadd.f32 0.0, %v2922
    %v2924 = vpop.f32.mrb[0].mxu0
    %v2925 = vadd.f32 0.0, %v2924
    %v2926 = vpop.f32.mrb[0].mxu0
    %v2927 = vadd.f32 0.0, %v2926
    %v2928 = vpop.f32.mrb[0].mxu0
    %v2929 = vadd.f32 0.0, %v2928
    %2930 = vmatprep.mubr.bf16.mxu0 0
    %2931 = vmatmul.mubr.bf16.gmra.mrb[0].mxu0 %v2796
    %v2932 = vpop.f32.mrb[0].mxu0
    %v2933 = vadd.f32 0.0, %v2932
    %v2934 = vpop.f32.mrb[0].mxu0
    %v2935 = vadd.f32 0.0, %v2934
    %v2936 = vpop.f32.mrb[0].mxu0
    %v2937 = vadd.f32 0.0, %v2936
    %v2938 = vpop.f32.mrb[0].mxu0
    %v2939 = vadd.f32 0.0, %v2938
    %2940 = vmatprep.mubr.bf16.mxu0 0
    %2941 = vmatmul.mubr.bf16.gmra.mrb[0].mxu0 %v2799
    %v2942 = vpop.f32.mrb[0].mxu0
    %v2943 = vadd.f32 0.0, %v2942
    %v2944 = vpop.f32.mrb[0].mxu0
    %v2945 = vadd.f32 0.0, %v2944
    %v2946 = vpop.f32.mrb[0].mxu0
    %v2947 = vadd.f32 0.0, %v2946
    %v2948 = vpop.f32.mrb[0].mxu0
    %v2949 = vadd.f32 0.0, %v2948
    %2950 = vmatprep.mubr.bf16.mxu0 0
    %2951 = vmatmul.mubr.bf16.gmra.mrb[0].mxu0 %v2802
    %v2952 = vpop.f32.mrb[0].mxu0
    %v2953 = vadd.f32 0.0, %v2952
    %v2954 = vpop.f32.mrb[0].mxu0
    %v2955 = vadd.f32 0.0, %v2954
    %v2956 = vpop.f32.mrb[0].mxu0
    %v2957 = vadd.f32 0.0, %v2956
    %v2958 = vpop.f32.mrb[0].mxu0
    %v2959 = vadd.f32 0.0, %v2958
    %2960 = vmatprep.mubr.bf16.mxu0 0
    %2961 = vmatmul.mubr.bf16.gmra.mrb[0].mxu0 %v2805
    %v2962 = vpop.f32.mrb[0].mxu0
    %v2963 = vadd.f32 0.0, %v2962
    %v2964 = vpop.f32.mrb[0].mxu0
    %v2965 = vadd.f32 0.0, %v2964
    %v2966 = vpop.f32.mrb[0].mxu0
    %v2967 = vadd.f32 0.0, %v2966
    %v2968 = vpop.f32.mrb[0].mxu0
    %v2969 = vadd.f32 0.0, %v2968
    %2970 = vmatprep.mubr.bf16.mxu0 0
    %2971 = vmatmul.mubr.bf16.gmra.mrb[0].mxu0 %v2808
    %v2972 = vpop.f32.mrb[0].mxu0
    %v2973 = vadd.f32 0.0, %v2972
    %v2974 = vpop.f32.mrb[0].mxu0
    %v2975 = vadd.f32 0.0, %v2974
    %v2976 = vpop.f32.mrb[0].mxu0
    %v2977 = vadd.f32 0.0, %v2976
    %v2978 = vpop.f32.mrb[0].mxu0
    %v2979 = vadd.f32 0.0, %v2978
    %2980 = vmatprep.mubr.bf16.mxu0 0
    %2981 = vmatmul.mubr.bf16.gmra.mrb[0].mxu0 %v2811
    %v2982 = vpop.f32.mrb[0].mxu0
    %v2983 = vadd.f32 0.0, %v2982
    %v2984 = vpop.f32.mrb[0].mxu0
    %v2985 = vadd.f32 0.0, %v2984
    %v2986 = vpop.f32.mrb[0].mxu0
    %v2987 = vadd.f32 0.0, %v2986
    %v2988 = vpop.f32.mrb[0].mxu0
    %v2989 = vadd.f32 0.0, %v2988
    %2990 = vmatprep.mubr.bf16.mxu0 0
    %2991 = vmatmul.mubr.bf16.gmra.mrb[0].mxu0 %v2814
    %v2992 = vpop.f32.mrb[0].mxu0
    %v2993 = vadd.f32 0.0, %v2992
    %v2994 = vpop.f32.mrb[0].mxu0
    %v2995 = vadd.f32 0.0, %v2994
    %v2996 = vpop.f32.mrb[0].mxu0
    %v2997 = vadd.f32 0.0, %v2996
    %v2998 = vpop.f32.mrb[0].mxu0
    %v2999 = vadd.f32 0.0, %v2998
    %3000 = vmatprep.mubr.bf16.mxu0 0
    %3001 = vmatmul.mubr.bf16.gmra.mrb[0].mxu0 %v2817
    %v3002 = vpop.f32.mrb[0].mxu0
    %v3003 = vadd.f32 0.0, %v3002
    %v3004 = vpop.f32.mrb[0].mxu0
    %v3005 = vadd.f32 0.0, %v3004
    %v3006 = vpop.f32.mrb[0].mxu0
    %v3007 = vadd.f32 0.0, %v3006
    %v3008 = vpop.f32.mrb[0].mxu0
    %v3009 = vadd.f32 0.0, %v3008
    %3010 = vmatprep.mubr.bf16.mxu0 0
    %3011 = vmatmul.mubr.bf16.gmra.mrb[0].mxu0 %v2820
    %v3012 = vpop.f32.mrb[0].mxu0
    %v3013 = vadd.f32 0.0, %v3012
    %v3014 = vpop.f32.mrb[0].mxu0
    %v3015 = vadd.f32 0.0, %v3014
    %v3016 = vpop.f32.mrb[0].mxu0
    %v3017 = vadd.f32 0.0, %v3016
    %v3018 = vpop.f32.mrb[0].mxu0
    %v3019 = vadd.f32 0.0, %v3018
    %3020 = vdwg.mxu0
    %v3021 = vmax.f32 %v910, %v912
    %3022 = vmax.xlane.f32.xlu0 %v3021
    %v3023 = vpop.xlane.xlu0 %3022
    %v3024 = vmax.f32 %v914, %v916
    %3025 = vmax.xlane.f32.xlu0 %v3024
    %v3026 = vpop.xlane.xlu0 %3025
    %v3027 = vmax.f32 %v920, %v922
    %3028 = vmax.xlane.f32.xlu0 %v3027
    %v3029 = vpop.xlane.xlu0 %3028
    %v3030 = vmax.f32 %v924, %v926
    %3031 = vmax.xlane.f32.xlu0 %v3030
    %v3032 = vpop.xlane.xlu0 %3031
    %v3033 = vmax.f32 %v930, %v932
    %3034 = vmax.xlane.f32.xlu0 %v3033
    %v3035 = vpop.xlane.xlu0 %3034
    %v3036 = vmax.f32 %v934, %v936
    %3037 = vmax.xlane.f32.xlu0 %v3036
    %v3038 = vpop.xlane.xlu0 %3037
    %v3039 = vmax.f32 %v940, %v942
    %3040 = vmax.xlane.f32.xlu0 %v3039
    %v3041 = vpop.xlane.xlu0 %3040
    %v3042 = vmax.f32 %v944, %v946
    %3043 = vmax.xlane.f32.xlu0 %v3042
    %v3044 = vpop.xlane.xlu0 %3043
    %v3045 = vmax.f32 %v950, %v952
    %3046 = vmax.xlane.f32.xlu0 %v3045
    %v3047 = vpop.xlane.xlu0 %3046
    %v3048 = vmax.f32 %v954, %v956
    %3049 = vmax.xlane.f32.xlu0 %v3048
    %v3050 = vpop.xlane.xlu0 %3049
    %v3051 = vmax.f32 %v960, %v962
    %3052 = vmax.xlane.f32.xlu0 %v3051
    %v3053 = vpop.xlane.xlu0 %3052
    %v3054 = vmax.f32 %v964, %v966
    %3055 = vmax.xlane.f32.xlu0 %v3054
    %v3056 = vpop.xlane.xlu0 %3055
    %v3057 = vmax.f32 %v970, %v972
    %3058 = vmax.xlane.f32.xlu0 %v3057
    %v3059 = vpop.xlane.xlu0 %3058
    %v3060 = vmax.f32 %v974, %v976
    %3061 = vmax.xlane.f32.xlu0 %v3060
    %v3062 = vpop.xlane.xlu0 %3061
    %v3063 = vmax.f32 %v980, %v982
    %3064 = vmax.xlane.f32.xlu0 %v3063
    %v3065 = vpop.xlane.xlu0 %3064
    %v3066 = vmax.f32 %v984, %v986
    %3067 = vmax.xlane.f32.xlu0 %v3066
    %v3068 = vpop.xlane.xlu0 %3067
    %v3069 = vmax.f32 %v990, %v992
    %3070 = vmax.xlane.f32.xlu0 %v3069
    %v3071 = vpop.xlane.xlu0 %3070
    %v3072 = vmax.f32 %v994, %v996
    %3073 = vmax.xlane.f32.xlu0 %v3072
    %v3074 = vpop.xlane.xlu0 %3073
    %v3075 = vmax.f32 %v1000, %v1002
    %3076 = vmax.xlane.f32.xlu0 %v3075
    %v3077 = vpop.xlane.xlu0 %3076
    %v3078 = vmax.f32 %v1004, %v1006
    %3079 = vmax.xlane.f32.xlu0 %v3078
    %v3080 = vpop.xlane.xlu0 %3079
    %v3081 = vmax.f32 %v1010, %v1012
    %3082 = vmax.xlane.f32.xlu0 %v3081
    %v3083 = vpop.xlane.xlu0 %3082
    %v3084 = vmax.f32 %v1014, %v1016
    %3085 = vmax.xlane.f32.xlu0 %v3084
    %v3086 = vpop.xlane.xlu0 %3085
    %v3087 = vmax.f32 %v1020, %v1022
    %3088 = vmax.xlane.f32.xlu0 %v3087
    %v3089 = vpop.xlane.xlu0 %3088
    %v3090 = vmax.f32 %v1024, %v1026
    %3091 = vmax.xlane.f32.xlu0 %v3090
    %v3092 = vpop.xlane.xlu0 %3091
    %v3093 = vmax.f32 %v1030, %v1032
    %3094 = vmax.xlane.f32.xlu0 %v3093
    %v3095 = vpop.xlane.xlu0 %3094
    %v3096 = vmax.f32 %v1034, %v1036
    %3097 = vmax.xlane.f32.xlu0 %v3096
    %v3098 = vpop.xlane.xlu0 %3097
    %v3099 = vmax.f32 %v1040, %v1042
    %3100 = vmax.xlane.f32.xlu0 %v3099
    %v3101 = vpop.xlane.xlu0 %3100
    %v3102 = vmax.f32 %v1044, %v1046
    %3103 = vmax.xlane.f32.xlu0 %v3102
    %v3104 = vpop.xlane.xlu0 %3103
    %v3105 = vmax.f32 %v1050, %v1052
    %3106 = vmax.xlane.f32.xlu0 %v3105
    %v3107 = vpop.xlane.xlu0 %3106
    %v3108 = vmax.f32 %v1054, %v1056
    %3109 = vmax.xlane.f32.xlu0 %v3108
    %v3110 = vpop.xlane.xlu0 %3109
    %v3111 = vmax.f32 %v1060, %v1062
    %3112 = vmax.xlane.f32.xlu0 %v3111
    %v3113 = vpop.xlane.xlu0 %3112
    %v3114 = vmax.f32 %v1064, %v1066
    %3115 = vmax.xlane.f32.xlu0 %v3114
    %v3116 = vpop.xlane.xlu0 %3115
    %v3117 = vmax.f32 %v1189, %v1191
    %3118 = vmax.xlane.f32.xlu0 %v3117
    %v3119 = vpop.xlane.xlu0 %3118
    %v3120 = vmax.f32 %v1193, %v1195
    %3121 = vmax.xlane.f32.xlu0 %v3120
    %v3122 = vpop.xlane.xlu0 %3121
    %v3123 = vmax.f32 %v1199, %v1201
    %3124 = vmax.xlane.f32.xlu0 %v3123
    %v3125 = vpop.xlane.xlu0 %3124
    %v3126 = vmax.f32 %v1203, %v1205
    %3127 = vmax.xlane.f32.xlu0 %v3126
    %v3128 = vpop.xlane.xlu0 %3127
    %v3129 = vmax.f32 %v1209, %v1211
    %3130 = vmax.xlane.f32.xlu0 %v3129
    %v3131 = vpop.xlane.xlu0 %3130
    %v3132 = vmax.f32 %v1213, %v1215
    %3133 = vmax.xlane.f32.xlu0 %v3132
    %v3134 = vpop.xlane.xlu0 %3133
    %v3135 = vmax.f32 %v1219, %v1221
    %3136 = vmax.xlane.f32.xlu0 %v3135
    %v3137 = vpop.xlane.xlu0 %3136
    %v3138 = vmax.f32 %v1223, %v1225
    %3139 = vmax.xlane.f32.xlu0 %v3138
    %v3140 = vpop.xlane.xlu0 %3139
    %v3141 = vmax.f32 %v1229, %v1231
    %3142 = vmax.xlane.f32.xlu0 %v3141
    %v3143 = vpop.xlane.xlu0 %3142
    %v3144 = vmax.f32 %v1233, %v1235
    %3145 = vmax.xlane.f32.xlu0 %v3144
    %v3146 = vpop.xlane.xlu0 %3145
    %v3147 = vmax.f32 %v1239, %v1241
    %3148 = vmax.xlane.f32.xlu0 %v3147
    %v3149 = vpop.xlane.xlu0 %3148
    %v3150 = vmax.f32 %v1243, %v1245
    %3151 = vmax.xlane.f32.xlu0 %v3150
    %v3152 = vpop.xlane.xlu0 %3151
    %v3153 = vmax.f32 %v1249, %v1251
    %3154 = vmax.xlane.f32.xlu0 %v3153
    %v3155 = vpop.xlane.xlu0 %3154
    %v3156 = vmax.f32 %v1253, %v1255
    %3157 = vmax.xlane.f32.xlu0 %v3156
    %v3158 = vpop.xlane.xlu0 %3157
    %v3159 = vmax.f32 %v1259, %v1261
    %3160 = vmax.xlane.f32.xlu0 %v3159
    %v3161 = vpop.xlane.xlu0 %3160
    %v3162 = vmax.f32 %v1263, %v1265
    %3163 = vmax.xlane.f32.xlu0 %v3162
    %v3164 = vpop.xlane.xlu0 %3163
    %v3165 = vmax.f32 %v1269, %v1271
    %3166 = vmax.xlane.f32.xlu0 %v3165
    %v3167 = vpop.xlane.xlu0 %3166
    %v3168 = vmax.f32 %v1273, %v1275
    %3169 = vmax.xlane.f32.xlu0 %v3168
    %v3170 = vpop.xlane.xlu0 %3169
    %v3171 = vmax.f32 %v1279, %v1281
    %3172 = vmax.xlane.f32.xlu0 %v3171
    %v3173 = vpop.xlane.xlu0 %3172
    %v3174 = vmax.f32 %v1283, %v1285
    %3175 = vmax.xlane.f32.xlu0 %v3174
    %v3176 = vpop.xlane.xlu0 %3175
    %v3177 = vmax.f32 %v1289, %v1291
    %3178 = vmax.xlane.f32.xlu0 %v3177
    %v3179 = vpop.xlane.xlu0 %3178
    %v3180 = vmax.f32 %v1293, %v1295
    %3181 = vmax.xlane.f32.xlu0 %v3180
    %v3182 = vpop.xlane.xlu0 %3181
    %v3183 = vmax.f32 %v1299, %v1301
    %3184 = vmax.xlane.f32.xlu0 %v3183
    %v3185 = vpop.xlane.xlu0 %3184
    %v3186 = vmax.f32 %v1303, %v1305
    %3187 = vmax.xlane.f32.xlu0 %v3186
    %v3188 = vpop.xlane.xlu0 %3187
    %v3189 = vmax.f32 %v1309, %v1311
    %3190 = vmax.xlane.f32.xlu0 %v3189
    %v3191 = vpop.xlane.xlu0 %3190
    %v3192 = vmax.f32 %v1313, %v1315
    %3193 = vmax.xlane.f32.xlu0 %v3192
    %v3194 = vpop.xlane.xlu0 %3193
    %v3195 = vmax.f32 %v1319, %v1321
    %3196 = vmax.xlane.f32.xlu0 %v3195
    %v3197 = vpop.xlane.xlu0 %3196
    %v3198 = vmax.f32 %v1323, %v1325
    %3199 = vmax.xlane.f32.xlu0 %v3198
    %v3200 = vpop.xlane.xlu0 %3199
    %v3201 = vmax.f32 %v1329, %v1331
    %3202 = vmax.xlane.f32.xlu0 %v3201
    %v3203 = vpop.xlane.xlu0 %3202
    %v3204 = vmax.f32 %v1333, %v1335
    %3205 = vmax.xlane.f32.xlu0 %v3204
    %v3206 = vpop.xlane.xlu0 %3205
    %v3207 = vmax.f32 %v1339, %v1341
    %3208 = vmax.xlane.f32.xlu0 %v3207
    %v3209 = vpop.xlane.xlu0 %3208
    %v3210 = vmax.f32 %v1343, %v1345
    %3211 = vmax.xlane.f32.xlu0 %v3210
    %v3212 = vpop.xlane.xlu0 %3211
    %v3213 = vmax.f32 %v1468, %v1470
    %3214 = vmax.xlane.f32.xlu0 %v3213
    %v3215 = vpop.xlane.xlu0 %3214
    %v3216 = vmax.f32 %v1472, %v1474
    %3217 = vmax.xlane.f32.xlu0 %v3216
    %v3218 = vpop.xlane.xlu0 %3217
    %v3219 = vmax.f32 %v1478, %v1480
    %3220 = vmax.xlane.f32.xlu0 %v3219
    %v3221 = vpop.xlane.xlu0 %3220
    %v3222 = vmax.f32 %v1482, %v1484
    %3223 = vmax.xlane.f32.xlu0 %v3222
    %v3224 = vpop.xlane.xlu0 %3223
    %v3225 = vmax.f32 %v1488, %v1490
    %3226 = vmax.xlane.f32.xlu0 %v3225
    %v3227 = vpop.xlane.xlu0 %3226
    %v3228 = vmax.f32 %v1492, %v1494
    %3229 = vmax.xlane.f32.xlu0 %v3228
    %v3230 = vpop.xlane.xlu0 %3229
    %v3231 = vmax.f32 %v1498, %v1500
    %3232 = vmax.xlane.f32.xlu0 %v3231
    %v3233 = vpop.xlane.xlu0 %3232
    %v3234 = vmax.f32 %v1502, %v1504
    %3235 = vmax.xlane.f32.xlu0 %v3234
    %v3236 = vpop.xlane.xlu0 %3235
    %v3237 = vmax.f32 %v1508, %v1510
    %3238 = vmax.xlane.f32.xlu0 %v3237
    %v3239 = vpop.xlane.xlu0 %3238
    %v3240 = vmax.f32 %v1512, %v1514
    %3241 = vmax.xlane.f32.xlu0 %v3240
    %v3242 = vpop.xlane.xlu0 %3241
    %v3243 = vmax.f32 %v1518, %v1520
    %3244 = vmax.xlane.f32.xlu0 %v3243
    %v3245 = vpop.xlane.xlu0 %3244
    %v3246 = vmax.f32 %v1522, %v1524
    %3247 = vmax.xlane.f32.xlu0 %v3246
    %v3248 = vpop.xlane.xlu0 %3247
    %v3249 = vmax.f32 %v1528, %v1530
    %3250 = vmax.xlane.f32.xlu0 %v3249
    %v3251 = vpop.xlane.xlu0 %3250
    %v3252 = vmax.f32 %v1532, %v1534
    %3253 = vmax.xlane.f32.xlu0 %v3252
    %v3254 = vpop.xlane.xlu0 %3253
    %v3255 = vmax.f32 %v1538, %v1540
    %3256 = vmax.xlane.f32.xlu0 %v3255
    %v3257 = vpop.xlane.xlu0 %3256
    %v3258 = vmax.f32 %v1542, %v1544
    %3259 = vmax.xlane.f32.xlu0 %v3258
    %v3260 = vpop.xlane.xlu0 %3259
    %v3261 = vmax.f32 %v1548, %v1550
    %3262 = vmax.xlane.f32.xlu0 %v3261
    %v3263 = vpop.xlane.xlu0 %3262
    %v3264 = vmax.f32 %v1552, %v1554
    %3265 = vmax.xlane.f32.xlu0 %v3264
    %v3266 = vpop.xlane.xlu0 %3265
    %v3267 = vmax.f32 %v1558, %v1560
    %3268 = vmax.xlane.f32.xlu0 %v3267
    %v3269 = vpop.xlane.xlu0 %3268
    %v3270 = vmax.f32 %v1562, %v1564
    %3271 = vmax.xlane.f32.xlu0 %v3270
    %v3272 = vpop.xlane.xlu0 %3271
    %v3273 = vmax.f32 %v1568, %v1570
    %3274 = vmax.xlane.f32.xlu0 %v3273
    %v3275 = vpop.xlane.xlu0 %3274
    %v3276 = vmax.f32 %v1572, %v1574
    %3277 = vmax.xlane.f32.xlu0 %v3276
    %v3278 = vpop.xlane.xlu0 %3277
    %v3279 = vmax.f32 %v1578, %v1580
    %3280 = vmax.xlane.f32.xlu0 %v3279
    %v3281 = vpop.xlane.xlu0 %3280
    %v3282 = vmax.f32 %v1582, %v1584
    %3283 = vmax.xlane.f32.xlu0 %v3282
    %v3284 = vpop.xlane.xlu0 %3283
    %v3285 = vmax.f32 %v1588, %v1590
    %3286 = vmax.xlane.f32.xlu0 %v3285
    %v3287 = vpop.xlane.xlu0 %3286
    %v3288 = vmax.f32 %v1592, %v1594
    %3289 = vmax.xlane.f32.xlu0 %v3288
    %v3290 = vpop.xlane.xlu0 %3289
    %v3291 = vmax.f32 %v1598, %v1600
    %3292 = vmax.xlane.f32.xlu0 %v3291
    %v3293 = vpop.xlane.xlu0 %3292
    %v3294 = vmax.f32 %v1602, %v1604
    %3295 = vmax.xlane.f32.xlu0 %v3294
    %v3296 = vpop.xlane.xlu0 %3295
    %v3297 = vmax.f32 %v1608, %v1610
    %3298 = vmax.xlane.f32.xlu0 %v3297
    %v3299 = vpop.xlane.xlu0 %3298
    %v3300 = vmax.f32 %v1612, %v1614
    %3301 = vmax.xlane.f32.xlu0 %v3300
    %v3302 = vpop.xlane.xlu0 %3301
    %v3303 = vmax.f32 %v1618, %v1620
    %3304 = vmax.xlane.f32.xlu0 %v3303
    %v3305 = vpop.xlane.xlu0 %3304
    %v3306 = vmax.f32 %v1622, %v1624
    %3307 = vmax.xlane.f32.xlu0 %v3306
    %v3308 = vpop.xlane.xlu0 %3307
    %v3309 = vmax.f32 %v1747, %v1749
    %3310 = vmax.xlane.f32.xlu0 %v3309
    %v3311 = vpop.xlane.xlu0 %3310
    %v3312 = vmax.f32 %v1751, %v1753
    %3313 = vmax.xlane.f32.xlu0 %v3312
    %v3314 = vpop.xlane.xlu0 %3313
    %v3315 = vmax.f32 %v1757, %v1759
    %3316 = vmax.xlane.f32.xlu0 %v3315
    %v3317 = vpop.xlane.xlu0 %3316
    %v3318 = vmax.f32 %v1761, %v1763
    %3319 = vmax.xlane.f32.xlu0 %v3318
    %v3320 = vpop.xlane.xlu0 %3319
    %v3321 = vmax.f32 %v1767, %v1769
    %3322 = vmax.xlane.f32.xlu0 %v3321
    %v3323 = vpop.xlane.xlu0 %3322
    %v3324 = vmax.f32 %v1771, %v1773
    %3325 = vmax.xlane.f32.xlu0 %v3324
    %v3326 = vpop.xlane.xlu0 %3325
    %v3327 = vmax.f32 %v1777, %v1779
    %3328 = vmax.xlane.f32.xlu0 %v3327
    %v3329 = vpop.xlane.xlu0 %3328
    %v3330 = vmax.f32 %v1781, %v1783
    %3331 = vmax.xlane.f32.xlu0 %v3330
    %v3332 = vpop.xlane.xlu0 %3331
    %v3333 = vmax.f32 %v1787, %v1789
    %3334 = vmax.xlane.f32.xlu0 %v3333
    %v3335 = vpop.xlane.xlu0 %3334
    %v3336 = vmax.f32 %v1791, %v1793
    %3337 = vmax.xlane.f32.xlu0 %v3336
    %v3338 = vpop.xlane.xlu0 %3337
    %v3339 = vmax.f32 %v1797, %v1799
    %3340 = vmax.xlane.f32.xlu0 %v3339
    %v3341 = vpop.xlane.xlu0 %3340
    %v3342 = vmax.f32 %v1801, %v1803
    %3343 = vmax.xlane.f32.xlu0 %v3342
    %v3344 = vpop.xlane.xlu0 %3343
    %v3345 = vmax.f32 %v1807, %v1809
    %3346 = vmax.xlane.f32.xlu0 %v3345
    %v3347 = vpop.xlane.xlu0 %3346
    %v3348 = vmax.f32 %v1811, %v1813
    %3349 = vmax.xlane.f32.xlu0 %v3348
    %v3350 = vpop.xlane.xlu0 %3349
    %v3351 = vmax.f32 %v1817, %v1819
    %3352 = vmax.xlane.f32.xlu0 %v3351
    %v3353 = vpop.xlane.xlu0 %3352
    %v3354 = vmax.f32 %v1821, %v1823
    %3355 = vmax.xlane.f32.xlu0 %v3354
    %v3356 = vpop.xlane.xlu0 %3355
    %v3357 = vmax.f32 %v1827, %v1829
    %3358 = vmax.xlane.f32.xlu0 %v3357
    %v3359 = vpop.xlane.xlu0 %3358
    %v3360 = vmax.f32 %v1831, %v1833
    %3361 = vmax.xlane.f32.xlu0 %v3360
    %v3362 = vpop.xlane.xlu0 %3361
    %v3363 = vmax.f32 %v1837, %v1839
    %3364 = vmax.xlane.f32.xlu0 %v3363
    %v3365 = vpop.xlane.xlu0 %3364
    %v3366 = vmax.f32 %v1841, %v1843
    %3367 = vmax.xlane.f32.xlu0 %v3366
    %v3368 = vpop.xlane.xlu0 %3367
    %v3369 = vmax.f32 %v1847, %v1849
    %3370 = vmax.xlane.f32.xlu0 %v3369
    %v3371 = vpop.xlane.xlu0 %3370
    %v3372 = vmax.f32 %v1851, %v1853
    %3373 = vmax.xlane.f32.xlu0 %v3372
    %v3374 = vpop.xlane.xlu0 %3373
    %v3375 = vmax.f32 %v1857, %v1859
    %3376 = vmax.xlane.f32.xlu0 %v3375
    %v3377 = vpop.xlane.xlu0 %3376
    %v3378 = vmax.f32 %v1861, %v1863
    %3379 = vmax.xlane.f32.xlu0 %v3378
    %v3380 = vpop.xlane.xlu0 %3379
    %v3381 = vmax.f32 %v1867, %v1869
    %3382 = vmax.xlane.f32.xlu0 %v3381
    %v3383 = vpop.xlane.xlu0 %3382
    %v3384 = vmax.f32 %v1871, %v1873
    %3385 = vmax.xlane.f32.xlu0 %v3384
    %v3386 = vpop.xlane.xlu0 %3385
    %v3387 = vmax.f32 %v1877, %v1879
    %3388 = vmax.xlane.f32.xlu0 %v3387
    %v3389 = vpop.xlane.xlu0 %3388
    %v3390 = vmax.f32 %v1881, %v1883
    %3391 = vmax.xlane.f32.xlu0 %v3390
    %v3392 = vpop.xlane.xlu0 %3391
    %v3393 = vmax.f32 %v1887, %v1889
    %3394 = vmax.xlane.f32.xlu0 %v3393
    %v3395 = vpop.xlane.xlu0 %3394
    %v3396 = vmax.f32 %v1891, %v1893
    %3397 = vmax.xlane.f32.xlu0 %v3396
    %v3398 = vpop.xlane.xlu0 %3397
    %v3399 = vmax.f32 %v1897, %v1899
    %3400 = vmax.xlane.f32.xlu0 %v3399
    %v3401 = vpop.xlane.xlu0 %3400
    %v3402 = vmax.f32 %v1901, %v1903
    %3403 = vmax.xlane.f32.xlu0 %v3402
    %v3404 = vpop.xlane.xlu0 %3403
    %v3405 = vmax.f32 %v2026, %v2028
    %3406 = vmax.xlane.f32.xlu0 %v3405
    %v3407 = vpop.xlane.xlu0 %3406
    %v3408 = vmax.f32 %v2030, %v2032
    %3409 = vmax.xlane.f32.xlu0 %v3408
    %v3410 = vpop.xlane.xlu0 %3409
    %v3411 = vmax.f32 %v2036, %v2038
    %3412 = vmax.xlane.f32.xlu0 %v3411
    %v3413 = vpop.xlane.xlu0 %3412
    %v3414 = vmax.f32 %v2040, %v2042
    %3415 = vmax.xlane.f32.xlu0 %v3414
    %v3416 = vpop.xlane.xlu0 %3415
    %v3417 = vmax.f32 %v2046, %v2048
    %3418 = vmax.xlane.f32.xlu0 %v3417
    %v3419 = vpop.xlane.xlu0 %3418
    %v3420 = vmax.f32 %v2050, %v2052
    %3421 = vmax.xlane.f32.xlu0 %v3420
    %v3422 = vpop.xlane.xlu0 %3421
    %v3423 = vmax.f32 %v2056, %v2058
    %3424 = vmax.xlane.f32.xlu0 %v3423
    %v3425 = vpop.xlane.xlu0 %3424
    %v3426 = vmax.f32 %v2060, %v2062
    %3427 = vmax.xlane.f32.xlu0 %v3426
    %v3428 = vpop.xlane.xlu0 %3427
    %v3429 = vmax.f32 %v2066, %v2068
    %3430 = vmax.xlane.f32.xlu0 %v3429
    %v3431 = vpop.xlane.xlu0 %3430
    %v3432 = vmax.f32 %v2070, %v2072
    %3433 = vmax.xlane.f32.xlu0 %v3432
    %v3434 = vpop.xlane.xlu0 %3433
    %v3435 = vmax.f32 %v2076, %v2078
    %3436 = vmax.xlane.f32.xlu0 %v3435
    %v3437 = vpop.xlane.xlu0 %3436
    %v3438 = vmax.f32 %v2080, %v2082
    %3439 = vmax.xlane.f32.xlu0 %v3438
    %v3440 = vpop.xlane.xlu0 %3439
    %v3441 = vmax.f32 %v2086, %v2088
    %3442 = vmax.xlane.f32.xlu0 %v3441
    %v3443 = vpop.xlane.xlu0 %3442
    %v3444 = vmax.f32 %v2090, %v2092
    %3445 = vmax.xlane.f32.xlu0 %v3444
    %v3446 = vpop.xlane.xlu0 %3445
    %v3447 = vmax.f32 %v2096, %v2098
    %3448 = vmax.xlane.f32.xlu0 %v3447
    %v3449 = vpop.xlane.xlu0 %3448
    %v3450 = vmax.f32 %v2100, %v2102
    %3451 = vmax.xlane.f32.xlu0 %v3450
    %v3452 = vpop.xlane.xlu0 %3451
    %v3453 = vmax.f32 %v2106, %v2108
    %3454 = vmax.xlane.f32.xlu0 %v3453
    %v3455 = vpop.xlane.xlu0 %3454
    %v3456 = vmax.f32 %v2110, %v2112
    %3457 = vmax.xlane.f32.xlu0 %v3456
    %v3458 = vpop.xlane.xlu0 %3457
    %v3459 = vmax.f32 %v2116, %v2118
    %3460 = vmax.xlane.f32.xlu0 %v3459
    %v3461 = vpop.xlane.xlu0 %3460
    %v3462 = vmax.f32 %v2120, %v2122
    %3463 = vmax.xlane.f32.xlu0 %v3462
    %v3464 = vpop.xlane.xlu0 %3463
    %v3465 = vmax.f32 %v2126, %v2128
    %3466 = vmax.xlane.f32.xlu0 %v3465
    %v3467 = vpop.xlane.xlu0 %3466
    %v3468 = vmax.f32 %v2130, %v2132
    %3469 = vmax.xlane.f32.xlu0 %v3468
    %v3470 = vpop.xlane.xlu0 %3469
    %v3471 = vmax.f32 %v2136, %v2138
    %3472 = vmax.xlane.f32.xlu0 %v3471
    %v3473 = vpop.xlane.xlu0 %3472
    %v3474 = vmax.f32 %v2140, %v2142
    %3475 = vmax.xlane.f32.xlu0 %v3474
    %v3476 = vpop.xlane.xlu0 %3475
    %v3477 = vmax.f32 %v2146, %v2148
    %3478 = vmax.xlane.f32.xlu0 %v3477
    %v3479 = vpop.xlane.xlu0 %3478
    %v3480 = vmax.f32 %v2150, %v2152
    %3481 = vmax.xlane.f32.xlu0 %v3480
    %v3482 = vpop.xlane.xlu0 %3481
    %v3483 = vmax.f32 %v2156, %v2158
    %3484 = vmax.xlane.f32.xlu0 %v3483
    %v3485 = vpop.xlane.xlu0 %3484
    %v3486 = vmax.f32 %v2160, %v2162
    %3487 = vmax.xlane.f32.xlu0 %v3486
    %v3488 = vpop.xlane.xlu0 %3487
    %v3489 = vmax.f32 %v2166, %v2168
    %3490 = vmax.xlane.f32.xlu0 %v3489
    %v3491 = vpop.xlane.xlu0 %3490
    %v3492 = vmax.f32 %v2170, %v2172
    %3493 = vmax.xlane.f32.xlu0 %v3492
    %v3494 = vpop.xlane.xlu0 %3493
    %v3495 = vmax.f32 %v2176, %v2178
    %3496 = vmax.xlane.f32.xlu0 %v3495
    %v3497 = vpop.xlane.xlu0 %3496
    %v3498 = vmax.f32 %v2180, %v2182
    %3499 = vmax.xlane.f32.xlu0 %v3498
    %v3500 = vpop.xlane.xlu0 %3499
    %v3501 = vmax.f32 %v2305, %v2307
    %3502 = vmax.xlane.f32.xlu0 %v3501
    %v3503 = vpop.xlane.xlu0 %3502
    %v3504 = vmax.f32 %v2309, %v2311
    %3505 = vmax.xlane.f32.xlu0 %v3504
    %v3506 = vpop.xlane.xlu0 %3505
    %v3507 = vmax.f32 %v2315, %v2317
    %3508 = vmax.xlane.f32.xlu0 %v3507
    %v3509 = vpop.xlane.xlu0 %3508
    %v3510 = vmax.f32 %v2319, %v2321
    %3511 = vmax.xlane.f32.xlu0 %v3510
    %v3512 = vpop.xlane.xlu0 %3511
    %v3513 = vmax.f32 %v2325, %v2327
    %3514 = vmax.xlane.f32.xlu0 %v3513
    %v3515 = vpop.xlane.xlu0 %3514
    %v3516 = vmax.f32 %v2329, %v2331
    %3517 = vmax.xlane.f32.xlu0 %v3516
    %v3518 = vpop.xlane.xlu0 %3517
    %v3519 = vmax.f32 %v2335, %v2337
    %3520 = vmax.xlane.f32.xlu0 %v3519
    %v3521 = vpop.xlane.xlu0 %3520
    %v3522 = vmax.f32 %v2339, %v2341
    %3523 = vmax.xlane.f32.xlu0 %v3522
    %v3524 = vpop.xlane.xlu0 %3523
    %v3525 = vmax.f32 %v2345, %v2347
    %3526 = vmax.xlane.f32.xlu0 %v3525
    %v3527 = vpop.xlane.xlu0 %3526
    %v3528 = vmax.f32 %v2349, %v2351
    %3529 = vmax.xlane.f32.xlu0 %v3528
    %v3530 = vpop.xlane.xlu0 %3529
    %v3531 = vmax.f32 %v2355, %v2357
    %3532 = vmax.xlane.f32.xlu0 %v3531
    %v3533 = vpop.xlane.xlu0 %3532
    %v3534 = vmax.f32 %v2359, %v2361
    %3535 = vmax.xlane.f32.xlu0 %v3534
    %v3536 = vpop.xlane.xlu0 %3535
    %v3537 = vmax.f32 %v2365, %v2367
    %3538 = vmax.xlane.f32.xlu0 %v3537
    %v3539 = vpop.xlane.xlu0 %3538
    %v3540 = vmax.f32 %v2369, %v2371
    %3541 = vmax.xlane.f32.xlu0 %v3540
    %v3542 = vpop.xlane.xlu0 %3541
    %v3543 = vmax.f32 %v2375, %v2377
    %3544 = vmax.xlane.f32.xlu0 %v3543
    %v3545 = vpop.xlane.xlu0 %3544
    %v3546 = vmax.f32 %v2379, %v2381
    %3547 = vmax.xlane.f32.xlu0 %v3546
    %v3548 = vpop.xlane.xlu0 %3547
    %v3549 = vmax.f32 %v2385, %v2387
    %3550 = vmax.xlane.f32.xlu0 %v3549
    %v3551 = vpop.xlane.xlu0 %3550
    %v3552 = vmax.f32 %v2389, %v2391
    %3553 = vmax.xlane.f32.xlu0 %v3552
    %v3554 = vpop.xlane.xlu0 %3553
    %v3555 = vmax.f32 %v2395, %v2397
    %3556 = vmax.xlane.f32.xlu0 %v3555
    %v3557 = vpop.xlane.xlu0 %3556
    %v3558 = vmax.f32 %v2399, %v2401
    %3559 = vmax.xlane.f32.xlu0 %v3558
    %v3560 = vpop.xlane.xlu0 %3559
    %v3561 = vmax.f32 %v2405, %v2407
    %3562 = vmax.xlane.f32.xlu0 %v3561
    %v3563 = vpop.xlane.xlu0 %3562
    %v3564 = vmax.f32 %v2409, %v2411
    %3565 = vmax.xlane.f32.xlu0 %v3564
    %v3566 = vpop.xlane.xlu0 %3565
    %v3567 = vmax.f32 %v2415, %v2417
    %3568 = vmax.xlane.f32.xlu0 %v3567
    %v3569 = vpop.xlane.xlu0 %3568
    %v3570 = vmax.f32 %v2419, %v2421
    %3571 = vmax.xlane.f32.xlu0 %v3570
    %v3572 = vpop.xlane.xlu0 %3571
    %v3573 = vmax.f32 %v2425, %v2427
    %3574 = vmax.xlane.f32.xlu0 %v3573
    %v3575 = vpop.xlane.xlu0 %3574
    %v3576 = vmax.f32 %v2429, %v2431
    %3577 = vmax.xlane.f32.xlu0 %v3576
    %v3578 = vpop.xlane.xlu0 %3577
    %v3579 = vmax.f32 %v2435, %v2437
    %3580 = vmax.xlane.f32.xlu0 %v3579
    %v3581 = vpop.xlane.xlu0 %3580
    %v3582 = vmax.f32 %v2439, %v2441
    %3583 = vmax.xlane.f32.xlu0 %v3582
    %v3584 = vpop.xlane.xlu0 %3583
    %v3585 = vmax.f32 %v2445, %v2447
    %3586 = vmax.xlane.f32.xlu0 %v3585
    %v3587 = vpop.xlane.xlu0 %3586
    %v3588 = vmax.f32 %v2449, %v2451
    %3589 = vmax.xlane.f32.xlu0 %v3588
    %v3590 = vpop.xlane.xlu0 %3589
    %v3591 = vmax.f32 %v2455, %v2457
    %3592 = vmax.xlane.f32.xlu0 %v3591
    %v3593 = vpop.xlane.xlu0 %3592
    %v3594 = vmax.f32 %v2459, %v2461
    %3595 = vmax.xlane.f32.xlu0 %v3594
    %v3596 = vpop.xlane.xlu0 %3595
    %v3597 = vmax.f32 %v2584, %v2586
    %3598 = vmax.xlane.f32.xlu0 %v3597
    %v3599 = vpop.xlane.xlu0 %3598
    %v3600 = vmax.f32 %v2588, %v2590
    %3601 = vmax.xlane.f32.xlu0 %v3600
    %v3602 = vpop.xlane.xlu0 %3601
    %v3603 = vmax.f32 %v2594, %v2596
    %3604 = vmax.xlane.f32.xlu0 %v3603
    %v3605 = vpop.xlane.xlu0 %3604
    %v3606 = vmax.f32 %v2598, %v2600
    %3607 = vmax.xlane.f32.xlu0 %v3606
    %v3608 = vpop.xlane.xlu0 %3607
    %v3609 = vmax.f32 %v2604, %v2606
    %3610 = vmax.xlane.f32.xlu0 %v3609
    %v3611 = vpop.xlane.xlu0 %3610
    %v3612 = vmax.f32 %v2608, %v2610
    %3613 = vmax.xlane.f32.xlu0 %v3612
    %v3614 = vpop.xlane.xlu0 %3613
    %v3615 = vmax.f32 %v2614, %v2616
    %3616 = vmax.xlane.f32.xlu0 %v3615
    %v3617 = vpop.xlane.xlu0 %3616
    %v3618 = vmax.f32 %v2618, %v2620
    %3619 = vmax.xlane.f32.xlu0 %v3618
    %v3620 = vpop.xlane.xlu0 %3619
    %v3621 = vmax.f32 %v2624, %v2626
    %3622 = vmax.xlane.f32.xlu0 %v3621
    %v3623 = vpop.xlane.xlu0 %3622
    %v3624 = vmax.f32 %v2628, %v2630
    %3625 = vmax.xlane.f32.xlu0 %v3624
    %v3626 = vpop.xlane.xlu0 %3625
    %v3627 = vmax.f32 %v2634, %v2636
    %3628 = vmax.xlane.f32.xlu0 %v3627
    %v3629 = vpop.xlane.xlu0 %3628
    %v3630 = vmax.f32 %v2638, %v2640
    %3631 = vmax.xlane.f32.xlu0 %v3630
    %v3632 = vpop.xlane.xlu0 %3631
    %v3633 = vmax.f32 %v2644, %v2646
    %3634 = vmax.xlane.f32.xlu0 %v3633
    %v3635 = vpop.xlane.xlu0 %3634
    %v3636 = vmax.f32 %v2648, %v2650
    %3637 = vmax.xlane.f32.xlu0 %v3636
    %v3638 = vpop.xlane.xlu0 %3637
    %v3639 = vmax.f32 %v2654, %v2656
    %3640 = vmax.xlane.f32.xlu0 %v3639
    %v3641 = vpop.xlane.xlu0 %3640
    %v3642 = vmax.f32 %v2658, %v2660
    %3643 = vmax.xlane.f32.xlu0 %v3642
    %v3644 = vpop.xlane.xlu0 %3643
    %v3645 = vmax.f32 %v2664, %v2666
    %3646 = vmax.xlane.f32.xlu0 %v3645
    %v3647 = vpop.xlane.xlu0 %3646
    %v3648 = vmax.f32 %v2668, %v2670
    %3649 = vmax.xlane.f32.xlu0 %v3648
    %v3650 = vpop.xlane.xlu0 %3649
    %v3651 = vmax.f32 %v2674, %v2676
    %3652 = vmax.xlane.f32.xlu0 %v3651
    %v3653 = vpop.xlane.xlu0 %3652
    %v3654 = vmax.f32 %v2678, %v2680
    %3655 = vmax.xlane.f32.xlu0 %v3654
    %v3656 = vpop.xlane.xlu0 %3655
    %v3657 = vmax.f32 %v2684, %v2686
    %3658 = vmax.xlane.f32.xlu0 %v3657
    %v3659 = vpop.xlane.xlu0 %3658
    %v3660 = vmax.f32 %v2688, %v2690
    %3661 = vmax.xlane.f32.xlu0 %v3660
    %v3662 = vpop.xlane.xlu0 %3661
    %v3663 = vmax.f32 %v2694, %v2696
    %3664 = vmax.xlane.f32.xlu0 %v3663
    %v3665 = vpop.xlane.xlu0 %3664
    %v3666 = vmax.f32 %v2698, %v2700
    %3667 = vmax.xlane.f32.xlu0 %v3666
    %v3668 = vpop.xlane.xlu0 %3667
    %v3669 = vmax.f32 %v2704, %v2706
    %3670 = vmax.xlane.f32.xlu0 %v3669
    %v3671 = vpop.xlane.xlu0 %3670
    %v3672 = vmax.f32 %v2708, %v2710
    %3673 = vmax.xlane.f32.xlu0 %v3672
    %v3674 = vpop.xlane.xlu0 %3673
    %v3675 = vmax.f32 %v2714, %v2716
    %3676 = vmax.xlane.f32.xlu0 %v3675
    %v3677 = vpop.xlane.xlu0 %3676
    %v3678 = vmax.f32 %v2718, %v2720
    %3679 = vmax.xlane.f32.xlu0 %v3678
    %v3680 = vpop.xlane.xlu0 %3679
    %v3681 = vmax.f32 %v2724, %v2726
    %3682 = vmax.xlane.f32.xlu0 %v3681
    %v3683 = vpop.xlane.xlu0 %3682
    %v3684 = vmax.f32 %v2728, %v2730
    %3685 = vmax.xlane.f32.xlu0 %v3684
    %v3686 = vpop.xlane.xlu0 %3685
    %v3687 = vmax.f32 %v2734, %v2736
    %3688 = vmax.xlane.f32.xlu0 %v3687
    %v3689 = vpop.xlane.xlu0 %3688
    %v3690 = vmax.f32 %v2738, %v2740
    %3691 = vmax.xlane.f32.xlu0 %v3690
    %v3692 = vpop.xlane.xlu0 %3691
    %v3693 = vmax.f32 %v2863, %v2865
    %3694 = vmax.xlane.f32.xlu0 %v3693
    %v3695 = vpop.xlane.xlu0 %3694
    %v3696 = vmax.f32 %v2867, %v2869
    %3697 = vmax.xlane.f32.xlu0 %v3696
    %v3698 = vpop.xlane.xlu0 %3697
    %v3699 = vmax.f32 %v2873, %v2875
    %3700 = vmax.xlane.f32.xlu0 %v3699
    %v3701 = vpop.xlane.xlu0 %3700
    %v3702 = vmax.f32 %v2877, %v2879
    %3703 = vmax.xlane.f32.xlu0 %v3702
    %v3704 = vpop.xlane.xlu0 %3703
    %v3705 = vmax.f32 %v2883, %v2885
    %3706 = vmax.xlane.f32.xlu0 %v3705
    %v3707 = vpop.xlane.xlu0 %3706
    %v3708 = vmax.f32 %v2887, %v2889
    %3709 = vmax.xlane.f32.xlu0 %v3708
    %v3710 = vpop.xlane.xlu0 %3709
    %v3711 = vmax.f32 %v2893, %v2895
    %3712 = vmax.xlane.f32.xlu0 %v3711
    %v3713 = vpop.xlane.xlu0 %3712
    %v3714 = vmax.f32 %v2897, %v2899
    %3715 = vmax.xlane.f32.xlu0 %v3714
    %v3716 = vpop.xlane.xlu0 %3715
    %v3717 = vmax.f32 %v2903, %v2905
    %3718 = vmax.xlane.f32.xlu0 %v3717
    %v3719 = vpop.xlane.xlu0 %3718
    %v3720 = vmax.f32 %v2907, %v2909
    %3721 = vmax.xlane.f32.xlu0 %v3720
    %v3722 = vpop.xlane.xlu0 %3721
    %v3723 = vmax.f32 %v2913, %v2915
    %3724 = vmax.xlane.f32.xlu0 %v3723
    %v3725 = vpop.xlane.xlu0 %3724
    %v3726 = vmax.f32 %v2917, %v2919
    %3727 = vmax.xlane.f32.xlu0 %v3726
    %v3728 = vpop.xlane.xlu0 %3727
    %v3729 = vmax.f32 %v2923, %v2925
    %3730 = vmax.xlane.f32.xlu0 %v3729
    %v3731 = vpop.xlane.xlu0 %3730
    %v3732 = vmax.f32 %v2927, %v2929
    %3733 = vmax.xlane.f32.xlu0 %v3732
    %v3734 = vpop.xlane.xlu0 %3733
    %v3735 = vmax.f32 %v2933, %v2935
    %3736 = vmax.xlane.f32.xlu0 %v3735
    %v3737 = vpop.xlane.xlu0 %3736
    %v3738 = vmax.f32 %v2937, %v2939
    %3739 = vmax.xlane.f32.xlu0 %v3738
    %v3740 = vpop.xlane.xlu0 %3739
    %v3741 = vmax.f32 %v2943, %v2945
    %3742 = vmax.xlane.f32.xlu0 %v3741
    %v3743 = vpop.xlane.xlu0 %3742
    %v3744 = vmax.f32 %v2947, %v2949
    %3745 = vmax.xlane.f32.xlu0 %v3744
    %v3746 = vpop.xlane.xlu0 %3745
    %v3747 = vmax.f32 %v2953, %v2955
    %3748 = vmax.xlane.f32.xlu0 %v3747
    %v3749 = vpop.xlane.xlu0 %3748
    %v3750 = vmax.f32 %v2957, %v2959
    %3751 = vmax.xlane.f32.xlu0 %v3750
    %v3752 = vpop.xlane.xlu0 %3751
    %v3753 = vmax.f32 %v2963, %v2965
    %3754 = vmax.xlane.f32.xlu0 %v3753
    %v3755 = vpop.xlane.xlu0 %3754
    %v3756 = vmax.f32 %v2967, %v2969
    %3757 = vmax.xlane.f32.xlu0 %v3756
    %v3758 = vpop.xlane.xlu0 %3757
    %v3759 = vmax.f32 %v2973, %v2975
    %3760 = vmax.xlane.f32.xlu0 %v3759
    %v3761 = vpop.xlane.xlu0 %3760
    %v3762 = vmax.f32 %v2977, %v2979
    %3763 = vmax.xlane.f32.xlu0 %v3762
    %v3764 = vpop.xlane.xlu0 %3763
    %v3765 = vmax.f32 %v2983, %v2985
    %3766 = vmax.xlane.f32.xlu0 %v3765
    %v3767 = vpop.xlane.xlu0 %3766
    %v3768 = vmax.f32 %v2987, %v2989
    %3769 = vmax.xlane.f32.xlu0 %v3768
    %v3770 = vpop.xlane.xlu0 %3769
    %v3771 = vmax.f32 %v2993, %v2995
    %3772 = vmax.xlane.f32.xlu0 %v3771
    %v3773 = vpop.xlane.xlu0 %3772
    %v3774 = vmax.f32 %v2997, %v2999
    %3775 = vmax.xlane.f32.xlu0 %v3774
    %v3776 = vpop.xlane.xlu0 %3775
    %v3777 = vmax.f32 %v3003, %v3005
    %3778 = vmax.xlane.f32.xlu0 %v3777
    %v3779 = vpop.xlane.xlu0 %3778
    %v3780 = vmax.f32 %v3007, %v3009
    %3781 = vmax.xlane.f32.xlu0 %v3780
    %v3782 = vpop.xlane.xlu0 %3781
    %v3783 = vmax.f32 %v3013, %v3015
    %3784 = vmax.xlane.f32.xlu0 %v3783
    %v3785 = vpop.xlane.xlu0 %3784
    %v3786 = vmax.f32 %v3017, %v3019
    %3787 = vmax.xlane.f32.xlu0 %v3786
    %v3788 = vpop.xlane.xlu0 %3787
    %v3789 = vsub.f32 %v910, %v3023
    %v3790 = vsub.f32 %v912, %v3023
    %v3791 = vsub.f32 %v914, %v3026
    %v3792 = vsub.f32 %v916, %v3026
    %v3793 = vsub.f32 %v920, %v3029
    %v3794 = vsub.f32 %v922, %v3029
    %v3795 = vsub.f32 %v924, %v3032
    %v3796 = vsub.f32 %v926, %v3032
    %v3797 = vsub.f32 %v930, %v3035
    %v3798 = vsub.f32 %v932, %v3035
    %v3799 = vsub.f32 %v934, %v3038
    %v3800 = vsub.f32 %v936, %v3038
    %v3801 = vsub.f32 %v940, %v3041
    %v3802 = vsub.f32 %v942, %v3041
    %v3803 = vsub.f32 %v944, %v3044
    %v3804 = vsub.f32 %v946, %v3044
    %v3805 = vsub.f32 %v950, %v3047
    %v3806 = vsub.f32 %v952, %v3047
    %v3807 = vsub.f32 %v954, %v3050
    %v3808 = vsub.f32 %v956, %v3050
    %v3809 = vsub.f32 %v960, %v3053
    %v3810 = vsub.f32 %v962, %v3053
    %v3811 = vsub.f32 %v964, %v3056
    %v3812 = vsub.f32 %v966, %v3056
    %v3813 = vsub.f32 %v970, %v3059
    %v3814 = vsub.f32 %v972, %v3059
    %v3815 = vsub.f32 %v974, %v3062
    %v3816 = vsub.f32 %v976, %v3062
    %v3817 = vsub.f32 %v980, %v3065
    %v3818 = vsub.f32 %v982, %v3065
    %v3819 = vsub.f32 %v984, %v3068
    %v3820 = vsub.f32 %v986, %v3068
    %v3821 = vsub.f32 %v990, %v3071
    %v3822 = vsub.f32 %v992, %v3071
    %v3823 = vsub.f32 %v994, %v3074
    %v3824 = vsub.f32 %v996, %v3074
    %v3825 = vsub.f32 %v1000, %v3077
    %v3826 = vsub.f32 %v1002, %v3077
    %v3827 = vsub.f32 %v1004, %v3080
    %v3828 = vsub.f32 %v1006, %v3080
    %v3829 = vsub.f32 %v1010, %v3083
    %v3830 = vsub.f32 %v1012, %v3083
    %v3831 = vsub.f32 %v1014, %v3086
    %v3832 = vsub.f32 %v1016, %v3086
    %v3833 = vsub.f32 %v1020, %v3089
    %v3834 = vsub.f32 %v1022, %v3089
    %v3835 = vsub.f32 %v1024, %v3092
    %v3836 = vsub.f32 %v1026, %v3092
    %v3837 = vsub.f32 %v1030, %v3095
    %v3838 = vsub.f32 %v1032, %v3095
    %v3839 = vsub.f32 %v1034, %v3098
    %v3840 = vsub.f32 %v1036, %v3098
    %v3841 = vsub.f32 %v1040, %v3101
    %v3842 = vsub.f32 %v1042, %v3101
    %v3843 = vsub.f32 %v1044, %v3104
    %v3844 = vsub.f32 %v1046, %v3104
    %v3845 = vsub.f32 %v1050, %v3107
    %v3846 = vsub.f32 %v1052, %v3107
    %v3847 = vsub.f32 %v1054, %v3110
    %v3848 = vsub.f32 %v1056, %v3110
    %v3849 = vsub.f32 %v1060, %v3113
    %v3850 = vsub.f32 %v1062, %v3113
    %v3851 = vsub.f32 %v1064, %v3116
    %v3852 = vsub.f32 %v1066, %v3116
    %v3853 = vsub.f32 %v1189, %v3119
    %v3854 = vsub.f32 %v1191, %v3119
    %v3855 = vsub.f32 %v1193, %v3122
    %v3856 = vsub.f32 %v1195, %v3122
    %v3857 = vsub.f32 %v1199, %v3125
    %v3858 = vsub.f32 %v1201, %v3125
    %v3859 = vsub.f32 %v1203, %v3128
    %v3860 = vsub.f32 %v1205, %v3128
    %v3861 = vsub.f32 %v1209, %v3131
    %v3862 = vsub.f32 %v1211, %v3131
    %v3863 = vsub.f32 %v1213, %v3134
    %v3864 = vsub.f32 %v1215, %v3134
    %v3865 = vsub.f32 %v1219, %v3137
    %v3866 = vsub.f32 %v1221, %v3137
    %v3867 = vsub.f32 %v1223, %v3140
    %v3868 = vsub.f32 %v1225, %v3140
    %v3869 = vsub.f32 %v1229, %v3143
    %v3870 = vsub.f32 %v1231, %v3143
    %v3871 = vsub.f32 %v1233, %v3146
    %v3872 = vsub.f32 %v1235, %v3146
    %v3873 = vsub.f32 %v1239, %v3149
    %v3874 = vsub.f32 %v1241, %v3149
    %v3875 = vsub.f32 %v1243, %v3152
    %v3876 = vsub.f32 %v1245, %v3152
    %v3877 = vsub.f32 %v1249, %v3155
    %v3878 = vsub.f32 %v1251, %v3155
    %v3879 = vsub.f32 %v1253, %v3158
    %v3880 = vsub.f32 %v1255, %v3158
    %v3881 = vsub.f32 %v1259, %v3161
    %v3882 = vsub.f32 %v1261, %v3161
    %v3883 = vsub.f32 %v1263, %v3164
    %v3884 = vsub.f32 %v1265, %v3164
    %v3885 = vsub.f32 %v1269, %v3167
    %v3886 = vsub.f32 %v1271, %v3167
    %v3887 = vsub.f32 %v1273, %v3170
    %v3888 = vsub.f32 %v1275, %v3170
    %v3889 = vsub.f32 %v1279, %v3173
    %v3890 = vsub.f32 %v1281, %v3173
    %v3891 = vsub.f32 %v1283, %v3176
    %v3892 = vsub.f32 %v1285, %v3176
    %v3893 = vsub.f32 %v1289, %v3179
    %v3894 = vsub.f32 %v1291, %v3179
    %v3895 = vsub.f32 %v1293, %v3182
    %v3896 = vsub.f32 %v1295, %v3182
    %v3897 = vsub.f32 %v1299, %v3185
    %v3898 = vsub.f32 %v1301, %v3185
    %v3899 = vsub.f32 %v1303, %v3188
    %v3900 = vsub.f32 %v1305, %v3188
    %v3901 = vsub.f32 %v1309, %v3191
    %v3902 = vsub.f32 %v1311, %v3191
    %v3903 = vsub.f32 %v1313, %v3194
    %v3904 = vsub.f32 %v1315, %v3194
    %v3905 = vsub.f32 %v1319, %v3197
    %v3906 = vsub.f32 %v1321, %v3197
    %v3907 = vsub.f32 %v1323, %v3200
    %v3908 = vsub.f32 %v1325, %v3200
    %v3909 = vsub.f32 %v1329, %v3203
    %v3910 = vsub.f32 %v1331, %v3203
    %v3911 = vsub.f32 %v1333, %v3206
    %v3912 = vsub.f32 %v1335, %v3206
    %v3913 = vsub.f32 %v1339, %v3209
    %v3914 = vsub.f32 %v1341, %v3209
    %v3915 = vsub.f32 %v1343, %v3212
    %v3916 = vsub.f32 %v1345, %v3212
    %v3917 = vsub.f32 %v1468, %v3215
    %v3918 = vsub.f32 %v1470, %v3215
    %v3919 = vsub.f32 %v1472, %v3218
    %v3920 = vsub.f32 %v1474, %v3218
    %v3921 = vsub.f32 %v1478, %v3221
    %v3922 = vsub.f32 %v1480, %v3221
    %v3923 = vsub.f32 %v1482, %v3224
    %v3924 = vsub.f32 %v1484, %v3224
    %v3925 = vsub.f32 %v1488, %v3227
    %v3926 = vsub.f32 %v1490, %v3227
    %v3927 = vsub.f32 %v1492, %v3230
    %v3928 = vsub.f32 %v1494, %v3230
    %v3929 = vsub.f32 %v1498, %v3233
    %v3930 = vsub.f32 %v1500, %v3233
    %v3931 = vsub.f32 %v1502, %v3236
    %v3932 = vsub.f32 %v1504, %v3236
    %v3933 = vsub.f32 %v1508, %v3239
    %v3934 = vsub.f32 %v1510, %v3239
    %v3935 = vsub.f32 %v1512, %v3242
    %v3936 = vsub.f32 %v1514, %v3242
    %v3937 = vsub.f32 %v1518, %v3245
    %v3938 = vsub.f32 %v1520, %v3245
    %v3939 = vsub.f32 %v1522, %v3248
    %v3940 = vsub.f32 %v1524, %v3248
    %v3941 = vsub.f32 %v1528, %v3251
    %v3942 = vsub.f32 %v1530, %v3251
    %v3943 = vsub.f32 %v1532, %v3254
    %v3944 = vsub.f32 %v1534, %v3254
    %v3945 = vsub.f32 %v1538, %v3257
    %v3946 = vsub.f32 %v1540, %v3257
    %v3947 = vsub.f32 %v1542, %v3260
    %v3948 = vsub.f32 %v1544, %v3260
    %v3949 = vsub.f32 %v1548, %v3263
    %v3950 = vsub.f32 %v1550, %v3263
    %v3951 = vsub.f32 %v1552, %v3266
    %v3952 = vsub.f32 %v1554, %v3266
    %v3953 = vsub.f32 %v1558, %v3269
    %v3954 = vsub.f32 %v1560, %v3269
    %v3955 = vsub.f32 %v1562, %v3272
    %v3956 = vsub.f32 %v1564, %v3272
    %v3957 = vsub.f32 %v1568, %v3275
    %v3958 = vsub.f32 %v1570, %v3275
    %v3959 = vsub.f32 %v1572, %v3278
    %v3960 = vsub.f32 %v1574, %v3278
    %v3961 = vsub.f32 %v1578, %v3281
    %v3962 = vsub.f32 %v1580, %v3281
    %v3963 = vsub.f32 %v1582, %v3284
    %v3964 = vsub.f32 %v1584, %v3284
    %v3965 = vsub.f32 %v1588, %v3287
    %v3966 = vsub.f32 %v1590, %v3287
    %v3967 = vsub.f32 %v1592, %v3290
    %v3968 = vsub.f32 %v1594, %v3290
    %v3969 = vsub.f32 %v1598, %v3293
    %v3970 = vsub.f32 %v1600, %v3293
    %v3971 = vsub.f32 %v1602, %v3296
    %v3972 = vsub.f32 %v1604, %v3296
    %v3973 = vsub.f32 %v1608, %v3299
    %v3974 = vsub.f32 %v1610, %v3299
    %v3975 = vsub.f32 %v1612, %v3302
    %v3976 = vsub.f32 %v1614, %v3302
    %v3977 = vsub.f32 %v1618, %v3305
    %v3978 = vsub.f32 %v1620, %v3305
    %v3979 = vsub.f32 %v1622, %v3308
    %v3980 = vsub.f32 %v1624, %v3308
    %v3981 = vsub.f32 %v1747, %v3311
    %v3982 = vsub.f32 %v1749, %v3311
    %v3983 = vsub.f32 %v1751, %v3314
    %v3984 = vsub.f32 %v1753, %v3314
    %v3985 = vsub.f32 %v1757, %v3317
    %v3986 = vsub.f32 %v1759, %v3317
    %v3987 = vsub.f32 %v1761, %v3320
    %v3988 = vsub.f32 %v1763, %v3320
    %v3989 = vsub.f32 %v1767, %v3323
    %v3990 = vsub.f32 %v1769, %v3323
    %v3991 = vsub.f32 %v1771, %v3326
    %v3992 = vsub.f32 %v1773, %v3326
    %v3993 = vsub.f32 %v1777, %v3329
    %v3994 = vsub.f32 %v1779, %v3329
    %v3995 = vsub.f32 %v1781, %v3332
    %v3996 = vsub.f32 %v1783, %v3332
    %v3997 = vsub.f32 %v1787, %v3335
    %v3998 = vsub.f32 %v1789, %v3335
    %v3999 = vsub.f32 %v1791, %v3338
    %v4000 = vsub.f32 %v1793, %v3338
    %v4001 = vsub.f32 %v1797, %v3341
    %v4002 = vsub.f32 %v1799, %v3341
    %v4003 = vsub.f32 %v1801, %v3344
    %v4004 = vsub.f32 %v1803, %v3344
    %v4005 = vsub.f32 %v1807, %v3347
    %v4006 = vsub.f32 %v1809, %v3347
    %v4007 = vsub.f32 %v1811, %v3350
    %v4008 = vsub.f32 %v1813, %v3350
    %v4009 = vsub.f32 %v1817, %v3353
    %v4010 = vsub.f32 %v1819, %v3353
    %v4011 = vsub.f32 %v1821, %v3356
    %v4012 = vsub.f32 %v1823, %v3356
    %v4013 = vsub.f32 %v1827, %v3359
    %v4014 = vsub.f32 %v1829, %v3359
    %v4015 = vsub.f32 %v1831, %v3362
    %v4016 = vsub.f32 %v1833, %v3362
    %v4017 = vsub.f32 %v1837, %v3365
    %v4018 = vsub.f32 %v1839, %v3365
    %v4019 = vsub.f32 %v1841, %v3368
    %v4020 = vsub.f32 %v1843, %v3368
    %v4021 = vsub.f32 %v1847, %v3371
    %v4022 = vsub.f32 %v1849, %v3371
    %v4023 = vsub.f32 %v1851, %v3374
    %v4024 = vsub.f32 %v1853, %v3374
    %v4025 = vsub.f32 %v1857, %v3377
    %v4026 = vsub.f32 %v1859, %v3377
    %v4027 = vsub.f32 %v1861, %v3380
    %v4028 = vsub.f32 %v1863, %v3380
    %v4029 = vsub.f32 %v1867, %v3383
    %v4030 = vsub.f32 %v1869, %v3383
    %v4031 = vsub.f32 %v1871, %v3386
    %v4032 = vsub.f32 %v1873, %v3386
    %v4033 = vsub.f32 %v1877, %v3389
    %v4034 = vsub.f32 %v1879, %v3389
    %v4035 = vsub.f32 %v1881, %v3392
    %v4036 = vsub.f32 %v1883, %v3392
    %v4037 = vsub.f32 %v1887, %v3395
    %v4038 = vsub.f32 %v1889, %v3395
    %v4039 = vsub.f32 %v1891, %v3398
    %v4040 = vsub.f32 %v1893, %v3398
    %v4041 = vsub.f32 %v1897, %v3401
    %v4042 = vsub.f32 %v1899, %v3401
    %v4043 = vsub.f32 %v1901, %v3404
    %v4044 = vsub.f32 %v1903, %v3404
    %v4045 = vsub.f32 %v2026, %v3407
    %v4046 = vsub.f32 %v2028, %v3407
    %v4047 = vsub.f32 %v2030, %v3410
    %v4048 = vsub.f32 %v2032, %v3410
    %v4049 = vsub.f32 %v2036, %v3413
    %v4050 = vsub.f32 %v2038, %v3413
    %v4051 = vsub.f32 %v2040, %v3416
    %v4052 = vsub.f32 %v2042, %v3416
    %v4053 = vsub.f32 %v2046, %v3419
    %v4054 = vsub.f32 %v2048, %v3419
    %v4055 = vsub.f32 %v2050, %v3422
    %v4056 = vsub.f32 %v2052, %v3422
    %v4057 = vsub.f32 %v2056, %v3425
    %v4058 = vsub.f32 %v2058, %v3425
    %v4059 = vsub.f32 %v2060, %v3428
    %v4060 = vsub.f32 %v2062, %v3428
    %v4061 = vsub.f32 %v2066, %v3431
    %v4062 = vsub.f32 %v2068, %v3431
    %v4063 = vsub.f32 %v2070, %v3434
    %v4064 = vsub.f32 %v2072, %v3434
    %v4065 = vsub.f32 %v2076, %v3437
    %v4066 = vsub.f32 %v2078, %v3437
    %v4067 = vsub.f32 %v2080, %v3440
    %v4068 = vsub.f32 %v2082, %v3440
    %v4069 = vsub.f32 %v2086, %v3443
    %v4070 = vsub.f32 %v2088, %v3443
    %v4071 = vsub.f32 %v2090, %v3446
    %v4072 = vsub.f32 %v2092, %v3446
    %v4073 = vsub.f32 %v2096, %v3449
    %v4074 = vsub.f32 %v2098, %v3449
    %v4075 = vsub.f32 %v2100, %v3452
    %v4076 = vsub.f32 %v2102, %v3452
    %v4077 = vsub.f32 %v2106, %v3455
    %v4078 = vsub.f32 %v2108, %v3455
    %v4079 = vsub.f32 %v2110, %v3458
    %v4080 = vsub.f32 %v2112, %v3458
    %v4081 = vsub.f32 %v2116, %v3461
    %v4082 = vsub.f32 %v2118, %v3461
    %v4083 = vsub.f32 %v2120, %v3464
    %v4084 = vsub.f32 %v2122, %v3464
    %v4085 = vsub.f32 %v2126, %v3467
    %v4086 = vsub.f32 %v2128, %v3467
    %v4087 = vsub.f32 %v2130, %v3470
    %v4088 = vsub.f32 %v2132, %v3470
    %v4089 = vsub.f32 %v2136, %v3473
    %v4090 = vsub.f32 %v2138, %v3473
    %v4091 = vsub.f32 %v2140, %v3476
    %v4092 = vsub.f32 %v2142, %v3476
    %v4093 = vsub.f32 %v2146, %v3479
    %v4094 = vsub.f32 %v2148, %v3479
    %v4095 = vsub.f32 %v2150, %v3482
    %v4096 = vsub.f32 %v2152, %v3482
    %v4097 = vsub.f32 %v2156, %v3485
    %v4098 = vsub.f32 %v2158, %v3485
    %v4099 = vsub.f32 %v2160, %v3488
    %v4100 = vsub.f32 %v2162, %v3488
    %v4101 = vsub.f32 %v2166, %v3491
    %v4102 = vsub.f32 %v2168, %v3491
    %v4103 = vsub.f32 %v2170, %v3494
    %v4104 = vsub.f32 %v2172, %v3494
    %v4105 = vsub.f32 %v2176, %v3497
    %v4106 = vsub.f32 %v2178, %v3497
    %v4107 = vsub.f32 %v2180, %v3500
    %v4108 = vsub.f32 %v2182, %v3500
    %v4109 = vsub.f32 %v2305, %v3503
    %v4110 = vsub.f32 %v2307, %v3503
    %v4111 = vsub.f32 %v2309, %v3506
    %v4112 = vsub.f32 %v2311, %v3506
    %v4113 = vsub.f32 %v2315, %v3509
    %v4114 = vsub.f32 %v2317, %v3509
    %v4115 = vsub.f32 %v2319, %v3512
    %v4116 = vsub.f32 %v2321, %v3512
    %v4117 = vsub.f32 %v2325, %v3515
    %v4118 = vsub.f32 %v2327, %v3515
    %v4119 = vsub.f32 %v2329, %v3518
    %v4120 = vsub.f32 %v2331, %v3518
    %v4121 = vsub.f32 %v2335, %v3521
    %v4122 = vsub.f32 %v2337, %v3521
    %v4123 = vsub.f32 %v2339, %v3524
    %v4124 = vsub.f32 %v2341, %v3524
    %v4125 = vsub.f32 %v2345, %v3527
    %v4126 = vsub.f32 %v2347, %v3527
    %v4127 = vsub.f32 %v2349, %v3530
    %v4128 = vsub.f32 %v2351, %v3530
    %v4129 = vsub.f32 %v2355, %v3533
    %v4130 = vsub.f32 %v2357, %v3533
    %v4131 = vsub.f32 %v2359, %v3536
    %v4132 = vsub.f32 %v2361, %v3536
    %v4133 = vsub.f32 %v2365, %v3539
    %v4134 = vsub.f32 %v2367, %v3539
    %v4135 = vsub.f32 %v2369, %v3542
    %v4136 = vsub.f32 %v2371, %v3542
    %v4137 = vsub.f32 %v2375, %v3545
    %v4138 = vsub.f32 %v2377, %v3545
    %v4139 = vsub.f32 %v2379, %v3548
    %v4140 = vsub.f32 %v2381, %v3548
    %v4141 = vsub.f32 %v2385, %v3551
    %v4142 = vsub.f32 %v2387, %v3551
    %v4143 = vsub.f32 %v2389, %v3554
    %v4144 = vsub.f32 %v2391, %v3554
    %v4145 = vsub.f32 %v2395, %v3557
    %v4146 = vsub.f32 %v2397, %v3557
    %v4147 = vsub.f32 %v2399, %v3560
    %v4148 = vsub.f32 %v2401, %v3560
    %v4149 = vsub.f32 %v2405, %v3563
    %v4150 = vsub.f32 %v2407, %v3563
    %v4151 = vsub.f32 %v2409, %v3566
    %v4152 = vsub.f32 %v2411, %v3566
    %v4153 = vsub.f32 %v2415, %v3569
    %v4154 = vsub.f32 %v2417, %v3569
    %v4155 = vsub.f32 %v2419, %v3572
    %v4156 = vsub.f32 %v2421, %v3572
    %v4157 = vsub.f32 %v2425, %v3575
    %v4158 = vsub.f32 %v2427, %v3575
    %v4159 = vsub.f32 %v2429, %v3578
    %v4160 = vsub.f32 %v2431, %v3578
    %v4161 = vsub.f32 %v2435, %v3581
    %v4162 = vsub.f32 %v2437, %v3581
    %v4163 = vsub.f32 %v2439, %v3584
    %v4164 = vsub.f32 %v2441, %v3584
    %v4165 = vsub.f32 %v2445, %v3587
    %v4166 = vsub.f32 %v2447, %v3587
    %v4167 = vsub.f32 %v2449, %v3590
    %v4168 = vsub.f32 %v2451, %v3590
    %v4169 = vsub.f32 %v2455, %v3593
    %v4170 = vsub.f32 %v2457, %v3593
    %v4171 = vsub.f32 %v2459, %v3596
    %v4172 = vsub.f32 %v2461, %v3596
    %v4173 = vsub.f32 %v2584, %v3599
    %v4174 = vsub.f32 %v2586, %v3599
    %v4175 = vsub.f32 %v2588, %v3602
    %v4176 = vsub.f32 %v2590, %v3602
    %v4177 = vsub.f32 %v2594, %v3605
    %v4178 = vsub.f32 %v2596, %v3605
    %v4179 = vsub.f32 %v2598, %v3608
    %v4180 = vsub.f32 %v2600, %v3608
    %v4181 = vsub.f32 %v2604, %v3611
    %v4182 = vsub.f32 %v2606, %v3611
    %v4183 = vsub.f32 %v2608, %v3614
    %v4184 = vsub.f32 %v2610, %v3614
    %v4185 = vsub.f32 %v2614, %v3617
    %v4186 = vsub.f32 %v2616, %v3617
    %v4187 = vsub.f32 %v2618, %v3620
    %v4188 = vsub.f32 %v2620, %v3620
    %v4189 = vsub.f32 %v2624, %v3623
    %v4190 = vsub.f32 %v2626, %v3623
    %v4191 = vsub.f32 %v2628, %v3626
    %v4192 = vsub.f32 %v2630, %v3626
    %v4193 = vsub.f32 %v2634, %v3629
    %v4194 = vsub.f32 %v2636, %v3629
    %v4195 = vsub.f32 %v2638, %v3632
    %v4196 = vsub.f32 %v2640, %v3632
    %v4197 = vsub.f32 %v2644, %v3635
    %v4198 = vsub.f32 %v2646, %v3635
    %v4199 = vsub.f32 %v2648, %v3638
    %v4200 = vsub.f32 %v2650, %v3638
    %v4201 = vsub.f32 %v2654, %v3641
    %v4202 = vsub.f32 %v2656, %v3641
    %v4203 = vsub.f32 %v2658, %v3644
    %v4204 = vsub.f32 %v2660, %v3644
    %v4205 = vsub.f32 %v2664, %v3647
    %v4206 = vsub.f32 %v2666, %v3647
    %v4207 = vsub.f32 %v2668, %v3650
    %v4208 = vsub.f32 %v2670, %v3650
    %v4209 = vsub.f32 %v2674, %v3653
    %v4210 = vsub.f32 %v2676, %v3653
    %v4211 = vsub.f32 %v2678, %v3656
    %v4212 = vsub.f32 %v2680, %v3656
    %v4213 = vsub.f32 %v2684, %v3659
    %v4214 = vsub.f32 %v2686, %v3659
    %v4215 = vsub.f32 %v2688, %v3662
    %v4216 = vsub.f32 %v2690, %v3662
    %v4217 = vsub.f32 %v2694, %v3665
    %v4218 = vsub.f32 %v2696, %v3665
    %v4219 = vsub.f32 %v2698, %v3668
    %v4220 = vsub.f32 %v2700, %v3668
    %v4221 = vsub.f32 %v2704, %v3671
    %v4222 = vsub.f32 %v2706, %v3671
    %v4223 = vsub.f32 %v2708, %v3674
    %v4224 = vsub.f32 %v2710, %v3674
    %v4225 = vsub.f32 %v2714, %v3677
    %v4226 = vsub.f32 %v2716, %v3677
    %v4227 = vsub.f32 %v2718, %v3680
    %v4228 = vsub.f32 %v2720, %v3680
    %v4229 = vsub.f32 %v2724, %v3683
    %v4230 = vsub.f32 %v2726, %v3683
    %v4231 = vsub.f32 %v2728, %v3686
    %v4232 = vsub.f32 %v2730, %v3686
    %v4233 = vsub.f32 %v2734, %v3689
    %v4234 = vsub.f32 %v2736, %v3689
    %v4235 = vsub.f32 %v2738, %v3692
    %v4236 = vsub.f32 %v2740, %v3692
    %v4237 = vsub.f32 %v2863, %v3695
    %v4238 = vsub.f32 %v2865, %v3695
    %v4239 = vsub.f32 %v2867, %v3698
    %v4240 = vsub.f32 %v2869, %v3698
    %v4241 = vsub.f32 %v2873, %v3701
    %v4242 = vsub.f32 %v2875, %v3701
    %v4243 = vsub.f32 %v2877, %v3704
    %v4244 = vsub.f32 %v2879, %v3704
    %v4245 = vsub.f32 %v2883, %v3707
    %v4246 = vsub.f32 %v2885, %v3707
    %v4247 = vsub.f32 %v2887, %v3710
    %v4248 = vsub.f32 %v2889, %v3710
    %v4249 = vsub.f32 %v2893, %v3713
    %v4250 = vsub.f32 %v2895, %v3713
    %v4251 = vsub.f32 %v2897, %v3716
    %v4252 = vsub.f32 %v2899, %v3716
    %v4253 = vsub.f32 %v2903, %v3719
    %v4254 = vsub.f32 %v2905, %v3719
    %v4255 = vsub.f32 %v2907, %v3722
    %v4256 = vsub.f32 %v2909, %v3722
    %v4257 = vsub.f32 %v2913, %v3725
    %v4258 = vsub.f32 %v2915, %v3725
    %v4259 = vsub.f32 %v2917, %v3728
    %v4260 = vsub.f32 %v2919, %v3728
    %v4261 = vsub.f32 %v2923, %v3731
    %v4262 = vsub.f32 %v2925, %v3731
    %v4263 = vsub.f32 %v2927, %v3734
    %v4264 = vsub.f32 %v2929, %v3734
    %v4265 = vsub.f32 %v2933, %v3737
    %v4266 = vsub.f32 %v2935, %v3737
    %v4267 = vsub.f32 %v2937, %v3740
    %v4268 = vsub.f32 %v2939, %v3740
    %v4269 = vsub.f32 %v2943, %v3743
    %v4270 = vsub.f32 %v2945, %v3743
    %v4271 = vsub.f32 %v2947, %v3746
    %v4272 = vsub.f32 %v2949, %v3746
    %v4273 = vsub.f32 %v2953, %v3749
    %v4274 = vsub.f32 %v2955, %v3749
    %v4275 = vsub.f32 %v2957, %v3752
    %v4276 = vsub.f32 %v2959, %v3752
    %v4277 = vsub.f32 %v2963, %v3755
    %v4278 = vsub.f32 %v2965, %v3755
    %v4279 = vsub.f32 %v2967, %v3758
    %v4280 = vsub.f32 %v2969, %v3758
    %v4281 = vsub.f32 %v2973, %v3761
    %v4282 = vsub.f32 %v2975, %v3761
    %v4283 = vsub.f32 %v2977, %v3764
    %v4284 = vsub.f32 %v2979, %v3764
    %v4285 = vsub.f32 %v2983, %v3767
    %v4286 = vsub.f32 %v2985, %v3767
    %v4287 = vsub.f32 %v2987, %v3770
    %v4288 = vsub.f32 %v2989, %v3770
    %v4289 = vsub.f32 %v2993, %v3773
    %v4290 = vsub.f32 %v2995, %v3773
    %v4291 = vsub.f32 %v2997, %v3776
    %v4292 = vsub.f32 %v2999, %v3776
    %v4293 = vsub.f32 %v3003, %v3779
    %v4294 = vsub.f32 %v3005, %v3779
    %v4295 = vsub.f32 %v3007, %v3782
    %v4296 = vsub.f32 %v3009, %v3782
    %v4297 = vsub.f32 %v3013, %v3785
    %v4298 = vsub.f32 %v3015, %v3785
    %v4299 = vsub.f32 %v3017, %v3788
    %v4300 = vsub.f32 %v3019, %v3788
    %v4301 = vmul.f32 %v3789, 1.442695
    %v4302 = vpow.pop %v4301
    %v4303 = vmul.f32 %v3790, 1.442695
    %v4304 = vpow.pop %v4303
    %v4305 = vmul.f32 %v3791, 1.442695
    %v4306 = vpow.pop %v4305
    %v4307 = vmul.f32 %v3792, 1.442695
    %v4308 = vpow.pop %v4307
    %v4309 = vmul.f32 %v3793, 1.442695
    %v4310 = vpow.pop %v4309
    %v4311 = vmul.f32 %v3794, 1.442695
    %v4312 = vpow.pop %v4311
    %v4313 = vmul.f32 %v3795, 1.442695
    %v4314 = vpow.pop %v4313
    %v4315 = vmul.f32 %v3796, 1.442695
    %v4316 = vpow.pop %v4315
    %v4317 = vmul.f32 %v3797, 1.442695
    %v4318 = vpow.pop %v4317
    %v4319 = vmul.f32 %v3798, 1.442695
    %v4320 = vpow.pop %v4319
    %v4321 = vmul.f32 %v3799, 1.442695
    %v4322 = vpow.pop %v4321
    %v4323 = vmul.f32 %v3800, 1.442695
    %v4324 = vpow.pop %v4323
    %v4325 = vmul.f32 %v3801, 1.442695
    %v4326 = vpow.pop %v4325
    %v4327 = vmul.f32 %v3802, 1.442695
    %v4328 = vpow.pop %v4327
    %v4329 = vmul.f32 %v3803, 1.442695
    %v4330 = vpow.pop %v4329
    %v4331 = vmul.f32 %v3804, 1.442695
    %v4332 = vpow.pop %v4331
    %v4333 = vmul.f32 %v3805, 1.442695
    %v4334 = vpow.pop %v4333
    %v4335 = vmul.f32 %v3806, 1.442695
    %v4336 = vpow.pop %v4335
    %v4337 = vmul.f32 %v3807, 1.442695
    %v4338 = vpow.pop %v4337
    %v4339 = vmul.f32 %v3808, 1.442695
    %v4340 = vpow.pop %v4339
    %v4341 = vmul.f32 %v3809, 1.442695
    %v4342 = vpow.pop %v4341
    %v4343 = vmul.f32 %v3810, 1.442695
    %v4344 = vpow.pop %v4343
    %v4345 = vmul.f32 %v3811, 1.442695
    %v4346 = vpow.pop %v4345
    %v4347 = vmul.f32 %v3812, 1.442695
    %v4348 = vpow.pop %v4347
    %v4349 = vmul.f32 %v3813, 1.442695
    %v4350 = vpow.pop %v4349
    %v4351 = vmul.f32 %v3814, 1.442695
    %v4352 = vpow.pop %v4351
    %v4353 = vmul.f32 %v3815, 1.442695
    %v4354 = vpow.pop %v4353
    %v4355 = vmul.f32 %v3816, 1.442695
    %v4356 = vpow.pop %v4355
    %v4357 = vmul.f32 %v3817, 1.442695
    %v4358 = vpow.pop %v4357
    %v4359 = vmul.f32 %v3818, 1.442695
    %v4360 = vpow.pop %v4359
    %v4361 = vmul.f32 %v3819, 1.442695
    %v4362 = vpow.pop %v4361
    %v4363 = vmul.f32 %v3820, 1.442695
    %v4364 = vpow.pop %v4363
    %v4365 = vmul.f32 %v3821, 1.442695
    %v4366 = vpow.pop %v4365
    %v4367 = vmul.f32 %v3822, 1.442695
    %v4368 = vpow.pop %v4367
    %v4369 = vmul.f32 %v3823, 1.442695
    %v4370 = vpow.pop %v4369
    %v4371 = vmul.f32 %v3824, 1.442695
    %v4372 = vpow.pop %v4371
    %v4373 = vmul.f32 %v3825, 1.442695
    %v4374 = vpow.pop %v4373
    %v4375 = vmul.f32 %v3826, 1.442695
    %v4376 = vpow.pop %v4375
    %v4377 = vmul.f32 %v3827, 1.442695
    %v4378 = vpow.pop %v4377
    %v4379 = vmul.f32 %v3828, 1.442695
    %v4380 = vpow.pop %v4379
    %v4381 = vmul.f32 %v3829, 1.442695
    %v4382 = vpow.pop %v4381
    %v4383 = vmul.f32 %v3830, 1.442695
    %v4384 = vpow.pop %v4383
    %v4385 = vmul.f32 %v3831, 1.442695
    %v4386 = vpow.pop %v4385
    %v4387 = vmul.f32 %v3832, 1.442695
    %v4388 = vpow.pop %v4387
    %v4389 = vmul.f32 %v3833, 1.442695
    %v4390 = vpow.pop %v4389
    %v4391 = vmul.f32 %v3834, 1.442695
    %v4392 = vpow.pop %v4391
    %v4393 = vmul.f32 %v3835, 1.442695
    %v4394 = vpow.pop %v4393
    %v4395 = vmul.f32 %v3836, 1.442695
    %v4396 = vpow.pop %v4395
    %v4397 = vmul.f32 %v3837, 1.442695
    %v4398 = vpow.pop %v4397
    %v4399 = vmul.f32 %v3838, 1.442695
    %v4400 = vpow.pop %v4399
    %v4401 = vmul.f32 %v3839, 1.442695
    %v4402 = vpow.pop %v4401
    %v4403 = vmul.f32 %v3840, 1.442695
    %v4404 = vpow.pop %v4403
    %v4405 = vmul.f32 %v3841, 1.442695
    %v4406 = vpow.pop %v4405
    %v4407 = vmul.f32 %v3842, 1.442695
    %v4408 = vpow.pop %v4407
    %v4409 = vmul.f32 %v3843, 1.442695
    %v4410 = vpow.pop %v4409
    %v4411 = vmul.f32 %v3844, 1.442695
    %v4412 = vpow.pop %v4411
    %v4413 = vmul.f32 %v3845, 1.442695
    %v4414 = vpow.pop %v4413
    %v4415 = vmul.f32 %v3846, 1.442695
    %v4416 = vpow.pop %v4415
    %v4417 = vmul.f32 %v3847, 1.442695
    %v4418 = vpow.pop %v4417
    %v4419 = vmul.f32 %v3848, 1.442695
    %v4420 = vpow.pop %v4419
    %v4421 = vmul.f32 %v3849, 1.442695
    %v4422 = vpow.pop %v4421
    %v4423 = vmul.f32 %v3850, 1.442695
    %v4424 = vpow.pop %v4423
    %v4425 = vmul.f32 %v3851, 1.442695
    %v4426 = vpow.pop %v4425
    %v4427 = vmul.f32 %v3852, 1.442695
    %v4428 = vpow.pop %v4427
    %v4429 = vmul.f32 %v3853, 1.442695
    %v4430 = vpow.pop %v4429
    %v4431 = vmul.f32 %v3854, 1.442695
    %v4432 = vpow.pop %v4431
    %v4433 = vmul.f32 %v3855, 1.442695
    %v4434 = vpow.pop %v4433
    %v4435 = vmul.f32 %v3856, 1.442695
    %v4436 = vpow.pop %v4435
    %v4437 = vmul.f32 %v3857, 1.442695
    %v4438 = vpow.pop %v4437
    %v4439 = vmul.f32 %v3858, 1.442695
    %v4440 = vpow.pop %v4439
    %v4441 = vmul.f32 %v3859, 1.442695
    %v4442 = vpow.pop %v4441
    %v4443 = vmul.f32 %v3860, 1.442695
    %v4444 = vpow.pop %v4443
    %v4445 = vmul.f32 %v3861, 1.442695
    %v4446 = vpow.pop %v4445
    %v4447 = vmul.f32 %v3862, 1.442695
    %v4448 = vpow.pop %v4447
    %v4449 = vmul.f32 %v3863, 1.442695
    %v4450 = vpow.pop %v4449
    %v4451 = vmul.f32 %v3864, 1.442695
    %v4452 = vpow.pop %v4451
    %v4453 = vmul.f32 %v3865, 1.442695
    %v4454 = vpow.pop %v4453
    %v4455 = vmul.f32 %v3866, 1.442695
    %v4456 = vpow.pop %v4455
    %v4457 = vmul.f32 %v3867, 1.442695
    %v4458 = vpow.pop %v4457
    %v4459 = vmul.f32 %v3868, 1.442695
    %v4460 = vpow.pop %v4459
    %v4461 = vmul.f32 %v3869, 1.442695
    %v4462 = vpow.pop %v4461
    %v4463 = vmul.f32 %v3870, 1.442695
    %v4464 = vpow.pop %v4463
    %v4465 = vmul.f32 %v3871, 1.442695
    %v4466 = vpow.pop %v4465
    %v4467 = vmul.f32 %v3872, 1.442695
    %v4468 = vpow.pop %v4467
    %v4469 = vmul.f32 %v3873, 1.442695
    %v4470 = vpow.pop %v4469
    %v4471 = vmul.f32 %v3874, 1.442695
    %v4472 = vpow.pop %v4471
    %v4473 = vmul.f32 %v3875, 1.442695
    %v4474 = vpow.pop %v4473
    %v4475 = vmul.f32 %v3876, 1.442695
    %v4476 = vpow.pop %v4475
    %v4477 = vmul.f32 %v3877, 1.442695
    %v4478 = vpow.pop %v4477
    %v4479 = vmul.f32 %v3878, 1.442695
    %v4480 = vpow.pop %v4479
    %v4481 = vmul.f32 %v3879, 1.442695
    %v4482 = vpow.pop %v4481
    %v4483 = vmul.f32 %v3880, 1.442695
    %v4484 = vpow.pop %v4483
    %v4485 = vmul.f32 %v3881, 1.442695
    %v4486 = vpow.pop %v4485
    %v4487 = vmul.f32 %v3882, 1.442695
    %v4488 = vpow.pop %v4487
    %v4489 = vmul.f32 %v3883, 1.442695
    %v4490 = vpow.pop %v4489
    %v4491 = vmul.f32 %v3884, 1.442695
    %v4492 = vpow.pop %v4491
    %v4493 = vmul.f32 %v3885, 1.442695
    %v4494 = vpow.pop %v4493
    %v4495 = vmul.f32 %v3886, 1.442695
    %v4496 = vpow.pop %v4495
    %v4497 = vmul.f32 %v3887, 1.442695
    %v4498 = vpow.pop %v4497
    %v4499 = vmul.f32 %v3888, 1.442695
    %v4500 = vpow.pop %v4499
    %v4501 = vmul.f32 %v3889, 1.442695
    %v4502 = vpow.pop %v4501
    %v4503 = vmul.f32 %v3890, 1.442695
    %v4504 = vpow.pop %v4503
    %v4505 = vmul.f32 %v3891, 1.442695
    %v4506 = vpow.pop %v4505
    %v4507 = vmul.f32 %v3892, 1.442695
    %v4508 = vpow.pop %v4507
    %v4509 = vmul.f32 %v3893, 1.442695
    %v4510 = vpow.pop %v4509
    %v4511 = vmul.f32 %v3894, 1.442695
    %v4512 = vpow.pop %v4511
    %v4513 = vmul.f32 %v3895, 1.442695
    %v4514 = vpow.pop %v4513
    %v4515 = vmul.f32 %v3896, 1.442695
    %v4516 = vpow.pop %v4515
    %v4517 = vmul.f32 %v3897, 1.442695
    %v4518 = vpow.pop %v4517
    %v4519 = vmul.f32 %v3898, 1.442695
    %v4520 = vpow.pop %v4519
    %v4521 = vmul.f32 %v3899, 1.442695
    %v4522 = vpow.pop %v4521
    %v4523 = vmul.f32 %v3900, 1.442695
    %v4524 = vpow.pop %v4523
    %v4525 = vmul.f32 %v3901, 1.442695
    %v4526 = vpow.pop %v4525
    %v4527 = vmul.f32 %v3902, 1.442695
    %v4528 = vpow.pop %v4527
    %v4529 = vmul.f32 %v3903, 1.442695
    %v4530 = vpow.pop %v4529
    %v4531 = vmul.f32 %v3904, 1.442695
    %v4532 = vpow.pop %v4531
    %v4533 = vmul.f32 %v3905, 1.442695
    %v4534 = vpow.pop %v4533
    %v4535 = vmul.f32 %v3906, 1.442695
    %v4536 = vpow.pop %v4535
    %v4537 = vmul.f32 %v3907, 1.442695
    %v4538 = vpow.pop %v4537
    %v4539 = vmul.f32 %v3908, 1.442695
    %v4540 = vpow.pop %v4539
    %v4541 = vmul.f32 %v3909, 1.442695
    %v4542 = vpow.pop %v4541
    %v4543 = vmul.f32 %v3910, 1.442695
    %v4544 = vpow.pop %v4543
    %v4545 = vmul.f32 %v3911, 1.442695
    %v4546 = vpow.pop %v4545
    %v4547 = vmul.f32 %v3912, 1.442695
    %v4548 = vpow.pop %v4547
    %v4549 = vmul.f32 %v3913, 1.442695
    %v4550 = vpow.pop %v4549
    %v4551 = vmul.f32 %v3914, 1.442695
    %v4552 = vpow.pop %v4551
    %v4553 = vmul.f32 %v3915, 1.442695
    %v4554 = vpow.pop %v4553
    %v4555 = vmul.f32 %v3916, 1.442695
    %v4556 = vpow.pop %v4555
    %v4557 = vmul.f32 %v3917, 1.442695
    %v4558 = vpow.pop %v4557
    %v4559 = vmul.f32 %v3918, 1.442695
    %v4560 = vpow.pop %v4559
    %v4561 = vmul.f32 %v3919, 1.442695
    %v4562 = vpow.pop %v4561
    %v4563 = vmul.f32 %v3920, 1.442695
    %v4564 = vpow.pop %v4563
    %v4565 = vmul.f32 %v3921, 1.442695
    %v4566 = vpow.pop %v4565
    %v4567 = vmul.f32 %v3922, 1.442695
    %v4568 = vpow.pop %v4567
    %v4569 = vmul.f32 %v3923, 1.442695
    %v4570 = vpow.pop %v4569
    %v4571 = vmul.f32 %v3924, 1.442695
    %v4572 = vpow.pop %v4571
    %v4573 = vmul.f32 %v3925, 1.442695
    %v4574 = vpow.pop %v4573
    %v4575 = vmul.f32 %v3926, 1.442695
    %v4576 = vpow.pop %v4575
    %v4577 = vmul.f32 %v3927, 1.442695
    %v4578 = vpow.pop %v4577
    %v4579 = vmul.f32 %v3928, 1.442695
    %v4580 = vpow.pop %v4579
    %v4581 = vmul.f32 %v3929, 1.442695
    %v4582 = vpow.pop %v4581
    %v4583 = vmul.f32 %v3930, 1.442695
    %v4584 = vpow.pop %v4583
    %v4585 = vmul.f32 %v3931, 1.442695
    %v4586 = vpow.pop %v4585
    %v4587 = vmul.f32 %v3932, 1.442695
    %v4588 = vpow.pop %v4587
    %v4589 = vmul.f32 %v3933, 1.442695
    %v4590 = vpow.pop %v4589
    %v4591 = vmul.f32 %v3934, 1.442695
    %v4592 = vpow.pop %v4591
    %v4593 = vmul.f32 %v3935, 1.442695
    %v4594 = vpow.pop %v4593
    %v4595 = vmul.f32 %v3936, 1.442695
    %v4596 = vpow.pop %v4595
    %v4597 = vmul.f32 %v3937, 1.442695
    %v4598 = vpow.pop %v4597
    %v4599 = vmul.f32 %v3938, 1.442695
    %v4600 = vpow.pop %v4599
    %v4601 = vmul.f32 %v3939, 1.442695
    %v4602 = vpow.pop %v4601
    %v4603 = vmul.f32 %v3940, 1.442695
    %v4604 = vpow.pop %v4603
    %v4605 = vmul.f32 %v3941, 1.442695
    %v4606 = vpow.pop %v4605
    %v4607 = vmul.f32 %v3942, 1.442695
    %v4608 = vpow.pop %v4607
    %v4609 = vmul.f32 %v3943, 1.442695
    %v4610 = vpow.pop %v4609
    %v4611 = vmul.f32 %v3944, 1.442695
    %v4612 = vpow.pop %v4611
    %v4613 = vmul.f32 %v3945, 1.442695
    %v4614 = vpow.pop %v4613
    %v4615 = vmul.f32 %v3946, 1.442695
    %v4616 = vpow.pop %v4615
    %v4617 = vmul.f32 %v3947, 1.442695
    %v4618 = vpow.pop %v4617
    %v4619 = vmul.f32 %v3948, 1.442695
    %v4620 = vpow.pop %v4619
    %v4621 = vmul.f32 %v3949, 1.442695
    %v4622 = vpow.pop %v4621
    %v4623 = vmul.f32 %v3950, 1.442695
    %v4624 = vpow.pop %v4623
    %v4625 = vmul.f32 %v3951, 1.442695
    %v4626 = vpow.pop %v4625
    %v4627 = vmul.f32 %v3952, 1.442695
    %v4628 = vpow.pop %v4627
    %v4629 = vmul.f32 %v3953, 1.442695
    %v4630 = vpow.pop %v4629
    %v4631 = vmul.f32 %v3954, 1.442695
    %v4632 = vpow.pop %v4631
    %v4633 = vmul.f32 %v3955, 1.442695
    %v4634 = vpow.pop %v4633
    %v4635 = vmul.f32 %v3956, 1.442695
    %v4636 = vpow.pop %v4635
    %v4637 = vmul.f32 %v3957, 1.442695
    %v4638 = vpow.pop %v4637
    %v4639 = vmul.f32 %v3958, 1.442695
    %v4640 = vpow.pop %v4639
    %v4641 = vmul.f32 %v3959, 1.442695
    %v4642 = vpow.pop %v4641
    %v4643 = vmul.f32 %v3960, 1.442695
    %v4644 = vpow.pop %v4643
    %v4645 = vmul.f32 %v3961, 1.442695
    %v4646 = vpow.pop %v4645
    %v4647 = vmul.f32 %v3962, 1.442695
    %v4648 = vpow.pop %v4647
    %v4649 = vmul.f32 %v3963, 1.442695
    %v4650 = vpow.pop %v4649
    %v4651 = vmul.f32 %v3964, 1.442695
    %v4652 = vpow.pop %v4651
    %v4653 = vmul.f32 %v3965, 1.442695
    %v4654 = vpow.pop %v4653
    %v4655 = vmul.f32 %v3966, 1.442695
    %v4656 = vpow.pop %v4655
    %v4657 = vmul.f32 %v3967, 1.442695
    %v4658 = vpow.pop %v4657
    %v4659 = vmul.f32 %v3968, 1.442695
    %v4660 = vpow.pop %v4659
    %v4661 = vmul.f32 %v3969, 1.442695
    %v4662 = vpow.pop %v4661
    %v4663 = vmul.f32 %v3970, 1.442695
    %v4664 = vpow.pop %v4663
    %v4665 = vmul.f32 %v3971, 1.442695
    %v4666 = vpow.pop %v4665
    %v4667 = vmul.f32 %v3972, 1.442695
    %v4668 = vpow.pop %v4667
    %v4669 = vmul.f32 %v3973, 1.442695
    %v4670 = vpow.pop %v4669
    %v4671 = vmul.f32 %v3974, 1.442695
    %v4672 = vpow.pop %v4671
    %v4673 = vmul.f32 %v3975, 1.442695
    %v4674 = vpow.pop %v4673
    %v4675 = vmul.f32 %v3976, 1.442695
    %v4676 = vpow.pop %v4675
    %v4677 = vmul.f32 %v3977, 1.442695
    %v4678 = vpow.pop %v4677
    %v4679 = vmul.f32 %v3978, 1.442695
    %v4680 = vpow.pop %v4679
    %v4681 = vmul.f32 %v3979, 1.442695
    %v4682 = vpow.pop %v4681
    %v4683 = vmul.f32 %v3980, 1.442695
    %v4684 = vpow.pop %v4683
    %v4685 = vmul.f32 %v3981, 1.442695
    %v4686 = vpow.pop %v4685
    %v4687 = vmul.f32 %v3982, 1.442695
    %v4688 = vpow.pop %v4687
    %v4689 = vmul.f32 %v3983, 1.442695
    %v4690 = vpow.pop %v4689
    %v4691 = vmul.f32 %v3984, 1.442695
    %v4692 = vpow.pop %v4691
    %v4693 = vmul.f32 %v3985, 1.442695
    %v4694 = vpow.pop %v4693
    %v4695 = vmul.f32 %v3986, 1.442695
    %v4696 = vpow.pop %v4695
    %v4697 = vmul.f32 %v3987, 1.442695
    %v4698 = vpow.pop %v4697
    %v4699 = vmul.f32 %v3988, 1.442695
    %v4700 = vpow.pop %v4699
    %v4701 = vmul.f32 %v3989, 1.442695
    %v4702 = vpow.pop %v4701
    %v4703 = vmul.f32 %v3990, 1.442695
    %v4704 = vpow.pop %v4703
    %v4705 = vmul.f32 %v3991, 1.442695
    %v4706 = vpow.pop %v4705
    %v4707 = vmul.f32 %v3992, 1.442695
    %v4708 = vpow.pop %v4707
    %v4709 = vmul.f32 %v3993, 1.442695
    %v4710 = vpow.pop %v4709
    %v4711 = vmul.f32 %v3994, 1.442695
    %v4712 = vpow.pop %v4711
    %v4713 = vmul.f32 %v3995, 1.442695
    %v4714 = vpow.pop %v4713
    %v4715 = vmul.f32 %v3996, 1.442695
    %v4716 = vpow.pop %v4715
    %v4717 = vmul.f32 %v3997, 1.442695
    %v4718 = vpow.pop %v4717
    %v4719 = vmul.f32 %v3998, 1.442695
    %v4720 = vpow.pop %v4719
    %v4721 = vmul.f32 %v3999, 1.442695
    %v4722 = vpow.pop %v4721
    %v4723 = vmul.f32 %v4000, 1.442695
    %v4724 = vpow.pop %v4723
    %v4725 = vmul.f32 %v4001, 1.442695
    %v4726 = vpow.pop %v4725
    %v4727 = vmul.f32 %v4002, 1.442695
    %v4728 = vpow.pop %v4727
    %v4729 = vmul.f32 %v4003, 1.442695
    %v4730 = vpow.pop %v4729
    %v4731 = vmul.f32 %v4004, 1.442695
    %v4732 = vpow.pop %v4731
    %v4733 = vmul.f32 %v4005, 1.442695
    %v4734 = vpow.pop %v4733
    %v4735 = vmul.f32 %v4006, 1.442695
    %v4736 = vpow.pop %v4735
    %v4737 = vmul.f32 %v4007, 1.442695
    %v4738 = vpow.pop %v4737
    %v4739 = vmul.f32 %v4008, 1.442695
    %v4740 = vpow.pop %v4739
    %v4741 = vmul.f32 %v4009, 1.442695
    %v4742 = vpow.pop %v4741
    %v4743 = vmul.f32 %v4010, 1.442695
    %v4744 = vpow.pop %v4743
    %v4745 = vmul.f32 %v4011, 1.442695
    %v4746 = vpow.pop %v4745
    %v4747 = vmul.f32 %v4012, 1.442695
    %v4748 = vpow.pop %v4747
    %v4749 = vmul.f32 %v4013, 1.442695
    %v4750 = vpow.pop %v4749
    %v4751 = vmul.f32 %v4014, 1.442695
    %v4752 = vpow.pop %v4751
    %v4753 = vmul.f32 %v4015, 1.442695
    %v4754 = vpow.pop %v4753
    %v4755 = vmul.f32 %v4016, 1.442695
    %v4756 = vpow.pop %v4755
    %v4757 = vmul.f32 %v4017, 1.442695
    %v4758 = vpow.pop %v4757
    %v4759 = vmul.f32 %v4018, 1.442695
    %v4760 = vpow.pop %v4759
    %v4761 = vmul.f32 %v4019, 1.442695
    %v4762 = vpow.pop %v4761
    %v4763 = vmul.f32 %v4020, 1.442695
    %v4764 = vpow.pop %v4763
    %v4765 = vmul.f32 %v4021, 1.442695
    %v4766 = vpow.pop %v4765
    %v4767 = vmul.f32 %v4022, 1.442695
    %v4768 = vpow.pop %v4767
    %v4769 = vmul.f32 %v4023, 1.442695
    %v4770 = vpow.pop %v4769
    %v4771 = vmul.f32 %v4024, 1.442695
    %v4772 = vpow.pop %v4771
    %v4773 = vmul.f32 %v4025, 1.442695
    %v4774 = vpow.pop %v4773
    %v4775 = vmul.f32 %v4026, 1.442695
    %v4776 = vpow.pop %v4775
    %v4777 = vmul.f32 %v4027, 1.442695
    %v4778 = vpow.pop %v4777
    %v4779 = vmul.f32 %v4028, 1.442695
    %v4780 = vpow.pop %v4779
    %v4781 = vmul.f32 %v4029, 1.442695
    %v4782 = vpow.pop %v4781
    %v4783 = vmul.f32 %v4030, 1.442695
    %v4784 = vpow.pop %v4783
    %v4785 = vmul.f32 %v4031, 1.442695
    %v4786 = vpow.pop %v4785
    %v4787 = vmul.f32 %v4032, 1.442695
    %v4788 = vpow.pop %v4787
    %v4789 = vmul.f32 %v4033, 1.442695
    %v4790 = vpow.pop %v4789
    %v4791 = vmul.f32 %v4034, 1.442695
    %v4792 = vpow.pop %v4791
    %v4793 = vmul.f32 %v4035, 1.442695
    %v4794 = vpow.pop %v4793
    %v4795 = vmul.f32 %v4036, 1.442695
    %v4796 = vpow.pop %v4795
    %v4797 = vmul.f32 %v4037, 1.442695
    %v4798 = vpow.pop %v4797
    %v4799 = vmul.f32 %v4038, 1.442695
    %v4800 = vpow.pop %v4799
    %v4801 = vmul.f32 %v4039, 1.442695
    %v4802 = vpow.pop %v4801
    %v4803 = vmul.f32 %v4040, 1.442695
    %v4804 = vpow.pop %v4803
    %v4805 = vmul.f32 %v4041, 1.442695
    %v4806 = vpow.pop %v4805
    %v4807 = vmul.f32 %v4042, 1.442695
    %v4808 = vpow.pop %v4807
    %v4809 = vmul.f32 %v4043, 1.442695
    %v4810 = vpow.pop %v4809
    %v4811 = vmul.f32 %v4044, 1.442695
    %v4812 = vpow.pop %v4811
    %v4813 = vmul.f32 %v4045, 1.442695
    %v4814 = vpow.pop %v4813
    %v4815 = vmul.f32 %v4046, 1.442695
    %v4816 = vpow.pop %v4815
    %v4817 = vmul.f32 %v4047, 1.442695
    %v4818 = vpow.pop %v4817
    %v4819 = vmul.f32 %v4048, 1.442695
    %v4820 = vpow.pop %v4819
    %v4821 = vmul.f32 %v4049, 1.442695
    %v4822 = vpow.pop %v4821
    %v4823 = vmul.f32 %v4050, 1.442695
    %v4824 = vpow.pop %v4823
    %v4825 = vmul.f32 %v4051, 1.442695
    %v4826 = vpow.pop %v4825
    %v4827 = vmul.f32 %v4052, 1.442695
    %v4828 = vpow.pop %v4827
    %v4829 = vmul.f32 %v4053, 1.442695
    %v4830 = vpow.pop %v4829
    %v4831 = vmul.f32 %v4054, 1.442695
    %v4832 = vpow.pop %v4831
    %v4833 = vmul.f32 %v4055, 1.442695
    %v4834 = vpow.pop %v4833
    %v4835 = vmul.f32 %v4056, 1.442695
    %v4836 = vpow.pop %v4835
    %v4837 = vmul.f32 %v4057, 1.442695
    %v4838 = vpow.pop %v4837
    %v4839 = vmul.f32 %v4058, 1.442695
    %v4840 = vpow.pop %v4839
    %v4841 = vmul.f32 %v4059, 1.442695
    %v4842 = vpow.pop %v4841
    %v4843 = vmul.f32 %v4060, 1.442695
    %v4844 = vpow.pop %v4843
    %v4845 = vmul.f32 %v4061, 1.442695
    %v4846 = vpow.pop %v4845
    %v4847 = vmul.f32 %v4062, 1.442695
    %v4848 = vpow.pop %v4847
    %v4849 = vmul.f32 %v4063, 1.442695
    %v4850 = vpow.pop %v4849
    %v4851 = vmul.f32 %v4064, 1.442695
    %v4852 = vpow.pop %v4851
    %v4853 = vmul.f32 %v4065, 1.442695
    %v4854 = vpow.pop %v4853
    %v4855 = vmul.f32 %v4066, 1.442695
    %v4856 = vpow.pop %v4855
    %v4857 = vmul.f32 %v4067, 1.442695
    %v4858 = vpow.pop %v4857
    %v4859 = vmul.f32 %v4068, 1.442695
    %v4860 = vpow.pop %v4859
    %v4861 = vmul.f32 %v4069, 1.442695
    %v4862 = vpow.pop %v4861
    %v4863 = vmul.f32 %v4070, 1.442695
    %v4864 = vpow.pop %v4863
    %v4865 = vmul.f32 %v4071, 1.442695
    %v4866 = vpow.pop %v4865
    %v4867 = vmul.f32 %v4072, 1.442695
    %v4868 = vpow.pop %v4867
    %v4869 = vmul.f32 %v4073, 1.442695
    %v4870 = vpow.pop %v4869
    %v4871 = vmul.f32 %v4074, 1.442695
    %v4872 = vpow.pop %v4871
    %v4873 = vmul.f32 %v4075, 1.442695
    %v4874 = vpow.pop %v4873
    %v4875 = vmul.f32 %v4076, 1.442695
    %v4876 = vpow.pop %v4875
    %v4877 = vmul.f32 %v4077, 1.442695
    %v4878 = vpow.pop %v4877
    %v4879 = vmul.f32 %v4078, 1.442695
    %v4880 = vpow.pop %v4879
    %v4881 = vmul.f32 %v4079, 1.442695
    %v4882 = vpow.pop %v4881
    %v4883 = vmul.f32 %v4080, 1.442695
    %v4884 = vpow.pop %v4883
    %v4885 = vmul.f32 %v4081, 1.442695
    %v4886 = vpow.pop %v4885
    %v4887 = vmul.f32 %v4082, 1.442695
    %v4888 = vpow.pop %v4887
    %v4889 = vmul.f32 %v4083, 1.442695
    %v4890 = vpow.pop %v4889
    %v4891 = vmul.f32 %v4084, 1.442695
    %v4892 = vpow.pop %v4891
    %v4893 = vmul.f32 %v4085, 1.442695
    %v4894 = vpow.pop %v4893
    %v4895 = vmul.f32 %v4086, 1.442695
    %v4896 = vpow.pop %v4895
    %v4897 = vmul.f32 %v4087, 1.442695
    %v4898 = vpow.pop %v4897
    %v4899 = vmul.f32 %v4088, 1.442695
    %v4900 = vpow.pop %v4899
    %v4901 = vmul.f32 %v4089, 1.442695
    %v4902 = vpow.pop %v4901
    %v4903 = vmul.f32 %v4090, 1.442695
    %v4904 = vpow.pop %v4903
    %v4905 = vmul.f32 %v4091, 1.442695
    %v4906 = vpow.pop %v4905
    %v4907 = vmul.f32 %v4092, 1.442695
    %v4908 = vpow.pop %v4907
    %v4909 = vmul.f32 %v4093, 1.442695
    %v4910 = vpow.pop %v4909
    %v4911 = vmul.f32 %v4094, 1.442695
    %v4912 = vpow.pop %v4911
    %v4913 = vmul.f32 %v4095, 1.442695
    %v4914 = vpow.pop %v4913
    %v4915 = vmul.f32 %v4096, 1.442695
    %v4916 = vpow.pop %v4915
    %v4917 = vmul.f32 %v4097, 1.442695
    %v4918 = vpow.pop %v4917
    %v4919 = vmul.f32 %v4098, 1.442695
    %v4920 = vpow.pop %v4919
    %v4921 = vmul.f32 %v4099, 1.442695
    %v4922 = vpow.pop %v4921
    %v4923 = vmul.f32 %v4100, 1.442695
    %v4924 = vpow.pop %v4923
    %v4925 = vmul.f32 %v4101, 1.442695
    %v4926 = vpow.pop %v4925
    %v4927 = vmul.f32 %v4102, 1.442695
    %v4928 = vpow.pop %v4927
    %v4929 = vmul.f32 %v4103, 1.442695
    %v4930 = vpow.pop %v4929
    %v4931 = vmul.f32 %v4104, 1.442695
    %v4932 = vpow.pop %v4931
    %v4933 = vmul.f32 %v4105, 1.442695
    %v4934 = vpow.pop %v4933
    %v4935 = vmul.f32 %v4106, 1.442695
    %v4936 = vpow.pop %v4935
    %v4937 = vmul.f32 %v4107, 1.442695
    %v4938 = vpow.pop %v4937
    %v4939 = vmul.f32 %v4108, 1.442695
    %v4940 = vpow.pop %v4939
    %v4941 = vmul.f32 %v4109, 1.442695
    %v4942 = vpow.pop %v4941
    %v4943 = vmul.f32 %v4110, 1.442695
    %v4944 = vpow.pop %v4943
    %v4945 = vmul.f32 %v4111, 1.442695
    %v4946 = vpow.pop %v4945
    %v4947 = vmul.f32 %v4112, 1.442695
    %v4948 = vpow.pop %v4947
    %v4949 = vmul.f32 %v4113, 1.442695
    %v4950 = vpow.pop %v4949
    %v4951 = vmul.f32 %v4114, 1.442695
    %v4952 = vpow.pop %v4951
    %v4953 = vmul.f32 %v4115, 1.442695
    %v4954 = vpow.pop %v4953
    %v4955 = vmul.f32 %v4116, 1.442695
    %v4956 = vpow.pop %v4955
    %v4957 = vmul.f32 %v4117, 1.442695
    %v4958 = vpow.pop %v4957
    %v4959 = vmul.f32 %v4118, 1.442695
    %v4960 = vpow.pop %v4959
    %v4961 = vmul.f32 %v4119, 1.442695
    %v4962 = vpow.pop %v4961
    %v4963 = vmul.f32 %v4120, 1.442695
    %v4964 = vpow.pop %v4963
    %v4965 = vmul.f32 %v4121, 1.442695
    %v4966 = vpow.pop %v4965
    %v4967 = vmul.f32 %v4122, 1.442695
    %v4968 = vpow.pop %v4967
    %v4969 = vmul.f32 %v4123, 1.442695
    %v4970 = vpow.pop %v4969
    %v4971 = vmul.f32 %v4124, 1.442695
    %v4972 = vpow.pop %v4971
    %v4973 = vmul.f32 %v4125, 1.442695
    %v4974 = vpow.pop %v4973
    %v4975 = vmul.f32 %v4126, 1.442695
    %v4976 = vpow.pop %v4975
    %v4977 = vmul.f32 %v4127, 1.442695
    %v4978 = vpow.pop %v4977
    %v4979 = vmul.f32 %v4128, 1.442695
    %v4980 = vpow.pop %v4979
    %v4981 = vmul.f32 %v4129, 1.442695
    %v4982 = vpow.pop %v4981
    %v4983 = vmul.f32 %v4130, 1.442695
    %v4984 = vpow.pop %v4983
    %v4985 = vmul.f32 %v4131, 1.442695
    %v4986 = vpow.pop %v4985
    %v4987 = vmul.f32 %v4132, 1.442695
    %v4988 = vpow.pop %v4987
    %v4989 = vmul.f32 %v4133, 1.442695
    %v4990 = vpow.pop %v4989
    %v4991 = vmul.f32 %v4134, 1.442695
    %v4992 = vpow.pop %v4991
    %v4993 = vmul.f32 %v4135, 1.442695
    %v4994 = vpow.pop %v4993
    %v4995 = vmul.f32 %v4136, 1.442695
    %v4996 = vpow.pop %v4995
    %v4997 = vmul.f32 %v4137, 1.442695
    %v4998 = vpow.pop %v4997
    %v4999 = vmul.f32 %v4138, 1.442695
    %v5000 = vpow.pop %v4999
    %v5001 = vmul.f32 %v4139, 1.442695
    %v5002 = vpow.pop %v5001
    %v5003 = vmul.f32 %v4140, 1.442695
    %v5004 = vpow.pop %v5003
    %v5005 = vmul.f32 %v4141, 1.442695
    %v5006 = vpow.pop %v5005
    %v5007 = vmul.f32 %v4142, 1.442695
    %v5008 = vpow.pop %v5007
    %v5009 = vmul.f32 %v4143, 1.442695
    %v5010 = vpow.pop %v5009
    %v5011 = vmul.f32 %v4144, 1.442695
    %v5012 = vpow.pop %v5011
    %v5013 = vmul.f32 %v4145, 1.442695
    %v5014 = vpow.pop %v5013
    %v5015 = vmul.f32 %v4146, 1.442695
    %v5016 = vpow.pop %v5015
    %v5017 = vmul.f32 %v4147, 1.442695
    %v5018 = vpow.pop %v5017
    %v5019 = vmul.f32 %v4148, 1.442695
    %v5020 = vpow.pop %v5019
    %v5021 = vmul.f32 %v4149, 1.442695
    %v5022 = vpow.pop %v5021
    %v5023 = vmul.f32 %v4150, 1.442695
    %v5024 = vpow.pop %v5023
    %v5025 = vmul.f32 %v4151, 1.442695
    %v5026 = vpow.pop %v5025
    %v5027 = vmul.f32 %v4152, 1.442695
    %v5028 = vpow.pop %v5027
    %v5029 = vmul.f32 %v4153, 1.442695
    %v5030 = vpow.pop %v5029
    %v5031 = vmul.f32 %v4154, 1.442695
    %v5032 = vpow.pop %v5031
    %v5033 = vmul.f32 %v4155, 1.442695
    %v5034 = vpow.pop %v5033
    %v5035 = vmul.f32 %v4156, 1.442695
    %v5036 = vpow.pop %v5035
    %v5037 = vmul.f32 %v4157, 1.442695
    %v5038 = vpow.pop %v5037
    %v5039 = vmul.f32 %v4158, 1.442695
    %v5040 = vpow.pop %v5039
    %v5041 = vmul.f32 %v4159, 1.442695
    %v5042 = vpow.pop %v5041
    %v5043 = vmul.f32 %v4160, 1.442695
    %v5044 = vpow.pop %v5043
    %v5045 = vmul.f32 %v4161, 1.442695
    %v5046 = vpow.pop %v5045
    %v5047 = vmul.f32 %v4162, 1.442695
    %v5048 = vpow.pop %v5047
    %v5049 = vmul.f32 %v4163, 1.442695
    %v5050 = vpow.pop %v5049
    %v5051 = vmul.f32 %v4164, 1.442695
    %v5052 = vpow.pop %v5051
    %v5053 = vmul.f32 %v4165, 1.442695
    %v5054 = vpow.pop %v5053
    %v5055 = vmul.f32 %v4166, 1.442695
    %v5056 = vpow.pop %v5055
    %v5057 = vmul.f32 %v4167, 1.442695
    %v5058 = vpow.pop %v5057
    %v5059 = vmul.f32 %v4168, 1.442695
    %v5060 = vpow.pop %v5059
    %v5061 = vmul.f32 %v4169, 1.442695
    %v5062 = vpow.pop %v5061
    %v5063 = vmul.f32 %v4170, 1.442695
    %v5064 = vpow.pop %v5063
    %v5065 = vmul.f32 %v4171, 1.442695
    %v5066 = vpow.pop %v5065
    %v5067 = vmul.f32 %v4172, 1.442695
    %v5068 = vpow.pop %v5067
    %v5069 = vmul.f32 %v4173, 1.442695
    %v5070 = vpow.pop %v5069
    %v5071 = vmul.f32 %v4174, 1.442695
    %v5072 = vpow.pop %v5071
    %v5073 = vmul.f32 %v4175, 1.442695
    %v5074 = vpow.pop %v5073
    %v5075 = vmul.f32 %v4176, 1.442695
    %v5076 = vpow.pop %v5075
    %v5077 = vmul.f32 %v4177, 1.442695
    %v5078 = vpow.pop %v5077
    %v5079 = vmul.f32 %v4178, 1.442695
    %v5080 = vpow.pop %v5079
    %v5081 = vmul.f32 %v4179, 1.442695
    %v5082 = vpow.pop %v5081
    %v5083 = vmul.f32 %v4180, 1.442695
    %v5084 = vpow.pop %v5083
    %v5085 = vmul.f32 %v4181, 1.442695
    %v5086 = vpow.pop %v5085
    %v5087 = vmul.f32 %v4182, 1.442695
    %v5088 = vpow.pop %v5087
    %v5089 = vmul.f32 %v4183, 1.442695
    %v5090 = vpow.pop %v5089
    %v5091 = vmul.f32 %v4184, 1.442695
    %v5092 = vpow.pop %v5091
    %v5093 = vmul.f32 %v4185, 1.442695
    %v5094 = vpow.pop %v5093
    %v5095 = vmul.f32 %v4186, 1.442695
    %v5096 = vpow.pop %v5095
    %v5097 = vmul.f32 %v4187, 1.442695
    %v5098 = vpow.pop %v5097
    %v5099 = vmul.f32 %v4188, 1.442695
    %v5100 = vpow.pop %v5099
    %v5101 = vmul.f32 %v4189, 1.442695
    %v5102 = vpow.pop %v5101
    %v5103 = vmul.f32 %v4190, 1.442695
    %v5104 = vpow.pop %v5103
    %v5105 = vmul.f32 %v4191, 1.442695
    %v5106 = vpow.pop %v5105
    %v5107 = vmul.f32 %v4192, 1.442695
    %v5108 = vpow.pop %v5107
    %v5109 = vmul.f32 %v4193, 1.442695
    %v5110 = vpow.pop %v5109
    %v5111 = vmul.f32 %v4194, 1.442695
    %v5112 = vpow.pop %v5111
    %v5113 = vmul.f32 %v4195, 1.442695
    %v5114 = vpow.pop %v5113
    %v5115 = vmul.f32 %v4196, 1.442695
    %v5116 = vpow.pop %v5115
    %v5117 = vmul.f32 %v4197, 1.442695
    %v5118 = vpow.pop %v5117
    %v5119 = vmul.f32 %v4198, 1.442695
    %v5120 = vpow.pop %v5119
    %v5121 = vmul.f32 %v4199, 1.442695
    %v5122 = vpow.pop %v5121
    %v5123 = vmul.f32 %v4200, 1.442695
    %v5124 = vpow.pop %v5123
    %v5125 = vmul.f32 %v4201, 1.442695
    %v5126 = vpow.pop %v5125
    %v5127 = vmul.f32 %v4202, 1.442695
    %v5128 = vpow.pop %v5127
    %v5129 = vmul.f32 %v4203, 1.442695
    %v5130 = vpow.pop %v5129
    %v5131 = vmul.f32 %v4204, 1.442695
    %v5132 = vpow.pop %v5131
    %v5133 = vmul.f32 %v4205, 1.442695
    %v5134 = vpow.pop %v5133
    %v5135 = vmul.f32 %v4206, 1.442695
    %v5136 = vpow.pop %v5135
    %v5137 = vmul.f32 %v4207, 1.442695
    %v5138 = vpow.pop %v5137
    %v5139 = vmul.f32 %v4208, 1.442695
    %v5140 = vpow.pop %v5139
    %v5141 = vmul.f32 %v4209, 1.442695
    %v5142 = vpow.pop %v5141
    %v5143 = vmul.f32 %v4210, 1.442695
    %v5144 = vpow.pop %v5143
    %v5145 = vmul.f32 %v4211, 1.442695
    %v5146 = vpow.pop %v5145
    %v5147 = vmul.f32 %v4212, 1.442695
    %v5148 = vpow.pop %v5147
    %v5149 = vmul.f32 %v4213, 1.442695
    %v5150 = vpow.pop %v5149
    %v5151 = vmul.f32 %v4214, 1.442695
    %v5152 = vpow.pop %v5151
    %v5153 = vmul.f32 %v4215, 1.442695
    %v5154 = vpow.pop %v5153
    %v5155 = vmul.f32 %v4216, 1.442695
    %v5156 = vpow.pop %v5155
    %v5157 = vmul.f32 %v4217, 1.442695
    %v5158 = vpow.pop %v5157
    %v5159 = vmul.f32 %v4218, 1.442695
    %v5160 = vpow.pop %v5159
    %v5161 = vmul.f32 %v4219, 1.442695
    %v5162 = vpow.pop %v5161
    %v5163 = vmul.f32 %v4220, 1.442695
    %v5164 = vpow.pop %v5163
    %v5165 = vmul.f32 %v4221, 1.442695
    %v5166 = vpow.pop %v5165
    %v5167 = vmul.f32 %v4222, 1.442695
    %v5168 = vpow.pop %v5167
    %v5169 = vmul.f32 %v4223, 1.442695
    %v5170 = vpow.pop %v5169
    %v5171 = vmul.f32 %v4224, 1.442695
    %v5172 = vpow.pop %v5171
    %v5173 = vmul.f32 %v4225, 1.442695
    %v5174 = vpow.pop %v5173
    %v5175 = vmul.f32 %v4226, 1.442695
    %v5176 = vpow.pop %v5175
    %v5177 = vmul.f32 %v4227, 1.442695
    %v5178 = vpow.pop %v5177
    %v5179 = vmul.f32 %v4228, 1.442695
    %v5180 = vpow.pop %v5179
    %v5181 = vmul.f32 %v4229, 1.442695
    %v5182 = vpow.pop %v5181
    %v5183 = vmul.f32 %v4230, 1.442695
    %v5184 = vpow.pop %v5183
    %v5185 = vmul.f32 %v4231, 1.442695
    %v5186 = vpow.pop %v5185
    %v5187 = vmul.f32 %v4232, 1.442695
    %v5188 = vpow.pop %v5187
    %v5189 = vmul.f32 %v4233, 1.442695
    %v5190 = vpow.pop %v5189
    %v5191 = vmul.f32 %v4234, 1.442695
    %v5192 = vpow.pop %v5191
    %v5193 = vmul.f32 %v4235, 1.442695
    %v5194 = vpow.pop %v5193
    %v5195 = vmul.f32 %v4236, 1.442695
    %v5196 = vpow.pop %v5195
    %v5197 = vmul.f32 %v4237, 1.442695
    %v5198 = vpow.pop %v5197
    %v5199 = vmul.f32 %v4238, 1.442695
    %v5200 = vpow.pop %v5199
    %v5201 = vmul.f32 %v4239, 1.442695
    %v5202 = vpow.pop %v5201
    %v5203 = vmul.f32 %v4240, 1.442695
    %v5204 = vpow.pop %v5203
    %v5205 = vmul.f32 %v4241, 1.442695
    %v5206 = vpow.pop %v5205
    %v5207 = vmul.f32 %v4242, 1.442695
    %v5208 = vpow.pop %v5207
    %v5209 = vmul.f32 %v4243, 1.442695
    %v5210 = vpow.pop %v5209
    %v5211 = vmul.f32 %v4244, 1.442695
    %v5212 = vpow.pop %v5211
    %v5213 = vmul.f32 %v4245, 1.442695
    %v5214 = vpow.pop %v5213
    %v5215 = vmul.f32 %v4246, 1.442695
    %v5216 = vpow.pop %v5215
    %v5217 = vmul.f32 %v4247, 1.442695
    %v5218 = vpow.pop %v5217
    %v5219 = vmul.f32 %v4248, 1.442695
    %v5220 = vpow.pop %v5219
    %v5221 = vmul.f32 %v4249, 1.442695
    %v5222 = vpow.pop %v5221
    %v5223 = vmul.f32 %v4250, 1.442695
    %v5224 = vpow.pop %v5223
    %v5225 = vmul.f32 %v4251, 1.442695
    %v5226 = vpow.pop %v5225
    %v5227 = vmul.f32 %v4252, 1.442695
    %v5228 = vpow.pop %v5227
    %v5229 = vmul.f32 %v4253, 1.442695
    %v5230 = vpow.pop %v5229
    %v5231 = vmul.f32 %v4254, 1.442695
    %v5232 = vpow.pop %v5231
    %v5233 = vmul.f32 %v4255, 1.442695
    %v5234 = vpow.pop %v5233
    %v5235 = vmul.f32 %v4256, 1.442695
    %v5236 = vpow.pop %v5235
    %v5237 = vmul.f32 %v4257, 1.442695
    %v5238 = vpow.pop %v5237
    %v5239 = vmul.f32 %v4258, 1.442695
    %v5240 = vpow.pop %v5239
    %v5241 = vmul.f32 %v4259, 1.442695
    %v5242 = vpow.pop %v5241
    %v5243 = vmul.f32 %v4260, 1.442695
    %v5244 = vpow.pop %v5243
    %v5245 = vmul.f32 %v4261, 1.442695
    %v5246 = vpow.pop %v5245
    %v5247 = vmul.f32 %v4262, 1.442695
    %v5248 = vpow.pop %v5247
    %v5249 = vmul.f32 %v4263, 1.442695
    %v5250 = vpow.pop %v5249
    %v5251 = vmul.f32 %v4264, 1.442695
    %v5252 = vpow.pop %v5251
    %v5253 = vmul.f32 %v4265, 1.442695
    %v5254 = vpow.pop %v5253
    %v5255 = vmul.f32 %v4266, 1.442695
    %v5256 = vpow.pop %v5255
    %v5257 = vmul.f32 %v4267, 1.442695
    %v5258 = vpow.pop %v5257
    %v5259 = vmul.f32 %v4268, 1.442695
    %v5260 = vpow.pop %v5259
    %v5261 = vmul.f32 %v4269, 1.442695
    %v5262 = vpow.pop %v5261
    %v5263 = vmul.f32 %v4270, 1.442695
    %v5264 = vpow.pop %v5263
    %v5265 = vmul.f32 %v4271, 1.442695
    %v5266 = vpow.pop %v5265
    %v5267 = vmul.f32 %v4272, 1.442695
    %v5268 = vpow.pop %v5267
    %v5269 = vmul.f32 %v4273, 1.442695
    %v5270 = vpow.pop %v5269
    %v5271 = vmul.f32 %v4274, 1.442695
    %v5272 = vpow.pop %v5271
    %v5273 = vmul.f32 %v4275, 1.442695
    %v5274 = vpow.pop %v5273
    %v5275 = vmul.f32 %v4276, 1.442695
    %v5276 = vpow.pop %v5275
    %v5277 = vmul.f32 %v4277, 1.442695
    %v5278 = vpow.pop %v5277
    %v5279 = vmul.f32 %v4278, 1.442695
    %v5280 = vpow.pop %v5279
    %v5281 = vmul.f32 %v4279, 1.442695
    %v5282 = vpow.pop %v5281
    %v5283 = vmul.f32 %v4280, 1.442695
    %v5284 = vpow.pop %v5283
    %v5285 = vmul.f32 %v4281, 1.442695
    %v5286 = vpow.pop %v5285
    %v5287 = vmul.f32 %v4282, 1.442695
    %v5288 = vpow.pop %v5287
    %v5289 = vmul.f32 %v4283, 1.442695
    %v5290 = vpow.pop %v5289
    %v5291 = vmul.f32 %v4284, 1.442695
    %v5292 = vpow.pop %v5291
    %v5293 = vmul.f32 %v4285, 1.442695
    %v5294 = vpow.pop %v5293
    %v5295 = vmul.f32 %v4286, 1.442695
    %v5296 = vpow.pop %v5295
    %v5297 = vmul.f32 %v4287, 1.442695
    %v5298 = vpow.pop %v5297
    %v5299 = vmul.f32 %v4288, 1.442695
    %v5300 = vpow.pop %v5299
    %v5301 = vmul.f32 %v4289, 1.442695
    %v5302 = vpow.pop %v5301
    %v5303 = vmul.f32 %v4290, 1.442695
    %v5304 = vpow.pop %v5303
    %v5305 = vmul.f32 %v4291, 1.442695
    %v5306 = vpow.pop %v5305
    %v5307 = vmul.f32 %v4292, 1.442695
    %v5308 = vpow.pop %v5307
    %v5309 = vmul.f32 %v4293, 1.442695
    %v5310 = vpow.pop %v5309
    %v5311 = vmul.f32 %v4294, 1.442695
    %v5312 = vpow.pop %v5311
    %v5313 = vmul.f32 %v4295, 1.442695
    %v5314 = vpow.pop %v5313
    %v5315 = vmul.f32 %v4296, 1.442695
    %v5316 = vpow.pop %v5315
    %v5317 = vmul.f32 %v4297, 1.442695
    %v5318 = vpow.pop %v5317
    %v5319 = vmul.f32 %v4298, 1.442695
    %v5320 = vpow.pop %v5319
    %v5321 = vmul.f32 %v4299, 1.442695
    %v5322 = vpow.pop %v5321
    %v5323 = vmul.f32 %v4300, 1.442695
    %v5324 = vpow.pop %v5323
    %v5325 = vpack.c.bf16 %v4306, %v4302
    %v5326 = vpack.c.bf16 %v4308, %v4304
    %v5327 = vpack.c.bf16 %v4314, %v4310
    %v5328 = vpack.c.bf16 %v4316, %v4312
    %v5329 = vpack.c.bf16 %v4322, %v4318
    %v5330 = vpack.c.bf16 %v4324, %v4320
    %v5331 = vpack.c.bf16 %v4330, %v4326
    %v5332 = vpack.c.bf16 %v4332, %v4328
    %v5333 = vpack.c.bf16 %v4338, %v4334
    %v5334 = vpack.c.bf16 %v4340, %v4336
    %v5335 = vpack.c.bf16 %v4346, %v4342
    %v5336 = vpack.c.bf16 %v4348, %v4344
    %v5337 = vpack.c.bf16 %v4354, %v4350
    %v5338 = vpack.c.bf16 %v4356, %v4352
    %v5339 = vpack.c.bf16 %v4362, %v4358
    %v5340 = vpack.c.bf16 %v4364, %v4360
    %v5341 = vpack.c.bf16 %v4370, %v4366
    %v5342 = vpack.c.bf16 %v4372, %v4368
    %v5343 = vpack.c.bf16 %v4378, %v4374
    %v5344 = vpack.c.bf16 %v4380, %v4376
    %v5345 = vpack.c.bf16 %v4386, %v4382
    %v5346 = vpack.c.bf16 %v4388, %v4384
    %v5347 = vpack.c.bf16 %v4394, %v4390
    %v5348 = vpack.c.bf16 %v4396, %v4392
    %v5349 = vpack.c.bf16 %v4402, %v4398
    %v5350 = vpack.c.bf16 %v4404, %v4400
    %v5351 = vpack.c.bf16 %v4410, %v4406
    %v5352 = vpack.c.bf16 %v4412, %v4408
    %v5353 = vpack.c.bf16 %v4418, %v4414
    %v5354 = vpack.c.bf16 %v4420, %v4416
    %v5355 = vpack.c.bf16 %v4426, %v4422
    %v5356 = vpack.c.bf16 %v4428, %v4424
    %v5357 = vpack.c.bf16 %v4434, %v4430
    %v5358 = vpack.c.bf16 %v4436, %v4432
    %v5359 = vpack.c.bf16 %v4442, %v4438
    %v5360 = vpack.c.bf16 %v4444, %v4440
    %v5361 = vpack.c.bf16 %v4450, %v4446
    %v5362 = vpack.c.bf16 %v4452, %v4448
    %v5363 = vpack.c.bf16 %v4458, %v4454
    %v5364 = vpack.c.bf16 %v4460, %v4456
    %v5365 = vpack.c.bf16 %v4466, %v4462
    %v5366 = vpack.c.bf16 %v4468, %v4464
    %v5367 = vpack.c.bf16 %v4474, %v4470
    %v5368 = vpack.c.bf16 %v4476, %v4472
    %v5369 = vpack.c.bf16 %v4482, %v4478
    %v5370 = vpack.c.bf16 %v4484, %v4480
    %v5371 = vpack.c.bf16 %v4490, %v4486
    %v5372 = vpack.c.bf16 %v4492, %v4488
    %v5373 = vpack.c.bf16 %v4498, %v4494
    %v5374 = vpack.c.bf16 %v4500, %v4496
    %v5375 = vpack.c.bf16 %v4506, %v4502
    %v5376 = vpack.c.bf16 %v4508, %v4504
    %v5377 = vpack.c.bf16 %v4514, %v4510
    %v5378 = vpack.c.bf16 %v4516, %v4512
    %v5379 = vpack.c.bf16 %v4522, %v4518
    %v5380 = vpack.c.bf16 %v4524, %v4520
    %v5381 = vpack.c.bf16 %v4530, %v4526
    %v5382 = vpack.c.bf16 %v4532, %v4528
    %v5383 = vpack.c.bf16 %v4538, %v4534
    %v5384 = vpack.c.bf16 %v4540, %v4536
    %v5385 = vpack.c.bf16 %v4546, %v4542
    %v5386 = vpack.c.bf16 %v4548, %v4544
    %v5387 = vpack.c.bf16 %v4554, %v4550
    %v5388 = vpack.c.bf16 %v4556, %v4552
    %v5389 = vpack.c.bf16 %v4562, %v4558
    %v5390 = vpack.c.bf16 %v4564, %v4560
    %v5391 = vpack.c.bf16 %v4570, %v4566
    %v5392 = vpack.c.bf16 %v4572, %v4568
    %v5393 = vpack.c.bf16 %v4578, %v4574
    %v5394 = vpack.c.bf16 %v4580, %v4576
    %v5395 = vpack.c.bf16 %v4586, %v4582
    %v5396 = vpack.c.bf16 %v4588, %v4584
    %v5397 = vpack.c.bf16 %v4594, %v4590
    %v5398 = vpack.c.bf16 %v4596, %v4592
    %v5399 = vpack.c.bf16 %v4602, %v4598
    %v5400 = vpack.c.bf16 %v4604, %v4600
    %v5401 = vpack.c.bf16 %v4610, %v4606
    %v5402 = vpack.c.bf16 %v4612, %v4608
    %v5403 = vpack.c.bf16 %v4618, %v4614
    %v5404 = vpack.c.bf16 %v4620, %v4616
    %v5405 = vpack.c.bf16 %v4626, %v4622
    %v5406 = vpack.c.bf16 %v4628, %v4624
    %v5407 = vpack.c.bf16 %v4634, %v4630
    %v5408 = vpack.c.bf16 %v4636, %v4632
    %v5409 = vpack.c.bf16 %v4642, %v4638
    %v5410 = vpack.c.bf16 %v4644, %v4640
    %v5411 = vpack.c.bf16 %v4650, %v4646
    %v5412 = vpack.c.bf16 %v4652, %v4648
    %v5413 = vpack.c.bf16 %v4658, %v4654
    %v5414 = vpack.c.bf16 %v4660, %v4656
    %v5415 = vpack.c.bf16 %v4666, %v4662
    %v5416 = vpack.c.bf16 %v4668, %v4664
    %v5417 = vpack.c.bf16 %v4674, %v4670
    %v5418 = vpack.c.bf16 %v4676, %v4672
    %v5419 = vpack.c.bf16 %v4682, %v4678
    %v5420 = vpack.c.bf16 %v4684, %v4680
    %v5421 = vpack.c.bf16 %v4690, %v4686
    %v5422 = vpack.c.bf16 %v4692, %v4688
    %v5423 = vpack.c.bf16 %v4698, %v4694
    %v5424 = vpack.c.bf16 %v4700, %v4696
    %v5425 = vpack.c.bf16 %v4706, %v4702
    %v5426 = vpack.c.bf16 %v4708, %v4704
    %v5427 = vpack.c.bf16 %v4714, %v4710
    %v5428 = vpack.c.bf16 %v4716, %v4712
    %v5429 = vpack.c.bf16 %v4722, %v4718
    %v5430 = vpack.c.bf16 %v4724, %v4720
    %v5431 = vpack.c.bf16 %v4730, %v4726
    %v5432 = vpack.c.bf16 %v4732, %v4728
    %v5433 = vpack.c.bf16 %v4738, %v4734
    %v5434 = vpack.c.bf16 %v4740, %v4736
    %v5435 = vpack.c.bf16 %v4746, %v4742
    %v5436 = vpack.c.bf16 %v4748, %v4744
    %v5437 = vpack.c.bf16 %v4754, %v4750
    %v5438 = vpack.c.bf16 %v4756, %v4752
    %v5439 = vpack.c.bf16 %v4762, %v4758
    %v5440 = vpack.c.bf16 %v4764, %v4760
    %v5441 = vpack.c.bf16 %v4770, %v4766
    %v5442 = vpack.c.bf16 %v4772, %v4768
    %v5443 = vpack.c.bf16 %v4778, %v4774
    %v5444 = vpack.c.bf16 %v4780, %v4776
    %v5445 = vpack.c.bf16 %v4786, %v4782
    %v5446 = vpack.c.bf16 %v4788, %v4784
    %v5447 = vpack.c.bf16 %v4794, %v4790
    %v5448 = vpack.c.bf16 %v4796, %v4792
    %v5449 = vpack.c.bf16 %v4802, %v4798
    %v5450 = vpack.c.bf16 %v4804, %v4800
    %v5451 = vpack.c.bf16 %v4810, %v4806
    %v5452 = vpack.c.bf16 %v4812, %v4808
    %v5453 = vpack.c.bf16 %v4818, %v4814
    %v5454 = vpack.c.bf16 %v4820, %v4816
    %v5455 = vpack.c.bf16 %v4826, %v4822
    %v5456 = vpack.c.bf16 %v4828, %v4824
    %v5457 = vpack.c.bf16 %v4834, %v4830
    %v5458 = vpack.c.bf16 %v4836, %v4832
    %v5459 = vpack.c.bf16 %v4842, %v4838
    %v5460 = vpack.c.bf16 %v4844, %v4840
    %v5461 = vpack.c.bf16 %v4850, %v4846
    %v5462 = vpack.c.bf16 %v4852, %v4848
    %v5463 = vpack.c.bf16 %v4858, %v4854
    %v5464 = vpack.c.bf16 %v4860, %v4856
    %v5465 = vpack.c.bf16 %v4866, %v4862
    %v5466 = vpack.c.bf16 %v4868, %v4864
    %v5467 = vpack.c.bf16 %v4874, %v4870
    %v5468 = vpack.c.bf16 %v4876, %v4872
    %v5469 = vpack.c.bf16 %v4882, %v4878
    %v5470 = vpack.c.bf16 %v4884, %v4880
    %v5471 = vpack.c.bf16 %v4890, %v4886
    %v5472 = vpack.c.bf16 %v4892, %v4888
    %v5473 = vpack.c.bf16 %v4898, %v4894
    %v5474 = vpack.c.bf16 %v4900, %v4896
    %v5475 = vpack.c.bf16 %v4906, %v4902
    %v5476 = vpack.c.bf16 %v4908, %v4904
    %v5477 = vpack.c.bf16 %v4914, %v4910
    %v5478 = vpack.c.bf16 %v4916, %v4912
    %v5479 = vpack.c.bf16 %v4922, %v4918
    %v5480 = vpack.c.bf16 %v4924, %v4920
    %v5481 = vpack.c.bf16 %v4930, %v4926
    %v5482 = vpack.c.bf16 %v4932, %v4928
    %v5483 = vpack.c.bf16 %v4938, %v4934
    %v5484 = vpack.c.bf16 %v4940, %v4936
    %v5485 = vpack.c.bf16 %v4946, %v4942
    %v5486 = vpack.c.bf16 %v4948, %v4944
    %v5487 = vpack.c.bf16 %v4954, %v4950
    %v5488 = vpack.c.bf16 %v4956, %v4952
    %v5489 = vpack.c.bf16 %v4962, %v4958
    %v5490 = vpack.c.bf16 %v4964, %v4960
    %v5491 = vpack.c.bf16 %v4970, %v4966
    %v5492 = vpack.c.bf16 %v4972, %v4968
    %v5493 = vpack.c.bf16 %v4978, %v4974
    %v5494 = vpack.c.bf16 %v4980, %v4976
    %v5495 = vpack.c.bf16 %v4986, %v4982
    %v5496 = vpack.c.bf16 %v4988, %v4984
    %v5497 = vpack.c.bf16 %v4994, %v4990
    %v5498 = vpack.c.bf16 %v4996, %v4992
    %v5499 = vpack.c.bf16 %v5002, %v4998
    %v5500 = vpack.c.bf16 %v5004, %v5000
    %v5501 = vpack.c.bf16 %v5010, %v5006
    %v5502 = vpack.c.bf16 %v5012, %v5008
    %v5503 = vpack.c.bf16 %v5018, %v5014
    %v5504 = vpack.c.bf16 %v5020, %v5016
    %v5505 = vpack.c.bf16 %v5026, %v5022
    %v5506 = vpack.c.bf16 %v5028, %v5024
    %v5507 = vpack.c.bf16 %v5034, %v5030
    %v5508 = vpack.c.bf16 %v5036, %v5032
    %v5509 = vpack.c.bf16 %v5042, %v5038
    %v5510 = vpack.c.bf16 %v5044, %v5040
    %v5511 = vpack.c.bf16 %v5050, %v5046
    %v5512 = vpack.c.bf16 %v5052, %v5048
    %v5513 = vpack.c.bf16 %v5058, %v5054
    %v5514 = vpack.c.bf16 %v5060, %v5056
    %v5515 = vpack.c.bf16 %v5066, %v5062
    %v5516 = vpack.c.bf16 %v5068, %v5064
    %v5517 = vpack.c.bf16 %v5074, %v5070
    %v5518 = vpack.c.bf16 %v5076, %v5072
    %v5519 = vpack.c.bf16 %v5082, %v5078
    %v5520 = vpack.c.bf16 %v5084, %v5080
    %v5521 = vpack.c.bf16 %v5090, %v5086
    %v5522 = vpack.c.bf16 %v5092, %v5088
    %v5523 = vpack.c.bf16 %v5098, %v5094
    %v5524 = vpack.c.bf16 %v5100, %v5096
    %v5525 = vpack.c.bf16 %v5106, %v5102
    %v5526 = vpack.c.bf16 %v5108, %v5104
    %v5527 = vpack.c.bf16 %v5114, %v5110
    %v5528 = vpack.c.bf16 %v5116, %v5112
    %v5529 = vpack.c.bf16 %v5122, %v5118
    %v5530 = vpack.c.bf16 %v5124, %v5120
    %v5531 = vpack.c.bf16 %v5130, %v5126
    %v5532 = vpack.c.bf16 %v5132, %v5128
    %v5533 = vpack.c.bf16 %v5138, %v5134
    %v5534 = vpack.c.bf16 %v5140, %v5136
    %v5535 = vpack.c.bf16 %v5146, %v5142
    %v5536 = vpack.c.bf16 %v5148, %v5144
    %v5537 = vpack.c.bf16 %v5154, %v5150
    %v5538 = vpack.c.bf16 %v5156, %v5152
    %v5539 = vpack.c.bf16 %v5162, %v5158
    %v5540 = vpack.c.bf16 %v5164, %v5160
    %v5541 = vpack.c.bf16 %v5170, %v5166
    %v5542 = vpack.c.bf16 %v5172, %v5168
    %v5543 = vpack.c.bf16 %v5178, %v5174
    %v5544 = vpack.c.bf16 %v5180, %v5176
    %v5545 = vpack.c.bf16 %v5186, %v5182
    %v5546 = vpack.c.bf16 %v5188, %v5184
    %v5547 = vpack.c.bf16 %v5194, %v5190
    %v5548 = vpack.c.bf16 %v5196, %v5192
    %v5549 = vpack.c.bf16 %v5202, %v5198
    %v5550 = vpack.c.bf16 %v5204, %v5200
    %v5551 = vpack.c.bf16 %v5210, %v5206
    %v5552 = vpack.c.bf16 %v5212, %v5208
    %v5553 = vpack.c.bf16 %v5218, %v5214
    %v5554 = vpack.c.bf16 %v5220, %v5216
    %v5555 = vpack.c.bf16 %v5226, %v5222
    %v5556 = vpack.c.bf16 %v5228, %v5224
    %v5557 = vpack.c.bf16 %v5234, %v5230
    %v5558 = vpack.c.bf16 %v5236, %v5232
    %v5559 = vpack.c.bf16 %v5242, %v5238
    %v5560 = vpack.c.bf16 %v5244, %v5240
    %v5561 = vpack.c.bf16 %v5250, %v5246
    %v5562 = vpack.c.bf16 %v5252, %v5248
    %v5563 = vpack.c.bf16 %v5258, %v5254
    %v5564 = vpack.c.bf16 %v5260, %v5256
    %v5565 = vpack.c.bf16 %v5266, %v5262
    %v5566 = vpack.c.bf16 %v5268, %v5264
    %v5567 = vpack.c.bf16 %v5274, %v5270
    %v5568 = vpack.c.bf16 %v5276, %v5272
    %v5569 = vpack.c.bf16 %v5282, %v5278
    %v5570 = vpack.c.bf16 %v5284, %v5280
    %v5571 = vpack.c.bf16 %v5290, %v5286
    %v5572 = vpack.c.bf16 %v5292, %v5288
    %v5573 = vpack.c.bf16 %v5298, %v5294
    %v5574 = vpack.c.bf16 %v5300, %v5296
    %v5575 = vpack.c.bf16 %v5306, %v5302
    %v5576 = vpack.c.bf16 %v5308, %v5304
    %v5577 = vpack.c.bf16 %v5314, %v5310
    %v5578 = vpack.c.bf16 %v5316, %v5312
    %v5579 = vpack.c.bf16 %v5322, %v5318
    %v5580 = vpack.c.bf16 %v5324, %v5320
    %5581 = vmatprep.subr.bf16.mxu0 %v5326
    %5582 = vmatpush1.bf16.xpose.msra.mxu0 %v5325
    %5583 = vmatprep.subr.bf16.mxu0 %v5328
    %5584 = vmatpush1.bf16.xpose.msra.mxu0 %v5327
    %5585 = vmatprep.subr.bf16.mxu0 %v5330
    %5586 = vmatpush1.bf16.xpose.msra.mxu0 %v5329
    %5587 = vmatprep.subr.bf16.mxu0 %v5332
    %5588 = vmatpush1.bf16.xpose.msra.mxu0 %v5331
    %5589 = vmatprep.subr.bf16.mxu0 %v5334
    %5590 = vmatpush1.bf16.xpose.msra.mxu0 %v5333
    %5591 = vmatprep.subr.bf16.mxu0 %v5336
    %5592 = vmatpush1.bf16.xpose.msra.mxu0 %v5335
    %5593 = vmatprep.subr.bf16.mxu0 %v5338
    %5594 = vmatpush1.bf16.xpose.msra.mxu0 %v5337
    %5595 = vmatprep.subr.bf16.mxu0 %v5340
    %5596 = vmatpush1.bf16.xpose.msra.mxu0 %v5339
    %5597 = vmatprep.subr.bf16.mxu0 %v5342
    %5598 = vmatpush1.bf16.xpose.msra.mxu0 %v5341
    %5599 = vmatprep.subr.bf16.mxu0 %v5344
    %5600 = vmatpush1.bf16.xpose.msra.mxu0 %v5343
    %5601 = vmatprep.subr.bf16.mxu0 %v5346
    %5602 = vmatpush1.bf16.xpose.msra.mxu0 %v5345
    %5603 = vmatprep.subr.bf16.mxu0 %v5348
    %5604 = vmatpush1.bf16.xpose.msra.mxu0 %v5347
    %5605 = vmatprep.subr.bf16.mxu0 %v5350
    %5606 = vmatpush1.bf16.xpose.msra.mxu0 %v5349
    %5607 = vmatprep.subr.bf16.mxu0 %v5352
    %5608 = vmatpush1.bf16.xpose.msra.mxu0 %v5351
    %5609 = vmatprep.subr.bf16.mxu0 %v5354
    %5610 = vmatpush1.bf16.xpose.msra.mxu0 %v5353
    %5611 = vmatprep.subr.bf16.mxu0 %v5356
    %5612 = vmatpush1.bf16.xpose.msra.mxu0 %v5355
    %5613 = vmatprep.mubr.bf16.mxu0 %v772
    %5614 = vmatmul.mubr.bf16.gmra.mrb[0].mxu0 %v771
    %v5615 = vpop.f32.mrb[0].mxu0
    %v5616 = vadd.f32 0.0, %v5615
    %v5617 = vpop.f32.mrb[0].mxu0
    %v5618 = vadd.f32 0.0, %v5617
    %v5619 = vpop.f32.mrb[0].mxu0
    %v5620 = vpop.f32.mrb[0].mxu0
    %5621 = vdwg.mxu0
    %5622 = vmatprep.subr.bf16.mxu0 %v5358
    %5623 = vmatpush1.bf16.xpose.msra.mxu0 %v5357
    %5624 = vmatprep.subr.bf16.mxu0 %v5360
    %5625 = vmatpush1.bf16.xpose.msra.mxu0 %v5359
    %5626 = vmatprep.subr.bf16.mxu0 %v5362
    %5627 = vmatpush1.bf16.xpose.msra.mxu0 %v5361
    %5628 = vmatprep.subr.bf16.mxu0 %v5364
    %5629 = vmatpush1.bf16.xpose.msra.mxu0 %v5363
    %5630 = vmatprep.subr.bf16.mxu0 %v5366
    %5631 = vmatpush1.bf16.xpose.msra.mxu0 %v5365
    %5632 = vmatprep.subr.bf16.mxu0 %v5368
    %5633 = vmatpush1.bf16.xpose.msra.mxu0 %v5367
    %5634 = vmatprep.subr.bf16.mxu0 %v5370
    %5635 = vmatpush1.bf16.xpose.msra.mxu0 %v5369
    %5636 = vmatprep.subr.bf16.mxu0 %v5372
    %5637 = vmatpush1.bf16.xpose.msra.mxu0 %v5371
    %5638 = vmatprep.subr.bf16.mxu0 %v5374
    %5639 = vmatpush1.bf16.xpose.msra.mxu0 %v5373
    %5640 = vmatprep.subr.bf16.mxu0 %v5376
    %5641 = vmatpush1.bf16.xpose.msra.mxu0 %v5375
    %5642 = vmatprep.subr.bf16.mxu0 %v5378
    %5643 = vmatpush1.bf16.xpose.msra.mxu0 %v5377
    %5644 = vmatprep.subr.bf16.mxu0 %v5380
    %5645 = vmatpush1.bf16.xpose.msra.mxu0 %v5379
    %5646 = vmatprep.subr.bf16.mxu0 %v5382
    %5647 = vmatpush1.bf16.xpose.msra.mxu0 %v5381
    %5648 = vmatprep.subr.bf16.mxu0 %v5384
    %5649 = vmatpush1.bf16.xpose.msra.mxu0 %v5383
    %5650 = vmatprep.subr.bf16.mxu0 %v5386
    %5651 = vmatpush1.bf16.xpose.msra.mxu0 %v5385
    %5652 = vmatprep.subr.bf16.mxu0 %v5388
    %5653 = vmatpush1.bf16.xpose.msra.mxu0 %v5387
    %5654 = vmatprep.mubr.bf16.mxu0 %v774
    %5655 = vmatmul.mubr.bf16.gmra.mrb[0].mxu0 %v773
    %v5656 = vpop.f32.mrb[0].mxu0
    %v5657 = vadd.f32 0.0, %v5656
    %v5658 = vpop.f32.mrb[0].mxu0
    %v5659 = vadd.f32 0.0, %v5658
    %v5660 = vpop.f32.mrb[0].mxu0
    %v5661 = vpop.f32.mrb[0].mxu0
    %5662 = vdwg.mxu0
    %5663 = vmatprep.subr.bf16.mxu0 %v5390
    %5664 = vmatpush1.bf16.xpose.msra.mxu0 %v5389
    %5665 = vmatprep.subr.bf16.mxu0 %v5392
    %5666 = vmatpush1.bf16.xpose.msra.mxu0 %v5391
    %5667 = vmatprep.subr.bf16.mxu0 %v5394
    %5668 = vmatpush1.bf16.xpose.msra.mxu0 %v5393
    %5669 = vmatprep.subr.bf16.mxu0 %v5396
    %5670 = vmatpush1.bf16.xpose.msra.mxu0 %v5395
    %5671 = vmatprep.subr.bf16.mxu0 %v5398
    %5672 = vmatpush1.bf16.xpose.msra.mxu0 %v5397
    %5673 = vmatprep.subr.bf16.mxu0 %v5400
    %5674 = vmatpush1.bf16.xpose.msra.mxu0 %v5399
    %5675 = vmatprep.subr.bf16.mxu0 %v5402
    %5676 = vmatpush1.bf16.xpose.msra.mxu0 %v5401
    %5677 = vmatprep.subr.bf16.mxu0 %v5404
    %5678 = vmatpush1.bf16.xpose.msra.mxu0 %v5403
    %5679 = vmatprep.subr.bf16.mxu0 %v5406
    %5680 = vmatpush1.bf16.xpose.msra.mxu0 %v5405
    %5681 = vmatprep.subr.bf16.mxu0 %v5408
    %5682 = vmatpush1.bf16.xpose.msra.mxu0 %v5407
    %5683 = vmatprep.subr.bf16.mxu0 %v5410
    %5684 = vmatpush1.bf16.xpose.msra.mxu0 %v5409
    %5685 = vmatprep.subr.bf16.mxu0 %v5412
    %5686 = vmatpush1.bf16.xpose.msra.mxu0 %v5411
    %5687 = vmatprep.subr.bf16.mxu0 %v5414
    %5688 = vmatpush1.bf16.xpose.msra.mxu0 %v5413
    %5689 = vmatprep.subr.bf16.mxu0 %v5416
    %5690 = vmatpush1.bf16.xpose.msra.mxu0 %v5415
    %5691 = vmatprep.subr.bf16.mxu0 %v5418
    %5692 = vmatpush1.bf16.xpose.msra.mxu0 %v5417
    %5693 = vmatprep.subr.bf16.mxu0 %v5420
    %5694 = vmatpush1.bf16.xpose.msra.mxu0 %v5419
    %5695 = vmatprep.mubr.bf16.mxu0 %v776
    %5696 = vmatmul.mubr.bf16.gmra.mrb[0].mxu0 %v775
    %v5697 = vpop.f32.mrb[0].mxu0
    %v5698 = vadd.f32 0.0, %v5697
    %v5699 = vpop.f32.mrb[0].mxu0
    %v5700 = vadd.f32 0.0, %v5699
    %v5701 = vpop.f32.mrb[0].mxu0
    %v5702 = vpop.f32.mrb[0].mxu0
    %5703 = vdwg.mxu0
    %5704 = vmatprep.subr.bf16.mxu0 %v5422
    %5705 = vmatpush1.bf16.xpose.msra.mxu0 %v5421
    %5706 = vmatprep.subr.bf16.mxu0 %v5424
    %5707 = vmatpush1.bf16.xpose.msra.mxu0 %v5423
    %5708 = vmatprep.subr.bf16.mxu0 %v5426
    %5709 = vmatpush1.bf16.xpose.msra.mxu0 %v5425
    %5710 = vmatprep.subr.bf16.mxu0 %v5428
    %5711 = vmatpush1.bf16.xpose.msra.mxu0 %v5427
    %5712 = vmatprep.subr.bf16.mxu0 %v5430
    %5713 = vmatpush1.bf16.xpose.msra.mxu0 %v5429
    %5714 = vmatprep.subr.bf16.mxu0 %v5432
    %5715 = vmatpush1.bf16.xpose.msra.mxu0 %v5431
    %5716 = vmatprep.subr.bf16.mxu0 %v5434
    %5717 = vmatpush1.bf16.xpose.msra.mxu0 %v5433
    %5718 = vmatprep.subr.bf16.mxu0 %v5436
    %5719 = vmatpush1.bf16.xpose.msra.mxu0 %v5435
    %5720 = vmatprep.subr.bf16.mxu0 %v5438
    %5721 = vmatpush1.bf16.xpose.msra.mxu0 %v5437
    %5722 = vmatprep.subr.bf16.mxu0 %v5440
    %5723 = vmatpush1.bf16.xpose.msra.mxu0 %v5439
    %5724 = vmatprep.subr.bf16.mxu0 %v5442
    %5725 = vmatpush1.bf16.xpose.msra.mxu0 %v5441
    %5726 = vmatprep.subr.bf16.mxu0 %v5444
    %5727 = vmatpush1.bf16.xpose.msra.mxu0 %v5443
    %5728 = vmatprep.subr.bf16.mxu0 %v5446
    %5729 = vmatpush1.bf16.xpose.msra.mxu0 %v5445
    %5730 = vmatprep.subr.bf16.mxu0 %v5448
    %5731 = vmatpush1.bf16.xpose.msra.mxu0 %v5447
    %5732 = vmatprep.subr.bf16.mxu0 %v5450
    %5733 = vmatpush1.bf16.xpose.msra.mxu0 %v5449
    %5734 = vmatprep.subr.bf16.mxu0 %v5452
    %5735 = vmatpush1.bf16.xpose.msra.mxu0 %v5451
    %5736 = vmatprep.mubr.bf16.mxu0 %v778
    %5737 = vmatmul.mubr.bf16.gmra.mrb[0].mxu0 %v777
    %v5738 = vpop.f32.mrb[0].mxu0
    %v5739 = vadd.f32 0.0, %v5738
    %v5740 = vpop.f32.mrb[0].mxu0
    %v5741 = vadd.f32 0.0, %v5740
    %v5742 = vpop.f32.mrb[0].mxu0
    %v5743 = vpop.f32.mrb[0].mxu0
    %5744 = vdwg.mxu0
    %5745 = vmatprep.subr.bf16.mxu0 %v5454
    %5746 = vmatpush1.bf16.xpose.msra.mxu0 %v5453
    %5747 = vmatprep.subr.bf16.mxu0 %v5456
    %5748 = vmatpush1.bf16.xpose.msra.mxu0 %v5455
    %5749 = vmatprep.subr.bf16.mxu0 %v5458
    %5750 = vmatpush1.bf16.xpose.msra.mxu0 %v5457
    %5751 = vmatprep.subr.bf16.mxu0 %v5460
    %5752 = vmatpush1.bf16.xpose.msra.mxu0 %v5459
    %5753 = vmatprep.subr.bf16.mxu0 %v5462
    %5754 = vmatpush1.bf16.xpose.msra.mxu0 %v5461
    %5755 = vmatprep.subr.bf16.mxu0 %v5464
    %5756 = vmatpush1.bf16.xpose.msra.mxu0 %v5463
    %5757 = vmatprep.subr.bf16.mxu0 %v5466
    %5758 = vmatpush1.bf16.xpose.msra.mxu0 %v5465
    %5759 = vmatprep.subr.bf16.mxu0 %v5468
    %5760 = vmatpush1.bf16.xpose.msra.mxu0 %v5467
    %5761 = vmatprep.subr.bf16.mxu0 %v5470
    %5762 = vmatpush1.bf16.xpose.msra.mxu0 %v5469
    %5763 = vmatprep.subr.bf16.mxu0 %v5472
    %5764 = vmatpush1.bf16.xpose.msra.mxu0 %v5471
    %5765 = vmatprep.subr.bf16.mxu0 %v5474
    %5766 = vmatpush1.bf16.xpose.msra.mxu0 %v5473
    %5767 = vmatprep.subr.bf16.mxu0 %v5476
    %5768 = vmatpush1.bf16.xpose.msra.mxu0 %v5475
    %5769 = vmatprep.subr.bf16.mxu0 %v5478
    %5770 = vmatpush1.bf16.xpose.msra.mxu0 %v5477
    %5771 = vmatprep.subr.bf16.mxu0 %v5480
    %5772 = vmatpush1.bf16.xpose.msra.mxu0 %v5479
    %5773 = vmatprep.subr.bf16.mxu0 %v5482
    %5774 = vmatpush1.bf16.xpose.msra.mxu0 %v5481
    %5775 = vmatprep.subr.bf16.mxu0 %v5484
    %5776 = vmatpush1.bf16.xpose.msra.mxu0 %v5483
    %5777 = vmatprep.mubr.bf16.mxu0 %v780
    %5778 = vmatmul.mubr.bf16.gmra.mrb[0].mxu0 %v779
    %v5779 = vpop.f32.mrb[0].mxu0
    %v5780 = vadd.f32 0.0, %v5779
    %v5781 = vpop.f32.mrb[0].mxu0
    %v5782 = vadd.f32 0.0, %v5781
    %v5783 = vpop.f32.mrb[0].mxu0
    %v5784 = vpop.f32.mrb[0].mxu0
    %5785 = vdwg.mxu0
    %5786 = vmatprep.subr.bf16.mxu0 %v5486
    %5787 = vmatpush1.bf16.xpose.msra.mxu0 %v5485
    %5788 = vmatprep.subr.bf16.mxu0 %v5488
    %5789 = vmatpush1.bf16.xpose.msra.mxu0 %v5487
    %5790 = vmatprep.subr.bf16.mxu0 %v5490
    %5791 = vmatpush1.bf16.xpose.msra.mxu0 %v5489
    %5792 = vmatprep.subr.bf16.mxu0 %v5492
    %5793 = vmatpush1.bf16.xpose.msra.mxu0 %v5491
    %5794 = vmatprep.subr.bf16.mxu0 %v5494
    %5795 = vmatpush1.bf16.xpose.msra.mxu0 %v5493
    %5796 = vmatprep.subr.bf16.mxu0 %v5496
    %5797 = vmatpush1.bf16.xpose.msra.mxu0 %v5495
    %5798 = vmatprep.subr.bf16.mxu0 %v5498
    %5799 = vmatpush1.bf16.xpose.msra.mxu0 %v5497
    %5800 = vmatprep.subr.bf16.mxu0 %v5500
    %5801 = vmatpush1.bf16.xpose.msra.mxu0 %v5499
    %5802 = vmatprep.subr.bf16.mxu0 %v5502
    %5803 = vmatpush1.bf16.xpose.msra.mxu0 %v5501
    %5804 = vmatprep.subr.bf16.mxu0 %v5504
    %5805 = vmatpush1.bf16.xpose.msra.mxu0 %v5503
    %5806 = vmatprep.subr.bf16.mxu0 %v5506
    %5807 = vmatpush1.bf16.xpose.msra.mxu0 %v5505
    %5808 = vmatprep.subr.bf16.mxu0 %v5508
    %5809 = vmatpush1.bf16.xpose.msra.mxu0 %v5507
    %5810 = vmatprep.subr.bf16.mxu0 %v5510
    %5811 = vmatpush1.bf16.xpose.msra.mxu0 %v5509
    %5812 = vmatprep.subr.bf16.mxu0 %v5512
    %5813 = vmatpush1.bf16.xpose.msra.mxu0 %v5511
    %5814 = vmatprep.subr.bf16.mxu0 %v5514
    %5815 = vmatpush1.bf16.xpose.msra.mxu0 %v5513
    %5816 = vmatprep.subr.bf16.mxu0 %v5516
    %5817 = vmatpush1.bf16.xpose.msra.mxu0 %v5515
    %5818 = vmatprep.mubr.bf16.mxu0 %v782
    %5819 = vmatmul.mubr.bf16.gmra.mrb[0].mxu0 %v781
    %v5820 = vpop.f32.mrb[0].mxu0
    %v5821 = vadd.f32 0.0, %v5820
    %v5822 = vpop.f32.mrb[0].mxu0
    %v5823 = vadd.f32 0.0, %v5822
    %v5824 = vpop.f32.mrb[0].mxu0
    %v5825 = vpop.f32.mrb[0].mxu0
    %5826 = vdwg.mxu0
    %5827 = vmatprep.subr.bf16.mxu0 %v5518
    %5828 = vmatpush1.bf16.xpose.msra.mxu0 %v5517
    %5829 = vmatprep.subr.bf16.mxu0 %v5520
    %5830 = vmatpush1.bf16.xpose.msra.mxu0 %v5519
    %5831 = vmatprep.subr.bf16.mxu0 %v5522
    %5832 = vmatpush1.bf16.xpose.msra.mxu0 %v5521
    %5833 = vmatprep.subr.bf16.mxu0 %v5524
    %5834 = vmatpush1.bf16.xpose.msra.mxu0 %v5523
    %5835 = vmatprep.subr.bf16.mxu0 %v5526
    %5836 = vmatpush1.bf16.xpose.msra.mxu0 %v5525
    %5837 = vmatprep.subr.bf16.mxu0 %v5528
    %5838 = vmatpush1.bf16.xpose.msra.mxu0 %v5527
    %5839 = vmatprep.subr.bf16.mxu0 %v5530
    %5840 = vmatpush1.bf16.xpose.msra.mxu0 %v5529
    %5841 = vmatprep.subr.bf16.mxu0 %v5532
    %5842 = vmatpush1.bf16.xpose.msra.mxu0 %v5531
    %5843 = vmatprep.subr.bf16.mxu0 %v5534
    %5844 = vmatpush1.bf16.xpose.msra.mxu0 %v5533
    %5845 = vmatprep.subr.bf16.mxu0 %v5536
    %5846 = vmatpush1.bf16.xpose.msra.mxu0 %v5535
    %5847 = vmatprep.subr.bf16.mxu0 %v5538
    %5848 = vmatpush1.bf16.xpose.msra.mxu0 %v5537
    %5849 = vmatprep.subr.bf16.mxu0 %v5540
    %5850 = vmatpush1.bf16.xpose.msra.mxu0 %v5539
    %5851 = vmatprep.subr.bf16.mxu0 %v5542
    %5852 = vmatpush1.bf16.xpose.msra.mxu0 %v5541
    %5853 = vmatprep.subr.bf16.mxu0 %v5544
    %5854 = vmatpush1.bf16.xpose.msra.mxu0 %v5543
    %5855 = vmatprep.subr.bf16.mxu0 %v5546
    %5856 = vmatpush1.bf16.xpose.msra.mxu0 %v5545
    %5857 = vmatprep.subr.bf16.mxu0 %v5548
    %5858 = vmatpush1.bf16.xpose.msra.mxu0 %v5547
    %5859 = vmatprep.mubr.bf16.mxu0 %v784
    %5860 = vmatmul.mubr.bf16.gmra.mrb[0].mxu0 %v783
    %v5861 = vpop.f32.mrb[0].mxu0
    %v5862 = vadd.f32 0.0, %v5861
    %v5863 = vpop.f32.mrb[0].mxu0
    %v5864 = vadd.f32 0.0, %v5863
    %v5865 = vpop.f32.mrb[0].mxu0
    %v5866 = vpop.f32.mrb[0].mxu0
    %5867 = vdwg.mxu0
    %5868 = vmatprep.subr.bf16.mxu0 %v5550
    %5869 = vmatpush1.bf16.xpose.msra.mxu0 %v5549
    %5870 = vmatprep.subr.bf16.mxu0 %v5552
    %5871 = vmatpush1.bf16.xpose.msra.mxu0 %v5551
    %5872 = vmatprep.subr.bf16.mxu0 %v5554
    %5873 = vmatpush1.bf16.xpose.msra.mxu0 %v5553
    %5874 = vmatprep.subr.bf16.mxu0 %v5556
    %5875 = vmatpush1.bf16.xpose.msra.mxu0 %v5555
    %5876 = vmatprep.subr.bf16.mxu0 %v5558
    %5877 = vmatpush1.bf16.xpose.msra.mxu0 %v5557
    %5878 = vmatprep.subr.bf16.mxu0 %v5560
    %5879 = vmatpush1.bf16.xpose.msra.mxu0 %v5559
    %5880 = vmatprep.subr.bf16.mxu0 %v5562
    %5881 = vmatpush1.bf16.xpose.msra.mxu0 %v5561
    %5882 = vmatprep.subr.bf16.mxu0 %v5564
    %5883 = vmatpush1.bf16.xpose.msra.mxu0 %v5563
    %5884 = vmatprep.subr.bf16.mxu0 %v5566
    %5885 = vmatpush1.bf16.xpose.msra.mxu0 %v5565
    %5886 = vmatprep.subr.bf16.mxu0 %v5568
    %5887 = vmatpush1.bf16.xpose.msra.mxu0 %v5567
    %5888 = vmatprep.subr.bf16.mxu0 %v5570
    %5889 = vmatpush1.bf16.xpose.msra.mxu0 %v5569
    %5890 = vmatprep.subr.bf16.mxu0 %v5572
    %5891 = vmatpush1.bf16.xpose.msra.mxu0 %v5571
    %5892 = vmatprep.subr.bf16.mxu0 %v5574
    %5893 = vmatpush1.bf16.xpose.msra.mxu0 %v5573
    %5894 = vmatprep.subr.bf16.mxu0 %v5576
    %5895 = vmatpush1.bf16.xpose.msra.mxu0 %v5575
    %5896 = vmatprep.subr.bf16.mxu0 %v5578
    %5897 = vmatpush1.bf16.xpose.msra.mxu0 %v5577
    %5898 = vmatprep.subr.bf16.mxu0 %v5580
    %5899 = vmatpush1.bf16.xpose.msra.mxu0 %v5579
    %5900 = vmatprep.mubr.bf16.mxu0 %v786
    %5901 = vmatmul.mubr.bf16.gmra.mrb[0].mxu0 %v785
    %v5902 = vpop.f32.mrb[0].mxu0
    %v5903 = vadd.f32 0.0, %v5902
    %v5904 = vpop.f32.mrb[0].mxu0
    %v5905 = vadd.f32 0.0, %v5904
    %v5906 = vpop.f32.mrb[0].mxu0
    %v5907 = vpop.f32.mrb[0].mxu0
    %5908 = vdwg.mxu0
    %5909 = vmatprep.subr.bf16.mxu0 %v5326
    %5910 = vmatpush1.bf16.xpose.msra.mxu0 %v5325
    %5911 = vmatprep.subr.bf16.mxu0 %v5328
    %5912 = vmatpush1.bf16.xpose.msra.mxu0 %v5327
    %5913 = vmatprep.subr.bf16.mxu0 %v5330
    %5914 = vmatpush1.bf16.xpose.msra.mxu0 %v5329
    %5915 = vmatprep.subr.bf16.mxu0 %v5332
    %5916 = vmatpush1.bf16.xpose.msra.mxu0 %v5331
    %5917 = vmatprep.subr.bf16.mxu0 %v5334
    %5918 = vmatpush1.bf16.xpose.msra.mxu0 %v5333
    %5919 = vmatprep.subr.bf16.mxu0 %v5336
    %5920 = vmatpush1.bf16.xpose.msra.mxu0 %v5335
    %5921 = vmatprep.subr.bf16.mxu0 %v5338
    %5922 = vmatpush1.bf16.xpose.msra.mxu0 %v5337
    %5923 = vmatprep.subr.bf16.mxu0 %v5340
    %5924 = vmatpush1.bf16.xpose.msra.mxu0 %v5339
    %5925 = vmatprep.subr.bf16.mxu0 %v5342
    %5926 = vmatpush1.bf16.xpose.msra.mxu0 %v5341
    %5927 = vmatprep.subr.bf16.mxu0 %v5344
    %5928 = vmatpush1.bf16.xpose.msra.mxu0 %v5343
    %5929 = vmatprep.subr.bf16.mxu0 %v5346
    %5930 = vmatpush1.bf16.xpose.msra.mxu0 %v5345
    %5931 = vmatprep.subr.bf16.mxu0 %v5348
    %5932 = vmatpush1.bf16.xpose.msra.mxu0 %v5347
    %5933 = vmatprep.subr.bf16.mxu0 %v5350
    %5934 = vmatpush1.bf16.xpose.msra.mxu0 %v5349
    %5935 = vmatprep.subr.bf16.mxu0 %v5352
    %5936 = vmatpush1.bf16.xpose.msra.mxu0 %v5351
    %5937 = vmatprep.subr.bf16.mxu0 %v5354
    %5938 = vmatpush1.bf16.xpose.msra.mxu0 %v5353
    %5939 = vmatprep.subr.bf16.mxu0 %v5356
    %5940 = vmatpush1.bf16.xpose.msra.mxu0 %v5355
    %5941 = vmatprep.mubr.bf16.mxu0 1065369472
    %5942 = vmatmul.mubr.bf16.gmra.mrb[0].mxu0 1065369472
    %v5943 = vpop.f32.mrb[0].mxu0
    %v5944 = vadd.f32 0.0, %v5943
    %v5945 = vpop.f32.mrb[0].mxu0
    %v5946 = vadd.f32 0.0, %v5945
    %v5947 = vpop.f32.mrb[0].mxu0
    %v5948 = vpop.f32.mrb[0].mxu0
    %5949 = vdwg.mxu0
    %5950 = vmatprep.subr.bf16.mxu0 %v5358
    %5951 = vmatpush1.bf16.xpose.msra.mxu0 %v5357
    %5952 = vmatprep.subr.bf16.mxu0 %v5360
    %5953 = vmatpush1.bf16.xpose.msra.mxu0 %v5359
    %5954 = vmatprep.subr.bf16.mxu0 %v5362
    %5955 = vmatpush1.bf16.xpose.msra.mxu0 %v5361
    %5956 = vmatprep.subr.bf16.mxu0 %v5364
    %5957 = vmatpush1.bf16.xpose.msra.mxu0 %v5363
    %5958 = vmatprep.subr.bf16.mxu0 %v5366
    %5959 = vmatpush1.bf16.xpose.msra.mxu0 %v5365
    %5960 = vmatprep.subr.bf16.mxu0 %v5368
    %5961 = vmatpush1.bf16.xpose.msra.mxu0 %v5367
    %5962 = vmatprep.subr.bf16.mxu0 %v5370
    %5963 = vmatpush1.bf16.xpose.msra.mxu0 %v5369
    %5964 = vmatprep.subr.bf16.mxu0 %v5372
    %5965 = vmatpush1.bf16.xpose.msra.mxu0 %v5371
    %5966 = vmatprep.subr.bf16.mxu0 %v5374
    %5967 = vmatpush1.bf16.xpose.msra.mxu0 %v5373
    %5968 = vmatprep.subr.bf16.mxu0 %v5376
    %5969 = vmatpush1.bf16.xpose.msra.mxu0 %v5375
    %5970 = vmatprep.subr.bf16.mxu0 %v5378
    %5971 = vmatpush1.bf16.xpose.msra.mxu0 %v5377
    %5972 = vmatprep.subr.bf16.mxu0 %v5380
    %5973 = vmatpush1.bf16.xpose.msra.mxu0 %v5379
    %5974 = vmatprep.subr.bf16.mxu0 %v5382
    %5975 = vmatpush1.bf16.xpose.msra.mxu0 %v5381
    %5976 = vmatprep.subr.bf16.mxu0 %v5384
    %5977 = vmatpush1.bf16.xpose.msra.mxu0 %v5383
    %5978 = vmatprep.subr.bf16.mxu0 %v5386
    %5979 = vmatpush1.bf16.xpose.msra.mxu0 %v5385
    %5980 = vmatprep.subr.bf16.mxu0 %v5388
    %5981 = vmatpush1.bf16.xpose.msra.mxu0 %v5387
    %5982 = vmatprep.mubr.bf16.mxu0 1065369472
    %5983 = vmatmul.mubr.bf16.gmra.mrb[0].mxu0 1065369472
    %v5984 = vpop.f32.mrb[0].mxu0
    %v5985 = vadd.f32 0.0, %v5984
    %v5986 = vpop.f32.mrb[0].mxu0
    %v5987 = vadd.f32 0.0, %v5986
    %v5988 = vpop.f32.mrb[0].mxu0
    %v5989 = vpop.f32.mrb[0].mxu0
    %5990 = vdwg.mxu0
    %5991 = vmatprep.subr.bf16.mxu0 %v5390
    %5992 = vmatpush1.bf16.xpose.msra.mxu0 %v5389
    %5993 = vmatprep.subr.bf16.mxu0 %v5392
    %5994 = vmatpush1.bf16.xpose.msra.mxu0 %v5391
    %5995 = vmatprep.subr.bf16.mxu0 %v5394
    %5996 = vmatpush1.bf16.xpose.msra.mxu0 %v5393
    %5997 = vmatprep.subr.bf16.mxu0 %v5396
    %5998 = vmatpush1.bf16.xpose.msra.mxu0 %v5395
    %5999 = vmatprep.subr.bf16.mxu0 %v5398
    %6000 = vmatpush1.bf16.xpose.msra.mxu0 %v5397
    %6001 = vmatprep.subr.bf16.mxu0 %v5400
    %6002 = vmatpush1.bf16.xpose.msra.mxu0 %v5399
    %6003 = vmatprep.subr.bf16.mxu0 %v5402
    %6004 = vmatpush1.bf16.xpose.msra.mxu0 %v5401
    %6005 = vmatprep.subr.bf16.mxu0 %v5404
    %6006 = vmatpush1.bf16.xpose.msra.mxu0 %v5403
    %6007 = vmatprep.subr.bf16.mxu0 %v5406
    %6008 = vmatpush1.bf16.xpose.msra.mxu0 %v5405
    %6009 = vmatprep.subr.bf16.mxu0 %v5408
    %6010 = vmatpush1.bf16.xpose.msra.mxu0 %v5407
    %6011 = vmatprep.subr.bf16.mxu0 %v5410
    %6012 = vmatpush1.bf16.xpose.msra.mxu0 %v5409
    %6013 = vmatprep.subr.bf16.mxu0 %v5412
    %6014 = vmatpush1.bf16.xpose.msra.mxu0 %v5411
    %6015 = vmatprep.subr.bf16.mxu0 %v5414
    %6016 = vmatpush1.bf16.xpose.msra.mxu0 %v5413
    %6017 = vmatprep.subr.bf16.mxu0 %v5416
    %6018 = vmatpush1.bf16.xpose.msra.mxu0 %v5415
    %6019 = vmatprep.subr.bf16.mxu0 %v5418
    %6020 = vmatpush1.bf16.xpose.msra.mxu0 %v5417
    %6021 = vmatprep.subr.bf16.mxu0 %v5420
    %6022 = vmatpush1.bf16.xpose.msra.mxu0 %v5419
    %6023 = vmatprep.mubr.bf16.mxu0 1065369472
    %6024 = vmatmul.mubr.bf16.gmra.mrb[0].mxu0 1065369472
    %v6025 = vpop.f32.mrb[0].mxu0
    %v6026 = vadd.f32 0.0, %v6025
    %v6027 = vpop.f32.mrb[0].mxu0
    %v6028 = vadd.f32 0.0, %v6027
    %v6029 = vpop.f32.mrb[0].mxu0
    %v6030 = vpop.f32.mrb[0].mxu0
    %6031 = vdwg.mxu0
    %6032 = vmatprep.subr.bf16.mxu0 %v5422
    %6033 = vmatpush1.bf16.xpose.msra.mxu0 %v5421
    %6034 = vmatprep.subr.bf16.mxu0 %v5424
    %6035 = vmatpush1.bf16.xpose.msra.mxu0 %v5423
    %6036 = vmatprep.subr.bf16.mxu0 %v5426
    %6037 = vmatpush1.bf16.xpose.msra.mxu0 %v5425
    %6038 = vmatprep.subr.bf16.mxu0 %v5428
    %6039 = vmatpush1.bf16.xpose.msra.mxu0 %v5427
    %6040 = vmatprep.subr.bf16.mxu0 %v5430
    %6041 = vmatpush1.bf16.xpose.msra.mxu0 %v5429
    %6042 = vmatprep.subr.bf16.mxu0 %v5432
    %6043 = vmatpush1.bf16.xpose.msra.mxu0 %v5431
    %6044 = vmatprep.subr.bf16.mxu0 %v5434
    %6045 = vmatpush1.bf16.xpose.msra.mxu0 %v5433
    %6046 = vmatprep.subr.bf16.mxu0 %v5436
    %6047 = vmatpush1.bf16.xpose.msra.mxu0 %v5435
    %6048 = vmatprep.subr.bf16.mxu0 %v5438
    %6049 = vmatpush1.bf16.xpose.msra.mxu0 %v5437
    %6050 = vmatprep.subr.bf16.mxu0 %v5440
    %6051 = vmatpush1.bf16.xpose.msra.mxu0 %v5439
    %6052 = vmatprep.subr.bf16.mxu0 %v5442
    %6053 = vmatpush1.bf16.xpose.msra.mxu0 %v5441
    %6054 = vmatprep.subr.bf16.mxu0 %v5444
    %6055 = vmatpush1.bf16.xpose.msra.mxu0 %v5443
    %6056 = vmatprep.subr.bf16.mxu0 %v5446
    %6057 = vmatpush1.bf16.xpose.msra.mxu0 %v5445
    %6058 = vmatprep.subr.bf16.mxu0 %v5448
    %6059 = vmatpush1.bf16.xpose.msra.mxu0 %v5447
    %6060 = vmatprep.subr.bf16.mxu0 %v5450
    %6061 = vmatpush1.bf16.xpose.msra.mxu0 %v5449
    %6062 = vmatprep.subr.bf16.mxu0 %v5452
    %6063 = vmatpush1.bf16.xpose.msra.mxu0 %v5451
    %6064 = vmatprep.mubr.bf16.mxu0 1065369472
    %6065 = vmatmul.mubr.bf16.gmra.mrb[0].mxu0 1065369472
    %v6066 = vpop.f32.mrb[0].mxu0
    %v6067 = vadd.f32 0.0, %v6066
    %v6068 = vpop.f32.mrb[0].mxu0
    %v6069 = vadd.f32 0.0, %v6068
    %v6070 = vpop.f32.mrb[0].mxu0
    %v6071 = vpop.f32.mrb[0].mxu0
    %6072 = vdwg.mxu0
    %6073 = vmatprep.subr.bf16.mxu0 %v5454
    %6074 = vmatpush1.bf16.xpose.msra.mxu0 %v5453
    %6075 = vmatprep.subr.bf16.mxu0 %v5456
    %6076 = vmatpush1.bf16.xpose.msra.mxu0 %v5455
    %6077 = vmatprep.subr.bf16.mxu0 %v5458
    %6078 = vmatpush1.bf16.xpose.msra.mxu0 %v5457
    %6079 = vmatprep.subr.bf16.mxu0 %v5460
    %6080 = vmatpush1.bf16.xpose.msra.mxu0 %v5459
    %6081 = vmatprep.subr.bf16.mxu0 %v5462
    %6082 = vmatpush1.bf16.xpose.msra.mxu0 %v5461
    %6083 = vmatprep.subr.bf16.mxu0 %v5464
    %6084 = vmatpush1.bf16.xpose.msra.mxu0 %v5463
    %6085 = vmatprep.subr.bf16.mxu0 %v5466
    %6086 = vmatpush1.bf16.xpose.msra.mxu0 %v5465
    %6087 = vmatprep.subr.bf16.mxu0 %v5468
    %6088 = vmatpush1.bf16.xpose.msra.mxu0 %v5467
    %6089 = vmatprep.subr.bf16.mxu0 %v5470
    %6090 = vmatpush1.bf16.xpose.msra.mxu0 %v5469
    %6091 = vmatprep.subr.bf16.mxu0 %v5472
    %6092 = vmatpush1.bf16.xpose.msra.mxu0 %v5471
    %6093 = vmatprep.subr.bf16.mxu0 %v5474
    %6094 = vmatpush1.bf16.xpose.msra.mxu0 %v5473
    %6095 = vmatprep.subr.bf16.mxu0 %v5476
    %6096 = vmatpush1.bf16.xpose.msra.mxu0 %v5475
    %6097 = vmatprep.subr.bf16.mxu0 %v5478
    %6098 = vmatpush1.bf16.xpose.msra.mxu0 %v5477
    %6099 = vmatprep.subr.bf16.mxu0 %v5480
    %6100 = vmatpush1.bf16.xpose.msra.mxu0 %v5479
    %6101 = vmatprep.subr.bf16.mxu0 %v5482
    %6102 = vmatpush1.bf16.xpose.msra.mxu0 %v5481
    %6103 = vmatprep.subr.bf16.mxu0 %v5484
    %6104 = vmatpush1.bf16.xpose.msra.mxu0 %v5483
    %6105 = vmatprep.mubr.bf16.mxu0 1065369472
    %6106 = vmatmul.mubr.bf16.gmra.mrb[0].mxu0 1065369472
    %v6107 = vpop.f32.mrb[0].mxu0
    %v6108 = vadd.f32 0.0, %v6107
    %v6109 = vpop.f32.mrb[0].mxu0
    %v6110 = vadd.f32 0.0, %v6109
    %v6111 = vpop.f32.mrb[0].mxu0
    %v6112 = vpop.f32.mrb[0].mxu0
    %6113 = vdwg.mxu0
    %6114 = vmatprep.subr.bf16.mxu0 %v5486
    %6115 = vmatpush1.bf16.xpose.msra.mxu0 %v5485
    %6116 = vmatprep.subr.bf16.mxu0 %v5488
    %6117 = vmatpush1.bf16.xpose.msra.mxu0 %v5487
    %6118 = vmatprep.subr.bf16.mxu0 %v5490
    %6119 = vmatpush1.bf16.xpose.msra.mxu0 %v5489
    %6120 = vmatprep.subr.bf16.mxu0 %v5492
    %6121 = vmatpush1.bf16.xpose.msra.mxu0 %v5491
    %6122 = vmatprep.subr.bf16.mxu0 %v5494
    %6123 = vmatpush1.bf16.xpose.msra.mxu0 %v5493
    %6124 = vmatprep.subr.bf16.mxu0 %v5496
    %6125 = vmatpush1.bf16.xpose.msra.mxu0 %v5495
    %6126 = vmatprep.subr.bf16.mxu0 %v5498
    %6127 = vmatpush1.bf16.xpose.msra.mxu0 %v5497
    %6128 = vmatprep.subr.bf16.mxu0 %v5500
    %6129 = vmatpush1.bf16.xpose.msra.mxu0 %v5499
    %6130 = vmatprep.subr.bf16.mxu0 %v5502
    %6131 = vmatpush1.bf16.xpose.msra.mxu0 %v5501
    %6132 = vmatprep.subr.bf16.mxu0 %v5504
    %6133 = vmatpush1.bf16.xpose.msra.mxu0 %v5503
    %6134 = vmatprep.subr.bf16.mxu0 %v5506
    %6135 = vmatpush1.bf16.xpose.msra.mxu0 %v5505
    %6136 = vmatprep.subr.bf16.mxu0 %v5508
    %6137 = vmatpush1.bf16.xpose.msra.mxu0 %v5507
    %6138 = vmatprep.subr.bf16.mxu0 %v5510
    %6139 = vmatpush1.bf16.xpose.msra.mxu0 %v5509
    %6140 = vmatprep.subr.bf16.mxu0 %v5512
    %6141 = vmatpush1.bf16.xpose.msra.mxu0 %v5511
    %6142 = vmatprep.subr.bf16.mxu0 %v5514
    %6143 = vmatpush1.bf16.xpose.msra.mxu0 %v5513
    %6144 = vmatprep.subr.bf16.mxu0 %v5516
    %6145 = vmatpush1.bf16.xpose.msra.mxu0 %v5515
    %6146 = vmatprep.mubr.bf16.mxu0 1065369472
    %6147 = vmatmul.mubr.bf16.gmra.mrb[0].mxu0 1065369472
    %v6148 = vpop.f32.mrb[0].mxu0
    %v6149 = vadd.f32 0.0, %v6148
    %v6150 = vpop.f32.mrb[0].mxu0
    %v6151 = vadd.f32 0.0, %v6150
    %v6152 = vpop.f32.mrb[0].mxu0
    %v6153 = vpop.f32.mrb[0].mxu0
    %6154 = vdwg.mxu0
    %6155 = vmatprep.subr.bf16.mxu0 %v5518
    %6156 = vmatpush1.bf16.xpose.msra.mxu0 %v5517
    %6157 = vmatprep.subr.bf16.mxu0 %v5520
    %6158 = vmatpush1.bf16.xpose.msra.mxu0 %v5519
    %6159 = vmatprep.subr.bf16.mxu0 %v5522
    %6160 = vmatpush1.bf16.xpose.msra.mxu0 %v5521
    %6161 = vmatprep.subr.bf16.mxu0 %v5524
    %6162 = vmatpush1.bf16.xpose.msra.mxu0 %v5523
    %6163 = vmatprep.subr.bf16.mxu0 %v5526
    %6164 = vmatpush1.bf16.xpose.msra.mxu0 %v5525
    %6165 = vmatprep.subr.bf16.mxu0 %v5528
    %6166 = vmatpush1.bf16.xpose.msra.mxu0 %v5527
    %6167 = vmatprep.subr.bf16.mxu0 %v5530
    %6168 = vmatpush1.bf16.xpose.msra.mxu0 %v5529
    %6169 = vmatprep.subr.bf16.mxu0 %v5532
    %6170 = vmatpush1.bf16.xpose.msra.mxu0 %v5531
    %6171 = vmatprep.subr.bf16.mxu0 %v5534
    %6172 = vmatpush1.bf16.xpose.msra.mxu0 %v5533
    %6173 = vmatprep.subr.bf16.mxu0 %v5536
    %6174 = vmatpush1.bf16.xpose.msra.mxu0 %v5535
    %6175 = vmatprep.subr.bf16.mxu0 %v5538
    %6176 = vmatpush1.bf16.xpose.msra.mxu0 %v5537
    %6177 = vmatprep.subr.bf16.mxu0 %v5540
    %6178 = vmatpush1.bf16.xpose.msra.mxu0 %v5539
    %6179 = vmatprep.subr.bf16.mxu0 %v5542
    %6180 = vmatpush1.bf16.xpose.msra.mxu0 %v5541
    %6181 = vmatprep.subr.bf16.mxu0 %v5544
    %6182 = vmatpush1.bf16.xpose.msra.mxu0 %v5543
    %6183 = vmatprep.subr.bf16.mxu0 %v5546
    %6184 = vmatpush1.bf16.xpose.msra.mxu0 %v5545
    %6185 = vmatprep.subr.bf16.mxu0 %v5548
    %6186 = vmatpush1.bf16.xpose.msra.mxu0 %v5547
    %6187 = vmatprep.mubr.bf16.mxu0 1065369472
    %6188 = vmatmul.mubr.bf16.gmra.mrb[0].mxu0 1065369472
    %v6189 = vpop.f32.mrb[0].mxu0
    %v6190 = vadd.f32 0.0, %v6189
    %v6191 = vpop.f32.mrb[0].mxu0
    %v6192 = vadd.f32 0.0, %v6191
    %v6193 = vpop.f32.mrb[0].mxu0
    %v6194 = vpop.f32.mrb[0].mxu0
    %6195 = vdwg.mxu0
    %6196 = vmatprep.subr.bf16.mxu0 %v5550
    %6197 = vmatpush1.bf16.xpose.msra.mxu0 %v5549
    %6198 = vmatprep.subr.bf16.mxu0 %v5552
    %6199 = vmatpush1.bf16.xpose.msra.mxu0 %v5551
    %6200 = vmatprep.subr.bf16.mxu0 %v5554
    %6201 = vmatpush1.bf16.xpose.msra.mxu0 %v5553
    %6202 = vmatprep.subr.bf16.mxu0 %v5556
    %6203 = vmatpush1.bf16.xpose.msra.mxu0 %v5555
    %6204 = vmatprep.subr.bf16.mxu0 %v5558
    %6205 = vmatpush1.bf16.xpose.msra.mxu0 %v5557
    %6206 = vmatprep.subr.bf16.mxu0 %v5560
    %6207 = vmatpush1.bf16.xpose.msra.mxu0 %v5559
    %6208 = vmatprep.subr.bf16.mxu0 %v5562
    %6209 = vmatpush1.bf16.xpose.msra.mxu0 %v5561
    %6210 = vmatprep.subr.bf16.mxu0 %v5564
    %6211 = vmatpush1.bf16.xpose.msra.mxu0 %v5563
    %6212 = vmatprep.subr.bf16.mxu0 %v5566
    %6213 = vmatpush1.bf16.xpose.msra.mxu0 %v5565
    %6214 = vmatprep.subr.bf16.mxu0 %v5568
    %6215 = vmatpush1.bf16.xpose.msra.mxu0 %v5567
    %6216 = vmatprep.subr.bf16.mxu0 %v5570
    %6217 = vmatpush1.bf16.xpose.msra.mxu0 %v5569
    %6218 = vmatprep.subr.bf16.mxu0 %v5572
    %6219 = vmatpush1.bf16.xpose.msra.mxu0 %v5571
    %6220 = vmatprep.subr.bf16.mxu0 %v5574
    %6221 = vmatpush1.bf16.xpose.msra.mxu0 %v5573
    %6222 = vmatprep.subr.bf16.mxu0 %v5576
    %6223 = vmatpush1.bf16.xpose.msra.mxu0 %v5575
    %6224 = vmatprep.subr.bf16.mxu0 %v5578
    %6225 = vmatpush1.bf16.xpose.msra.mxu0 %v5577
    %6226 = vmatprep.subr.bf16.mxu0 %v5580
    %6227 = vmatpush1.bf16.xpose.msra.mxu0 %v5579
    %6228 = vmatprep.mubr.bf16.mxu0 1065369472
    %6229 = vmatmul.mubr.bf16.gmra.mrb[0].mxu0 1065369472
    %v6230 = vpop.f32.mrb[0].mxu0
    %v6231 = vadd.f32 0.0, %v6230
    %v6232 = vpop.f32.mrb[0].mxu0
    %v6233 = vadd.f32 0.0, %v6232
    %v6234 = vpop.f32.mrb[0].mxu0
    %v6235 = vpop.f32.mrb[0].mxu0
    %6236 = vdwg.mxu0
    %v6237 = vrcp.pop %v5944
    %v6238 = vrcp.pop %v5946
    %v6239 = vrcp.pop %v5985
    %v6240 = vrcp.pop %v5987
    %v6241 = vrcp.pop %v6026
    %v6242 = vrcp.pop %v6028
    %v6243 = vrcp.pop %v6067
    %v6244 = vrcp.pop %v6069
    %v6245 = vrcp.pop %v6108
    %v6246 = vrcp.pop %v6110
    %v6247 = vrcp.pop %v6149
    %v6248 = vrcp.pop %v6151
    %v6249 = vrcp.pop %v6190
    %v6250 = vrcp.pop %v6192
    %v6251 = vrcp.pop %v6231
    %v6252 = vrcp.pop %v6233
    %v6253 = vlaneseq
    %v6254 = vshrl.u32 %v6253, 7
    %v6255 = vsub.s32 0, %v6254
    %v6256 = vrot.slane %v6237, %v6255
    %v6257 = vlaneseq
    %v6258 = vshrl.u32 %v6257, 7
    %v6259 = vsub.s32 0, %v6258
    %v6260 = vrot.slane %v6238, %v6259
    %v6261 = vlaneseq
    %v6262 = vshrl.u32 %v6261, 7
    %v6263 = vsub.s32 0, %v6262
    %v6264 = vrot.slane %v6239, %v6263
    %v6265 = vlaneseq
    %v6266 = vshrl.u32 %v6265, 7
    %v6267 = vsub.s32 0, %v6266
    %v6268 = vrot.slane %v6240, %v6267
    %v6269 = vlaneseq
    %v6270 = vshrl.u32 %v6269, 7
    %v6271 = vsub.s32 0, %v6270
    %v6272 = vrot.slane %v6241, %v6271
    %v6273 = vlaneseq
    %v6274 = vshrl.u32 %v6273, 7
    %v6275 = vsub.s32 0, %v6274
    %v6276 = vrot.slane %v6242, %v6275
    %v6277 = vlaneseq
    %v6278 = vshrl.u32 %v6277, 7
    %v6279 = vsub.s32 0, %v6278
    %v6280 = vrot.slane %v6243, %v6279
    %v6281 = vlaneseq
    %v6282 = vshrl.u32 %v6281, 7
    %v6283 = vsub.s32 0, %v6282
    %v6284 = vrot.slane %v6244, %v6283
    %v6285 = vlaneseq
    %v6286 = vshrl.u32 %v6285, 7
    %v6287 = vsub.s32 0, %v6286
    %v6288 = vrot.slane %v6245, %v6287
    %v6289 = vlaneseq
    %v6290 = vshrl.u32 %v6289, 7
    %v6291 = vsub.s32 0, %v6290
    %v6292 = vrot.slane %v6246, %v6291
    %v6293 = vlaneseq
    %v6294 = vshrl.u32 %v6293, 7
    %v6295 = vsub.s32 0, %v6294
    %v6296 = vrot.slane %v6247, %v6295
    %v6297 = vlaneseq
    %v6298 = vshrl.u32 %v6297, 7
    %v6299 = vsub.s32 0, %v6298
    %v6300 = vrot.slane %v6248, %v6299
    %v6301 = vlaneseq
    %v6302 = vshrl.u32 %v6301, 7
    %v6303 = vsub.s32 0, %v6302
    %v6304 = vrot.slane %v6249, %v6303
    %v6305 = vlaneseq
    %v6306 = vshrl.u32 %v6305, 7
    %v6307 = vsub.s32 0, %v6306
    %v6308 = vrot.slane %v6250, %v6307
    %v6309 = vlaneseq
    %v6310 = vshrl.u32 %v6309, 7
    %v6311 = vsub.s32 0, %v6310
    %v6312 = vrot.slane %v6251, %v6311
    %v6313 = vlaneseq
    %v6314 = vshrl.u32 %v6313, 7
    %v6315 = vsub.s32 0, %v6314
    %v6316 = vrot.slane %v6252, %v6315
    %v6317 = vmul.f32 %v5616, %v6256
    %v6318 = vmul.f32 %v5618, %v6260
    %v6319 = vmul.f32 %v5657, %v6264
    %v6320 = vmul.f32 %v5659, %v6268
    %v6321 = vmul.f32 %v5698, %v6272
    %v6322 = vmul.f32 %v5700, %v6276
    %v6323 = vmul.f32 %v5739, %v6280
    %v6324 = vmul.f32 %v5741, %v6284
    %v6325 = vmul.f32 %v5780, %v6288
    %v6326 = vmul.f32 %v5782, %v6292
    %v6327 = vmul.f32 %v5821, %v6296
    %v6328 = vmul.f32 %v5823, %v6300
    %v6329 = vmul.f32 %v5862, %v6304
    %v6330 = vmul.f32 %v5864, %v6308
    %v6331 = vmul.f32 %v5903, %v6312
    %v6332 = vmul.f32 %v5905, %v6316
    %v6333 = vadd.f32 %v6317, %v6318
    %6334 = vadd.xlane.f32.xlu0 %v6333
    %v6335 = vpop.xlane.xlu0 %6334
    %v6336 = vadd.f32 %v6319, %v6320
    %6337 = vadd.xlane.f32.xlu0 %v6336
    %v6338 = vpop.xlane.xlu0 %6337
    %v6339 = vadd.f32 %v6321, %v6322
    %6340 = vadd.xlane.f32.xlu0 %v6339
    %v6341 = vpop.xlane.xlu0 %6340
    %v6342 = vadd.f32 %v6323, %v6324
    %6343 = vadd.xlane.f32.xlu0 %v6342
    %v6344 = vpop.xlane.xlu0 %6343
    %v6345 = vadd.f32 %v6325, %v6326
    %6346 = vadd.xlane.f32.xlu0 %v6345
    %v6347 = vpop.xlane.xlu0 %6346
    %v6348 = vadd.f32 %v6327, %v6328
    %6349 = vadd.xlane.f32.xlu0 %v6348
    %v6350 = vpop.xlane.xlu0 %6349
    %v6351 = vadd.f32 %v6329, %v6330
    %6352 = vadd.xlane.f32.xlu0 %v6351
    %v6353 = vpop.xlane.xlu0 %6352
    %v6354 = vadd.f32 %v6331, %v6332
    %6355 = vadd.xlane.f32.xlu0 %v6354
    %v6356 = vpop.xlane.xlu0 %6355
    %v6357 = vmul.f32 %v6335, %v184
    %v6358 = vmul.f32 %v6338, %v184
    %v6359 = vmul.f32 %v6341, %v184
    %v6360 = vmul.f32 %v6344, %v184
    %v6361 = vmul.f32 %v6347, %v184
    %v6362 = vmul.f32 %v6350, %v184
    %v6363 = vmul.f32 %v6353, %v184
    %v6364 = vmul.f32 %v6356, %v184
    %v6365 = vsub.f32 %v6317, %v6357
    %v6366 = vsub.f32 %v6318, %v6357
    %v6367 = vsub.f32 %v6319, %v6358
    %v6368 = vsub.f32 %v6320, %v6358
    %v6369 = vsub.f32 %v6321, %v6359
    %v6370 = vsub.f32 %v6322, %v6359
    %v6371 = vsub.f32 %v6323, %v6360
    %v6372 = vsub.f32 %v6324, %v6360
    %v6373 = vsub.f32 %v6325, %v6361
    %v6374 = vsub.f32 %v6326, %v6361
    %v6375 = vsub.f32 %v6327, %v6362
    %v6376 = vsub.f32 %v6328, %v6362
    %v6377 = vsub.f32 %v6329, %v6363
    %v6378 = vsub.f32 %v6330, %v6363
    %v6379 = vsub.f32 %v6331, %v6364
    %v6380 = vsub.f32 %v6332, %v6364
    %v6381 = vld [vmem:[%s3] sm:$0xf]
    %v6382 = vld [vmem:[%s3 + $0x4] sm:$0xf]
    %v6383 = vld [vmem:[%s3 + $0x8] sm:$0xf]
    %v6384 = vld [vmem:[%s3 + $0xc] sm:$0xf]
    %v6385 = vld [vmem:[%s3 + $0x10] sm:$0xf]
    %v6386 = vld [vmem:[%s3 + $0x14] sm:$0xf]
    %v6387 = vld [vmem:[%s3 + $0x18] sm:$0xf]
    %v6388 = vld [vmem:[%s3 + $0x1c] sm:$0xf]
    %v6389 = vpack.c.bf16 %v6367, %v6365
    %v6390 = vpack.c.bf16 %v6368, %v6366
    %v6391 = vpack.c.bf16 %v6371, %v6369
    %v6392 = vpack.c.bf16 %v6372, %v6370
    %v6393 = vpack.c.bf16 %v6375, %v6373
    %v6394 = vpack.c.bf16 %v6376, %v6374
    %v6395 = vpack.c.bf16 %v6379, %v6377
    %v6396 = vpack.c.bf16 %v6380, %v6378
    %v6405 = vunpack.c.l.b16 %v6381
    %v6406 = vunpack.c.l.b16 %v6382
    %v6407 = vunpack.c.l.b16 %v6383
    %v6408 = vunpack.c.l.b16 %v6384
    %v6409 = vunpack.c.l.b16 %v6385
    %v6410 = vunpack.c.l.b16 %v6386
    %v6411 = vunpack.c.l.b16 %v6387
    %v6412 = vunpack.c.l.b16 %v6388
    %v6413 = vpack.c.b16 %v6406, %v6405
    %v6414 = vpack.c.b16 %v6408, %v6407
    %v6415 = vpack.c.b16 %v6410, %v6409
    %v6416 = vpack.c.b16 %v6412, %v6411
    %v6418 = vsel %vm501, %v6413, 0
    %v6421 = vsel %vm501, %v6414, 0
    %v6424 = vsel %vm501, %v6415, 0
    %v6427 = vsel %vm501, %v6416, 0
    %6429 = vmatprep.subr.bf16.mxu0 %v6390
    %6430 = vmatpush1.bf16.msra.mxu0 %v6389
    %6431 = vmatprep.subr.bf16.mxu0 %v6392
    %6432 = vmatpush1.bf16.msra.mxu0 %v6391
    %6433 = vmatprep.subr.bf16.mxu0 %v6394
    %6434 = vmatpush1.bf16.msra.mxu0 %v6393
    %6435 = vmatprep.subr.bf16.mxu0 %v6396
    %6436 = vmatpush1.bf16.msra.mxu0 %v6395
    %6437 = vmatprep.subr.bf16.mxu0 0
    %6438 = vmatpush1.bf16.msra.mxu0 0
    %6439 = vmatprep.subr.bf16.mxu0 0
    %6440 = vmatpush1.bf16.msra.mxu0 0
    %6441 = vmatprep.subr.bf16.mxu0 0
    %6442 = vmatpush1.bf16.msra.mxu0 0
    %6443 = vmatprep.subr.bf16.mxu0 0
    %6444 = vmatpush1.bf16.msra.mxu0 0
    %6445 = vmatprep.subr.bf16.mxu0 0
    %6446 = vmatpush1.bf16.msra.mxu0 0
    %6447 = vmatprep.subr.bf16.mxu0 0
    %6448 = vmatpush1.bf16.msra.mxu0 0
    %6449 = vmatprep.subr.bf16.mxu0 0
    %6450 = vmatpush1.bf16.msra.mxu0 0
    %6451 = vmatprep.subr.bf16.mxu0 0
    %6452 = vmatpush1.bf16.msra.mxu0 0
    %6453 = vmatprep.subr.bf16.mxu0 0
    %6454 = vmatpush1.bf16.msra.mxu0 0
    %6455 = vmatprep.subr.bf16.mxu0 0
    %6456 = vmatpush1.bf16.msra.mxu0 0
    %6457 = vmatprep.subr.bf16.mxu0 0
    %6458 = vmatpush1.bf16.msra.mxu0 0
    %6459 = vmatprep.subr.bf16.mxu0 0
    %6460 = vmatpush1.bf16.msra.mxu0 0
    %6461 = vmatprep.mubr.bf16.mxu0 0
    %6462 = vmatmul.mubr.bf16.gmra.mrb[0].mxu0 %v6418
    %v6463 = vpop.f32.mrb[0].mxu0
    %v6464 = vadd.f32 0.0, %v6463
    %v6465 = vpop.f32.mrb[0].mxu0
    %v6466 = vadd.f32 0.0, %v6465
    %v6467 = vpop.f32.mrb[0].mxu0
    %v6468 = vadd.f32 0.0, %v6467
    %v6469 = vpop.f32.mrb[0].mxu0
    %v6470 = vadd.f32 0.0, %v6469
    %6471 = vmatprep.mubr.bf16.mxu0 0
    %6472 = vmatmul.mubr.bf16.gmra.mrb[0].mxu0 %v6421
    %v6473 = vpop.f32.mrb[0].mxu0
    %v6474 = vadd.f32 0.0, %v6473
    %v6475 = vpop.f32.mrb[0].mxu0
    %v6476 = vadd.f32 0.0, %v6475
    %v6477 = vpop.f32.mrb[0].mxu0
    %v6478 = vadd.f32 0.0, %v6477
    %v6479 = vpop.f32.mrb[0].mxu0
    %v6480 = vadd.f32 0.0, %v6479
    %6481 = vmatprep.mubr.bf16.mxu0 0
    %6482 = vmatmul.mubr.bf16.gmra.mrb[0].mxu0 %v6424
    %v6483 = vpop.f32.mrb[0].mxu0
    %v6484 = vadd.f32 0.0, %v6483
    %v6485 = vpop.f32.mrb[0].mxu0
    %v6486 = vadd.f32 0.0, %v6485
    %v6487 = vpop.f32.mrb[0].mxu0
    %v6488 = vadd.f32 0.0, %v6487
    %v6489 = vpop.f32.mrb[0].mxu0
    %v6490 = vadd.f32 0.0, %v6489
    %6491 = vmatprep.mubr.bf16.mxu0 0
    %6492 = vmatmul.mubr.bf16.gmra.mrb[0].mxu0 %v6427
    %v6493 = vpop.f32.mrb[0].mxu0
    %v6494 = vadd.f32 0.0, %v6493
    %v6495 = vpop.f32.mrb[0].mxu0
    %v6496 = vadd.f32 0.0, %v6495
    %v6497 = vpop.f32.mrb[0].mxu0
    %v6498 = vadd.f32 0.0, %v6497
    %v6499 = vpop.f32.mrb[0].mxu0
    %v6500 = vadd.f32 0.0, %v6499
    %6501 = vdwg.mxu0
    %v6502 = vld [vmem:[%s4] sm:$0xf]
    %v6503 = vld [vmem:[%s4 + $0x4] sm:$0xf]
    %v6504 = vld [vmem:[%s4 + $0x8] sm:$0xf]
    %v6505 = vld [vmem:[%s4 + $0xc] sm:$0xf]
    %v6506 = vpack.c.bf16 %v6468, %v6464
    %v6507 = vpack.c.bf16 %v6470, %v6466
    %v6508 = vpack.c.bf16 %v6478, %v6474
    %v6509 = vpack.c.bf16 %v6480, %v6476
    %v6510 = vpack.c.bf16 %v6488, %v6484
    %v6511 = vpack.c.bf16 %v6490, %v6486
    %v6512 = vpack.c.bf16 %v6498, %v6494
    %v6513 = vpack.c.bf16 %v6500, %v6496
    %v6518 = vunpack.c.l.b16 %v6502
    %v6519 = vunpack.c.l.b16 %v6503
    %v6520 = vunpack.c.l.b16 %v6504
    %v6521 = vunpack.c.l.b16 %v6505
    %v6522 = vpack.c.b16 %v6519, %v6518
    %v6523 = vpack.c.b16 %v6521, %v6520
    %v6525 = vsel %vm501, %v6522, 0
    %v6528 = vsel %vm501, %v6523, 0
    %6530 = vmatprep.subr.bf16.mxu0 %v6507
    %6531 = vmatpush1.bf16.msra.mxu0 %v6506
    %6532 = vmatprep.subr.bf16.mxu0 %v6509
    %6533 = vmatpush1.bf16.msra.mxu0 %v6508
    %6534 = vmatprep.subr.bf16.mxu0 %v6511
    %6535 = vmatpush1.bf16.msra.mxu0 %v6510
    %6536 = vmatprep.subr.bf16.mxu0 %v6513
    %6537 = vmatpush1.bf16.msra.mxu0 %v6512
    %6538 = vmatprep.subr.bf16.mxu0 0
    %6539 = vmatpush1.bf16.msra.mxu0 0
    %6540 = vmatprep.subr.bf16.mxu0 0
    %6541 = vmatpush1.bf16.msra.mxu0 0
    %6542 = vmatprep.subr.bf16.mxu0 0
    %6543 = vmatpush1.bf16.msra.mxu0 0
    %6544 = vmatprep.subr.bf16.mxu0 0
    %6545 = vmatpush1.bf16.msra.mxu0 0
    %6546 = vmatprep.subr.bf16.mxu0 0
    %6547 = vmatpush1.bf16.msra.mxu0 0
    %6548 = vmatprep.subr.bf16.mxu0 0
    %6549 = vmatpush1.bf16.msra.mxu0 0
    %6550 = vmatprep.subr.bf16.mxu0 0
    %6551 = vmatpush1.bf16.msra.mxu0 0
    %6552 = vmatprep.subr.bf16.mxu0 0
    %6553 = vmatpush1.bf16.msra.mxu0 0
    %6554 = vmatprep.subr.bf16.mxu0 0
    %6555 = vmatpush1.bf16.msra.mxu0 0
    %6556 = vmatprep.subr.bf16.mxu0 0
    %6557 = vmatpush1.bf16.msra.mxu0 0
    %6558 = vmatprep.subr.bf16.mxu0 0
    %6559 = vmatpush1.bf16.msra.mxu0 0
    %6560 = vmatprep.subr.bf16.mxu0 0
    %6561 = vmatpush1.bf16.msra.mxu0 0
    %6562 = vmatprep.mubr.bf16.mxu0 0
    %6563 = vmatmul.mubr.bf16.gmra.mrb[0].mxu0 %v6525
    %v6564 = vpop.f32.mrb[0].mxu0
    %v6565 = vadd.f32 0.0, %v6564
    %v6566 = vpop.f32.mrb[0].mxu0
    %v6567 = vadd.f32 0.0, %v6566
    %v6568 = vpop.f32.mrb[0].mxu0
    %v6569 = vadd.f32 0.0, %v6568
    %v6570 = vpop.f32.mrb[0].mxu0
    %v6571 = vadd.f32 0.0, %v6570
    %6572 = vmatprep.mubr.bf16.mxu0 0
    %6573 = vmatmul.mubr.bf16.gmra.mrb[0].mxu0 %v6528
    %v6574 = vpop.f32.mrb[0].mxu0
    %v6575 = vadd.f32 0.0, %v6574
    %v6576 = vpop.f32.mrb[0].mxu0
    %v6577 = vadd.f32 0.0, %v6576
    %v6578 = vpop.f32.mrb[0].mxu0
    %v6579 = vadd.f32 0.0, %v6578
    %v6580 = vpop.f32.mrb[0].mxu0
    %v6581 = vadd.f32 0.0, %v6580
    %6582 = vdwg.mxu0
    %v6583 = vadd.f32 %v6565, %v6567
    %6584 = vadd.xlane.f32.xlu0 %v6583
    %v6585 = vpop.xlane.xlu0 %6584
    %v6586 = vadd.f32 %v6569, %v6571
    %6587 = vadd.xlane.f32.xlu0 %v6586
    %v6588 = vpop.xlane.xlu0 %6587
    %v6589 = vadd.f32 %v6575, %v6577
    %6590 = vadd.xlane.f32.xlu0 %v6589
    %v6591 = vpop.xlane.xlu0 %6590
    %v6592 = vadd.f32 %v6579, %v6581
    %6593 = vadd.xlane.f32.xlu0 %v6592
    %v6594 = vpop.xlane.xlu0 %6593
    %v6595 = vmul.f32 %v6585, %v184
    %v6596 = vmul.f32 %v6588, %v184
    %v6597 = vmul.f32 %v6591, %v184
    %v6598 = vmul.f32 %v6594, %v184
    %v6599 = vsub.f32 %v6565, %v6595
    %v6600 = vsub.f32 %v6567, %v6595
    %v6601 = vsub.f32 %v6569, %v6596
    %v6602 = vsub.f32 %v6571, %v6596
    %v6603 = vsub.f32 %v6575, %v6597
    %v6604 = vsub.f32 %v6577, %v6597
    %v6605 = vsub.f32 %v6579, %v6598
    %v6606 = vsub.f32 %v6581, %v6598
    %v6607 = vmul.f32 %v6599, %v6599
    %v6608 = vmul.f32 %v6600, %v6600
    %v6609 = vmul.f32 %v6601, %v6601
    %v6610 = vmul.f32 %v6602, %v6602
    %v6611 = vmul.f32 %v6603, %v6603
    %v6612 = vmul.f32 %v6604, %v6604
    %v6613 = vmul.f32 %v6605, %v6605
    %v6614 = vmul.f32 %v6606, %v6606
    %v6615 = vadd.f32 %v6607, %v6608
    %6616 = vadd.xlane.f32.xlu0 %v6615
    %v6617 = vpop.xlane.xlu0 %6616
    %v6618 = vadd.f32 %v6609, %v6610
    %6619 = vadd.xlane.f32.xlu0 %v6618
    %v6620 = vpop.xlane.xlu0 %6619
    %v6621 = vadd.f32 %v6611, %v6612
    %6622 = vadd.xlane.f32.xlu0 %v6621
    %v6623 = vpop.xlane.xlu0 %6622
    %v6624 = vadd.f32 %v6613, %v6614
    %6625 = vadd.xlane.f32.xlu0 %v6624
    %v6626 = vpop.xlane.xlu0 %6625
    %v6627 = vmul.f32 %v6617, %v184
    %v6628 = vmul.f32 %v6620, %v184
    %v6629 = vmul.f32 %v6623, %v184
    %v6630 = vmul.f32 %v6626, %v184
    %v6631 = vadd.f32 %v6627, 1e-05
    %v6632 = vadd.f32 %v6628, 1e-05
    %v6633 = vadd.f32 %v6629, 1e-05
    %v6634 = vadd.f32 %v6630, 1e-05
    %v6635 = vrsqrt.pop %v6631
    %v6636 = vrsqrt.pop %v6632
    %v6637 = vrsqrt.pop %v6633
    %v6638 = vrsqrt.pop %v6634
    %v6639 = vmul.f32 %v6635, %v26
    %v6640 = vmul.f32 %v6636, %v27
    %v6641 = vmul.f32 %v6637, %v28
    %v6642 = vmul.f32 %v6638, %v29
    %6644 = vset.pattern.permute.xlu0 3
    %6645 = vperm.xlu0 %6644, %v6639
    %v6646 = vpop.permute.xlu0 %6645
    %6649 = vset.pattern.permute.xlu0 3
    %6650 = vperm.xlu0 %6649, %v6640
    %v6651 = vpop.permute.xlu0 %6650
    %6654 = vset.pattern.permute.xlu0 3
    %6655 = vperm.xlu0 %6654, %v6641
    %v6656 = vpop.permute.xlu0 %6655
    %6659 = vset.pattern.permute.xlu0 3
    %6660 = vperm.xlu0 %6659, %v6642
    %v6661 = vpop.permute.xlu0 %6660
    %v6663 = vmul.f32 %v6599, %v6646
    %v6664 = vmul.f32 %v6600, %v6646
    %v6665 = vmul.f32 %v6601, %v6651
    %v6666 = vmul.f32 %v6602, %v6651
    %v6667 = vmul.f32 %v6603, %v6656
    %v6668 = vmul.f32 %v6604, %v6656
    %v6669 = vmul.f32 %v6605, %v6661
    %v6670 = vmul.f32 %v6606, %v6661
    %6671 = vset.pattern.permute.xlu0 4
    %6672 = vperm.xlu0 %6671, %v26
    %v6673 = vpop.permute.xlu0 %6672
    %6675 = vset.pattern.permute.xlu0 4
    %6676 = vperm.xlu0 %6675, %v27
    %v6677 = vpop.permute.xlu0 %6676
    %6679 = vset.pattern.permute.xlu0 4
    %6680 = vperm.xlu0 %6679, %v28
    %v6681 = vpop.permute.xlu0 %6680
    %6683 = vset.pattern.permute.xlu0 4
    %6684 = vperm.xlu0 %6683, %v29
    %v6685 = vpop.permute.xlu0 %6684
    %v6687 = vadd.f32 %v6663, %v6673
    %v6688 = vadd.f32 %v6664, %v6673
    %v6689 = vadd.f32 %v6665, %v6677
    %v6690 = vadd.f32 %v6666, %v6677
    %v6691 = vadd.f32 %v6667, %v6681
    %v6692 = vadd.f32 %v6668, %v6681
    %v6693 = vadd.f32 %v6669, %v6685
    %v6694 = vadd.f32 %v6670, %v6685
    %v6695 = vmax.f32 %v6687, 0.0
    %v6696 = vmax.f32 %v6688, 0.0
    %v6697 = vmax.f32 %v6689, 0.0
    %v6698 = vmax.f32 %v6690, 0.0
    %v6699 = vmax.f32 %v6691, 0.0
    %v6700 = vmax.f32 %v6692, 0.0
    %v6701 = vmax.f32 %v6693, 0.0
    %v6702 = vmax.f32 %v6694, 0.0
    %6703 = vst [vmem:[#allocation2] sm:$0xff] %v6695
    %6704 = vst [vmem:[#allocation2 + $0x8] sm:$0xff] %v6696
    %6705 = vst [vmem:[#allocation2 + $0x10] sm:$0xff] %v6697
    %6706 = vst [vmem:[#allocation2 + $0x18] sm:$0xff] %v6698
    %6707 = vst [vmem:[#allocation2 + $0x20] sm:$0xff] %v6699
    %6708 = vst [vmem:[#allocation2 + $0x28] sm:$0xff] %v6700
    %6709 = vst [vmem:[#allocation2 + $0x30] sm:$0xff] %v6701
    %6710 = vst [vmem:[#allocation2 + $0x38] sm:$0xff] %v6702
    // Predicated region
    $region26: #{tpu_custom_call.1} parent=1 // pred_check
      _
    $region27: #{tpu_custom_call.1} parent=1 // pred_check_branch
      %6712 = sbr.rel (0) target = $region29
    $region28: #{tpu_custom_call.1} parent=1 // pred_region
      %s6714 = ssub.s32 1024, 1024
      %6715 = vsyncadd [#allocation3], %s6714
      %s6716 = sshll.u32 [#allocation2], 4
      %s6717 = int_to_ptr.vmem [resolvable:$true] %s6716
      %6722 = dma.vmem_to_hbm [thread:$0]  %s6717, 1024, %s6, [#allocation3], 256, 256, 16
    $region29: #{tpu_custom_call.1} parent=1 // pred_fallthru
      _
    // Predicated region
    $region30: #{tpu_custom_call.1} parent=1 // pred_check
      _
    $region31: #{tpu_custom_call.1} parent=1 // pred_check_branch
      %6724 = sbr.rel (0) target = $region33
    $region32: #{tpu_custom_call.1} parent=1 // pred_region
      %6725 = dma.done [#allocation3], 1024
    $region33: #{tpu_custom_call.1} parent=1 // pred_fallthru
      _
    %6726 = vsyncpa [#allocation3], 1

</llo_original>
